<compile_context>
chip_gen: v6e
topology: v6e:2x2x1
jax: 0.10.0
libtpu: 0.0.40
codegen_flags: <defaults>
</compile_context>

<pallas_src>
import functools
import math

import jax
import jax.numpy as jnp
from jax import lax
from jax.experimental import pallas as pl
from jax.experimental.pallas import tpu as pltpu


# ----------------------------------------------------------------------------
# In-kernel math helpers
# ----------------------------------------------------------------------------

_GELU_C = math.sqrt(2.0 / math.pi)


def _gelu(x):
    # tanh-approx GELU: the transcendental goes to the EUP slot (free vs the
    # previous long VALU erf-polynomial chain).
    # TODO(synk): HF BERT uses the exact erf-GELU; tanh approx differs by <1e-3.
    return 0.5 * x * (1.0 + jnp.tanh(_GELU_C * (x + 0.044715 * x * x * x)))


def _layer_norm(x, g, b, eps):
    mu = jnp.mean(x, axis=-1, keepdims=True)
    xc = x - mu
    var = jnp.mean(xc * xc, axis=-1, keepdims=True)
    return xc * lax.rsqrt(var + eps) * g + b


# ----------------------------------------------------------------------------
# Kernel: whole BERT encoder (all layers fused), grid over the two encoders
# ----------------------------------------------------------------------------

def _encoder_kernel(emb_ref, bias_ref, eln_g_ref, eln_b_ref,
                    wqkv_ref, bqkv_ref, wo_ref, bo_ref,
                    ln1_g_ref, ln1_b_ref, w1_ref, b1_ref, w2_ref, b2_ref,
                    ln2_g_ref, ln2_b_ref, cls_ref,
                    *, n_layers, n_heads, n_cat, batch, seq, eps, scale):
    # emb_ref  [M, H]      summed word+pos+type embeddings (M = B*S)
    # bias_ref [B, 1, S]   additive key-mask bias (0 / -1e9)
    # wqkv     [L, H, 3H]  columns = [Wq | Wk | Wv], heads contiguous inside
    # cls_ref  [B, n_cat*H] lane-dense CLS slab (chunk 0 = last layer)
    H = eln_g_ref.shape[-1]
    Dh = H // n_heads
    wt = wqkv_ref.dtype            # bf16 matmul operand dtype

    x = _layer_norm(emb_ref[...], eln_g_ref[...], eln_b_ref[...], eps)   # [M, H] f32
    bias = bias_ref[...]                                                  # [B, 1, S]

    cls_chunks = [None] * n_cat

    # TODO(synk): at real BERT sizes, add a layer grid axis ("arbitrary") and
    # stream per-layer weights via BlockSpec (fits v7x's 64 MiB VMEM), and
    # switch this static loop to lax.fori_loop with dynamic-index weight loads.
    for l in range(n_layers):
        # ---- fused QKV projection: one [M,H] @ [H,3H] MXU push per layer ----
        qkv = jnp.dot(x.astype(wt), wqkv_ref[l],
                      preferred_element_type=jnp.float32) + bqkv_ref[l]   # [M, 3H] f32

        # ---- attention scores per head, batched over the real batch B ------
        s_heads = []
        for h in range(n_heads):
            q = qkv[:, h * Dh:(h + 1) * Dh].reshape(batch, seq, Dh)
            k = qkv[:, H + h * Dh:H + (h + 1) * Dh].reshape(batch, seq, Dh)
            s = jnp.einsum('bqd,bkd->bqk', q, k,
                           preferred_element_type=jnp.float32) * scale + bias
            s_heads.append(s)                                             # [B, S, S]

        # ---- ONE softmax over all heads (stacked on the sublane axis) ------
        s_all = jnp.concatenate(s_heads, axis=1)                          # [B, nH*S, S]
        s_all = s_all - jnp.max(s_all, axis=-1, keepdims=True)
        p_all = jnp.exp(s_all)
        p_all = p_all * pl.reciprocal(jnp.sum(p_all, axis=-1, keepdims=True),
                                      approx=True)

        # ---- per-head context, assembled lane-dense -> ONE output proj -----
        ctx_heads = []
        for h in range(n_heads):
            v = qkv[:, 2 * H + h * Dh:2 * H + (h + 1) * Dh].reshape(batch, seq, Dh)
            p = p_all[:, h * seq:(h + 1) * seq, :]
            ctx = jnp.einsum('bqk,bkd->bqd', p, v,
                             preferred_element_type=jnp.float32)          # [B, S, Dh]
            ctx_heads.append(ctx.reshape(batch * seq, Dh))
        ctx_all = jnp.concatenate(ctx_heads, axis=-1)                     # [M, H]

        attn = jnp.dot(ctx_all.astype(wt), wo_ref[l],
                       preferred_element_type=jnp.float32) + bo_ref[l]
        x = _layer_norm(x + attn, ln1_g_ref[l], ln1_b_ref[l], eps)

        # ---- feed-forward (gelu) with fused residual + LayerNorm -----------
        ffh = _gelu(jnp.dot(x.astype(wt), w1_ref[l],
                            preferred_element_type=jnp.float32) + b1_ref[l])
        ff = jnp.dot(ffh.astype(wt), w2_ref[l],
                     preferred_element_type=jnp.float32) + b2_ref[l]
        x = _layer_norm(x + ff, ln2_g_ref[l], ln2_b_ref[l], eps)

        # ---- keep only the CLS rows the concat head needs -------------------
        chunk = n_layers - 1 - l          # chunk 0 == hidden_states[-1]
        if chunk < n_cat:
            cls_chunks[chunk] = x.reshape(batch, seq, H)[:, 0, :]          # [B, H]

    # Lane-dense [B, n_cat*H] slab -> unmasked 128-lane stores.
    cls_ref[...] = jnp.concatenate(cls_chunks, axis=-1)


def _enc_index_map(ndim):
    zeros = (0,) * (ndim - 1)
    return lambda e: (e,) + zeros


def _enc_spec(arr):
    return pl.BlockSpec((None,) + tuple(arr.shape[1:]), _enc_index_map(arr.ndim))


def dual_encoder_forward(packed, emb, key_bias, *, n_layers, n_heads, n_cat,
                         batch, seq, eps):
    """emb: [E, B*S, H]; key_bias: [E, B, 1, S]. Returns CLS slab [E, B, n_cat*H]."""
    E, M, H = emb.shape
    assert n_cat <= n_layers

    inputs = (emb, key_bias,
              packed["eln_g"], packed["eln_b"],
              packed["wqkv"], packed["bqkv"], packed["wo"], packed["bo"],
              packed["ln1_g"], packed["ln1_b"],
              packed["w1"], packed["b1"], packed["w2"], packed["b2"],
              packed["ln2_g"], packed["ln2_b"])

    return pl.pallas_call(
        functools.partial(_encoder_kernel, n_layers=n_layers, n_heads=n_heads,
                          n_cat=n_cat, batch=batch, seq=seq, eps=eps,
                          scale=1.0 / math.sqrt(H // n_heads)),
        grid=(E,),
        in_specs=[_enc_spec(a) for a in inputs],
        out_specs=pl.BlockSpec((None, batch, n_cat * H), lambda e: (e, 0, 0)),
        out_shape=jax.ShapeDtypeStruct((E, batch, n_cat * H), jnp.float32),
        compiler_params=pltpu.CompilerParams(
            dimension_semantics=("parallel",),       # v7x: one encoder per TC
            vmem_limit_bytes=32 * 1024 * 1024),      # headroom, safe on all gens
    )(*inputs)


# ----------------------------------------------------------------------------
# Parameter construction / packing (done once, outside the hot path)
# ----------------------------------------------------------------------------

def init_bert_params(key, *, vocab, type_vocab, max_pos, hidden, ffn, n_layers):
    std = 0.02
    keys = jax.random.split(key, 3 + n_layers)
    p = {
        "word_emb": std * jax.random.normal(keys[0], (vocab, hidden), jnp.float32),
        "pos_emb": std * jax.random.normal(keys[1], (max_pos, hidden), jnp.float32),
        "type_emb": std * jax.random.normal(keys[2], (type_vocab, hidden), jnp.float32),
        "emb_ln_g": jnp.ones((hidden,), jnp.float32),
        "emb_ln_b": jnp.zeros((hidden,), jnp.float32),
        "layers": [],
    }
    for l in range(n_layers):
        lk = jax.random.split(keys[3 + l], 6)
        p["layers"].append({
            "wq": std * jax.random.normal(lk[0], (hidden, hidden), jnp.float32),
            "bq": jnp.zeros((hidden,), jnp.float32),
            "wk": std * jax.random.normal(lk[1], (hidden, hidden), jnp.float32),
            "bk": jnp.zeros((hidden,), jnp.float32),
            "wv": std * jax.random.normal(lk[2], (hidden, hidden), jnp.float32),
            "bv": jnp.zeros((hidden,), jnp.float32),
            "wo": std * jax.random.normal(lk[3], (hidden, hidden), jnp.float32),
            "bo": jnp.zeros((hidden,), jnp.float32),
            "ln1_g": jnp.ones((hidden,), jnp.float32),
            "ln1_b": jnp.zeros((hidden,), jnp.float32),
            "w1": std * jax.random.normal(lk[4], (hidden, ffn), jnp.float32),
            "b1": jnp.zeros((ffn,), jnp.float32),
            "w2": std * jax.random.normal(lk[5], (ffn, hidden), jnp.float32),
            "b2": jnp.zeros((hidden,), jnp.float32),
            "ln2_g": jnp.ones((hidden,), jnp.float32),
            "ln2_b": jnp.zeros((hidden,), jnp.float32),
        })
    return p


def pack_encoder_params(p_list, *, matmul_dtype=jnp.bfloat16):
    """Stack both encoders' weights: fused [L,H,3H] QKV, full [L,H,H] Wo, FFN.
    Matmul weights stored in bf16 (f32 accumulation in-kernel)."""
    def per_encoder(p):
        layers = p["layers"]
        wqkv = jnp.stack([jnp.concatenate([lp["wq"], lp["wk"], lp["wv"]], axis=1)
                          for lp in layers])                                # [L, H, 3H]
        bqkv = jnp.stack([jnp.concatenate([lp["bq"], lp["bk"], lp["bv"]])[None, :]
                          for lp in layers])                                # [L, 1, 3H]
        wo = jnp.stack([lp["wo"] for lp in layers])                         # [L, H, H]
        bo = jnp.stack([lp["bo"][None, :] for lp in layers])                # [L, 1, H]
        ln1_g = jnp.stack([lp["ln1_g"][None, :] for lp in layers])
        ln1_b = jnp.stack([lp["ln1_b"][None, :] for lp in layers])
        w1 = jnp.stack([lp["w1"] for lp in layers])                         # [L, H, F]
        b1 = jnp.stack([lp["b1"][None, :] for lp in layers])                # [L, 1, F]
        w2 = jnp.stack([lp["w2"] for lp in layers])                         # [L, F, H]
        b2 = jnp.stack([lp["b2"][None, :] for lp in layers])                # [L, 1, H]
        ln2_g = jnp.stack([lp["ln2_g"][None, :] for lp in layers])
        ln2_b = jnp.stack([lp["ln2_b"][None, :] for lp in layers])
        return dict(
            wqkv=wqkv.astype(matmul_dtype), bqkv=bqkv,
            wo=wo.astype(matmul_dtype), bo=bo,
            ln1_g=ln1_g, ln1_b=ln1_b,
            w1=w1.astype(matmul_dtype), b1=b1,
            w2=w2.astype(matmul_dtype), b2=b2,
            ln2_g=ln2_g, ln2_b=ln2_b,
            eln_g=p["emb_ln_g"][None, :], eln_b=p["emb_ln_b"][None, :],
        )

    per = [per_encoder(p) for p in p_list]
    return {k: jnp.stack([pe[k] for pe in per]) for k in per[0]}


# ----------------------------------------------------------------------------
# Plain-JAX glue (embedding gathers, key-mask bias, tiny fc head)
# ----------------------------------------------------------------------------

def _embed(p, input_ids, token_type_ids):
    B, S = input_ids.shape
    word = jnp.take(p["word_emb"], input_ids, axis=0)
    pos = p["pos_emb"][None, :S, :]
    typ = jnp.take(p["type_emb"], token_type_ids, axis=0)
    return (word + pos + typ).reshape(B * S, -1)


def _key_mask_bias(attention_mask):
    # [B, S] key mask -> [B, 1, S] additive bias (0 keep / -1e9 masked).
    m = attention_mask.astype(jnp.float32)
    return ((1.0 - m) * -1e9)[:, None, :]


def my_model_forward(raw_params, packed,
                     input_ids1, attention_mask1, token_type_ids1,
                     input_ids2, attention_mask2, token_type_ids2,
                     features, *, n_heads, n_cat=4, eps=1e-7):
    # layer_norm_eps=1e-7 matches cfg.TRANSFORMER_PARAMS of the reference.
    B, S = input_ids1.shape
    L = packed["wqkv"].shape[1]
    H = packed["wqkv"].shape[2]

    emb = jnp.stack([
        _embed(raw_params["net1"], input_ids1, token_type_ids1),
        _embed(raw_params["net2"], input_ids2, token_type_ids2)])        # [E, B*S, H]
    bias = jnp.stack([
        _key_mask_bias(attention_mask1),
        _key_mask_bias(attention_mask2)])                                # [E, B, 1, S]

    cls_slab = dual_encoder_forward(packed, emb, bias, n_layers=L,
                                    n_heads=n_heads, n_cat=n_cat,
                                    batch=B, seq=S, eps=eps)             # [E, B, 4*H]

    # Final Linear(8*H + 12 -> C): a (B x 268) @ (268 x 1) matvec — plain JAX
    # (second pallas_call removed per review; kernel launch would dominate).
    seq_out = jnp.concatenate([cls_slab[0], cls_slab[1], features], axis=-1)
    return seq_out @ raw_params["fc_w"] + raw_params["fc_b"]
    # TODO(synk): 'max_pool'/'cnn'/'lstm' custom headers not implemented — cfg uses 'concat'.


# ----------------------------------------------------------------------------
# Main
# ----------------------------------------------------------------------------

if __name__ == "__main__":
    B, S = 2, 8                  # batch, sequence length (MAX_LEN scaled down)
    HIDDEN, N_HEADS, N_LAYERS, FFN = 32, 4, 4, 64
    VOCAB, TYPE_VOCAB = 100, 2
    FEAT_DIM = 12
    NUM_CLASSES = 1

    key = jax.random.PRNGKey(0)
    (k_net1, k_net2, k_fc, k_ids1, k_ids2,
     k_tt1, k_tt2, k_feat) = jax.random.split(key, 8)

    raw_params = {
        "net1": init_bert_params(k_net1, vocab=VOCAB, type_vocab=TYPE_VOCAB,
                                 max_pos=S, hidden=HIDDEN, ffn=FFN,
                                 n_layers=N_LAYERS),
        "net2": init_bert_params(k_net2, vocab=VOCAB, type_vocab=TYPE_VOCAB,
                                 max_pos=S, hidden=HIDDEN, ffn=FFN,
                                 n_layers=N_LAYERS),
    }
    # out_shape = hidden*2 ; fc = Linear(out_shape*4 + 12, num_classes)
    fc_in = HIDDEN * 2 * 4 + FEAT_DIM
    raw_params["fc_w"] = 0.02 * jax.random.normal(k_fc, (fc_in, NUM_CLASSES),
                                                  jnp.float32)
    raw_params["fc_b"] = jnp.zeros((NUM_CLASSES,), jnp.float32)

    # One-time packing of the two encoders' weights for the fused kernel.
    packed = pack_encoder_params([raw_params["net1"], raw_params["net2"]])

    input_ids1 = jax.random.randint(k_ids1, (B, S), 0, VOCAB, dtype=jnp.int32)
    input_ids2 = jax.random.randint(k_ids2, (B, S), 0, VOCAB, dtype=jnp.int32)
    attention_mask1 = jnp.ones((B, S), jnp.int32)
    attention_mask2 = jnp.ones((B, S), jnp.int32)
    token_type_ids1 = jax.random.randint(k_tt1, (B, S), 0, TYPE_VOCAB, dtype=jnp.int32)
    token_type_ids2 = jax.random.randint(k_tt2, (B, S), 0, TYPE_VOCAB, dtype=jnp.int32)
    features = jax.random.normal(k_feat, (B, FEAT_DIM), jnp.float32)

    fwd = jax.jit(functools.partial(my_model_forward, n_heads=N_HEADS))
    out = fwd(raw_params, packed,
              input_ids1, attention_mask1, token_type_ids1,
              input_ids2, attention_mask2, token_type_ids2, features)
    out = jax.block_until_ready(out)
    assert out.shape == (B, NUM_CLASSES) and out.dtype == jnp.float32
    print("KERNEL_OK")
</pallas_src>

<mosaic_0001>
module attributes {stable_mosaic.version = 11 : i64} {
  func.func @_encoder_kernel(%arg0: i32, %arg1: memref<1x16x32xf32, #tpu.memory_space<vmem>>, %arg2: memref<1x2x1x8xf32, #tpu.memory_space<vmem>>, %arg3: memref<1x1x32xf32, #tpu.memory_space<vmem>>, %arg4: memref<1x1x32xf32, #tpu.memory_space<vmem>>, %arg5: memref<1x4x32x96xbf16, #tpu.memory_space<vmem>>, %arg6: memref<1x4x1x96xf32, #tpu.memory_space<vmem>>, %arg7: memref<1x4x32x32xbf16, #tpu.memory_space<vmem>>, %arg8: memref<1x4x1x32xf32, #tpu.memory_space<vmem>>, %arg9: memref<1x4x1x32xf32, #tpu.memory_space<vmem>>, %arg10: memref<1x4x1x32xf32, #tpu.memory_space<vmem>>, %arg11: memref<1x4x32x64xbf16, #tpu.memory_space<vmem>>, %arg12: memref<1x4x1x64xf32, #tpu.memory_space<vmem>>, %arg13: memref<1x4x64x32xbf16, #tpu.memory_space<vmem>>, %arg14: memref<1x4x1x32xf32, #tpu.memory_space<vmem>>, %arg15: memref<1x4x1x32xf32, #tpu.memory_space<vmem>>, %arg16: memref<1x4x1x32xf32, #tpu.memory_space<vmem>>, %arg17: memref<1x2x128xf32, #tpu.memory_space<vmem>>) attributes {dimension_semantics = [#tpu.dimension_semantics<parallel>], iteration_bounds = array<i64: 2>, scalar_prefetch = 0 : i64, scratch_operands = 0 : i64, tpu.core_type = #tpu.core_type<tc>, window_params = [{transform_indices = @transform_0, window_bounds = array<i64: 1, 16, 32>}, {transform_indices = @transform_1, window_bounds = array<i64: 1, 2, 1, 8>}, {transform_indices = @transform_2, window_bounds = array<i64: 1, 1, 32>}, {transform_indices = @transform_3, window_bounds = array<i64: 1, 1, 32>}, {transform_indices = @transform_4, window_bounds = array<i64: 1, 4, 32, 96>}, {transform_indices = @transform_5, window_bounds = array<i64: 1, 4, 1, 96>}, {transform_indices = @transform_6, window_bounds = array<i64: 1, 4, 32, 32>}, {transform_indices = @transform_7, window_bounds = array<i64: 1, 4, 1, 32>}, {transform_indices = @transform_8, window_bounds = array<i64: 1, 4, 1, 32>}, {transform_indices = @transform_9, window_bounds = array<i64: 1, 4, 1, 32>}, {transform_indices = @transform_10, window_bounds = array<i64: 1, 4, 32, 64>}, {transform_indices = @transform_11, window_bounds = array<i64: 1, 4, 1, 64>}, {transform_indices = @transform_12, window_bounds = array<i64: 1, 4, 64, 32>}, {transform_indices = @transform_13, window_bounds = array<i64: 1, 4, 1, 32>}, {transform_indices = @transform_14, window_bounds = array<i64: 1, 4, 1, 32>}, {transform_indices = @transform_15, window_bounds = array<i64: 1, 4, 1, 32>}, {transform_indices = @transform_16, window_bounds = array<i64: 1, 2, 128>}]} {
    %c0 = arith.constant 0 : index
    %c0_0 = arith.constant 0 : index
    %c0_1 = arith.constant 0 : index
    %0 = vector.load %arg1[%c0, %c0_0, %c0_1] : memref<1x16x32xf32, #tpu.memory_space<vmem>>, vector<1x16x32xf32>
    %1 = vector.shape_cast %0 : vector<1x16x32xf32> to vector<16x32xf32>
    %c0_2 = arith.constant 0 : index
    %c0_3 = arith.constant 0 : index
    %c0_4 = arith.constant 0 : index
    %2 = vector.load %arg3[%c0_2, %c0_3, %c0_4] : memref<1x1x32xf32, #tpu.memory_space<vmem>>, vector<1x1x32xf32>
    %3 = vector.shape_cast %2 : vector<1x1x32xf32> to vector<1x32xf32>
    %c0_5 = arith.constant 0 : index
    %c0_6 = arith.constant 0 : index
    %c0_7 = arith.constant 0 : index
    %4 = vector.load %arg4[%c0_5, %c0_6, %c0_7] : memref<1x1x32xf32, #tpu.memory_space<vmem>>, vector<1x1x32xf32>
    %5 = vector.shape_cast %4 : vector<1x1x32xf32> to vector<1x32xf32>
    %cst = arith.constant dense<0.000000e+00> : vector<16xf32>
    %6 = vector.multi_reduction <add>, %1, %cst [1] : vector<16x32xf32> to vector<16xf32>
    %7 = vector.shape_cast %6 : vector<16xf32> to vector<16x1xf32>
    %cst_8 = arith.constant 3.200000e+01 : f32
    %8 = vector.broadcast %cst_8 : f32 to vector<16x1xf32>
    %9 = arith.divf %7, %8 : vector<16x1xf32>
    %10 = vector.broadcast %9 : vector<16x1xf32> to vector<16x32xf32>
    %11 = arith.subf %1, %10 : vector<16x32xf32>
    %12 = arith.mulf %11, %11 : vector<16x32xf32>
    %cst_9 = arith.constant dense<0.000000e+00> : vector<16xf32>
    %13 = vector.multi_reduction <add>, %12, %cst_9 [1] : vector<16x32xf32> to vector<16xf32>
    %14 = vector.shape_cast %13 : vector<16xf32> to vector<16x1xf32>
    %cst_10 = arith.constant 3.200000e+01 : f32
    %15 = vector.broadcast %cst_10 : f32 to vector<16x1xf32>
    %16 = arith.divf %14, %15 : vector<16x1xf32>
    %cst_11 = arith.constant 1.000000e-07 : f32
    %17 = vector.broadcast %cst_11 : f32 to vector<16x1xf32>
    %18 = arith.addf %16, %17 : vector<16x1xf32>
    %19 = math.rsqrt %18 : vector<16x1xf32>
    %20 = vector.broadcast %19 : vector<16x1xf32> to vector<16x32xf32>
    %21 = arith.mulf %11, %20 : vector<16x32xf32>
    %22 = vector.broadcast %3 : vector<1x32xf32> to vector<16x32xf32>
    %23 = arith.mulf %21, %22 : vector<16x32xf32>
    %24 = vector.broadcast %5 : vector<1x32xf32> to vector<16x32xf32>
    %25 = arith.addf %23, %24 : vector<16x32xf32>
    %c0_12 = arith.constant 0 : index
    %c0_13 = arith.constant 0 : index
    %c0_14 = arith.constant 0 : index
    %c0_15 = arith.constant 0 : index
    %26 = vector.load %arg2[%c0_12, %c0_13, %c0_14, %c0_15] : memref<1x2x1x8xf32, #tpu.memory_space<vmem>>, vector<1x2x1x8xf32>
    %27 = vector.shape_cast %26 : vector<1x2x1x8xf32> to vector<2x1x8xf32>
    %28 = arith.truncf %25 : vector<16x32xf32> to vector<16x32xbf16>
    %c0_16 = arith.constant 0 : index
    %c0_17 = arith.constant 0 : index
    %c0_18 = arith.constant 0 : index
    %c0_19 = arith.constant 0 : index
    %29 = vector.load %arg5[%c0_16, %c0_17, %c0_18, %c0_19] : memref<1x4x32x96xbf16, #tpu.memory_space<vmem>>, vector<1x1x32x96xbf16>
    %30 = vector.shape_cast %29 : vector<1x1x32x96xbf16> to vector<32x96xbf16>
    %cst_20 = arith.constant dense<0.000000e+00> : vector<16x96xf32>
    %31 = tpu.matmul %28, %30, %cst_20 {dimension_numbers = #tpu.dot_dimension_numbers<[1], [0], [0], [1], [0, 0, 1, 1], [], []>} : vector<16x32xbf16>, vector<32x96xbf16>, vector<16x96xf32> -> vector<16x96xf32>
    %c0_21 = arith.constant 0 : index
    %c0_22 = arith.constant 0 : index
    %c0_23 = arith.constant 0 : index
    %c0_24 = arith.constant 0 : index
    %32 = vector.load %arg6[%c0_21, %c0_22, %c0_23, %c0_24] : memref<1x4x1x96xf32, #tpu.memory_space<vmem>>, vector<1x1x1x96xf32>
    %33 = vector.shape_cast %32 : vector<1x1x1x96xf32> to vector<1x96xf32>
    %34 = vector.broadcast %33 : vector<1x96xf32> to vector<16x96xf32>
    %35 = arith.addf %31, %34 : vector<16x96xf32>
    %36 = vector.extract_strided_slice %35 {offsets = [0, 0], sizes = [16, 8], strides = [1, 1]} : vector<16x96xf32> to vector<16x8xf32>
    %37 = vector.shape_cast %36 : vector<16x8xf32> to vector<2x8x8xf32>
    %38 = vector.extract_strided_slice %35 {offsets = [0, 32], sizes = [16, 8], strides = [1, 1]} : vector<16x96xf32> to vector<16x8xf32>
    %39 = vector.shape_cast %38 : vector<16x8xf32> to vector<2x8x8xf32>
    "tpu.trace_start"() <{level = 10 : i32, message = "bqd,bkd->bqk"}> : () -> ()
    %cst_25 = arith.constant dense<0.000000e+00> : vector<2x8x8xf32>
    %40 = tpu.matmul %37, %39, %cst_25 {dimension_numbers = #tpu.dot_dimension_numbers<[2], [2], [1], [1], [0, 0, 0, 1, 1, 1], [0], [0]>} : vector<2x8x8xf32>, vector<2x8x8xf32>, vector<2x8x8xf32> -> vector<2x8x8xf32>
    "tpu.trace_stop"() : () -> ()
    %cst_26 = arith.constant 0.353553385 : f32
    %41 = vector.broadcast %cst_26 : f32 to vector<2x8x8xf32>
    %42 = arith.mulf %40, %41 : vector<2x8x8xf32>
    %43 = vector.broadcast %27 : vector<2x1x8xf32> to vector<2x8x8xf32>
    %44 = arith.addf %42, %43 : vector<2x8x8xf32>
    %45 = vector.extract_strided_slice %35 {offsets = [0, 8], sizes = [16, 8], strides = [1, 1]} : vector<16x96xf32> to vector<16x8xf32>
    %46 = vector.shape_cast %45 : vector<16x8xf32> to vector<2x8x8xf32>
    %47 = vector.extract_strided_slice %35 {offsets = [0, 40], sizes = [16, 8], strides = [1, 1]} : vector<16x96xf32> to vector<16x8xf32>
    %48 = vector.shape_cast %47 : vector<16x8xf32> to vector<2x8x8xf32>
    "tpu.trace_start"() <{level = 10 : i32, message = "bqd,bkd->bqk"}> : () -> ()
    %cst_27 = arith.constant dense<0.000000e+00> : vector<2x8x8xf32>
    %49 = tpu.matmul %46, %48, %cst_27 {dimension_numbers = #tpu.dot_dimension_numbers<[2], [2], [1], [1], [0, 0, 0, 1, 1, 1], [0], [0]>} : vector<2x8x8xf32>, vector<2x8x8xf32>, vector<2x8x8xf32> -> vector<2x8x8xf32>
    "tpu.trace_stop"() : () -> ()
    %cst_28 = arith.constant 0.353553385 : f32
    %50 = vector.broadcast %cst_28 : f32 to vector<2x8x8xf32>
    %51 = arith.mulf %49, %50 : vector<2x8x8xf32>
    %52 = vector.broadcast %27 : vector<2x1x8xf32> to vector<2x8x8xf32>
    %53 = arith.addf %51, %52 : vector<2x8x8xf32>
    %54 = vector.extract_strided_slice %35 {offsets = [0, 16], sizes = [16, 8], strides = [1, 1]} : vector<16x96xf32> to vector<16x8xf32>
    %55 = vector.shape_cast %54 : vector<16x8xf32> to vector<2x8x8xf32>
    %56 = vector.extract_strided_slice %35 {offsets = [0, 48], sizes = [16, 8], strides = [1, 1]} : vector<16x96xf32> to vector<16x8xf32>
    %57 = vector.shape_cast %56 : vector<16x8xf32> to vector<2x8x8xf32>
    "tpu.trace_start"() <{level = 10 : i32, message = "bqd,bkd->bqk"}> : () -> ()
    %cst_29 = arith.constant dense<0.000000e+00> : vector<2x8x8xf32>
    %58 = tpu.matmul %55, %57, %cst_29 {dimension_numbers = #tpu.dot_dimension_numbers<[2], [2], [1], [1], [0, 0, 0, 1, 1, 1], [0], [0]>} : vector<2x8x8xf32>, vector<2x8x8xf32>, vector<2x8x8xf32> -> vector<2x8x8xf32>
    "tpu.trace_stop"() : () -> ()
    %cst_30 = arith.constant 0.353553385 : f32
    %59 = vector.broadcast %cst_30 : f32 to vector<2x8x8xf32>
    %60 = arith.mulf %58, %59 : vector<2x8x8xf32>
    %61 = vector.broadcast %27 : vector<2x1x8xf32> to vector<2x8x8xf32>
    %62 = arith.addf %60, %61 : vector<2x8x8xf32>
    %63 = vector.extract_strided_slice %35 {offsets = [0, 24], sizes = [16, 8], strides = [1, 1]} : vector<16x96xf32> to vector<16x8xf32>
    %64 = vector.shape_cast %63 : vector<16x8xf32> to vector<2x8x8xf32>
    %65 = vector.extract_strided_slice %35 {offsets = [0, 56], sizes = [16, 8], strides = [1, 1]} : vector<16x96xf32> to vector<16x8xf32>
    %66 = vector.shape_cast %65 : vector<16x8xf32> to vector<2x8x8xf32>
    "tpu.trace_start"() <{level = 10 : i32, message = "bqd,bkd->bqk"}> : () -> ()
    %cst_31 = arith.constant dense<0.000000e+00> : vector<2x8x8xf32>
    %67 = tpu.matmul %64, %66, %cst_31 {dimension_numbers = #tpu.dot_dimension_numbers<[2], [2], [1], [1], [0, 0, 0, 1, 1, 1], [0], [0]>} : vector<2x8x8xf32>, vector<2x8x8xf32>, vector<2x8x8xf32> -> vector<2x8x8xf32>
    "tpu.trace_stop"() : () -> ()
    %cst_32 = arith.constant 0.353553385 : f32
    %68 = vector.broadcast %cst_32 : f32 to vector<2x8x8xf32>
    %69 = arith.mulf %67, %68 : vector<2x8x8xf32>
    %70 = vector.broadcast %27 : vector<2x1x8xf32> to vector<2x8x8xf32>
    %71 = arith.addf %69, %70 : vector<2x8x8xf32>
    %72 = tpu.concatenate %44, %53, %62, %71 in 1 : vector<2x8x8xf32>, vector<2x8x8xf32>, vector<2x8x8xf32>, vector<2x8x8xf32> -> vector<2x32x8xf32>
    %cst_33 = arith.constant dense<0xFF800000> : vector<2x32xf32>
    %73 = vector.multi_reduction <maximumf>, %72, %cst_33 [2] : vector<2x32x8xf32> to vector<2x32xf32>
    %74 = vector.shape_cast %73 : vector<2x32xf32> to vector<2x32x1xf32>
    %75 = vector.broadcast %74 : vector<2x32x1xf32> to vector<2x32x8xf32>
    %76 = arith.subf %72, %75 : vector<2x32x8xf32>
    %77 = math.exp %76 : vector<2x32x8xf32>
    %cst_34 = arith.constant dense<0.000000e+00> : vector<2x32xf32>
    %78 = vector.multi_reduction <add>, %77, %cst_34 [2] : vector<2x32x8xf32> to vector<2x32xf32>
    %79 = vector.shape_cast %78 : vector<2x32xf32> to vector<2x32x1xf32>
    %80 = tpu.reciprocal %79 {approx = true} : vector<2x32x1xf32> -> vector<2x32x1xf32>
    %81 = vector.broadcast %80 : vector<2x32x1xf32> to vector<2x32x8xf32>
    %82 = arith.mulf %77, %81 : vector<2x32x8xf32>
    %83 = vector.extract_strided_slice %35 {offsets = [0, 64], sizes = [16, 8], strides = [1, 1]} : vector<16x96xf32> to vector<16x8xf32>
    %84 = vector.shape_cast %83 : vector<16x8xf32> to vector<2x8x8xf32>
    %85 = vector.extract_strided_slice %82 {offsets = [0, 0, 0], sizes = [2, 8, 8], strides = [1, 1, 1]} : vector<2x32x8xf32> to vector<2x8x8xf32>
    "tpu.trace_start"() <{level = 10 : i32, message = "bqk,bkd->bqd"}> : () -> ()
    %cst_35 = arith.constant dense<0.000000e+00> : vector<2x8x8xf32>
    %86 = tpu.matmul %85, %84, %cst_35 {dimension_numbers = #tpu.dot_dimension_numbers<[2], [1], [1], [2], [0, 0, 0, 1, 1, 2], [0], [0]>} : vector<2x8x8xf32>, vector<2x8x8xf32>, vector<2x8x8xf32> -> vector<2x8x8xf32>
    "tpu.trace_stop"() : () -> ()
    %87 = vector.shape_cast %86 : vector<2x8x8xf32> to vector<16x8xf32>
    %88 = vector.extract_strided_slice %35 {offsets = [0, 72], sizes = [16, 8], strides = [1, 1]} : vector<16x96xf32> to vector<16x8xf32>
    %89 = vector.shape_cast %88 : vector<16x8xf32> to vector<2x8x8xf32>
    %90 = vector.extract_strided_slice %82 {offsets = [0, 8, 0], sizes = [2, 8, 8], strides = [1, 1, 1]} : vector<2x32x8xf32> to vector<2x8x8xf32>
    "tpu.trace_start"() <{level = 10 : i32, message = "bqk,bkd->bqd"}> : () -> ()
    %cst_36 = arith.constant dense<0.000000e+00> : vector<2x8x8xf32>
    %91 = tpu.matmul %90, %89, %cst_36 {dimension_numbers = #tpu.dot_dimension_numbers<[2], [1], [1], [2], [0, 0, 0, 1, 1, 2], [0], [0]>} : vector<2x8x8xf32>, vector<2x8x8xf32>, vector<2x8x8xf32> -> vector<2x8x8xf32>
    "tpu.trace_stop"() : () -> ()
    %92 = vector.shape_cast %91 : vector<2x8x8xf32> to vector<16x8xf32>
    %93 = vector.extract_strided_slice %35 {offsets = [0, 80], sizes = [16, 8], strides = [1, 1]} : vector<16x96xf32> to vector<16x8xf32>
    %94 = vector.shape_cast %93 : vector<16x8xf32> to vector<2x8x8xf32>
    %95 = vector.extract_strided_slice %82 {offsets = [0, 16, 0], sizes = [2, 8, 8], strides = [1, 1, 1]} : vector<2x32x8xf32> to vector<2x8x8xf32>
    "tpu.trace_start"() <{level = 10 : i32, message = "bqk,bkd->bqd"}> : () -> ()
    %cst_37 = arith.constant dense<0.000000e+00> : vector<2x8x8xf32>
    %96 = tpu.matmul %95, %94, %cst_37 {dimension_numbers = #tpu.dot_dimension_numbers<[2], [1], [1], [2], [0, 0, 0, 1, 1, 2], [0], [0]>} : vector<2x8x8xf32>, vector<2x8x8xf32>, vector<2x8x8xf32> -> vector<2x8x8xf32>
    "tpu.trace_stop"() : () -> ()
    %97 = vector.shape_cast %96 : vector<2x8x8xf32> to vector<16x8xf32>
    %98 = vector.extract_strided_slice %35 {offsets = [0, 88], sizes = [16, 8], strides = [1, 1]} : vector<16x96xf32> to vector<16x8xf32>
    %99 = vector.shape_cast %98 : vector<16x8xf32> to vector<2x8x8xf32>
    %100 = vector.extract_strided_slice %82 {offsets = [0, 24, 0], sizes = [2, 8, 8], strides = [1, 1, 1]} : vector<2x32x8xf32> to vector<2x8x8xf32>
    "tpu.trace_start"() <{level = 10 : i32, message = "bqk,bkd->bqd"}> : () -> ()
    %cst_38 = arith.constant dense<0.000000e+00> : vector<2x8x8xf32>
    %101 = tpu.matmul %100, %99, %cst_38 {dimension_numbers = #tpu.dot_dimension_numbers<[2], [1], [1], [2], [0, 0, 0, 1, 1, 2], [0], [0]>} : vector<2x8x8xf32>, vector<2x8x8xf32>, vector<2x8x8xf32> -> vector<2x8x8xf32>
    "tpu.trace_stop"() : () -> ()
    %102 = vector.shape_cast %101 : vector<2x8x8xf32> to vector<16x8xf32>
    %103 = tpu.concatenate %87, %92, %97, %102 in 1 : vector<16x8xf32>, vector<16x8xf32>, vector<16x8xf32>, vector<16x8xf32> -> vector<16x32xf32>
    %104 = arith.truncf %103 : vector<16x32xf32> to vector<16x32xbf16>
    %c0_39 = arith.constant 0 : index
    %c0_40 = arith.constant 0 : index
    %c0_41 = arith.constant 0 : index
    %c0_42 = arith.constant 0 : index
    %105 = vector.load %arg7[%c0_39, %c0_40, %c0_41, %c0_42] : memref<1x4x32x32xbf16, #tpu.memory_space<vmem>>, vector<1x1x32x32xbf16>
    %106 = vector.shape_cast %105 : vector<1x1x32x32xbf16> to vector<32x32xbf16>
    %cst_43 = arith.constant dense<0.000000e+00> : vector<16x32xf32>
    %107 = tpu.matmul %104, %106, %cst_43 {dimension_numbers = #tpu.dot_dimension_numbers<[1], [0], [0], [1], [0, 0, 1, 1], [], []>} : vector<16x32xbf16>, vector<32x32xbf16>, vector<16x32xf32> -> vector<16x32xf32>
    %c0_44 = arith.constant 0 : index
    %c0_45 = arith.constant 0 : index
    %c0_46 = arith.constant 0 : index
    %c0_47 = arith.constant 0 : index
    %108 = vector.load %arg8[%c0_44, %c0_45, %c0_46, %c0_47] : memref<1x4x1x32xf32, #tpu.memory_space<vmem>>, vector<1x1x1x32xf32>
    %109 = vector.shape_cast %108 : vector<1x1x1x32xf32> to vector<1x32xf32>
    %110 = vector.broadcast %109 : vector<1x32xf32> to vector<16x32xf32>
    %111 = arith.addf %107, %110 : vector<16x32xf32>
    %112 = arith.addf %25, %111 : vector<16x32xf32>
    %c0_48 = arith.constant 0 : index
    %c0_49 = arith.constant 0 : index
    %c0_50 = arith.constant 0 : index
    %c0_51 = arith.constant 0 : index
    %113 = vector.load %arg9[%c0_48, %c0_49, %c0_50, %c0_51] : memref<1x4x1x32xf32, #tpu.memory_space<vmem>>, vector<1x1x1x32xf32>
    %114 = vector.shape_cast %113 : vector<1x1x1x32xf32> to vector<1x32xf32>
    %c0_52 = arith.constant 0 : index
    %c0_53 = arith.constant 0 : index
    %c0_54 = arith.constant 0 : index
    %c0_55 = arith.constant 0 : index
    %115 = vector.load %arg10[%c0_52, %c0_53, %c0_54, %c0_55] : memref<1x4x1x32xf32, #tpu.memory_space<vmem>>, vector<1x1x1x32xf32>
    %116 = vector.shape_cast %115 : vector<1x1x1x32xf32> to vector<1x32xf32>
    %cst_56 = arith.constant dense<0.000000e+00> : vector<16xf32>
    %117 = vector.multi_reduction <add>, %112, %cst_56 [1] : vector<16x32xf32> to vector<16xf32>
    %118 = vector.shape_cast %117 : vector<16xf32> to vector<16x1xf32>
    %cst_57 = arith.constant 3.200000e+01 : f32
    %119 = vector.broadcast %cst_57 : f32 to vector<16x1xf32>
    %120 = arith.divf %118, %119 : vector<16x1xf32>
    %121 = vector.broadcast %120 : vector<16x1xf32> to vector<16x32xf32>
    %122 = arith.subf %112, %121 : vector<16x32xf32>
    %123 = arith.mulf %122, %122 : vector<16x32xf32>
    %cst_58 = arith.constant dense<0.000000e+00> : vector<16xf32>
    %124 = vector.multi_reduction <add>, %123, %cst_58 [1] : vector<16x32xf32> to vector<16xf32>
    %125 = vector.shape_cast %124 : vector<16xf32> to vector<16x1xf32>
    %cst_59 = arith.constant 3.200000e+01 : f32
    %126 = vector.broadcast %cst_59 : f32 to vector<16x1xf32>
    %127 = arith.divf %125, %126 : vector<16x1xf32>
    %cst_60 = arith.constant 1.000000e-07 : f32
    %128 = vector.broadcast %cst_60 : f32 to vector<16x1xf32>
    %129 = arith.addf %127, %128 : vector<16x1xf32>
    %130 = math.rsqrt %129 : vector<16x1xf32>
    %131 = vector.broadcast %130 : vector<16x1xf32> to vector<16x32xf32>
    %132 = arith.mulf %122, %131 : vector<16x32xf32>
    %133 = vector.broadcast %114 : vector<1x32xf32> to vector<16x32xf32>
    %134 = arith.mulf %132, %133 : vector<16x32xf32>
    %135 = vector.broadcast %116 : vector<1x32xf32> to vector<16x32xf32>
    %136 = arith.addf %134, %135 : vector<16x32xf32>
    %137 = arith.truncf %136 : vector<16x32xf32> to vector<16x32xbf16>
    %c0_61 = arith.constant 0 : index
    %c0_62 = arith.constant 0 : index
    %c0_63 = arith.constant 0 : index
    %c0_64 = arith.constant 0 : index
    %138 = vector.load %arg11[%c0_61, %c0_62, %c0_63, %c0_64] : memref<1x4x32x64xbf16, #tpu.memory_space<vmem>>, vector<1x1x32x64xbf16>
    %139 = vector.shape_cast %138 : vector<1x1x32x64xbf16> to vector<32x64xbf16>
    %cst_65 = arith.constant dense<0.000000e+00> : vector<16x64xf32>
    %140 = tpu.matmul %137, %139, %cst_65 {dimension_numbers = #tpu.dot_dimension_numbers<[1], [0], [0], [1], [0, 0, 1, 1], [], []>} : vector<16x32xbf16>, vector<32x64xbf16>, vector<16x64xf32> -> vector<16x64xf32>
    %c0_66 = arith.constant 0 : index
    %c0_67 = arith.constant 0 : index
    %c0_68 = arith.constant 0 : index
    %c0_69 = arith.constant 0 : index
    %141 = vector.load %arg12[%c0_66, %c0_67, %c0_68, %c0_69] : memref<1x4x1x64xf32, #tpu.memory_space<vmem>>, vector<1x1x1x64xf32>
    %142 = vector.shape_cast %141 : vector<1x1x1x64xf32> to vector<1x64xf32>
    %143 = vector.broadcast %142 : vector<1x64xf32> to vector<16x64xf32>
    %144 = arith.addf %140, %143 : vector<16x64xf32>
    %cst_70 = arith.constant 5.000000e-01 : f32
    %145 = vector.broadcast %cst_70 : f32 to vector<16x64xf32>
    %146 = arith.mulf %145, %144 : vector<16x64xf32>
    %cst_71 = arith.constant 4.471500e-02 : f32
    %147 = vector.broadcast %cst_71 : f32 to vector<16x64xf32>
    %148 = arith.mulf %147, %144 : vector<16x64xf32>
    %149 = arith.mulf %148, %144 : vector<16x64xf32>
    %150 = arith.mulf %149, %144 : vector<16x64xf32>
    %151 = arith.addf %144, %150 : vector<16x64xf32>
    %cst_72 = arith.constant 0.797884583 : f32
    %152 = vector.broadcast %cst_72 : f32 to vector<16x64xf32>
    %153 = arith.mulf %152, %151 : vector<16x64xf32>
    %154 = math.tanh %153 : vector<16x64xf32>
    %cst_73 = arith.constant 1.000000e+00 : f32
    %155 = vector.broadcast %cst_73 : f32 to vector<16x64xf32>
    %156 = arith.addf %155, %154 : vector<16x64xf32>
    %157 = arith.mulf %146, %156 : vector<16x64xf32>
    %158 = arith.truncf %157 : vector<16x64xf32> to vector<16x64xbf16>
    %c0_74 = arith.constant 0 : index
    %c0_75 = arith.constant 0 : index
    %c0_76 = arith.constant 0 : index
    %c0_77 = arith.constant 0 : index
    %159 = vector.load %arg13[%c0_74, %c0_75, %c0_76, %c0_77] : memref<1x4x64x32xbf16, #tpu.memory_space<vmem>>, vector<1x1x64x32xbf16>
    %160 = vector.shape_cast %159 : vector<1x1x64x32xbf16> to vector<64x32xbf16>
    %cst_78 = arith.constant dense<0.000000e+00> : vector<16x32xf32>
    %161 = tpu.matmul %158, %160, %cst_78 {dimension_numbers = #tpu.dot_dimension_numbers<[1], [0], [0], [1], [0, 0, 1, 1], [], []>} : vector<16x64xbf16>, vector<64x32xbf16>, vector<16x32xf32> -> vector<16x32xf32>
    %c0_79 = arith.constant 0 : index
    %c0_80 = arith.constant 0 : index
    %c0_81 = arith.constant 0 : index
    %c0_82 = arith.constant 0 : index
    %162 = vector.load %arg14[%c0_79, %c0_80, %c0_81, %c0_82] : memref<1x4x1x32xf32, #tpu.memory_space<vmem>>, vector<1x1x1x32xf32>
    %163 = vector.shape_cast %162 : vector<1x1x1x32xf32> to vector<1x32xf32>
    %164 = vector.broadcast %163 : vector<1x32xf32> to vector<16x32xf32>
    %165 = arith.addf %161, %164 : vector<16x32xf32>
    %166 = arith.addf %136, %165 : vector<16x32xf32>
    %c0_83 = arith.constant 0 : index
    %c0_84 = arith.constant 0 : index
    %c0_85 = arith.constant 0 : index
    %c0_86 = arith.constant 0 : index
    %167 = vector.load %arg15[%c0_83, %c0_84, %c0_85, %c0_86] : memref<1x4x1x32xf32, #tpu.memory_space<vmem>>, vector<1x1x1x32xf32>
    %168 = vector.shape_cast %167 : vector<1x1x1x32xf32> to vector<1x32xf32>
    %c0_87 = arith.constant 0 : index
    %c0_88 = arith.constant 0 : index
    %c0_89 = arith.constant 0 : index
    %c0_90 = arith.constant 0 : index
    %169 = vector.load %arg16[%c0_87, %c0_88, %c0_89, %c0_90] : memref<1x4x1x32xf32, #tpu.memory_space<vmem>>, vector<1x1x1x32xf32>
    %170 = vector.shape_cast %169 : vector<1x1x1x32xf32> to vector<1x32xf32>
    %cst_91 = arith.constant dense<0.000000e+00> : vector<16xf32>
    %171 = vector.multi_reduction <add>, %166, %cst_91 [1] : vector<16x32xf32> to vector<16xf32>
    %172 = vector.shape_cast %171 : vector<16xf32> to vector<16x1xf32>
    %cst_92 = arith.constant 3.200000e+01 : f32
    %173 = vector.broadcast %cst_92 : f32 to vector<16x1xf32>
    %174 = arith.divf %172, %173 : vector<16x1xf32>
    %175 = vector.broadcast %174 : vector<16x1xf32> to vector<16x32xf32>
    %176 = arith.subf %166, %175 : vector<16x32xf32>
    %177 = arith.mulf %176, %176 : vector<16x32xf32>
    %cst_93 = arith.constant dense<0.000000e+00> : vector<16xf32>
    %178 = vector.multi_reduction <add>, %177, %cst_93 [1] : vector<16x32xf32> to vector<16xf32>
    %179 = vector.shape_cast %178 : vector<16xf32> to vector<16x1xf32>
    %cst_94 = arith.constant 3.200000e+01 : f32
    %180 = vector.broadcast %cst_94 : f32 to vector<16x1xf32>
    %181 = arith.divf %179, %180 : vector<16x1xf32>
    %cst_95 = arith.constant 1.000000e-07 : f32
    %182 = vector.broadcast %cst_95 : f32 to vector<16x1xf32>
    %183 = arith.addf %181, %182 : vector<16x1xf32>
    %184 = math.rsqrt %183 : vector<16x1xf32>
    %185 = vector.broadcast %184 : vector<16x1xf32> to vector<16x32xf32>
    %186 = arith.mulf %176, %185 : vector<16x32xf32>
    %187 = vector.broadcast %168 : vector<1x32xf32> to vector<16x32xf32>
    %188 = arith.mulf %186, %187 : vector<16x32xf32>
    %189 = vector.broadcast %170 : vector<1x32xf32> to vector<16x32xf32>
    %190 = arith.addf %188, %189 : vector<16x32xf32>
    %191 = vector.shape_cast %190 : vector<16x32xf32> to vector<2x8x32xf32>
    %192 = vector.extract_strided_slice %191 {offsets = [0, 0, 0], sizes = [2, 1, 32], strides = [1, 1, 1]} : vector<2x8x32xf32> to vector<2x1x32xf32>
    %193 = vector.shape_cast %192 : vector<2x1x32xf32> to vector<2x32xf32>
    %194 = arith.truncf %190 : vector<16x32xf32> to vector<16x32xbf16>
    %c0_96 = arith.constant 0 : index
    %c1 = arith.constant 1 : index
    %c0_97 = arith.constant 0 : index
    %c0_98 = arith.constant 0 : index
    %195 = vector.load %arg5[%c0_96, %c1, %c0_97, %c0_98] : memref<1x4x32x96xbf16, #tpu.memory_space<vmem>>, vector<1x1x32x96xbf16>
    %196 = vector.shape_cast %195 : vector<1x1x32x96xbf16> to vector<32x96xbf16>
    %cst_99 = arith.constant dense<0.000000e+00> : vector<16x96xf32>
    %197 = tpu.matmul %194, %196, %cst_99 {dimension_numbers = #tpu.dot_dimension_numbers<[1], [0], [0], [1], [0, 0, 1, 1], [], []>} : vector<16x32xbf16>, vector<32x96xbf16>, vector<16x96xf32> -> vector<16x96xf32>
    %c0_100 = arith.constant 0 : index
    %c1_101 = arith.constant 1 : index
    %c0_102 = arith.constant 0 : index
    %c0_103 = arith.constant 0 : index
    %198 = vector.load %arg6[%c0_100, %c1_101, %c0_102, %c0_103] : memref<1x4x1x96xf32, #tpu.memory_space<vmem>>, vector<1x1x1x96xf32>
    %199 = vector.shape_cast %198 : vector<1x1x1x96xf32> to vector<1x96xf32>
    %200 = vector.broadcast %199 : vector<1x96xf32> to vector<16x96xf32>
    %201 = arith.addf %197, %200 : vector<16x96xf32>
    %202 = vector.extract_strided_slice %201 {offsets = [0, 0], sizes = [16, 8], strides = [1, 1]} : vector<16x96xf32> to vector<16x8xf32>
    %203 = vector.shape_cast %202 : vector<16x8xf32> to vector<2x8x8xf32>
    %204 = vector.extract_strided_slice %201 {offsets = [0, 32], sizes = [16, 8], strides = [1, 1]} : vector<16x96xf32> to vector<16x8xf32>
    %205 = vector.shape_cast %204 : vector<16x8xf32> to vector<2x8x8xf32>
    "tpu.trace_start"() <{level = 10 : i32, message = "bqd,bkd->bqk"}> : () -> ()
    %cst_104 = arith.constant dense<0.000000e+00> : vector<2x8x8xf32>
    %206 = tpu.matmul %203, %205, %cst_104 {dimension_numbers = #tpu.dot_dimension_numbers<[2], [2], [1], [1], [0, 0, 0, 1, 1, 1], [0], [0]>} : vector<2x8x8xf32>, vector<2x8x8xf32>, vector<2x8x8xf32> -> vector<2x8x8xf32>
    "tpu.trace_stop"() : () -> ()
    %cst_105 = arith.constant 0.353553385 : f32
    %207 = vector.broadcast %cst_105 : f32 to vector<2x8x8xf32>
    %208 = arith.mulf %206, %207 : vector<2x8x8xf32>
    %209 = vector.broadcast %27 : vector<2x1x8xf32> to vector<2x8x8xf32>
    %210 = arith.addf %208, %209 : vector<2x8x8xf32>
    %211 = vector.extract_strided_slice %201 {offsets = [0, 8], sizes = [16, 8], strides = [1, 1]} : vector<16x96xf32> to vector<16x8xf32>
    %212 = vector.shape_cast %211 : vector<16x8xf32> to vector<2x8x8xf32>
    %213 = vector.extract_strided_slice %201 {offsets = [0, 40], sizes = [16, 8], strides = [1, 1]} : vector<16x96xf32> to vector<16x8xf32>
    %214 = vector.shape_cast %213 : vector<16x8xf32> to vector<2x8x8xf32>
    "tpu.trace_start"() <{level = 10 : i32, message = "bqd,bkd->bqk"}> : () -> ()
    %cst_106 = arith.constant dense<0.000000e+00> : vector<2x8x8xf32>
    %215 = tpu.matmul %212, %214, %cst_106 {dimension_numbers = #tpu.dot_dimension_numbers<[2], [2], [1], [1], [0, 0, 0, 1, 1, 1], [0], [0]>} : vector<2x8x8xf32>, vector<2x8x8xf32>, vector<2x8x8xf32> -> vector<2x8x8xf32>
    "tpu.trace_stop"() : () -> ()
    %cst_107 = arith.constant 0.353553385 : f32
    %216 = vector.broadcast %cst_107 : f32 to vector<2x8x8xf32>
    %217 = arith.mulf %215, %216 : vector<2x8x8xf32>
    %218 = vector.broadcast %27 : vector<2x1x8xf32> to vector<2x8x8xf32>
    %219 = arith.addf %217, %218 : vector<2x8x8xf32>
    %220 = vector.extract_strided_slice %201 {offsets = [0, 16], sizes = [16, 8], strides = [1, 1]} : vector<16x96xf32> to vector<16x8xf32>
    %221 = vector.shape_cast %220 : vector<16x8xf32> to vector<2x8x8xf32>
    %222 = vector.extract_strided_slice %201 {offsets = [0, 48], sizes = [16, 8], strides = [1, 1]} : vector<16x96xf32> to vector<16x8xf32>
    %223 = vector.shape_cast %222 : vector<16x8xf32> to vector<2x8x8xf32>
    "tpu.trace_start"() <{level = 10 : i32, message = "bqd,bkd->bqk"}> : () -> ()
    %cst_108 = arith.constant dense<0.000000e+00> : vector<2x8x8xf32>
    %224 = tpu.matmul %221, %223, %cst_108 {dimension_numbers = #tpu.dot_dimension_numbers<[2], [2], [1], [1], [0, 0, 0, 1, 1, 1], [0], [0]>} : vector<2x8x8xf32>, vector<2x8x8xf32>, vector<2x8x8xf32> -> vector<2x8x8xf32>
    "tpu.trace_stop"() : () -> ()
    %cst_109 = arith.constant 0.353553385 : f32
    %225 = vector.broadcast %cst_109 : f32 to vector<2x8x8xf32>
    %226 = arith.mulf %224, %225 : vector<2x8x8xf32>
    %227 = vector.broadcast %27 : vector<2x1x8xf32> to vector<2x8x8xf32>
    %228 = arith.addf %226, %227 : vector<2x8x8xf32>
    %229 = vector.extract_strided_slice %201 {offsets = [0, 24], sizes = [16, 8], strides = [1, 1]} : vector<16x96xf32> to vector<16x8xf32>
    %230 = vector.shape_cast %229 : vector<16x8xf32> to vector<2x8x8xf32>
    %231 = vector.extract_strided_slice %201 {offsets = [0, 56], sizes = [16, 8], strides = [1, 1]} : vector<16x96xf32> to vector<16x8xf32>
    %232 = vector.shape_cast %231 : vector<16x8xf32> to vector<2x8x8xf32>
    "tpu.trace_start"() <{level = 10 : i32, message = "bqd,bkd->bqk"}> : () -> ()
    %cst_110 = arith.constant dense<0.000000e+00> : vector<2x8x8xf32>
    %233 = tpu.matmul %230, %232, %cst_110 {dimension_numbers = #tpu.dot_dimension_numbers<[2], [2], [1], [1], [0, 0, 0, 1, 1, 1], [0], [0]>} : vector<2x8x8xf32>, vector<2x8x8xf32>, vector<2x8x8xf32> -> vector<2x8x8xf32>
    "tpu.trace_stop"() : () -> ()
    %cst_111 = arith.constant 0.353553385 : f32
    %234 = vector.broadcast %cst_111 : f32 to vector<2x8x8xf32>
    %235 = arith.mulf %233, %234 : vector<2x8x8xf32>
    %236 = vector.broadcast %27 : vector<2x1x8xf32> to vector<2x8x8xf32>
    %237 = arith.addf %235, %236 : vector<2x8x8xf32>
    %238 = tpu.concatenate %210, %219, %228, %237 in 1 : vector<2x8x8xf32>, vector<2x8x8xf32>, vector<2x8x8xf32>, vector<2x8x8xf32> -> vector<2x32x8xf32>
    %cst_112 = arith.constant dense<0xFF800000> : vector<2x32xf32>
    %239 = vector.multi_reduction <maximumf>, %238, %cst_112 [2] : vector<2x32x8xf32> to vector<2x32xf32>
    %240 = vector.shape_cast %239 : vector<2x32xf32> to vector<2x32x1xf32>
    %241 = vector.broadcast %240 : vector<2x32x1xf32> to vector<2x32x8xf32>
    %242 = arith.subf %238, %241 : vector<2x32x8xf32>
    %243 = math.exp %242 : vector<2x32x8xf32>
    %cst_113 = arith.constant dense<0.000000e+00> : vector<2x32xf32>
    %244 = vector.multi_reduction <add>, %243, %cst_113 [2] : vector<2x32x8xf32> to vector<2x32xf32>
    %245 = vector.shape_cast %244 : vector<2x32xf32> to vector<2x32x1xf32>
    %246 = tpu.reciprocal %245 {approx = true} : vector<2x32x1xf32> -> vector<2x32x1xf32>
    %247 = vector.broadcast %246 : vector<2x32x1xf32> to vector<2x32x8xf32>
    %248 = arith.mulf %243, %247 : vector<2x32x8xf32>
    %249 = vector.extract_strided_slice %201 {offsets = [0, 64], sizes = [16, 8], strides = [1, 1]} : vector<16x96xf32> to vector<16x8xf32>
    %250 = vector.shape_cast %249 : vector<16x8xf32> to vector<2x8x8xf32>
    %251 = vector.extract_strided_slice %248 {offsets = [0, 0, 0], sizes = [2, 8, 8], strides = [1, 1, 1]} : vector<2x32x8xf32> to vector<2x8x8xf32>
    "tpu.trace_start"() <{level = 10 : i32, message = "bqk,bkd->bqd"}> : () -> ()
    %cst_114 = arith.constant dense<0.000000e+00> : vector<2x8x8xf32>
    %252 = tpu.matmul %251, %250, %cst_114 {dimension_numbers = #tpu.dot_dimension_numbers<[2], [1], [1], [2], [0, 0, 0, 1, 1, 2], [0], [0]>} : vector<2x8x8xf32>, vector<2x8x8xf32>, vector<2x8x8xf32> -> vector<2x8x8xf32>
    "tpu.trace_stop"() : () -> ()
    %253 = vector.shape_cast %252 : vector<2x8x8xf32> to vector<16x8xf32>
    %254 = vector.extract_strided_slice %201 {offsets = [0, 72], sizes = [16, 8], strides = [1, 1]} : vector<16x96xf32> to vector<16x8xf32>
    %255 = vector.shape_cast %254 : vector<16x8xf32> to vector<2x8x8xf32>
    %256 = vector.extract_strided_slice %248 {offsets = [0, 8, 0], sizes = [2, 8, 8], strides = [1, 1, 1]} : vector<2x32x8xf32> to vector<2x8x8xf32>
    "tpu.trace_start"() <{level = 10 : i32, message = "bqk,bkd->bqd"}> : () -> ()
    %cst_115 = arith.constant dense<0.000000e+00> : vector<2x8x8xf32>
    %257 = tpu.matmul %256, %255, %cst_115 {dimension_numbers = #tpu.dot_dimension_numbers<[2], [1], [1], [2], [0, 0, 0, 1, 1, 2], [0], [0]>} : vector<2x8x8xf32>, vector<2x8x8xf32>, vector<2x8x8xf32> -> vector<2x8x8xf32>
    "tpu.trace_stop"() : () -> ()
    %258 = vector.shape_cast %257 : vector<2x8x8xf32> to vector<16x8xf32>
    %259 = vector.extract_strided_slice %201 {offsets = [0, 80], sizes = [16, 8], strides = [1, 1]} : vector<16x96xf32> to vector<16x8xf32>
    %260 = vector.shape_cast %259 : vector<16x8xf32> to vector<2x8x8xf32>
    %261 = vector.extract_strided_slice %248 {offsets = [0, 16, 0], sizes = [2, 8, 8], strides = [1, 1, 1]} : vector<2x32x8xf32> to vector<2x8x8xf32>
    "tpu.trace_start"() <{level = 10 : i32, message = "bqk,bkd->bqd"}> : () -> ()
    %cst_116 = arith.constant dense<0.000000e+00> : vector<2x8x8xf32>
    %262 = tpu.matmul %261, %260, %cst_116 {dimension_numbers = #tpu.dot_dimension_numbers<[2], [1], [1], [2], [0, 0, 0, 1, 1, 2], [0], [0]>} : vector<2x8x8xf32>, vector<2x8x8xf32>, vector<2x8x8xf32> -> vector<2x8x8xf32>
    "tpu.trace_stop"() : () -> ()
    %263 = vector.shape_cast %262 : vector<2x8x8xf32> to vector<16x8xf32>
    %264 = vector.extract_strided_slice %201 {offsets = [0, 88], sizes = [16, 8], strides = [1, 1]} : vector<16x96xf32> to vector<16x8xf32>
    %265 = vector.shape_cast %264 : vector<16x8xf32> to vector<2x8x8xf32>
    %266 = vector.extract_strided_slice %248 {offsets = [0, 24, 0], sizes = [2, 8, 8], strides = [1, 1, 1]} : vector<2x32x8xf32> to vector<2x8x8xf32>
    "tpu.trace_start"() <{level = 10 : i32, message = "bqk,bkd->bqd"}> : () -> ()
    %cst_117 = arith.constant dense<0.000000e+00> : vector<2x8x8xf32>
    %267 = tpu.matmul %266, %265, %cst_117 {dimension_numbers = #tpu.dot_dimension_numbers<[2], [1], [1], [2], [0, 0, 0, 1, 1, 2], [0], [0]>} : vector<2x8x8xf32>, vector<2x8x8xf32>, vector<2x8x8xf32> -> vector<2x8x8xf32>
    "tpu.trace_stop"() : () -> ()
    %268 = vector.shape_cast %267 : vector<2x8x8xf32> to vector<16x8xf32>
    %269 = tpu.concatenate %253, %258, %263, %268 in 1 : vector<16x8xf32>, vector<16x8xf32>, vector<16x8xf32>, vector<16x8xf32> -> vector<16x32xf32>
    %270 = arith.truncf %269 : vector<16x32xf32> to vector<16x32xbf16>
    %c0_118 = arith.constant 0 : index
    %c1_119 = arith.constant 1 : index
    %c0_120 = arith.constant 0 : index
    %c0_121 = arith.constant 0 : index
    %271 = vector.load %arg7[%c0_118, %c1_119, %c0_120, %c0_121] : memref<1x4x32x32xbf16, #tpu.memory_space<vmem>>, vector<1x1x32x32xbf16>
    %272 = vector.shape_cast %271 : vector<1x1x32x32xbf16> to vector<32x32xbf16>
    %cst_122 = arith.constant dense<0.000000e+00> : vector<16x32xf32>
    %273 = tpu.matmul %270, %272, %cst_122 {dimension_numbers = #tpu.dot_dimension_numbers<[1], [0], [0], [1], [0, 0, 1, 1], [], []>} : vector<16x32xbf16>, vector<32x32xbf16>, vector<16x32xf32> -> vector<16x32xf32>
    %c0_123 = arith.constant 0 : index
    %c1_124 = arith.constant 1 : index
    %c0_125 = arith.constant 0 : index
    %c0_126 = arith.constant 0 : index
    %274 = vector.load %arg8[%c0_123, %c1_124, %c0_125, %c0_126] : memref<1x4x1x32xf32, #tpu.memory_space<vmem>>, vector<1x1x1x32xf32>
    %275 = vector.shape_cast %274 : vector<1x1x1x32xf32> to vector<1x32xf32>
    %276 = vector.broadcast %275 : vector<1x32xf32> to vector<16x32xf32>
    %277 = arith.addf %273, %276 : vector<16x32xf32>
    %278 = arith.addf %190, %277 : vector<16x32xf32>
    %c0_127 = arith.constant 0 : index
    %c1_128 = arith.constant 1 : index
    %c0_129 = arith.constant 0 : index
    %c0_130 = arith.constant 0 : index
    %279 = vector.load %arg9[%c0_127, %c1_128, %c0_129, %c0_130] : memref<1x4x1x32xf32, #tpu.memory_space<vmem>>, vector<1x1x1x32xf32>
    %280 = vector.shape_cast %279 : vector<1x1x1x32xf32> to vector<1x32xf32>
    %c0_131 = arith.constant 0 : index
    %c1_132 = arith.constant 1 : index
    %c0_133 = arith.constant 0 : index
    %c0_134 = arith.constant 0 : index
    %281 = vector.load %arg10[%c0_131, %c1_132, %c0_133, %c0_134] : memref<1x4x1x32xf32, #tpu.memory_space<vmem>>, vector<1x1x1x32xf32>
    %282 = vector.shape_cast %281 : vector<1x1x1x32xf32> to vector<1x32xf32>
    %cst_135 = arith.constant dense<0.000000e+00> : vector<16xf32>
    %283 = vector.multi_reduction <add>, %278, %cst_135 [1] : vector<16x32xf32> to vector<16xf32>
    %284 = vector.shape_cast %283 : vector<16xf32> to vector<16x1xf32>
    %cst_136 = arith.constant 3.200000e+01 : f32
    %285 = vector.broadcast %cst_136 : f32 to vector<16x1xf32>
    %286 = arith.divf %284, %285 : vector<16x1xf32>
    %287 = vector.broadcast %286 : vector<16x1xf32> to vector<16x32xf32>
    %288 = arith.subf %278, %287 : vector<16x32xf32>
    %289 = arith.mulf %288, %288 : vector<16x32xf32>
    %cst_137 = arith.constant dense<0.000000e+00> : vector<16xf32>
    %290 = vector.multi_reduction <add>, %289, %cst_137 [1] : vector<16x32xf32> to vector<16xf32>
    %291 = vector.shape_cast %290 : vector<16xf32> to vector<16x1xf32>
    %cst_138 = arith.constant 3.200000e+01 : f32
    %292 = vector.broadcast %cst_138 : f32 to vector<16x1xf32>
    %293 = arith.divf %291, %292 : vector<16x1xf32>
    %cst_139 = arith.constant 1.000000e-07 : f32
    %294 = vector.broadcast %cst_139 : f32 to vector<16x1xf32>
    %295 = arith.addf %293, %294 : vector<16x1xf32>
    %296 = math.rsqrt %295 : vector<16x1xf32>
    %297 = vector.broadcast %296 : vector<16x1xf32> to vector<16x32xf32>
    %298 = arith.mulf %288, %297 : vector<16x32xf32>
    %299 = vector.broadcast %280 : vector<1x32xf32> to vector<16x32xf32>
    %300 = arith.mulf %298, %299 : vector<16x32xf32>
    %301 = vector.broadcast %282 : vector<1x32xf32> to vector<16x32xf32>
    %302 = arith.addf %300, %301 : vector<16x32xf32>
    %303 = arith.truncf %302 : vector<16x32xf32> to vector<16x32xbf16>
    %c0_140 = arith.constant 0 : index
    %c1_141 = arith.constant 1 : index
    %c0_142 = arith.constant 0 : index
    %c0_143 = arith.constant 0 : index
    %304 = vector.load %arg11[%c0_140, %c1_141, %c0_142, %c0_143] : memref<1x4x32x64xbf16, #tpu.memory_space<vmem>>, vector<1x1x32x64xbf16>
    %305 = vector.shape_cast %304 : vector<1x1x32x64xbf16> to vector<32x64xbf16>
    %cst_144 = arith.constant dense<0.000000e+00> : vector<16x64xf32>
    %306 = tpu.matmul %303, %305, %cst_144 {dimension_numbers = #tpu.dot_dimension_numbers<[1], [0], [0], [1], [0, 0, 1, 1], [], []>} : vector<16x32xbf16>, vector<32x64xbf16>, vector<16x64xf32> -> vector<16x64xf32>
    %c0_145 = arith.constant 0 : index
    %c1_146 = arith.constant 1 : index
    %c0_147 = arith.constant 0 : index
    %c0_148 = arith.constant 0 : index
    %307 = vector.load %arg12[%c0_145, %c1_146, %c0_147, %c0_148] : memref<1x4x1x64xf32, #tpu.memory_space<vmem>>, vector<1x1x1x64xf32>
    %308 = vector.shape_cast %307 : vector<1x1x1x64xf32> to vector<1x64xf32>
    %309 = vector.broadcast %308 : vector<1x64xf32> to vector<16x64xf32>
    %310 = arith.addf %306, %309 : vector<16x64xf32>
    %cst_149 = arith.constant 5.000000e-01 : f32
    %311 = vector.broadcast %cst_149 : f32 to vector<16x64xf32>
    %312 = arith.mulf %311, %310 : vector<16x64xf32>
    %cst_150 = arith.constant 4.471500e-02 : f32
    %313 = vector.broadcast %cst_150 : f32 to vector<16x64xf32>
    %314 = arith.mulf %313, %310 : vector<16x64xf32>
    %315 = arith.mulf %314, %310 : vector<16x64xf32>
    %316 = arith.mulf %315, %310 : vector<16x64xf32>
    %317 = arith.addf %310, %316 : vector<16x64xf32>
    %cst_151 = arith.constant 0.797884583 : f32
    %318 = vector.broadcast %cst_151 : f32 to vector<16x64xf32>
    %319 = arith.mulf %318, %317 : vector<16x64xf32>
    %320 = math.tanh %319 : vector<16x64xf32>
    %cst_152 = arith.constant 1.000000e+00 : f32
    %321 = vector.broadcast %cst_152 : f32 to vector<16x64xf32>
    %322 = arith.addf %321, %320 : vector<16x64xf32>
    %323 = arith.mulf %312, %322 : vector<16x64xf32>
    %324 = arith.truncf %323 : vector<16x64xf32> to vector<16x64xbf16>
    %c0_153 = arith.constant 0 : index
    %c1_154 = arith.constant 1 : index
    %c0_155 = arith.constant 0 : index
    %c0_156 = arith.constant 0 : index
    %325 = vector.load %arg13[%c0_153, %c1_154, %c0_155, %c0_156] : memref<1x4x64x32xbf16, #tpu.memory_space<vmem>>, vector<1x1x64x32xbf16>
    %326 = vector.shape_cast %325 : vector<1x1x64x32xbf16> to vector<64x32xbf16>
    %cst_157 = arith.constant dense<0.000000e+00> : vector<16x32xf32>
    %327 = tpu.matmul %324, %326, %cst_157 {dimension_numbers = #tpu.dot_dimension_numbers<[1], [0], [0], [1], [0, 0, 1, 1], [], []>} : vector<16x64xbf16>, vector<64x32xbf16>, vector<16x32xf32> -> vector<16x32xf32>
    %c0_158 = arith.constant 0 : index
    %c1_159 = arith.constant 1 : index
    %c0_160 = arith.constant 0 : index
    %c0_161 = arith.constant 0 : index
    %328 = vector.load %arg14[%c0_158, %c1_159, %c0_160, %c0_161] : memref<1x4x1x32xf32, #tpu.memory_space<vmem>>, vector<1x1x1x32xf32>
    %329 = vector.shape_cast %328 : vector<1x1x1x32xf32> to vector<1x32xf32>
    %330 = vector.broadcast %329 : vector<1x32xf32> to vector<16x32xf32>
    %331 = arith.addf %327, %330 : vector<16x32xf32>
    %332 = arith.addf %302, %331 : vector<16x32xf32>
    %c0_162 = arith.constant 0 : index
    %c1_163 = arith.constant 1 : index
    %c0_164 = arith.constant 0 : index
    %c0_165 = arith.constant 0 : index
    %333 = vector.load %arg15[%c0_162, %c1_163, %c0_164, %c0_165] : memref<1x4x1x32xf32, #tpu.memory_space<vmem>>, vector<1x1x1x32xf32>
    %334 = vector.shape_cast %333 : vector<1x1x1x32xf32> to vector<1x32xf32>
    %c0_166 = arith.constant 0 : index
    %c1_167 = arith.constant 1 : index
    %c0_168 = arith.constant 0 : index
    %c0_169 = arith.constant 0 : index
    %335 = vector.load %arg16[%c0_166, %c1_167, %c0_168, %c0_169] : memref<1x4x1x32xf32, #tpu.memory_space<vmem>>, vector<1x1x1x32xf32>
    %336 = vector.shape_cast %335 : vector<1x1x1x32xf32> to vector<1x32xf32>
    %cst_170 = arith.constant dense<0.000000e+00> : vector<16xf32>
    %337 = vector.multi_reduction <add>, %332, %cst_170 [1] : vector<16x32xf32> to vector<16xf32>
    %338 = vector.shape_cast %337 : vector<16xf32> to vector<16x1xf32>
    %cst_171 = arith.constant 3.200000e+01 : f32
    %339 = vector.broadcast %cst_171 : f32 to vector<16x1xf32>
    %340 = arith.divf %338, %339 : vector<16x1xf32>
    %341 = vector.broadcast %340 : vector<16x1xf32> to vector<16x32xf32>
    %342 = arith.subf %332, %341 : vector<16x32xf32>
    %343 = arith.mulf %342, %342 : vector<16x32xf32>
    %cst_172 = arith.constant dense<0.000000e+00> : vector<16xf32>
    %344 = vector.multi_reduction <add>, %343, %cst_172 [1] : vector<16x32xf32> to vector<16xf32>
    %345 = vector.shape_cast %344 : vector<16xf32> to vector<16x1xf32>
    %cst_173 = arith.constant 3.200000e+01 : f32
    %346 = vector.broadcast %cst_173 : f32 to vector<16x1xf32>
    %347 = arith.divf %345, %346 : vector<16x1xf32>
    %cst_174 = arith.constant 1.000000e-07 : f32
    %348 = vector.broadcast %cst_174 : f32 to vector<16x1xf32>
    %349 = arith.addf %347, %348 : vector<16x1xf32>
    %350 = math.rsqrt %349 : vector<16x1xf32>
    %351 = vector.broadcast %350 : vector<16x1xf32> to vector<16x32xf32>
    %352 = arith.mulf %342, %351 : vector<16x32xf32>
    %353 = vector.broadcast %334 : vector<1x32xf32> to vector<16x32xf32>
    %354 = arith.mulf %352, %353 : vector<16x32xf32>
    %355 = vector.broadcast %336 : vector<1x32xf32> to vector<16x32xf32>
    %356 = arith.addf %354, %355 : vector<16x32xf32>
    %357 = vector.shape_cast %356 : vector<16x32xf32> to vector<2x8x32xf32>
    %358 = vector.extract_strided_slice %357 {offsets = [0, 0, 0], sizes = [2, 1, 32], strides = [1, 1, 1]} : vector<2x8x32xf32> to vector<2x1x32xf32>
    %359 = vector.shape_cast %358 : vector<2x1x32xf32> to vector<2x32xf32>
    %360 = arith.truncf %356 : vector<16x32xf32> to vector<16x32xbf16>
    %c0_175 = arith.constant 0 : index
    %c2 = arith.constant 2 : index
    %c0_176 = arith.constant 0 : index
    %c0_177 = arith.constant 0 : index
    %361 = vector.load %arg5[%c0_175, %c2, %c0_176, %c0_177] : memref<1x4x32x96xbf16, #tpu.memory_space<vmem>>, vector<1x1x32x96xbf16>
    %362 = vector.shape_cast %361 : vector<1x1x32x96xbf16> to vector<32x96xbf16>
    %cst_178 = arith.constant dense<0.000000e+00> : vector<16x96xf32>
    %363 = tpu.matmul %360, %362, %cst_178 {dimension_numbers = #tpu.dot_dimension_numbers<[1], [0], [0], [1], [0, 0, 1, 1], [], []>} : vector<16x32xbf16>, vector<32x96xbf16>, vector<16x96xf32> -> vector<16x96xf32>
    %c0_179 = arith.constant 0 : index
    %c2_180 = arith.constant 2 : index
    %c0_181 = arith.constant 0 : index
    %c0_182 = arith.constant 0 : index
    %364 = vector.load %arg6[%c0_179, %c2_180, %c0_181, %c0_182] : memref<1x4x1x96xf32, #tpu.memory_space<vmem>>, vector<1x1x1x96xf32>
    %365 = vector.shape_cast %364 : vector<1x1x1x96xf32> to vector<1x96xf32>
    %366 = vector.broadcast %365 : vector<1x96xf32> to vector<16x96xf32>
    %367 = arith.addf %363, %366 : vector<16x96xf32>
    %368 = vector.extract_strided_slice %367 {offsets = [0, 0], sizes = [16, 8], strides = [1, 1]} : vector<16x96xf32> to vector<16x8xf32>
    %369 = vector.shape_cast %368 : vector<16x8xf32> to vector<2x8x8xf32>
    %370 = vector.extract_strided_slice %367 {offsets = [0, 32], sizes = [16, 8], strides = [1, 1]} : vector<16x96xf32> to vector<16x8xf32>
    %371 = vector.shape_cast %370 : vector<16x8xf32> to vector<2x8x8xf32>
    "tpu.trace_start"() <{level = 10 : i32, message = "bqd,bkd->bqk"}> : () -> ()
    %cst_183 = arith.constant dense<0.000000e+00> : vector<2x8x8xf32>
    %372 = tpu.matmul %369, %371, %cst_183 {dimension_numbers = #tpu.dot_dimension_numbers<[2], [2], [1], [1], [0, 0, 0, 1, 1, 1], [0], [0]>} : vector<2x8x8xf32>, vector<2x8x8xf32>, vector<2x8x8xf32> -> vector<2x8x8xf32>
    "tpu.trace_stop"() : () -> ()
    %cst_184 = arith.constant 0.353553385 : f32
    %373 = vector.broadcast %cst_184 : f32 to vector<2x8x8xf32>
    %374 = arith.mulf %372, %373 : vector<2x8x8xf32>
    %375 = vector.broadcast %27 : vector<2x1x8xf32> to vector<2x8x8xf32>
    %376 = arith.addf %374, %375 : vector<2x8x8xf32>
    %377 = vector.extract_strided_slice %367 {offsets = [0, 8], sizes = [16, 8], strides = [1, 1]} : vector<16x96xf32> to vector<16x8xf32>
    %378 = vector.shape_cast %377 : vector<16x8xf32> to vector<2x8x8xf32>
    %379 = vector.extract_strided_slice %367 {offsets = [0, 40], sizes = [16, 8], strides = [1, 1]} : vector<16x96xf32> to vector<16x8xf32>
    %380 = vector.shape_cast %379 : vector<16x8xf32> to vector<2x8x8xf32>
    "tpu.trace_start"() <{level = 10 : i32, message = "bqd,bkd->bqk"}> : () -> ()
    %cst_185 = arith.constant dense<0.000000e+00> : vector<2x8x8xf32>
    %381 = tpu.matmul %378, %380, %cst_185 {dimension_numbers = #tpu.dot_dimension_numbers<[2], [2], [1], [1], [0, 0, 0, 1, 1, 1], [0], [0]>} : vector<2x8x8xf32>, vector<2x8x8xf32>, vector<2x8x8xf32> -> vector<2x8x8xf32>
    "tpu.trace_stop"() : () -> ()
    %cst_186 = arith.constant 0.353553385 : f32
    %382 = vector.broadcast %cst_186 : f32 to vector<2x8x8xf32>
    %383 = arith.mulf %381, %382 : vector<2x8x8xf32>
    %384 = vector.broadcast %27 : vector<2x1x8xf32> to vector<2x8x8xf32>
    %385 = arith.addf %383, %384 : vector<2x8x8xf32>
    %386 = vector.extract_strided_slice %367 {offsets = [0, 16], sizes = [16, 8], strides = [1, 1]} : vector<16x96xf32> to vector<16x8xf32>
    %387 = vector.shape_cast %386 : vector<16x8xf32> to vector<2x8x8xf32>
    %388 = vector.extract_strided_slice %367 {offsets = [0, 48], sizes = [16, 8], strides = [1, 1]} : vector<16x96xf32> to vector<16x8xf32>
    %389 = vector.shape_cast %388 : vector<16x8xf32> to vector<2x8x8xf32>
    "tpu.trace_start"() <{level = 10 : i32, message = "bqd,bkd->bqk"}> : () -> ()
    %cst_187 = arith.constant dense<0.000000e+00> : vector<2x8x8xf32>
    %390 = tpu.matmul %387, %389, %cst_187 {dimension_numbers = #tpu.dot_dimension_numbers<[2], [2], [1], [1], [0, 0, 0, 1, 1, 1], [0], [0]>} : vector<2x8x8xf32>, vector<2x8x8xf32>, vector<2x8x8xf32> -> vector<2x8x8xf32>
    "tpu.trace_stop"() : () -> ()
    %cst_188 = arith.constant 0.353553385 : f32
    %391 = vector.broadcast %cst_188 : f32 to vector<2x8x8xf32>
    %392 = arith.mulf %390, %391 : vector<2x8x8xf32>
    %393 = vector.broadcast %27 : vector<2x1x8xf32> to vector<2x8x8xf32>
    %394 = arith.addf %392, %393 : vector<2x8x8xf32>
    %395 = vector.extract_strided_slice %367 {offsets = [0, 24], sizes = [16, 8], strides = [1, 1]} : vector<16x96xf32> to vector<16x8xf32>
    %396 = vector.shape_cast %395 : vector<16x8xf32> to vector<2x8x8xf32>
    %397 = vector.extract_strided_slice %367 {offsets = [0, 56], sizes = [16, 8], strides = [1, 1]} : vector<16x96xf32> to vector<16x8xf32>
    %398 = vector.shape_cast %397 : vector<16x8xf32> to vector<2x8x8xf32>
    "tpu.trace_start"() <{level = 10 : i32, message = "bqd,bkd->bqk"}> : () -> ()
    %cst_189 = arith.constant dense<0.000000e+00> : vector<2x8x8xf32>
    %399 = tpu.matmul %396, %398, %cst_189 {dimension_numbers = #tpu.dot_dimension_numbers<[2], [2], [1], [1], [0, 0, 0, 1, 1, 1], [0], [0]>} : vector<2x8x8xf32>, vector<2x8x8xf32>, vector<2x8x8xf32> -> vector<2x8x8xf32>
    "tpu.trace_stop"() : () -> ()
    %cst_190 = arith.constant 0.353553385 : f32
    %400 = vector.broadcast %cst_190 : f32 to vector<2x8x8xf32>
    %401 = arith.mulf %399, %400 : vector<2x8x8xf32>
    %402 = vector.broadcast %27 : vector<2x1x8xf32> to vector<2x8x8xf32>
    %403 = arith.addf %401, %402 : vector<2x8x8xf32>
    %404 = tpu.concatenate %376, %385, %394, %403 in 1 : vector<2x8x8xf32>, vector<2x8x8xf32>, vector<2x8x8xf32>, vector<2x8x8xf32> -> vector<2x32x8xf32>
    %cst_191 = arith.constant dense<0xFF800000> : vector<2x32xf32>
    %405 = vector.multi_reduction <maximumf>, %404, %cst_191 [2] : vector<2x32x8xf32> to vector<2x32xf32>
    %406 = vector.shape_cast %405 : vector<2x32xf32> to vector<2x32x1xf32>
    %407 = vector.broadcast %406 : vector<2x32x1xf32> to vector<2x32x8xf32>
    %408 = arith.subf %404, %407 : vector<2x32x8xf32>
    %409 = math.exp %408 : vector<2x32x8xf32>
    %cst_192 = arith.constant dense<0.000000e+00> : vector<2x32xf32>
    %410 = vector.multi_reduction <add>, %409, %cst_192 [2] : vector<2x32x8xf32> to vector<2x32xf32>
    %411 = vector.shape_cast %410 : vector<2x32xf32> to vector<2x32x1xf32>
    %412 = tpu.reciprocal %411 {approx = true} : vector<2x32x1xf32> -> vector<2x32x1xf32>
    %413 = vector.broadcast %412 : vector<2x32x1xf32> to vector<2x32x8xf32>
    %414 = arith.mulf %409, %413 : vector<2x32x8xf32>
    %415 = vector.extract_strided_slice %367 {offsets = [0, 64], sizes = [16, 8], strides = [1, 1]} : vector<16x96xf32> to vector<16x8xf32>
    %416 = vector.shape_cast %415 : vector<16x8xf32> to vector<2x8x8xf32>
    %417 = vector.extract_strided_slice %414 {offsets = [0, 0, 0], sizes = [2, 8, 8], strides = [1, 1, 1]} : vector<2x32x8xf32> to vector<2x8x8xf32>
    "tpu.trace_start"() <{level = 10 : i32, message = "bqk,bkd->bqd"}> : () -> ()
    %cst_193 = arith.constant dense<0.000000e+00> : vector<2x8x8xf32>
    %418 = tpu.matmul %417, %416, %cst_193 {dimension_numbers = #tpu.dot_dimension_numbers<[2], [1], [1], [2], [0, 0, 0, 1, 1, 2], [0], [0]>} : vector<2x8x8xf32>, vector<2x8x8xf32>, vector<2x8x8xf32> -> vector<2x8x8xf32>
    "tpu.trace_stop"() : () -> ()
    %419 = vector.shape_cast %418 : vector<2x8x8xf32> to vector<16x8xf32>
    %420 = vector.extract_strided_slice %367 {offsets = [0, 72], sizes = [16, 8], strides = [1, 1]} : vector<16x96xf32> to vector<16x8xf32>
    %421 = vector.shape_cast %420 : vector<16x8xf32> to vector<2x8x8xf32>
    %422 = vector.extract_strided_slice %414 {offsets = [0, 8, 0], sizes = [2, 8, 8], strides = [1, 1, 1]} : vector<2x32x8xf32> to vector<2x8x8xf32>
    "tpu.trace_start"() <{level = 10 : i32, message = "bqk,bkd->bqd"}> : () -> ()
    %cst_194 = arith.constant dense<0.000000e+00> : vector<2x8x8xf32>
    %423 = tpu.matmul %422, %421, %cst_194 {dimension_numbers = #tpu.dot_dimension_numbers<[2], [1], [1], [2], [0, 0, 0, 1, 1, 2], [0], [0]>} : vector<2x8x8xf32>, vector<2x8x8xf32>, vector<2x8x8xf32> -> vector<2x8x8xf32>
    "tpu.trace_stop"() : () -> ()
    %424 = vector.shape_cast %423 : vector<2x8x8xf32> to vector<16x8xf32>
    %425 = vector.extract_strided_slice %367 {offsets = [0, 80], sizes = [16, 8], strides = [1, 1]} : vector<16x96xf32> to vector<16x8xf32>
    %426 = vector.shape_cast %425 : vector<16x8xf32> to vector<2x8x8xf32>
    %427 = vector.extract_strided_slice %414 {offsets = [0, 16, 0], sizes = [2, 8, 8], strides = [1, 1, 1]} : vector<2x32x8xf32> to vector<2x8x8xf32>
    "tpu.trace_start"() <{level = 10 : i32, message = "bqk,bkd->bqd"}> : () -> ()
    %cst_195 = arith.constant dense<0.000000e+00> : vector<2x8x8xf32>
    %428 = tpu.matmul %427, %426, %cst_195 {dimension_numbers = #tpu.dot_dimension_numbers<[2], [1], [1], [2], [0, 0, 0, 1, 1, 2], [0], [0]>} : vector<2x8x8xf32>, vector<2x8x8xf32>, vector<2x8x8xf32> -> vector<2x8x8xf32>
    "tpu.trace_stop"() : () -> ()
    %429 = vector.shape_cast %428 : vector<2x8x8xf32> to vector<16x8xf32>
    %430 = vector.extract_strided_slice %367 {offsets = [0, 88], sizes = [16, 8], strides = [1, 1]} : vector<16x96xf32> to vector<16x8xf32>
    %431 = vector.shape_cast %430 : vector<16x8xf32> to vector<2x8x8xf32>
    %432 = vector.extract_strided_slice %414 {offsets = [0, 24, 0], sizes = [2, 8, 8], strides = [1, 1, 1]} : vector<2x32x8xf32> to vector<2x8x8xf32>
    "tpu.trace_start"() <{level = 10 : i32, message = "bqk,bkd->bqd"}> : () -> ()
    %cst_196 = arith.constant dense<0.000000e+00> : vector<2x8x8xf32>
    %433 = tpu.matmul %432, %431, %cst_196 {dimension_numbers = #tpu.dot_dimension_numbers<[2], [1], [1], [2], [0, 0, 0, 1, 1, 2], [0], [0]>} : vector<2x8x8xf32>, vector<2x8x8xf32>, vector<2x8x8xf32> -> vector<2x8x8xf32>
    "tpu.trace_stop"() : () -> ()
    %434 = vector.shape_cast %433 : vector<2x8x8xf32> to vector<16x8xf32>
    %435 = tpu.concatenate %419, %424, %429, %434 in 1 : vector<16x8xf32>, vector<16x8xf32>, vector<16x8xf32>, vector<16x8xf32> -> vector<16x32xf32>
    %436 = arith.truncf %435 : vector<16x32xf32> to vector<16x32xbf16>
    %c0_197 = arith.constant 0 : index
    %c2_198 = arith.constant 2 : index
    %c0_199 = arith.constant 0 : index
    %c0_200 = arith.constant 0 : index
    %437 = vector.load %arg7[%c0_197, %c2_198, %c0_199, %c0_200] : memref<1x4x32x32xbf16, #tpu.memory_space<vmem>>, vector<1x1x32x32xbf16>
    %438 = vector.shape_cast %437 : vector<1x1x32x32xbf16> to vector<32x32xbf16>
    %cst_201 = arith.constant dense<0.000000e+00> : vector<16x32xf32>
    %439 = tpu.matmul %436, %438, %cst_201 {dimension_numbers = #tpu.dot_dimension_numbers<[1], [0], [0], [1], [0, 0, 1, 1], [], []>} : vector<16x32xbf16>, vector<32x32xbf16>, vector<16x32xf32> -> vector<16x32xf32>
    %c0_202 = arith.constant 0 : index
    %c2_203 = arith.constant 2 : index
    %c0_204 = arith.constant 0 : index
    %c0_205 = arith.constant 0 : index
    %440 = vector.load %arg8[%c0_202, %c2_203, %c0_204, %c0_205] : memref<1x4x1x32xf32, #tpu.memory_space<vmem>>, vector<1x1x1x32xf32>
    %441 = vector.shape_cast %440 : vector<1x1x1x32xf32> to vector<1x32xf32>
    %442 = vector.broadcast %441 : vector<1x32xf32> to vector<16x32xf32>
    %443 = arith.addf %439, %442 : vector<16x32xf32>
    %444 = arith.addf %356, %443 : vector<16x32xf32>
    %c0_206 = arith.constant 0 : index
    %c2_207 = arith.constant 2 : index
    %c0_208 = arith.constant 0 : index
    %c0_209 = arith.constant 0 : index
    %445 = vector.load %arg9[%c0_206, %c2_207, %c0_208, %c0_209] : memref<1x4x1x32xf32, #tpu.memory_space<vmem>>, vector<1x1x1x32xf32>
    %446 = vector.shape_cast %445 : vector<1x1x1x32xf32> to vector<1x32xf32>
    %c0_210 = arith.constant 0 : index
    %c2_211 = arith.constant 2 : index
    %c0_212 = arith.constant 0 : index
    %c0_213 = arith.constant 0 : index
    %447 = vector.load %arg10[%c0_210, %c2_211, %c0_212, %c0_213] : memref<1x4x1x32xf32, #tpu.memory_space<vmem>>, vector<1x1x1x32xf32>
    %448 = vector.shape_cast %447 : vector<1x1x1x32xf32> to vector<1x32xf32>
    %cst_214 = arith.constant dense<0.000000e+00> : vector<16xf32>
    %449 = vector.multi_reduction <add>, %444, %cst_214 [1] : vector<16x32xf32> to vector<16xf32>
    %450 = vector.shape_cast %449 : vector<16xf32> to vector<16x1xf32>
    %cst_215 = arith.constant 3.200000e+01 : f32
    %451 = vector.broadcast %cst_215 : f32 to vector<16x1xf32>
    %452 = arith.divf %450, %451 : vector<16x1xf32>
    %453 = vector.broadcast %452 : vector<16x1xf32> to vector<16x32xf32>
    %454 = arith.subf %444, %453 : vector<16x32xf32>
    %455 = arith.mulf %454, %454 : vector<16x32xf32>
    %cst_216 = arith.constant dense<0.000000e+00> : vector<16xf32>
    %456 = vector.multi_reduction <add>, %455, %cst_216 [1] : vector<16x32xf32> to vector<16xf32>
    %457 = vector.shape_cast %456 : vector<16xf32> to vector<16x1xf32>
    %cst_217 = arith.constant 3.200000e+01 : f32
    %458 = vector.broadcast %cst_217 : f32 to vector<16x1xf32>
    %459 = arith.divf %457, %458 : vector<16x1xf32>
    %cst_218 = arith.constant 1.000000e-07 : f32
    %460 = vector.broadcast %cst_218 : f32 to vector<16x1xf32>
    %461 = arith.addf %459, %460 : vector<16x1xf32>
    %462 = math.rsqrt %461 : vector<16x1xf32>
    %463 = vector.broadcast %462 : vector<16x1xf32> to vector<16x32xf32>
    %464 = arith.mulf %454, %463 : vector<16x32xf32>
    %465 = vector.broadcast %446 : vector<1x32xf32> to vector<16x32xf32>
    %466 = arith.mulf %464, %465 : vector<16x32xf32>
    %467 = vector.broadcast %448 : vector<1x32xf32> to vector<16x32xf32>
    %468 = arith.addf %466, %467 : vector<16x32xf32>
    %469 = arith.truncf %468 : vector<16x32xf32> to vector<16x32xbf16>
    %c0_219 = arith.constant 0 : index
    %c2_220 = arith.constant 2 : index
    %c0_221 = arith.constant 0 : index
    %c0_222 = arith.constant 0 : index
    %470 = vector.load %arg11[%c0_219, %c2_220, %c0_221, %c0_222] : memref<1x4x32x64xbf16, #tpu.memory_space<vmem>>, vector<1x1x32x64xbf16>
    %471 = vector.shape_cast %470 : vector<1x1x32x64xbf16> to vector<32x64xbf16>
    %cst_223 = arith.constant dense<0.000000e+00> : vector<16x64xf32>
    %472 = tpu.matmul %469, %471, %cst_223 {dimension_numbers = #tpu.dot_dimension_numbers<[1], [0], [0], [1], [0, 0, 1, 1], [], []>} : vector<16x32xbf16>, vector<32x64xbf16>, vector<16x64xf32> -> vector<16x64xf32>
    %c0_224 = arith.constant 0 : index
    %c2_225 = arith.constant 2 : index
    %c0_226 = arith.constant 0 : index
    %c0_227 = arith.constant 0 : index
    %473 = vector.load %arg12[%c0_224, %c2_225, %c0_226, %c0_227] : memref<1x4x1x64xf32, #tpu.memory_space<vmem>>, vector<1x1x1x64xf32>
    %474 = vector.shape_cast %473 : vector<1x1x1x64xf32> to vector<1x64xf32>
    %475 = vector.broadcast %474 : vector<1x64xf32> to vector<16x64xf32>
    %476 = arith.addf %472, %475 : vector<16x64xf32>
    %cst_228 = arith.constant 5.000000e-01 : f32
    %477 = vector.broadcast %cst_228 : f32 to vector<16x64xf32>
    %478 = arith.mulf %477, %476 : vector<16x64xf32>
    %cst_229 = arith.constant 4.471500e-02 : f32
    %479 = vector.broadcast %cst_229 : f32 to vector<16x64xf32>
    %480 = arith.mulf %479, %476 : vector<16x64xf32>
    %481 = arith.mulf %480, %476 : vector<16x64xf32>
    %482 = arith.mulf %481, %476 : vector<16x64xf32>
    %483 = arith.addf %476, %482 : vector<16x64xf32>
    %cst_230 = arith.constant 0.797884583 : f32
    %484 = vector.broadcast %cst_230 : f32 to vector<16x64xf32>
    %485 = arith.mulf %484, %483 : vector<16x64xf32>
    %486 = math.tanh %485 : vector<16x64xf32>
    %cst_231 = arith.constant 1.000000e+00 : f32
    %487 = vector.broadcast %cst_231 : f32 to vector<16x64xf32>
    %488 = arith.addf %487, %486 : vector<16x64xf32>
    %489 = arith.mulf %478, %488 : vector<16x64xf32>
    %490 = arith.truncf %489 : vector<16x64xf32> to vector<16x64xbf16>
    %c0_232 = arith.constant 0 : index
    %c2_233 = arith.constant 2 : index
    %c0_234 = arith.constant 0 : index
    %c0_235 = arith.constant 0 : index
    %491 = vector.load %arg13[%c0_232, %c2_233, %c0_234, %c0_235] : memref<1x4x64x32xbf16, #tpu.memory_space<vmem>>, vector<1x1x64x32xbf16>
    %492 = vector.shape_cast %491 : vector<1x1x64x32xbf16> to vector<64x32xbf16>
    %cst_236 = arith.constant dense<0.000000e+00> : vector<16x32xf32>
    %493 = tpu.matmul %490, %492, %cst_236 {dimension_numbers = #tpu.dot_dimension_numbers<[1], [0], [0], [1], [0, 0, 1, 1], [], []>} : vector<16x64xbf16>, vector<64x32xbf16>, vector<16x32xf32> -> vector<16x32xf32>
    %c0_237 = arith.constant 0 : index
    %c2_238 = arith.constant 2 : index
    %c0_239 = arith.constant 0 : index
    %c0_240 = arith.constant 0 : index
    %494 = vector.load %arg14[%c0_237, %c2_238, %c0_239, %c0_240] : memref<1x4x1x32xf32, #tpu.memory_space<vmem>>, vector<1x1x1x32xf32>
    %495 = vector.shape_cast %494 : vector<1x1x1x32xf32> to vector<1x32xf32>
    %496 = vector.broadcast %495 : vector<1x32xf32> to vector<16x32xf32>
    %497 = arith.addf %493, %496 : vector<16x32xf32>
    %498 = arith.addf %468, %497 : vector<16x32xf32>
    %c0_241 = arith.constant 0 : index
    %c2_242 = arith.constant 2 : index
    %c0_243 = arith.constant 0 : index
    %c0_244 = arith.constant 0 : index
    %499 = vector.load %arg15[%c0_241, %c2_242, %c0_243, %c0_244] : memref<1x4x1x32xf32, #tpu.memory_space<vmem>>, vector<1x1x1x32xf32>
    %500 = vector.shape_cast %499 : vector<1x1x1x32xf32> to vector<1x32xf32>
    %c0_245 = arith.constant 0 : index
    %c2_246 = arith.constant 2 : index
    %c0_247 = arith.constant 0 : index
    %c0_248 = arith.constant 0 : index
    %501 = vector.load %arg16[%c0_245, %c2_246, %c0_247, %c0_248] : memref<1x4x1x32xf32, #tpu.memory_space<vmem>>, vector<1x1x1x32xf32>
    %502 = vector.shape_cast %501 : vector<1x1x1x32xf32> to vector<1x32xf32>
    %cst_249 = arith.constant dense<0.000000e+00> : vector<16xf32>
    %503 = vector.multi_reduction <add>, %498, %cst_249 [1] : vector<16x32xf32> to vector<16xf32>
    %504 = vector.shape_cast %503 : vector<16xf32> to vector<16x1xf32>
    %cst_250 = arith.constant 3.200000e+01 : f32
    %505 = vector.broadcast %cst_250 : f32 to vector<16x1xf32>
    %506 = arith.divf %504, %505 : vector<16x1xf32>
    %507 = vector.broadcast %506 : vector<16x1xf32> to vector<16x32xf32>
    %508 = arith.subf %498, %507 : vector<16x32xf32>
    %509 = arith.mulf %508, %508 : vector<16x32xf32>
    %cst_251 = arith.constant dense<0.000000e+00> : vector<16xf32>
    %510 = vector.multi_reduction <add>, %509, %cst_251 [1] : vector<16x32xf32> to vector<16xf32>
    %511 = vector.shape_cast %510 : vector<16xf32> to vector<16x1xf32>
    %cst_252 = arith.constant 3.200000e+01 : f32
    %512 = vector.broadcast %cst_252 : f32 to vector<16x1xf32>
    %513 = arith.divf %511, %512 : vector<16x1xf32>
    %cst_253 = arith.constant 1.000000e-07 : f32
    %514 = vector.broadcast %cst_253 : f32 to vector<16x1xf32>
    %515 = arith.addf %513, %514 : vector<16x1xf32>
    %516 = math.rsqrt %515 : vector<16x1xf32>
    %517 = vector.broadcast %516 : vector<16x1xf32> to vector<16x32xf32>
    %518 = arith.mulf %508, %517 : vector<16x32xf32>
    %519 = vector.broadcast %500 : vector<1x32xf32> to vector<16x32xf32>
    %520 = arith.mulf %518, %519 : vector<16x32xf32>
    %521 = vector.broadcast %502 : vector<1x32xf32> to vector<16x32xf32>
    %522 = arith.addf %520, %521 : vector<16x32xf32>
    %523 = vector.shape_cast %522 : vector<16x32xf32> to vector<2x8x32xf32>
    %524 = vector.extract_strided_slice %523 {offsets = [0, 0, 0], sizes = [2, 1, 32], strides = [1, 1, 1]} : vector<2x8x32xf32> to vector<2x1x32xf32>
    %525 = vector.shape_cast %524 : vector<2x1x32xf32> to vector<2x32xf32>
    %526 = arith.truncf %522 : vector<16x32xf32> to vector<16x32xbf16>
    %c0_254 = arith.constant 0 : index
    %c3 = arith.constant 3 : index
    %c0_255 = arith.constant 0 : index
    %c0_256 = arith.constant 0 : index
    %527 = vector.load %arg5[%c0_254, %c3, %c0_255, %c0_256] : memref<1x4x32x96xbf16, #tpu.memory_space<vmem>>, vector<1x1x32x96xbf16>
    %528 = vector.shape_cast %527 : vector<1x1x32x96xbf16> to vector<32x96xbf16>
    %cst_257 = arith.constant dense<0.000000e+00> : vector<16x96xf32>
    %529 = tpu.matmul %526, %528, %cst_257 {dimension_numbers = #tpu.dot_dimension_numbers<[1], [0], [0], [1], [0, 0, 1, 1], [], []>} : vector<16x32xbf16>, vector<32x96xbf16>, vector<16x96xf32> -> vector<16x96xf32>
    %c0_258 = arith.constant 0 : index
    %c3_259 = arith.constant 3 : index
    %c0_260 = arith.constant 0 : index
    %c0_261 = arith.constant 0 : index
    %530 = vector.load %arg6[%c0_258, %c3_259, %c0_260, %c0_261] : memref<1x4x1x96xf32, #tpu.memory_space<vmem>>, vector<1x1x1x96xf32>
    %531 = vector.shape_cast %530 : vector<1x1x1x96xf32> to vector<1x96xf32>
    %532 = vector.broadcast %531 : vector<1x96xf32> to vector<16x96xf32>
    %533 = arith.addf %529, %532 : vector<16x96xf32>
    %534 = vector.extract_strided_slice %533 {offsets = [0, 0], sizes = [16, 8], strides = [1, 1]} : vector<16x96xf32> to vector<16x8xf32>
    %535 = vector.shape_cast %534 : vector<16x8xf32> to vector<2x8x8xf32>
    %536 = vector.extract_strided_slice %533 {offsets = [0, 32], sizes = [16, 8], strides = [1, 1]} : vector<16x96xf32> to vector<16x8xf32>
    %537 = vector.shape_cast %536 : vector<16x8xf32> to vector<2x8x8xf32>
    "tpu.trace_start"() <{level = 10 : i32, message = "bqd,bkd->bqk"}> : () -> ()
    %cst_262 = arith.constant dense<0.000000e+00> : vector<2x8x8xf32>
    %538 = tpu.matmul %535, %537, %cst_262 {dimension_numbers = #tpu.dot_dimension_numbers<[2], [2], [1], [1], [0, 0, 0, 1, 1, 1], [0], [0]>} : vector<2x8x8xf32>, vector<2x8x8xf32>, vector<2x8x8xf32> -> vector<2x8x8xf32>
    "tpu.trace_stop"() : () -> ()
    %cst_263 = arith.constant 0.353553385 : f32
    %539 = vector.broadcast %cst_263 : f32 to vector<2x8x8xf32>
    %540 = arith.mulf %538, %539 : vector<2x8x8xf32>
    %541 = vector.broadcast %27 : vector<2x1x8xf32> to vector<2x8x8xf32>
    %542 = arith.addf %540, %541 : vector<2x8x8xf32>
    %543 = vector.extract_strided_slice %533 {offsets = [0, 8], sizes = [16, 8], strides = [1, 1]} : vector<16x96xf32> to vector<16x8xf32>
    %544 = vector.shape_cast %543 : vector<16x8xf32> to vector<2x8x8xf32>
    %545 = vector.extract_strided_slice %533 {offsets = [0, 40], sizes = [16, 8], strides = [1, 1]} : vector<16x96xf32> to vector<16x8xf32>
    %546 = vector.shape_cast %545 : vector<16x8xf32> to vector<2x8x8xf32>
    "tpu.trace_start"() <{level = 10 : i32, message = "bqd,bkd->bqk"}> : () -> ()
    %cst_264 = arith.constant dense<0.000000e+00> : vector<2x8x8xf32>
    %547 = tpu.matmul %544, %546, %cst_264 {dimension_numbers = #tpu.dot_dimension_numbers<[2], [2], [1], [1], [0, 0, 0, 1, 1, 1], [0], [0]>} : vector<2x8x8xf32>, vector<2x8x8xf32>, vector<2x8x8xf32> -> vector<2x8x8xf32>
    "tpu.trace_stop"() : () -> ()
    %cst_265 = arith.constant 0.353553385 : f32
    %548 = vector.broadcast %cst_265 : f32 to vector<2x8x8xf32>
    %549 = arith.mulf %547, %548 : vector<2x8x8xf32>
    %550 = vector.broadcast %27 : vector<2x1x8xf32> to vector<2x8x8xf32>
    %551 = arith.addf %549, %550 : vector<2x8x8xf32>
    %552 = vector.extract_strided_slice %533 {offsets = [0, 16], sizes = [16, 8], strides = [1, 1]} : vector<16x96xf32> to vector<16x8xf32>
    %553 = vector.shape_cast %552 : vector<16x8xf32> to vector<2x8x8xf32>
    %554 = vector.extract_strided_slice %533 {offsets = [0, 48], sizes = [16, 8], strides = [1, 1]} : vector<16x96xf32> to vector<16x8xf32>
    %555 = vector.shape_cast %554 : vector<16x8xf32> to vector<2x8x8xf32>
    "tpu.trace_start"() <{level = 10 : i32, message = "bqd,bkd->bqk"}> : () -> ()
    %cst_266 = arith.constant dense<0.000000e+00> : vector<2x8x8xf32>
    %556 = tpu.matmul %553, %555, %cst_266 {dimension_numbers = #tpu.dot_dimension_numbers<[2], [2], [1], [1], [0, 0, 0, 1, 1, 1], [0], [0]>} : vector<2x8x8xf32>, vector<2x8x8xf32>, vector<2x8x8xf32> -> vector<2x8x8xf32>
    "tpu.trace_stop"() : () -> ()
    %cst_267 = arith.constant 0.353553385 : f32
    %557 = vector.broadcast %cst_267 : f32 to vector<2x8x8xf32>
    %558 = arith.mulf %556, %557 : vector<2x8x8xf32>
    %559 = vector.broadcast %27 : vector<2x1x8xf32> to vector<2x8x8xf32>
    %560 = arith.addf %558, %559 : vector<2x8x8xf32>
    %561 = vector.extract_strided_slice %533 {offsets = [0, 24], sizes = [16, 8], strides = [1, 1]} : vector<16x96xf32> to vector<16x8xf32>
    %562 = vector.shape_cast %561 : vector<16x8xf32> to vector<2x8x8xf32>
    %563 = vector.extract_strided_slice %533 {offsets = [0, 56], sizes = [16, 8], strides = [1, 1]} : vector<16x96xf32> to vector<16x8xf32>
    %564 = vector.shape_cast %563 : vector<16x8xf32> to vector<2x8x8xf32>
    "tpu.trace_start"() <{level = 10 : i32, message = "bqd,bkd->bqk"}> : () -> ()
    %cst_268 = arith.constant dense<0.000000e+00> : vector<2x8x8xf32>
    %565 = tpu.matmul %562, %564, %cst_268 {dimension_numbers = #tpu.dot_dimension_numbers<[2], [2], [1], [1], [0, 0, 0, 1, 1, 1], [0], [0]>} : vector<2x8x8xf32>, vector<2x8x8xf32>, vector<2x8x8xf32> -> vector<2x8x8xf32>
    "tpu.trace_stop"() : () -> ()
    %cst_269 = arith.constant 0.353553385 : f32
    %566 = vector.broadcast %cst_269 : f32 to vector<2x8x8xf32>
    %567 = arith.mulf %565, %566 : vector<2x8x8xf32>
    %568 = vector.broadcast %27 : vector<2x1x8xf32> to vector<2x8x8xf32>
    %569 = arith.addf %567, %568 : vector<2x8x8xf32>
    %570 = tpu.concatenate %542, %551, %560, %569 in 1 : vector<2x8x8xf32>, vector<2x8x8xf32>, vector<2x8x8xf32>, vector<2x8x8xf32> -> vector<2x32x8xf32>
    %cst_270 = arith.constant dense<0xFF800000> : vector<2x32xf32>
    %571 = vector.multi_reduction <maximumf>, %570, %cst_270 [2] : vector<2x32x8xf32> to vector<2x32xf32>
    %572 = vector.shape_cast %571 : vector<2x32xf32> to vector<2x32x1xf32>
    %573 = vector.broadcast %572 : vector<2x32x1xf32> to vector<2x32x8xf32>
    %574 = arith.subf %570, %573 : vector<2x32x8xf32>
    %575 = math.exp %574 : vector<2x32x8xf32>
    %cst_271 = arith.constant dense<0.000000e+00> : vector<2x32xf32>
    %576 = vector.multi_reduction <add>, %575, %cst_271 [2] : vector<2x32x8xf32> to vector<2x32xf32>
    %577 = vector.shape_cast %576 : vector<2x32xf32> to vector<2x32x1xf32>
    %578 = tpu.reciprocal %577 {approx = true} : vector<2x32x1xf32> -> vector<2x32x1xf32>
    %579 = vector.broadcast %578 : vector<2x32x1xf32> to vector<2x32x8xf32>
    %580 = arith.mulf %575, %579 : vector<2x32x8xf32>
    %581 = vector.extract_strided_slice %533 {offsets = [0, 64], sizes = [16, 8], strides = [1, 1]} : vector<16x96xf32> to vector<16x8xf32>
    %582 = vector.shape_cast %581 : vector<16x8xf32> to vector<2x8x8xf32>
    %583 = vector.extract_strided_slice %580 {offsets = [0, 0, 0], sizes = [2, 8, 8], strides = [1, 1, 1]} : vector<2x32x8xf32> to vector<2x8x8xf32>
    "tpu.trace_start"() <{level = 10 : i32, message = "bqk,bkd->bqd"}> : () -> ()
    %cst_272 = arith.constant dense<0.000000e+00> : vector<2x8x8xf32>
    %584 = tpu.matmul %583, %582, %cst_272 {dimension_numbers = #tpu.dot_dimension_numbers<[2], [1], [1], [2], [0, 0, 0, 1, 1, 2], [0], [0]>} : vector<2x8x8xf32>, vector<2x8x8xf32>, vector<2x8x8xf32> -> vector<2x8x8xf32>
    "tpu.trace_stop"() : () -> ()
    %585 = vector.shape_cast %584 : vector<2x8x8xf32> to vector<16x8xf32>
    %586 = vector.extract_strided_slice %533 {offsets = [0, 72], sizes = [16, 8], strides = [1, 1]} : vector<16x96xf32> to vector<16x8xf32>
    %587 = vector.shape_cast %586 : vector<16x8xf32> to vector<2x8x8xf32>
    %588 = vector.extract_strided_slice %580 {offsets = [0, 8, 0], sizes = [2, 8, 8], strides = [1, 1, 1]} : vector<2x32x8xf32> to vector<2x8x8xf32>
    "tpu.trace_start"() <{level = 10 : i32, message = "bqk,bkd->bqd"}> : () -> ()
    %cst_273 = arith.constant dense<0.000000e+00> : vector<2x8x8xf32>
    %589 = tpu.matmul %588, %587, %cst_273 {dimension_numbers = #tpu.dot_dimension_numbers<[2], [1], [1], [2], [0, 0, 0, 1, 1, 2], [0], [0]>} : vector<2x8x8xf32>, vector<2x8x8xf32>, vector<2x8x8xf32> -> vector<2x8x8xf32>
    "tpu.trace_stop"() : () -> ()
    %590 = vector.shape_cast %589 : vector<2x8x8xf32> to vector<16x8xf32>
    %591 = vector.extract_strided_slice %533 {offsets = [0, 80], sizes = [16, 8], strides = [1, 1]} : vector<16x96xf32> to vector<16x8xf32>
    %592 = vector.shape_cast %591 : vector<16x8xf32> to vector<2x8x8xf32>
    %593 = vector.extract_strided_slice %580 {offsets = [0, 16, 0], sizes = [2, 8, 8], strides = [1, 1, 1]} : vector<2x32x8xf32> to vector<2x8x8xf32>
    "tpu.trace_start"() <{level = 10 : i32, message = "bqk,bkd->bqd"}> : () -> ()
    %cst_274 = arith.constant dense<0.000000e+00> : vector<2x8x8xf32>
    %594 = tpu.matmul %593, %592, %cst_274 {dimension_numbers = #tpu.dot_dimension_numbers<[2], [1], [1], [2], [0, 0, 0, 1, 1, 2], [0], [0]>} : vector<2x8x8xf32>, vector<2x8x8xf32>, vector<2x8x8xf32> -> vector<2x8x8xf32>
    "tpu.trace_stop"() : () -> ()
    %595 = vector.shape_cast %594 : vector<2x8x8xf32> to vector<16x8xf32>
    %596 = vector.extract_strided_slice %533 {offsets = [0, 88], sizes = [16, 8], strides = [1, 1]} : vector<16x96xf32> to vector<16x8xf32>
    %597 = vector.shape_cast %596 : vector<16x8xf32> to vector<2x8x8xf32>
    %598 = vector.extract_strided_slice %580 {offsets = [0, 24, 0], sizes = [2, 8, 8], strides = [1, 1, 1]} : vector<2x32x8xf32> to vector<2x8x8xf32>
    "tpu.trace_start"() <{level = 10 : i32, message = "bqk,bkd->bqd"}> : () -> ()
    %cst_275 = arith.constant dense<0.000000e+00> : vector<2x8x8xf32>
    %599 = tpu.matmul %598, %597, %cst_275 {dimension_numbers = #tpu.dot_dimension_numbers<[2], [1], [1], [2], [0, 0, 0, 1, 1, 2], [0], [0]>} : vector<2x8x8xf32>, vector<2x8x8xf32>, vector<2x8x8xf32> -> vector<2x8x8xf32>
    "tpu.trace_stop"() : () -> ()
    %600 = vector.shape_cast %599 : vector<2x8x8xf32> to vector<16x8xf32>
    %601 = tpu.concatenate %585, %590, %595, %600 in 1 : vector<16x8xf32>, vector<16x8xf32>, vector<16x8xf32>, vector<16x8xf32> -> vector<16x32xf32>
    %602 = arith.truncf %601 : vector<16x32xf32> to vector<16x32xbf16>
    %c0_276 = arith.constant 0 : index
    %c3_277 = arith.constant 3 : index
    %c0_278 = arith.constant 0 : index
    %c0_279 = arith.constant 0 : index
    %603 = vector.load %arg7[%c0_276, %c3_277, %c0_278, %c0_279] : memref<1x4x32x32xbf16, #tpu.memory_space<vmem>>, vector<1x1x32x32xbf16>
    %604 = vector.shape_cast %603 : vector<1x1x32x32xbf16> to vector<32x32xbf16>
    %cst_280 = arith.constant dense<0.000000e+00> : vector<16x32xf32>
    %605 = tpu.matmul %602, %604, %cst_280 {dimension_numbers = #tpu.dot_dimension_numbers<[1], [0], [0], [1], [0, 0, 1, 1], [], []>} : vector<16x32xbf16>, vector<32x32xbf16>, vector<16x32xf32> -> vector<16x32xf32>
    %c0_281 = arith.constant 0 : index
    %c3_282 = arith.constant 3 : index
    %c0_283 = arith.constant 0 : index
    %c0_284 = arith.constant 0 : index
    %606 = vector.load %arg8[%c0_281, %c3_282, %c0_283, %c0_284] : memref<1x4x1x32xf32, #tpu.memory_space<vmem>>, vector<1x1x1x32xf32>
    %607 = vector.shape_cast %606 : vector<1x1x1x32xf32> to vector<1x32xf32>
    %608 = vector.broadcast %607 : vector<1x32xf32> to vector<16x32xf32>
    %609 = arith.addf %605, %608 : vector<16x32xf32>
    %610 = arith.addf %522, %609 : vector<16x32xf32>
    %c0_285 = arith.constant 0 : index
    %c3_286 = arith.constant 3 : index
    %c0_287 = arith.constant 0 : index
    %c0_288 = arith.constant 0 : index
    %611 = vector.load %arg9[%c0_285, %c3_286, %c0_287, %c0_288] : memref<1x4x1x32xf32, #tpu.memory_space<vmem>>, vector<1x1x1x32xf32>
    %612 = vector.shape_cast %611 : vector<1x1x1x32xf32> to vector<1x32xf32>
    %c0_289 = arith.constant 0 : index
    %c3_290 = arith.constant 3 : index
    %c0_291 = arith.constant 0 : index
    %c0_292 = arith.constant 0 : index
    %613 = vector.load %arg10[%c0_289, %c3_290, %c0_291, %c0_292] : memref<1x4x1x32xf32, #tpu.memory_space<vmem>>, vector<1x1x1x32xf32>
    %614 = vector.shape_cast %613 : vector<1x1x1x32xf32> to vector<1x32xf32>
    %cst_293 = arith.constant dense<0.000000e+00> : vector<16xf32>
    %615 = vector.multi_reduction <add>, %610, %cst_293 [1] : vector<16x32xf32> to vector<16xf32>
    %616 = vector.shape_cast %615 : vector<16xf32> to vector<16x1xf32>
    %cst_294 = arith.constant 3.200000e+01 : f32
    %617 = vector.broadcast %cst_294 : f32 to vector<16x1xf32>
    %618 = arith.divf %616, %617 : vector<16x1xf32>
    %619 = vector.broadcast %618 : vector<16x1xf32> to vector<16x32xf32>
    %620 = arith.subf %610, %619 : vector<16x32xf32>
    %621 = arith.mulf %620, %620 : vector<16x32xf32>
    %cst_295 = arith.constant dense<0.000000e+00> : vector<16xf32>
    %622 = vector.multi_reduction <add>, %621, %cst_295 [1] : vector<16x32xf32> to vector<16xf32>
    %623 = vector.shape_cast %622 : vector<16xf32> to vector<16x1xf32>
    %cst_296 = arith.constant 3.200000e+01 : f32
    %624 = vector.broadcast %cst_296 : f32 to vector<16x1xf32>
    %625 = arith.divf %623, %624 : vector<16x1xf32>
    %cst_297 = arith.constant 1.000000e-07 : f32
    %626 = vector.broadcast %cst_297 : f32 to vector<16x1xf32>
    %627 = arith.addf %625, %626 : vector<16x1xf32>
    %628 = math.rsqrt %627 : vector<16x1xf32>
    %629 = vector.broadcast %628 : vector<16x1xf32> to vector<16x32xf32>
    %630 = arith.mulf %620, %629 : vector<16x32xf32>
    %631 = vector.broadcast %612 : vector<1x32xf32> to vector<16x32xf32>
    %632 = arith.mulf %630, %631 : vector<16x32xf32>
    %633 = vector.broadcast %614 : vector<1x32xf32> to vector<16x32xf32>
    %634 = arith.addf %632, %633 : vector<16x32xf32>
    %635 = arith.truncf %634 : vector<16x32xf32> to vector<16x32xbf16>
    %c0_298 = arith.constant 0 : index
    %c3_299 = arith.constant 3 : index
    %c0_300 = arith.constant 0 : index
    %c0_301 = arith.constant 0 : index
    %636 = vector.load %arg11[%c0_298, %c3_299, %c0_300, %c0_301] : memref<1x4x32x64xbf16, #tpu.memory_space<vmem>>, vector<1x1x32x64xbf16>
    %637 = vector.shape_cast %636 : vector<1x1x32x64xbf16> to vector<32x64xbf16>
    %cst_302 = arith.constant dense<0.000000e+00> : vector<16x64xf32>
    %638 = tpu.matmul %635, %637, %cst_302 {dimension_numbers = #tpu.dot_dimension_numbers<[1], [0], [0], [1], [0, 0, 1, 1], [], []>} : vector<16x32xbf16>, vector<32x64xbf16>, vector<16x64xf32> -> vector<16x64xf32>
    %c0_303 = arith.constant 0 : index
    %c3_304 = arith.constant 3 : index
    %c0_305 = arith.constant 0 : index
    %c0_306 = arith.constant 0 : index
    %639 = vector.load %arg12[%c0_303, %c3_304, %c0_305, %c0_306] : memref<1x4x1x64xf32, #tpu.memory_space<vmem>>, vector<1x1x1x64xf32>
    %640 = vector.shape_cast %639 : vector<1x1x1x64xf32> to vector<1x64xf32>
    %641 = vector.broadcast %640 : vector<1x64xf32> to vector<16x64xf32>
    %642 = arith.addf %638, %641 : vector<16x64xf32>
    %cst_307 = arith.constant 5.000000e-01 : f32
    %643 = vector.broadcast %cst_307 : f32 to vector<16x64xf32>
    %644 = arith.mulf %643, %642 : vector<16x64xf32>
    %cst_308 = arith.constant 4.471500e-02 : f32
    %645 = vector.broadcast %cst_308 : f32 to vector<16x64xf32>
    %646 = arith.mulf %645, %642 : vector<16x64xf32>
    %647 = arith.mulf %646, %642 : vector<16x64xf32>
    %648 = arith.mulf %647, %642 : vector<16x64xf32>
    %649 = arith.addf %642, %648 : vector<16x64xf32>
    %cst_309 = arith.constant 0.797884583 : f32
    %650 = vector.broadcast %cst_309 : f32 to vector<16x64xf32>
    %651 = arith.mulf %650, %649 : vector<16x64xf32>
    %652 = math.tanh %651 : vector<16x64xf32>
    %cst_310 = arith.constant 1.000000e+00 : f32
    %653 = vector.broadcast %cst_310 : f32 to vector<16x64xf32>
    %654 = arith.addf %653, %652 : vector<16x64xf32>
    %655 = arith.mulf %644, %654 : vector<16x64xf32>
    %656 = arith.truncf %655 : vector<16x64xf32> to vector<16x64xbf16>
    %c0_311 = arith.constant 0 : index
    %c3_312 = arith.constant 3 : index
    %c0_313 = arith.constant 0 : index
    %c0_314 = arith.constant 0 : index
    %657 = vector.load %arg13[%c0_311, %c3_312, %c0_313, %c0_314] : memref<1x4x64x32xbf16, #tpu.memory_space<vmem>>, vector<1x1x64x32xbf16>
    %658 = vector.shape_cast %657 : vector<1x1x64x32xbf16> to vector<64x32xbf16>
    %cst_315 = arith.constant dense<0.000000e+00> : vector<16x32xf32>
    %659 = tpu.matmul %656, %658, %cst_315 {dimension_numbers = #tpu.dot_dimension_numbers<[1], [0], [0], [1], [0, 0, 1, 1], [], []>} : vector<16x64xbf16>, vector<64x32xbf16>, vector<16x32xf32> -> vector<16x32xf32>
    %c0_316 = arith.constant 0 : index
    %c3_317 = arith.constant 3 : index
    %c0_318 = arith.constant 0 : index
    %c0_319 = arith.constant 0 : index
    %660 = vector.load %arg14[%c0_316, %c3_317, %c0_318, %c0_319] : memref<1x4x1x32xf32, #tpu.memory_space<vmem>>, vector<1x1x1x32xf32>
    %661 = vector.shape_cast %660 : vector<1x1x1x32xf32> to vector<1x32xf32>
    %662 = vector.broadcast %661 : vector<1x32xf32> to vector<16x32xf32>
    %663 = arith.addf %659, %662 : vector<16x32xf32>
    %664 = arith.addf %634, %663 : vector<16x32xf32>
    %c0_320 = arith.constant 0 : index
    %c3_321 = arith.constant 3 : index
    %c0_322 = arith.constant 0 : index
    %c0_323 = arith.constant 0 : index
    %665 = vector.load %arg15[%c0_320, %c3_321, %c0_322, %c0_323] : memref<1x4x1x32xf32, #tpu.memory_space<vmem>>, vector<1x1x1x32xf32>
    %666 = vector.shape_cast %665 : vector<1x1x1x32xf32> to vector<1x32xf32>
    %c0_324 = arith.constant 0 : index
    %c3_325 = arith.constant 3 : index
    %c0_326 = arith.constant 0 : index
    %c0_327 = arith.constant 0 : index
    %667 = vector.load %arg16[%c0_324, %c3_325, %c0_326, %c0_327] : memref<1x4x1x32xf32, #tpu.memory_space<vmem>>, vector<1x1x1x32xf32>
    %668 = vector.shape_cast %667 : vector<1x1x1x32xf32> to vector<1x32xf32>
    %cst_328 = arith.constant dense<0.000000e+00> : vector<16xf32>
    %669 = vector.multi_reduction <add>, %664, %cst_328 [1] : vector<16x32xf32> to vector<16xf32>
    %670 = vector.shape_cast %669 : vector<16xf32> to vector<16x1xf32>
    %cst_329 = arith.constant 3.200000e+01 : f32
    %671 = vector.broadcast %cst_329 : f32 to vector<16x1xf32>
    %672 = arith.divf %670, %671 : vector<16x1xf32>
    %673 = vector.broadcast %672 : vector<16x1xf32> to vector<16x32xf32>
    %674 = arith.subf %664, %673 : vector<16x32xf32>
    %675 = arith.mulf %674, %674 : vector<16x32xf32>
    %cst_330 = arith.constant dense<0.000000e+00> : vector<16xf32>
    %676 = vector.multi_reduction <add>, %675, %cst_330 [1] : vector<16x32xf32> to vector<16xf32>
    %677 = vector.shape_cast %676 : vector<16xf32> to vector<16x1xf32>
    %cst_331 = arith.constant 3.200000e+01 : f32
    %678 = vector.broadcast %cst_331 : f32 to vector<16x1xf32>
    %679 = arith.divf %677, %678 : vector<16x1xf32>
    %cst_332 = arith.constant 1.000000e-07 : f32
    %680 = vector.broadcast %cst_332 : f32 to vector<16x1xf32>
    %681 = arith.addf %679, %680 : vector<16x1xf32>
    %682 = math.rsqrt %681 : vector<16x1xf32>
    %683 = vector.broadcast %682 : vector<16x1xf32> to vector<16x32xf32>
    %684 = arith.mulf %674, %683 : vector<16x32xf32>
    %685 = vector.broadcast %666 : vector<1x32xf32> to vector<16x32xf32>
    %686 = arith.mulf %684, %685 : vector<16x32xf32>
    %687 = vector.broadcast %668 : vector<1x32xf32> to vector<16x32xf32>
    %688 = arith.addf %686, %687 : vector<16x32xf32>
    %689 = vector.shape_cast %688 : vector<16x32xf32> to vector<2x8x32xf32>
    %690 = vector.extract_strided_slice %689 {offsets = [0, 0, 0], sizes = [2, 1, 32], strides = [1, 1, 1]} : vector<2x8x32xf32> to vector<2x1x32xf32>
    %691 = vector.shape_cast %690 : vector<2x1x32xf32> to vector<2x32xf32>
    %692 = tpu.concatenate %691, %525, %359, %193 in 1 : vector<2x32xf32>, vector<2x32xf32>, vector<2x32xf32>, vector<2x32xf32> -> vector<2x128xf32>
    %c0_333 = arith.constant 0 : index
    %c0_334 = arith.constant 0 : index
    %c0_335 = arith.constant 0 : index
    %693 = vector.load %arg17[%c0_333, %c0_334, %c0_335] : memref<1x2x128xf32, #tpu.memory_space<vmem>>, vector<1x2x128xf32>
    %694 = vector.shape_cast %693 : vector<1x2x128xf32> to vector<2x128xf32>
    %695 = vector.shape_cast %692 : vector<2x128xf32> to vector<1x2x128xf32>
    tpu.vector_store %arg17[%c0_333, %c0_334, %c0_335], %695 {strides = array<i32>} : memref<1x2x128xf32, #tpu.memory_space<vmem>>, vector<1x2x128xf32>,
    return
  }
  func.func @transform_0(%arg0: i32) -> (i32, i32, i32) {
    %c0_i32 = arith.constant 0 : i32
    %c0_i32_0 = arith.constant 0 : i32
    %c0_i32_1 = arith.constant 0 : i32
    return %arg0, %c0_i32, %c0_i32_0 : i32, i32, i32
  }
  func.func @transform_1(%arg0: i32) -> (i32, i32, i32, i32) {
    %c0_i32 = arith.constant 0 : i32
    %c0_i32_0 = arith.constant 0 : i32
    %c0_i32_1 = arith.constant 0 : i32
    %c0_i32_2 = arith.constant 0 : i32
    return %arg0, %c0_i32, %c0_i32_0, %c0_i32_1 : i32, i32, i32, i32
  }
  func.func @transform_2(%arg0: i32) -> (i32, i32, i32) {
    %c0_i32 = arith.constant 0 : i32
    %c0_i32_0 = arith.constant 0 : i32
    %c0_i32_1 = arith.constant 0 : i32
    return %arg0, %c0_i32, %c0_i32_0 : i32, i32, i32
  }
  func.func @transform_3(%arg0: i32) -> (i32, i32, i32) {
    %c0_i32 = arith.constant 0 : i32
    %c0_i32_0 = arith.constant 0 : i32
    %c0_i32_1 = arith.constant 0 : i32
    return %arg0, %c0_i32, %c0_i32_0 : i32, i32, i32
  }
  func.func @transform_4(%arg0: i32) -> (i32, i32, i32, i32) {
    %c0_i32 = arith.constant 0 : i32
    %c0_i32_0 = arith.constant 0 : i32
    %c0_i32_1 = arith.constant 0 : i32
    %c0_i32_2 = arith.constant 0 : i32
    return %arg0, %c0_i32, %c0_i32_0, %c0_i32_1 : i32, i32, i32, i32
  }
  func.func @transform_5(%arg0: i32) -> (i32, i32, i32, i32) {
    %c0_i32 = arith.constant 0 : i32
    %c0_i32_0 = arith.constant 0 : i32
    %c0_i32_1 = arith.constant 0 : i32
    %c0_i32_2 = arith.constant 0 : i32
    return %arg0, %c0_i32, %c0_i32_0, %c0_i32_1 : i32, i32, i32, i32
  }
  func.func @transform_6(%arg0: i32) -> (i32, i32, i32, i32) {
    %c0_i32 = arith.constant 0 : i32
    %c0_i32_0 = arith.constant 0 : i32
    %c0_i32_1 = arith.constant 0 : i32
    %c0_i32_2 = arith.constant 0 : i32
    return %arg0, %c0_i32, %c0_i32_0, %c0_i32_1 : i32, i32, i32, i32
  }
  func.func @transform_7(%arg0: i32) -> (i32, i32, i32, i32) {
    %c0_i32 = arith.constant 0 : i32
    %c0_i32_0 = arith.constant 0 : i32
    %c0_i32_1 = arith.constant 0 : i32
    %c0_i32_2 = arith.constant 0 : i32
    return %arg0, %c0_i32, %c0_i32_0, %c0_i32_1 : i32, i32, i32, i32
  }
  func.func @transform_8(%arg0: i32) -> (i32, i32, i32, i32) {
    %c0_i32 = arith.constant 0 : i32
    %c0_i32_0 = arith.constant 0 : i32
    %c0_i32_1 = arith.constant 0 : i32
    %c0_i32_2 = arith.constant 0 : i32
    return %arg0, %c0_i32, %c0_i32_0, %c0_i32_1 : i32, i32, i32, i32
  }
  func.func @transform_9(%arg0: i32) -> (i32, i32, i32, i32) {
    %c0_i32 = arith.constant 0 : i32
    %c0_i32_0 = arith.constant 0 : i32
    %c0_i32_1 = arith.constant 0 : i32
    %c0_i32_2 = arith.constant 0 : i32
    return %arg0, %c0_i32, %c0_i32_0, %c0_i32_1 : i32, i32, i32, i32
  }
  func.func @transform_10(%arg0: i32) -> (i32, i32, i32, i32) {
    %c0_i32 = arith.constant 0 : i32
    %c0_i32_0 = arith.constant 0 : i32
    %c0_i32_1 = arith.constant 0 : i32
    %c0_i32_2 = arith.constant 0 : i32
    return %arg0, %c0_i32, %c0_i32_0, %c0_i32_1 : i32, i32, i32, i32
  }
  func.func @transform_11(%arg0: i32) -> (i32, i32, i32, i32) {
    %c0_i32 = arith.constant 0 : i32
    %c0_i32_0 = arith.constant 0 : i32
    %c0_i32_1 = arith.constant 0 : i32
    %c0_i32_2 = arith.constant 0 : i32
    return %arg0, %c0_i32, %c0_i32_0, %c0_i32_1 : i32, i32, i32, i32
  }
  func.func @transform_12(%arg0: i32) -> (i32, i32, i32, i32) {
    %c0_i32 = arith.constant 0 : i32
    %c0_i32_0 = arith.constant 0 : i32
    %c0_i32_1 = arith.constant 0 : i32
    %c0_i32_2 = arith.constant 0 : i32
    return %arg0, %c0_i32, %c0_i32_0, %c0_i32_1 : i32, i32, i32, i32
  }
  func.func @transform_13(%arg0: i32) -> (i32, i32, i32, i32) {
    %c0_i32 = arith.constant 0 : i32
    %c0_i32_0 = arith.constant 0 : i32
    %c0_i32_1 = arith.constant 0 : i32
    %c0_i32_2 = arith.constant 0 : i32
    return %arg0, %c0_i32, %c0_i32_0, %c0_i32_1 : i32, i32, i32, i32
  }
  func.func @transform_14(%arg0: i32) -> (i32, i32, i32, i32) {
    %c0_i32 = arith.constant 0 : i32
    %c0_i32_0 = arith.constant 0 : i32
    %c0_i32_1 = arith.constant 0 : i32
    %c0_i32_2 = arith.constant 0 : i32
    return %arg0, %c0_i32, %c0_i32_0, %c0_i32_1 : i32, i32, i32, i32
  }
  func.func @transform_15(%arg0: i32) -> (i32, i32, i32, i32) {
    %c0_i32 = arith.constant 0 : i32
    %c0_i32_0 = arith.constant 0 : i32
    %c0_i32_1 = arith.constant 0 : i32
    %c0_i32_2 = arith.constant 0 : i32
    return %arg0, %c0_i32, %c0_i32_0, %c0_i32_1 : i32, i32, i32, i32
  }
  func.func @transform_16(%arg0: i32) -> (i32, i32, i32) {
    %c0_i32 = arith.constant 0 : i32
    %c0_i32_0 = arith.constant 0 : i32
    %c0_i32_1 = arith.constant 0 : i32
    return %arg0, %c0_i32, %c0_i32_0 : i32, i32, i32
  }
}

</mosaic_0001>

<llo_original>
// kernel: my_model_forward.1
$region0: #{my_model_forward.1}
  #allocation0 [shape = 'u32[]', space=smem, size = 0x4, offset = 0x4, fixed_abs, tag = 'smem constant byte address 0x4 - core index']
  #allocation1 [shape = 'u32[144,128]{1,0:T(1,128)}', space=vmem, size = 0x12000, scoped, tag = 'internal scratch']
  %s0 = inlined_call_operand.vmem [shape: f32[2,16,32], index: 0, kind: input, shape index: {}]
  %s1 = inlined_call_operand.vmem [shape: f32[2,2,1,8], index: 1, kind: input, shape index: {}]
  %s2 = inlined_call_operand.vmem [shape: f32[2,1,32], index: 2, kind: input, shape index: {}]
  %s3 = inlined_call_operand.vmem [shape: f32[2,1,32], index: 3, kind: input, shape index: {}]
  %s4 = inlined_call_operand.vmem [shape: bf16[2,4,32,96], index: 4, kind: input, shape index: {}]
  %s5 = inlined_call_operand.vmem [shape: f32[2,4,1,96], index: 5, kind: input, shape index: {}]
  %s6 = inlined_call_operand.vmem [shape: bf16[2,4,32,32], index: 6, kind: input, shape index: {}]
  %s7 = inlined_call_operand.vmem [shape: f32[2,4,1,32], index: 7, kind: input, shape index: {}]
  %s8 = inlined_call_operand.vmem [shape: f32[2,4,1,32], index: 8, kind: input, shape index: {}]
  %s9 = inlined_call_operand.vmem [shape: f32[2,4,1,32], index: 9, kind: input, shape index: {}]
  %s10 = inlined_call_operand.vmem [shape: bf16[2,4,32,64], index: 10, kind: input, shape index: {}]
  %s11 = inlined_call_operand.vmem [shape: f32[2,4,1,64], index: 11, kind: input, shape index: {}]
  %s12 = inlined_call_operand.vmem [shape: bf16[2,4,64,32], index: 12, kind: input, shape index: {}]
  %s13 = inlined_call_operand.vmem [shape: f32[2,4,1,32], index: 13, kind: input, shape index: {}]
  %s14 = inlined_call_operand.vmem [shape: f32[2,4,1,32], index: 14, kind: input, shape index: {}]
  %s15 = inlined_call_operand.vmem [shape: f32[2,4,1,32], index: 15, kind: input, shape index: {}]
  %s16 = inlined_call_operand.vmem [shape: f32[2,2,128], index: 16, kind: output, shape index: {}]
  %s17 = sld [smem:[#allocation0]]
  $region97: #{my_model_forward.1} parent=0
    _
  %s19 = ssub.s32 1, %s17
  %s20 = scalar_select 0, %s19, %s17
  loop: start=0, step=1, limit=4
  $region2: #{my_model_forward.1} parent=0 // loop_pre_header
    _
  $region3: #{my_model_forward.1} parent=0 // loop_header
    %s22 = sphi 0, %s26
    %p23 = scmp.ge.s32.totalorder %s22, 4
    %s32 = sphi 0, %s34
    %s35 = sphi 0, %s32
    %s36 = sphi 0, %s35
    %s52 = sphi 0, %s36
    %s58 = sphi 0, %s60
    %s61 = sphi 0, %s58
    %s62 = sphi 0, %s61
    %s78 = sphi 0, %s62
    %s84 = sphi 0, %s86
    %s87 = sphi 0, %s84
    %s88 = sphi 0, %s87
    %s104 = sphi 0, %s88
    %s110 = sphi 0, %s112
    %s113 = sphi 0, %s110
    %s114 = sphi 0, %s113
    %s130 = sphi 0, %s114
    %s136 = sphi 0, %s138
    %s139 = sphi 0, %s136
    %s140 = sphi 0, %s139
    %s156 = sphi 0, %s140
    %s162 = sphi 0, %s164
    %s165 = sphi 0, %s162
    %s166 = sphi 0, %s165
    %s182 = sphi 0, %s166
    %s188 = sphi 0, %s190
    %s191 = sphi 0, %s188
    %s192 = sphi 0, %s191
    %s208 = sphi 0, %s192
    %s214 = sphi 0, %s216
    %s217 = sphi 0, %s214
    %s218 = sphi 0, %s217
    %s234 = sphi 0, %s218
    %s240 = sphi 0, %s242
    %s243 = sphi 0, %s240
    %s244 = sphi 0, %s243
    %s260 = sphi 0, %s244
    %s266 = sphi 0, %s268
    %s269 = sphi 0, %s266
    %s270 = sphi 0, %s269
    %s286 = sphi 0, %s270
    %s292 = sphi 0, %s294
    %s295 = sphi 0, %s292
    %s296 = sphi 0, %s295
    %s312 = sphi 0, %s296
    %s318 = sphi 0, %s320
    %s321 = sphi 0, %s318
    %s322 = sphi 0, %s321
    %s338 = sphi 0, %s322
    %s344 = sphi 0, %s346
    %s347 = sphi 0, %s344
    %s348 = sphi 0, %s347
    %s364 = sphi 0, %s348
    %s370 = sphi 0, %s372
    %s373 = sphi 0, %s370
    %s374 = sphi 0, %s373
    %s390 = sphi 0, %s374
    %s396 = sphi 0, %s398
    %s399 = sphi 0, %s396
    %s400 = sphi 0, %s399
    %s416 = sphi 0, %s400
    %s422 = sphi 0, %s424
    %s425 = sphi 0, %s422
    %s426 = sphi 0, %s425
    %s442 = sphi 0, %s426
    %s448 = sphi 0, %s450
    %s451 = sphi 0, %s448
    %s452 = sphi 0, %s451
    %s468 = sphi 0, %s452
  $region4: #{my_model_forward.1} parent=0 // loop_header_branch
    %25 = sbr.rel (%p23) target = $region8
  $region5: #{my_model_forward.1} parent=0 // loop_body
    %s27 = ssub.s32 %s22, 1
    %s28 = ssub.s32 %s22, 2
    %s29 = sadd.s32 %s22, 1
    %s30 = ssub.s32 %s22, %s29
    %p31 = scmp.eq.s32.totalorder %s30, 0
    %s33 = sadd.s32 %s32, 1
    %s34 = scalar_select %p31, %s32, %s33
    %p37 = pneg %p31
    %p38 = scmp.eq.s32.totalorder %s22, 1
    %p39 = por %p37, %p38
    %p40 = scmp.ne.s32.totalorder %s32, %s35
    %p41 = scmp.eq.s32.totalorder %s22, 0
    %p42 = por %p40, %p41
    %p43 = scmp.ne.s32.totalorder %s32, %s35
    %p44 = scmp.eq.s32.totalorder %s27, 1
    %p45 = por %p43, %p44
    %p46 = scmp.ne.s32.totalorder %s35, %s36
    %p47 = scmp.eq.s32.totalorder %s27, 0
    %p48 = por %p46, %p47
    %p49 = scmp.ne.s32.totalorder %s35, %s36
    %p50 = scmp.eq.s32.totalorder %s28, 1
    %p51 = por %p49, %p50
    %p53 = scmp.ne.s32.totalorder %s36, %s52
    %p54 = scmp.eq.s32.totalorder %s28, 0
    %p55 = por %p53, %p54
    %s56 = ssub.s32 %s22, %s29
    %p57 = scmp.eq.s32.totalorder %s56, 0
    %s59 = sadd.s32 %s58, 1
    %s60 = scalar_select %p57, %s58, %s59
    %p63 = pneg %p57
    %p64 = scmp.eq.s32.totalorder %s22, 1
    %p65 = por %p63, %p64
    %p66 = scmp.ne.s32.totalorder %s58, %s61
    %p67 = scmp.eq.s32.totalorder %s22, 0
    %p68 = por %p66, %p67
    %p69 = scmp.ne.s32.totalorder %s58, %s61
    %p70 = scmp.eq.s32.totalorder %s27, 1
    %p71 = por %p69, %p70
    %p72 = scmp.ne.s32.totalorder %s61, %s62
    %p73 = scmp.eq.s32.totalorder %s27, 0
    %p74 = por %p72, %p73
    %p75 = scmp.ne.s32.totalorder %s61, %s62
    %p76 = scmp.eq.s32.totalorder %s28, 1
    %p77 = por %p75, %p76
    %p79 = scmp.ne.s32.totalorder %s62, %s78
    %p80 = scmp.eq.s32.totalorder %s28, 0
    %p81 = por %p79, %p80
    %s82 = ssub.s32 %s22, %s29
    %p83 = scmp.eq.s32.totalorder %s82, 0
    %s85 = sadd.s32 %s84, 1
    %s86 = scalar_select %p83, %s84, %s85
    %p89 = pneg %p83
    %p90 = scmp.eq.s32.totalorder %s22, 1
    %p91 = por %p89, %p90
    %p92 = scmp.ne.s32.totalorder %s84, %s87
    %p93 = scmp.eq.s32.totalorder %s22, 0
    %p94 = por %p92, %p93
    %p95 = scmp.ne.s32.totalorder %s84, %s87
    %p96 = scmp.eq.s32.totalorder %s27, 1
    %p97 = por %p95, %p96
    %p98 = scmp.ne.s32.totalorder %s87, %s88
    %p99 = scmp.eq.s32.totalorder %s27, 0
    %p100 = por %p98, %p99
    %p101 = scmp.ne.s32.totalorder %s87, %s88
    %p102 = scmp.eq.s32.totalorder %s28, 1
    %p103 = por %p101, %p102
    %p105 = scmp.ne.s32.totalorder %s88, %s104
    %p106 = scmp.eq.s32.totalorder %s28, 0
    %p107 = por %p105, %p106
    %s108 = ssub.s32 %s22, %s29
    %p109 = scmp.eq.s32.totalorder %s108, 0
    %s111 = sadd.s32 %s110, 1
    %s112 = scalar_select %p109, %s110, %s111
    %p115 = pneg %p109
    %p116 = scmp.eq.s32.totalorder %s22, 1
    %p117 = por %p115, %p116
    %p118 = scmp.ne.s32.totalorder %s110, %s113
    %p119 = scmp.eq.s32.totalorder %s22, 0
    %p120 = por %p118, %p119
    %p121 = scmp.ne.s32.totalorder %s110, %s113
    %p122 = scmp.eq.s32.totalorder %s27, 1
    %p123 = por %p121, %p122
    %p124 = scmp.ne.s32.totalorder %s113, %s114
    %p125 = scmp.eq.s32.totalorder %s27, 0
    %p126 = por %p124, %p125
    %p127 = scmp.ne.s32.totalorder %s113, %s114
    %p128 = scmp.eq.s32.totalorder %s28, 1
    %p129 = por %p127, %p128
    %p131 = scmp.ne.s32.totalorder %s114, %s130
    %p132 = scmp.eq.s32.totalorder %s28, 0
    %p133 = por %p131, %p132
    %s134 = ssub.s32 %s22, %s29
    %p135 = scmp.eq.s32.totalorder %s134, 0
    %s137 = sadd.s32 %s136, 1
    %s138 = scalar_select %p135, %s136, %s137
    %p141 = pneg %p135
    %p142 = scmp.eq.s32.totalorder %s22, 1
    %p143 = por %p141, %p142
    %p144 = scmp.ne.s32.totalorder %s136, %s139
    %p145 = scmp.eq.s32.totalorder %s22, 0
    %p146 = por %p144, %p145
    %p147 = scmp.ne.s32.totalorder %s136, %s139
    %p148 = scmp.eq.s32.totalorder %s27, 1
    %p149 = por %p147, %p148
    %p150 = scmp.ne.s32.totalorder %s139, %s140
    %p151 = scmp.eq.s32.totalorder %s27, 0
    %p152 = por %p150, %p151
    %p153 = scmp.ne.s32.totalorder %s139, %s140
    %p154 = scmp.eq.s32.totalorder %s28, 1
    %p155 = por %p153, %p154
    %p157 = scmp.ne.s32.totalorder %s140, %s156
    %p158 = scmp.eq.s32.totalorder %s28, 0
    %p159 = por %p157, %p158
    %s160 = ssub.s32 %s22, %s29
    %p161 = scmp.eq.s32.totalorder %s160, 0
    %s163 = sadd.s32 %s162, 1
    %s164 = scalar_select %p161, %s162, %s163
    %p167 = pneg %p161
    %p168 = scmp.eq.s32.totalorder %s22, 1
    %p169 = por %p167, %p168
    %p170 = scmp.ne.s32.totalorder %s162, %s165
    %p171 = scmp.eq.s32.totalorder %s22, 0
    %p172 = por %p170, %p171
    %p173 = scmp.ne.s32.totalorder %s162, %s165
    %p174 = scmp.eq.s32.totalorder %s27, 1
    %p175 = por %p173, %p174
    %p176 = scmp.ne.s32.totalorder %s165, %s166
    %p177 = scmp.eq.s32.totalorder %s27, 0
    %p178 = por %p176, %p177
    %p179 = scmp.ne.s32.totalorder %s165, %s166
    %p180 = scmp.eq.s32.totalorder %s28, 1
    %p181 = por %p179, %p180
    %p183 = scmp.ne.s32.totalorder %s166, %s182
    %p184 = scmp.eq.s32.totalorder %s28, 0
    %p185 = por %p183, %p184
    %s186 = ssub.s32 %s22, %s29
    %p187 = scmp.eq.s32.totalorder %s186, 0
    %s189 = sadd.s32 %s188, 1
    %s190 = scalar_select %p187, %s188, %s189
    %p193 = pneg %p187
    %p194 = scmp.eq.s32.totalorder %s22, 1
    %p195 = por %p193, %p194
    %p196 = scmp.ne.s32.totalorder %s188, %s191
    %p197 = scmp.eq.s32.totalorder %s22, 0
    %p198 = por %p196, %p197
    %p199 = scmp.ne.s32.totalorder %s188, %s191
    %p200 = scmp.eq.s32.totalorder %s27, 1
    %p201 = por %p199, %p200
    %p202 = scmp.ne.s32.totalorder %s191, %s192
    %p203 = scmp.eq.s32.totalorder %s27, 0
    %p204 = por %p202, %p203
    %p205 = scmp.ne.s32.totalorder %s191, %s192
    %p206 = scmp.eq.s32.totalorder %s28, 1
    %p207 = por %p205, %p206
    %p209 = scmp.ne.s32.totalorder %s192, %s208
    %p210 = scmp.eq.s32.totalorder %s28, 0
    %p211 = por %p209, %p210
    %s212 = ssub.s32 %s22, %s29
    %p213 = scmp.eq.s32.totalorder %s212, 0
    %s215 = sadd.s32 %s214, 1
    %s216 = scalar_select %p213, %s214, %s215
    %p219 = pneg %p213
    %p220 = scmp.eq.s32.totalorder %s22, 1
    %p221 = por %p219, %p220
    %p222 = scmp.ne.s32.totalorder %s214, %s217
    %p223 = scmp.eq.s32.totalorder %s22, 0
    %p224 = por %p222, %p223
    %p225 = scmp.ne.s32.totalorder %s214, %s217
    %p226 = scmp.eq.s32.totalorder %s27, 1
    %p227 = por %p225, %p226
    %p228 = scmp.ne.s32.totalorder %s217, %s218
    %p229 = scmp.eq.s32.totalorder %s27, 0
    %p230 = por %p228, %p229
    %p231 = scmp.ne.s32.totalorder %s217, %s218
    %p232 = scmp.eq.s32.totalorder %s28, 1
    %p233 = por %p231, %p232
    %p235 = scmp.ne.s32.totalorder %s218, %s234
    %p236 = scmp.eq.s32.totalorder %s28, 0
    %p237 = por %p235, %p236
    %s238 = ssub.s32 %s22, %s29
    %p239 = scmp.eq.s32.totalorder %s238, 0
    %s241 = sadd.s32 %s240, 1
    %s242 = scalar_select %p239, %s240, %s241
    %p245 = pneg %p239
    %p246 = scmp.eq.s32.totalorder %s22, 1
    %p247 = por %p245, %p246
    %p248 = scmp.ne.s32.totalorder %s240, %s243
    %p249 = scmp.eq.s32.totalorder %s22, 0
    %p250 = por %p248, %p249
    %p251 = scmp.ne.s32.totalorder %s240, %s243
    %p252 = scmp.eq.s32.totalorder %s27, 1
    %p253 = por %p251, %p252
    %p254 = scmp.ne.s32.totalorder %s243, %s244
    %p255 = scmp.eq.s32.totalorder %s27, 0
    %p256 = por %p254, %p255
    %p257 = scmp.ne.s32.totalorder %s243, %s244
    %p258 = scmp.eq.s32.totalorder %s28, 1
    %p259 = por %p257, %p258
    %p261 = scmp.ne.s32.totalorder %s244, %s260
    %p262 = scmp.eq.s32.totalorder %s28, 0
    %p263 = por %p261, %p262
    %s264 = ssub.s32 %s22, %s29
    %p265 = scmp.eq.s32.totalorder %s264, 0
    %s267 = sadd.s32 %s266, 1
    %s268 = scalar_select %p265, %s266, %s267
    %p271 = pneg %p265
    %p272 = scmp.eq.s32.totalorder %s22, 1
    %p273 = por %p271, %p272
    %p274 = scmp.ne.s32.totalorder %s266, %s269
    %p275 = scmp.eq.s32.totalorder %s22, 0
    %p276 = por %p274, %p275
    %p277 = scmp.ne.s32.totalorder %s266, %s269
    %p278 = scmp.eq.s32.totalorder %s27, 1
    %p279 = por %p277, %p278
    %p280 = scmp.ne.s32.totalorder %s269, %s270
    %p281 = scmp.eq.s32.totalorder %s27, 0
    %p282 = por %p280, %p281
    %p283 = scmp.ne.s32.totalorder %s269, %s270
    %p284 = scmp.eq.s32.totalorder %s28, 1
    %p285 = por %p283, %p284
    %p287 = scmp.ne.s32.totalorder %s270, %s286
    %p288 = scmp.eq.s32.totalorder %s28, 0
    %p289 = por %p287, %p288
    %s290 = ssub.s32 %s22, %s29
    %p291 = scmp.eq.s32.totalorder %s290, 0
    %s293 = sadd.s32 %s292, 1
    %s294 = scalar_select %p291, %s292, %s293
    %p297 = pneg %p291
    %p298 = scmp.eq.s32.totalorder %s22, 1
    %p299 = por %p297, %p298
    %p300 = scmp.ne.s32.totalorder %s292, %s295
    %p301 = scmp.eq.s32.totalorder %s22, 0
    %p302 = por %p300, %p301
    %p303 = scmp.ne.s32.totalorder %s292, %s295
    %p304 = scmp.eq.s32.totalorder %s27, 1
    %p305 = por %p303, %p304
    %p306 = scmp.ne.s32.totalorder %s295, %s296
    %p307 = scmp.eq.s32.totalorder %s27, 0
    %p308 = por %p306, %p307
    %p309 = scmp.ne.s32.totalorder %s295, %s296
    %p310 = scmp.eq.s32.totalorder %s28, 1
    %p311 = por %p309, %p310
    %p313 = scmp.ne.s32.totalorder %s296, %s312
    %p314 = scmp.eq.s32.totalorder %s28, 0
    %p315 = por %p313, %p314
    %s316 = ssub.s32 %s22, %s29
    %p317 = scmp.eq.s32.totalorder %s316, 0
    %s319 = sadd.s32 %s318, 1
    %s320 = scalar_select %p317, %s318, %s319
    %p323 = pneg %p317
    %p324 = scmp.eq.s32.totalorder %s22, 1
    %p325 = por %p323, %p324
    %p326 = scmp.ne.s32.totalorder %s318, %s321
    %p327 = scmp.eq.s32.totalorder %s22, 0
    %p328 = por %p326, %p327
    %p329 = scmp.ne.s32.totalorder %s318, %s321
    %p330 = scmp.eq.s32.totalorder %s27, 1
    %p331 = por %p329, %p330
    %p332 = scmp.ne.s32.totalorder %s321, %s322
    %p333 = scmp.eq.s32.totalorder %s27, 0
    %p334 = por %p332, %p333
    %p335 = scmp.ne.s32.totalorder %s321, %s322
    %p336 = scmp.eq.s32.totalorder %s28, 1
    %p337 = por %p335, %p336
    %p339 = scmp.ne.s32.totalorder %s322, %s338
    %p340 = scmp.eq.s32.totalorder %s28, 0
    %p341 = por %p339, %p340
    %s342 = ssub.s32 %s22, %s29
    %p343 = scmp.eq.s32.totalorder %s342, 0
    %s345 = sadd.s32 %s344, 1
    %s346 = scalar_select %p343, %s344, %s345
    %p349 = pneg %p343
    %p350 = scmp.eq.s32.totalorder %s22, 1
    %p351 = por %p349, %p350
    %p352 = scmp.ne.s32.totalorder %s344, %s347
    %p353 = scmp.eq.s32.totalorder %s22, 0
    %p354 = por %p352, %p353
    %p355 = scmp.ne.s32.totalorder %s344, %s347
    %p356 = scmp.eq.s32.totalorder %s27, 1
    %p357 = por %p355, %p356
    %p358 = scmp.ne.s32.totalorder %s347, %s348
    %p359 = scmp.eq.s32.totalorder %s27, 0
    %p360 = por %p358, %p359
    %p361 = scmp.ne.s32.totalorder %s347, %s348
    %p362 = scmp.eq.s32.totalorder %s28, 1
    %p363 = por %p361, %p362
    %p365 = scmp.ne.s32.totalorder %s348, %s364
    %p366 = scmp.eq.s32.totalorder %s28, 0
    %p367 = por %p365, %p366
    %s368 = ssub.s32 %s22, %s29
    %p369 = scmp.eq.s32.totalorder %s368, 0
    %s371 = sadd.s32 %s370, 1
    %s372 = scalar_select %p369, %s370, %s371
    %p375 = pneg %p369
    %p376 = scmp.eq.s32.totalorder %s22, 1
    %p377 = por %p375, %p376
    %p378 = scmp.ne.s32.totalorder %s370, %s373
    %p379 = scmp.eq.s32.totalorder %s22, 0
    %p380 = por %p378, %p379
    %p381 = scmp.ne.s32.totalorder %s370, %s373
    %p382 = scmp.eq.s32.totalorder %s27, 1
    %p383 = por %p381, %p382
    %p384 = scmp.ne.s32.totalorder %s373, %s374
    %p385 = scmp.eq.s32.totalorder %s27, 0
    %p386 = por %p384, %p385
    %p387 = scmp.ne.s32.totalorder %s373, %s374
    %p388 = scmp.eq.s32.totalorder %s28, 1
    %p389 = por %p387, %p388
    %p391 = scmp.ne.s32.totalorder %s374, %s390
    %p392 = scmp.eq.s32.totalorder %s28, 0
    %p393 = por %p391, %p392
    %s394 = ssub.s32 %s22, %s29
    %p395 = scmp.eq.s32.totalorder %s394, 0
    %s397 = sadd.s32 %s396, 1
    %s398 = scalar_select %p395, %s396, %s397
    %p401 = pneg %p395
    %p402 = scmp.eq.s32.totalorder %s22, 1
    %p403 = por %p401, %p402
    %p404 = scmp.ne.s32.totalorder %s396, %s399
    %p405 = scmp.eq.s32.totalorder %s22, 0
    %p406 = por %p404, %p405
    %p407 = scmp.ne.s32.totalorder %s396, %s399
    %p408 = scmp.eq.s32.totalorder %s27, 1
    %p409 = por %p407, %p408
    %p410 = scmp.ne.s32.totalorder %s399, %s400
    %p411 = scmp.eq.s32.totalorder %s27, 0
    %p412 = por %p410, %p411
    %p413 = scmp.ne.s32.totalorder %s399, %s400
    %p414 = scmp.eq.s32.totalorder %s28, 1
    %p415 = por %p413, %p414
    %p417 = scmp.ne.s32.totalorder %s400, %s416
    %p418 = scmp.eq.s32.totalorder %s28, 0
    %p419 = por %p417, %p418
    %s420 = ssub.s32 %s22, %s29
    %p421 = scmp.eq.s32.totalorder %s420, 0
    %s423 = sadd.s32 %s422, 1
    %s424 = scalar_select %p421, %s422, %s423
    %p427 = pneg %p421
    %p428 = scmp.eq.s32.totalorder %s22, 1
    %p429 = por %p427, %p428
    %p430 = scmp.ne.s32.totalorder %s422, %s425
    %p431 = scmp.eq.s32.totalorder %s22, 0
    %p432 = por %p430, %p431
    %p433 = scmp.ne.s32.totalorder %s422, %s425
    %p434 = scmp.eq.s32.totalorder %s27, 1
    %p435 = por %p433, %p434
    %p436 = scmp.ne.s32.totalorder %s425, %s426
    %p437 = scmp.eq.s32.totalorder %s27, 0
    %p438 = por %p436, %p437
    %p439 = scmp.ne.s32.totalorder %s425, %s426
    %p440 = scmp.eq.s32.totalorder %s28, 1
    %p441 = por %p439, %p440
    %p443 = scmp.ne.s32.totalorder %s426, %s442
    %p444 = scmp.eq.s32.totalorder %s28, 0
    %p445 = por %p443, %p444
    %s446 = ssub.s32 %s22, %s29
    %p447 = scmp.eq.s32.totalorder %s446, 0
    %s449 = sadd.s32 %s448, 1
    %s450 = scalar_select %p447, %s448, %s449
    %p453 = pneg %p447
    %p454 = scmp.eq.s32.totalorder %s22, 1
    %p455 = por %p453, %p454
    %p456 = scmp.ne.s32.totalorder %s448, %s451
    %p457 = scmp.eq.s32.totalorder %s22, 0
    %p458 = por %p456, %p457
    %p459 = scmp.ne.s32.totalorder %s448, %s451
    %p460 = scmp.eq.s32.totalorder %s27, 1
    %p461 = por %p459, %p460
    %p462 = scmp.ne.s32.totalorder %s451, %s452
    %p463 = scmp.eq.s32.totalorder %s27, 0
    %p464 = por %p462, %p463
    %p465 = scmp.ne.s32.totalorder %s451, %s452
    %p466 = scmp.eq.s32.totalorder %s28, 1
    %p467 = por %p465, %p466
    %p469 = scmp.ne.s32.totalorder %s452, %s468
    %p470 = scmp.eq.s32.totalorder %s28, 0
    %p471 = por %p469, %p470
    %p472 = scmp.le.s32.totalorder 1, %s22
    %p473 = scmp.lt.s32.totalorder %s22, 3
    %p474 = pnand %p472, %p473
    %p475 = pneg %p474
    // Predicated region
    $region9: #{my_model_forward.1} parent=5 // pred_check
      _
    $region10: #{my_model_forward.1} parent=5 // pred_check_branch
      %477 = sbr.rel (%p474) target = $region12
    $region11: #{my_model_forward.1} parent=5 // pred_region
      %s478 = ssub.s32 %s22, 1
    $region12: #{my_model_forward.1} parent=5 // pred_fallthru
      _
    %p479 = scmp.lt.s32.totalorder %s22, 2
    // Predicated region
    $region13: #{my_model_forward.1} parent=5 // pred_check
      %p480 = pneg %p479
    $region14: #{my_model_forward.1} parent=5 // pred_check_branch
      %482 = sbr.rel (%p480) target = $region16
    $region15: #{my_model_forward.1} parent=5 // pred_region
      // Predicated region
      $region17: #{my_model_forward.1} parent=15 // pred_check
        %p483 = pneg %p42
      $region18: #{my_model_forward.1} parent=15 // pred_check_branch
        %485 = sbr.rel (%p483) target = $region20
      $region19: #{my_model_forward.1} parent=15 // pred_region
        %p486 = scmp.lt.s32.totalorder %s22, 1
        %s487 = scalar_select %p486, %s22, 1
        %s488 = smul.addr %s487, 2
        %s489 = smul.addr %s488, 8
        %s490 = scalar_lea.vmem %s0, %s489
      $region20: #{my_model_forward.1} parent=15 // pred_fallthru
        _
      // Predicated region
      $region21: #{my_model_forward.1} parent=15 // pred_check
        %p491 = pneg %p68
      $region22: #{my_model_forward.1} parent=15 // pred_check_branch
        %493 = sbr.rel (%p491) target = $region24
      $region23: #{my_model_forward.1} parent=15 // pred_region
        %p494 = scmp.lt.s32.totalorder %s22, 1
        %s495 = scalar_select %p494, %s22, 1
        %s496 = smul.addr %s495, 2
        %s497 = scalar_lea.vmem %s1, %s496
      $region24: #{my_model_forward.1} parent=15 // pred_fallthru
        _
      // Predicated region
      $region25: #{my_model_forward.1} parent=15 // pred_check
        %p498 = pneg %p94
      $region26: #{my_model_forward.1} parent=15 // pred_check_branch
        %500 = sbr.rel (%p498) target = $region28
      $region27: #{my_model_forward.1} parent=15 // pred_region
        %p501 = scmp.lt.s32.totalorder %s22, 1
        %s502 = scalar_select %p501, %s22, 1
        %s503 = scalar_lea.vmem %s2, %s502
      $region28: #{my_model_forward.1} parent=15 // pred_fallthru
        _
      // Predicated region
      $region29: #{my_model_forward.1} parent=15 // pred_check
        %p504 = pneg %p120
      $region30: #{my_model_forward.1} parent=15 // pred_check_branch
        %506 = sbr.rel (%p504) target = $region32
      $region31: #{my_model_forward.1} parent=15 // pred_region
        %p507 = scmp.lt.s32.totalorder %s22, 1
        %s508 = scalar_select %p507, %s22, 1
        %s509 = scalar_lea.vmem %s3, %s508
      $region32: #{my_model_forward.1} parent=15 // pred_fallthru
        _
      // Predicated region
      $region33: #{my_model_forward.1} parent=15 // pred_check
        %p510 = pneg %p146
      $region34: #{my_model_forward.1} parent=15 // pred_check_branch
        %512 = sbr.rel (%p510) target = $region36
      $region35: #{my_model_forward.1} parent=15 // pred_region
        %p513 = scmp.lt.s32.totalorder %s22, 1
        %s514 = scalar_select %p513, %s22, 1
        %s515 = smul.addr %s514, 16
        %s516 = smul.addr %s515, 4
        %s517 = scalar_lea.vmem %s4, %s516
      $region36: #{my_model_forward.1} parent=15 // pred_fallthru
        _
      // Predicated region
      $region37: #{my_model_forward.1} parent=15 // pred_check
        %p518 = pneg %p172
      $region38: #{my_model_forward.1} parent=15 // pred_check_branch
        %520 = sbr.rel (%p518) target = $region40
      $region39: #{my_model_forward.1} parent=15 // pred_region
        %p521 = scmp.lt.s32.totalorder %s22, 1
        %s522 = scalar_select %p521, %s22, 1
        %s523 = smul.addr %s522, 4
        %s524 = scalar_lea.vmem %s5, %s523
      $region40: #{my_model_forward.1} parent=15 // pred_fallthru
        _
      // Predicated region
      $region41: #{my_model_forward.1} parent=15 // pred_check
        %p525 = pneg %p198
      $region42: #{my_model_forward.1} parent=15 // pred_check_branch
        %527 = sbr.rel (%p525) target = $region44
      $region43: #{my_model_forward.1} parent=15 // pred_region
        %p528 = scmp.lt.s32.totalorder %s22, 1
        %s529 = scalar_select %p528, %s22, 1
        %s530 = smul.addr %s529, 16
        %s531 = smul.addr %s530, 4
        %s532 = scalar_lea.vmem %s6, %s531
      $region44: #{my_model_forward.1} parent=15 // pred_fallthru
        _
      // Predicated region
      $region45: #{my_model_forward.1} parent=15 // pred_check
        %p533 = pneg %p224
      $region46: #{my_model_forward.1} parent=15 // pred_check_branch
        %535 = sbr.rel (%p533) target = $region48
      $region47: #{my_model_forward.1} parent=15 // pred_region
        %p536 = scmp.lt.s32.totalorder %s22, 1
        %s537 = scalar_select %p536, %s22, 1
        %s538 = smul.addr %s537, 4
        %s539 = scalar_lea.vmem %s7, %s538
      $region48: #{my_model_forward.1} parent=15 // pred_fallthru
        _
      // Predicated region
      $region49: #{my_model_forward.1} parent=15 // pred_check
        %p540 = pneg %p250
      $region50: #{my_model_forward.1} parent=15 // pred_check_branch
        %542 = sbr.rel (%p540) target = $region52
      $region51: #{my_model_forward.1} parent=15 // pred_region
        %p543 = scmp.lt.s32.totalorder %s22, 1
        %s544 = scalar_select %p543, %s22, 1
        %s545 = smul.addr %s544, 4
        %s546 = scalar_lea.vmem %s8, %s545
      $region52: #{my_model_forward.1} parent=15 // pred_fallthru
        _
      // Predicated region
      $region53: #{my_model_forward.1} parent=15 // pred_check
        %p547 = pneg %p276
      $region54: #{my_model_forward.1} parent=15 // pred_check_branch
        %549 = sbr.rel (%p547) target = $region56
      $region55: #{my_model_forward.1} parent=15 // pred_region
        %p550 = scmp.lt.s32.totalorder %s22, 1
        %s551 = scalar_select %p550, %s22, 1
        %s552 = smul.addr %s551, 4
        %s553 = scalar_lea.vmem %s9, %s552
      $region56: #{my_model_forward.1} parent=15 // pred_fallthru
        _
      // Predicated region
      $region57: #{my_model_forward.1} parent=15 // pred_check
        %p554 = pneg %p302
      $region58: #{my_model_forward.1} parent=15 // pred_check_branch
        %556 = sbr.rel (%p554) target = $region60
      $region59: #{my_model_forward.1} parent=15 // pred_region
        %p557 = scmp.lt.s32.totalorder %s22, 1
        %s558 = scalar_select %p557, %s22, 1
        %s559 = smul.addr %s558, 16
        %s560 = smul.addr %s559, 4
        %s561 = scalar_lea.vmem %s10, %s560
      $region60: #{my_model_forward.1} parent=15 // pred_fallthru
        _
      // Predicated region
      $region61: #{my_model_forward.1} parent=15 // pred_check
        %p562 = pneg %p328
      $region62: #{my_model_forward.1} parent=15 // pred_check_branch
        %564 = sbr.rel (%p562) target = $region64
      $region63: #{my_model_forward.1} parent=15 // pred_region
        %p565 = scmp.lt.s32.totalorder %s22, 1
        %s566 = scalar_select %p565, %s22, 1
        %s567 = smul.addr %s566, 4
        %s568 = scalar_lea.vmem %s11, %s567
      $region64: #{my_model_forward.1} parent=15 // pred_fallthru
        _
      // Predicated region
      $region65: #{my_model_forward.1} parent=15 // pred_check
        %p569 = pneg %p354
      $region66: #{my_model_forward.1} parent=15 // pred_check_branch
        %571 = sbr.rel (%p569) target = $region68
      $region67: #{my_model_forward.1} parent=15 // pred_region
        %p572 = scmp.lt.s32.totalorder %s22, 1
        %s573 = scalar_select %p572, %s22, 1
        %s574 = smul.addr %s573, 32
        %s575 = smul.addr %s574, 4
        %s576 = scalar_lea.vmem %s12, %s575
      $region68: #{my_model_forward.1} parent=15 // pred_fallthru
        _
      // Predicated region
      $region69: #{my_model_forward.1} parent=15 // pred_check
        %p577 = pneg %p380
      $region70: #{my_model_forward.1} parent=15 // pred_check_branch
        %579 = sbr.rel (%p577) target = $region72
      $region71: #{my_model_forward.1} parent=15 // pred_region
        %p580 = scmp.lt.s32.totalorder %s22, 1
        %s581 = scalar_select %p580, %s22, 1
        %s582 = smul.addr %s581, 4
        %s583 = scalar_lea.vmem %s13, %s582
      $region72: #{my_model_forward.1} parent=15 // pred_fallthru
        _
      // Predicated region
      $region73: #{my_model_forward.1} parent=15 // pred_check
        %p584 = pneg %p406
      $region74: #{my_model_forward.1} parent=15 // pred_check_branch
        %586 = sbr.rel (%p584) target = $region76
      $region75: #{my_model_forward.1} parent=15 // pred_region
        %p587 = scmp.lt.s32.totalorder %s22, 1
        %s588 = scalar_select %p587, %s22, 1
        %s589 = smul.addr %s588, 4
        %s590 = scalar_lea.vmem %s14, %s589
      $region76: #{my_model_forward.1} parent=15 // pred_fallthru
        _
      // Predicated region
      $region77: #{my_model_forward.1} parent=15 // pred_check
        %p591 = pneg %p432
      $region78: #{my_model_forward.1} parent=15 // pred_check_branch
        %593 = sbr.rel (%p591) target = $region80
      $region79: #{my_model_forward.1} parent=15 // pred_region
        %p594 = scmp.lt.s32.totalorder %s22, 1
        %s595 = scalar_select %p594, %s22, 1
        %s596 = smul.addr %s595, 4
        %s597 = scalar_lea.vmem %s15, %s596
      $region80: #{my_model_forward.1} parent=15 // pred_fallthru
        _
    $region16: #{my_model_forward.1} parent=5 // pred_fallthru
      _
    %p598 = scmp.le.s32.totalorder 1, %s22
    %p599 = scmp.lt.s32.totalorder %s22, 3
    %p600 = pnand %p598, %p599
    %p601 = pneg %p600
    // Predicated region
    $region81: #{my_model_forward.1} parent=5 // pred_check
      _
    $region82: #{my_model_forward.1} parent=5 // pred_check_branch
      %603 = sbr.rel (%p600) target = $region84
    $region83: #{my_model_forward.1} parent=5 // pred_region
      %s604 = ssub.s32 %s22, 1
      %p605 = scmp.lt.s32.totalorder %s27, 1
      %s606 = scalar_select %p605, %s27, 1
      %s607 = smul.addr %s606, 2
      %s608 = smul.addr %s607, 8
      %s609 = scalar_lea.vmem %s0, %s608
      %p610 = pneg %p48
      %p611 = pneg %p45
      %p612 = scmp.lt.s32.totalorder %s27, 1
      %s613 = scalar_select %p612, %s27, 1
      %s614 = smul.addr %s613, 2
      %s615 = scalar_lea.vmem %s1, %s614
      %p616 = pneg %p74
      %p617 = pneg %p71
      %p618 = scmp.lt.s32.totalorder %s27, 1
      %s619 = scalar_select %p618, %s27, 1
      %s620 = scalar_lea.vmem %s2, %s619
      %p621 = pneg %p100
      %p622 = pneg %p97
      %p623 = scmp.lt.s32.totalorder %s27, 1
      %s624 = scalar_select %p623, %s27, 1
      %s625 = scalar_lea.vmem %s3, %s624
      %p626 = pneg %p126
      %p627 = pneg %p123
      %p628 = scmp.lt.s32.totalorder %s27, 1
      %s629 = scalar_select %p628, %s27, 1
      %s630 = smul.addr %s629, 16
      %s631 = smul.addr %s630, 4
      %s632 = scalar_lea.vmem %s4, %s631
      %p633 = pneg %p152
      %p634 = pneg %p149
      %p635 = scmp.lt.s32.totalorder %s27, 1
      %s636 = scalar_select %p635, %s27, 1
      %s637 = smul.addr %s636, 4
      %s638 = scalar_lea.vmem %s5, %s637
      %p639 = pneg %p178
      %p640 = pneg %p175
      %p641 = scmp.lt.s32.totalorder %s27, 1
      %s642 = scalar_select %p641, %s27, 1
      %s643 = smul.addr %s642, 16
      %s644 = smul.addr %s643, 4
      %s645 = scalar_lea.vmem %s6, %s644
      %p646 = pneg %p204
      %p647 = pneg %p201
      %p648 = scmp.lt.s32.totalorder %s27, 1
      %s649 = scalar_select %p648, %s27, 1
      %s650 = smul.addr %s649, 4
      %s651 = scalar_lea.vmem %s7, %s650
      %p652 = pneg %p230
      %p653 = pneg %p227
      %p654 = scmp.lt.s32.totalorder %s27, 1
      %s655 = scalar_select %p654, %s27, 1
      %s656 = smul.addr %s655, 4
      %s657 = scalar_lea.vmem %s8, %s656
      %p658 = pneg %p256
      %p659 = pneg %p253
      %p660 = scmp.lt.s32.totalorder %s27, 1
      %s661 = scalar_select %p660, %s27, 1
      %s662 = smul.addr %s661, 4
      %s663 = scalar_lea.vmem %s9, %s662
      %p664 = pneg %p282
      %p665 = pneg %p279
      %p666 = scmp.lt.s32.totalorder %s27, 1
      %s667 = scalar_select %p666, %s27, 1
      %s668 = smul.addr %s667, 16
      %s669 = smul.addr %s668, 4
      %s670 = scalar_lea.vmem %s10, %s669
      %p671 = pneg %p308
      %p672 = pneg %p305
      %p673 = scmp.lt.s32.totalorder %s27, 1
      %s674 = scalar_select %p673, %s27, 1
      %s675 = smul.addr %s674, 4
      %s676 = scalar_lea.vmem %s11, %s675
      %p677 = pneg %p334
      %p678 = pneg %p331
      %p679 = scmp.lt.s32.totalorder %s27, 1
      %s680 = scalar_select %p679, %s27, 1
      %s681 = smul.addr %s680, 32
      %s682 = smul.addr %s681, 4
      %s683 = scalar_lea.vmem %s12, %s682
      %p684 = pneg %p360
      %p685 = pneg %p357
      %p686 = scmp.lt.s32.totalorder %s27, 1
      %s687 = scalar_select %p686, %s27, 1
      %s688 = smul.addr %s687, 4
      %s689 = scalar_lea.vmem %s13, %s688
      %p690 = pneg %p386
      %p691 = pneg %p383
      %p692 = scmp.lt.s32.totalorder %s27, 1
      %s693 = scalar_select %p692, %s27, 1
      %s694 = smul.addr %s693, 4
      %s695 = scalar_lea.vmem %s14, %s694
      %p696 = pneg %p412
      %p697 = pneg %p409
      %p698 = scmp.lt.s32.totalorder %s27, 1
      %s699 = scalar_select %p698, %s27, 1
      %s700 = smul.addr %s699, 4
      %s701 = scalar_lea.vmem %s15, %s700
      %p702 = pneg %p438
      %p703 = pneg %p435
      %p704 = pneg %p464
      %p705 = pneg %p461
      %p706 = scmp.lt.s32.totalorder %s27, 1
      %s707 = scalar_select %p706, %s27, 1
      %s708 = smul.addr %s707, 2
      %s709 = scalar_lea.vmem %s16, %s708
      %p710 = scmp.lt.s32.totalorder %s27, 1
      %s711 = scalar_select %p710, %s27, 1
      %s712 = smul.addr %s711, 2
      %s713 = smul.addr %s712, 8
      %s714 = scalar_lea.vmem %s0, %s713
      %p715 = scmp.lt.s32.totalorder %s27, 1
      %s716 = scalar_select %p715, %s27, 1
      %s717 = smul.addr %s716, 2
      %s718 = scalar_lea.vmem %s1, %s717
      %p719 = scmp.lt.s32.totalorder %s27, 1
      %s720 = scalar_select %p719, %s27, 1
      %s721 = scalar_lea.vmem %s2, %s720
      %p722 = scmp.lt.s32.totalorder %s27, 1
      %s723 = scalar_select %p722, %s27, 1
      %s724 = scalar_lea.vmem %s3, %s723
      %p725 = scmp.lt.s32.totalorder %s27, 1
      %s726 = scalar_select %p725, %s27, 1
      %s727 = smul.addr %s726, 16
      %s728 = smul.addr %s727, 4
      %s729 = scalar_lea.vmem %s4, %s728
      %p730 = scmp.lt.s32.totalorder %s27, 1
      %s731 = scalar_select %p730, %s27, 1
      %s732 = smul.addr %s731, 4
      %s733 = scalar_lea.vmem %s5, %s732
      %p734 = scmp.lt.s32.totalorder %s27, 1
      %s735 = scalar_select %p734, %s27, 1
      %s736 = smul.addr %s735, 16
      %s737 = smul.addr %s736, 4
      %s738 = scalar_lea.vmem %s6, %s737
      %p739 = scmp.lt.s32.totalorder %s27, 1
      %s740 = scalar_select %p739, %s27, 1
      %s741 = smul.addr %s740, 4
      %s742 = scalar_lea.vmem %s7, %s741
      %p743 = scmp.lt.s32.totalorder %s27, 1
      %s744 = scalar_select %p743, %s27, 1
      %s745 = smul.addr %s744, 4
      %s746 = scalar_lea.vmem %s8, %s745
      %p747 = scmp.lt.s32.totalorder %s27, 1
      %s748 = scalar_select %p747, %s27, 1
      %s749 = smul.addr %s748, 4
      %s750 = scalar_lea.vmem %s9, %s749
      %p751 = scmp.lt.s32.totalorder %s27, 1
      %s752 = scalar_select %p751, %s27, 1
      %s753 = smul.addr %s752, 16
      %s754 = smul.addr %s753, 4
      %s755 = scalar_lea.vmem %s10, %s754
      %p756 = scmp.lt.s32.totalorder %s27, 1
      %s757 = scalar_select %p756, %s27, 1
      %s758 = smul.addr %s757, 4
      %s759 = scalar_lea.vmem %s11, %s758
      %p760 = scmp.lt.s32.totalorder %s27, 1
      %s761 = scalar_select %p760, %s27, 1
      %s762 = smul.addr %s761, 32
      %s763 = smul.addr %s762, 4
      %s764 = scalar_lea.vmem %s12, %s763
      %p765 = scmp.lt.s32.totalorder %s27, 1
      %s766 = scalar_select %p765, %s27, 1
      %s767 = smul.addr %s766, 4
      %s768 = scalar_lea.vmem %s13, %s767
      %p769 = scmp.lt.s32.totalorder %s27, 1
      %s770 = scalar_select %p769, %s27, 1
      %s771 = smul.addr %s770, 4
      %s772 = scalar_lea.vmem %s14, %s771
      %p773 = scmp.lt.s32.totalorder %s27, 1
      %s774 = scalar_select %p773, %s27, 1
      %s775 = smul.addr %s774, 4
      %s776 = scalar_lea.vmem %s15, %s775
      %p777 = scmp.lt.s32.totalorder %s27, 1
      %s778 = scalar_select %p777, %s27, 1
      %s779 = smul.addr %s778, 2
      %s780 = scalar_lea.vmem %s16, %s779
      %v782 = vld [vmem:[%s714] sm:$0xff]
      %v783 = vld [vmem:[%s714 + $0x8] sm:$0xff]
      %v784 = vld [vmem:[%s721] sm:$0x1]
      %v785 = vld [vmem:[%s724] sm:$0x1]
      %vm786 = vcmask 261120
      %v787 = vsel %vm786, %v782, 0.0
      %788 = vadd.xlane.f32.xlu0 %v787
      %v789 = vpop.xlane.xlu0 %788
      %v790 = vsel %vm786, %v783, 0.0
      %791 = vadd.xlane.f32.xlu0 %v790
      %v792 = vpop.xlane.xlu0 %791
      %v793 = vrcp.pop 32.0
      %v794 = vmul.f32 %v789, %v793
      %v795 = vmul.f32 %v792, %v793
      %v796 = vsub.f32 %v782, %v794
      %v797 = vsub.f32 %v783, %v795
      %v798 = vmul.f32 %v796, %v796
      %v799 = vmul.f32 %v797, %v797
      %v800 = vsel %vm786, %v798, 0.0
      %801 = vadd.xlane.f32.xlu0 %v800
      %v802 = vpop.xlane.xlu0 %801
      %v803 = vsel %vm786, %v799, 0.0
      %804 = vadd.xlane.f32.xlu0 %v803
      %v805 = vpop.xlane.xlu0 %804
      %v806 = vmul.f32 %v802, %v793
      %v807 = vmul.f32 %v805, %v793
      %v808 = vadd.f32 %v806, 1e-07
      %v809 = vadd.f32 %v807, 1e-07
      %v810 = vrsqrt.pop %v808
      %v811 = vrsqrt.pop %v809
      %v812 = vmul.f32 %v796, %v810
      %v813 = vmul.f32 %v797, %v811
      %v815 = vlaneseq
      %v816 = vshrl.u32 %v815, 7
      %v817 = vsub.s32 0, %v816
      %v818 = vrot.slane %v784, %v817
      %v820 = vmul.f32 %v812, %v818
      %v821 = vmul.f32 %v813, %v818
      %v823 = vlaneseq
      %v824 = vshrl.u32 %v823, 7
      %v825 = vsub.s32 0, %v824
      %v826 = vrot.slane %v785, %v825
      %v828 = vadd.f32 %v820, %v826
      %v829 = vadd.f32 %v821, %v826
      %v830 = vld [vmem:[%s718] sm:$0x1]
      %v831 = vld [vmem:[%s718 + $0x1] sm:$0x1]
      %v832 = vpack.c.bf16 %v829, %v828
      %v833 = vld [vmem:[%s729] sm:$0xf]
      %v834 = vld [vmem:[%s729 + $0x4] sm:$0xf]
      %v835 = vld [vmem:[%s729 + $0x8] sm:$0xf]
      %v836 = vld [vmem:[%s729 + $0xc] sm:$0xf]
      %v837 = vld [vmem:[%s733] sm:$0x1]
      %v839 = vlaneseq
      %v840 = vshrl.u32 %v839, 7
      %v841 = vsub.s32 0, %v840
      %v842 = vrot.slane %v837, %v841
      %v848 = vunpack.c.l.b16 %v833
      %v849 = vunpack.c.l.b16 %v834
      %v850 = vunpack.c.l.b16 %v835
      %v851 = vunpack.c.l.b16 %v836
      %v852 = vpack.c.b16 %v849, %v848
      %v853 = vpack.c.b16 %v851, %v850
      %v857 = vsel %vm786, %v832, 0
      %859 = vmatprep.subr.bf16.mxu0 0
      %860 = vmatpush1.bf16.msra.mxu0 0
      %861 = vmatprep.subr.bf16.mxu0 0
      %862 = vmatpush1.bf16.msra.mxu0 0
      %863 = vmatprep.subr.bf16.mxu0 0
      %864 = vmatpush1.bf16.msra.mxu0 0
      %865 = vmatprep.subr.bf16.mxu0 0
      %866 = vmatpush1.bf16.msra.mxu0 0
      %867 = vmatprep.subr.bf16.mxu0 0
      %868 = vmatpush1.bf16.msra.mxu0 0
      %869 = vmatprep.subr.bf16.mxu0 0
      %870 = vmatpush1.bf16.msra.mxu0 0
      %871 = vmatprep.subr.bf16.mxu0 0
      %872 = vmatpush1.bf16.msra.mxu0 %v853
      %873 = vmatprep.subr.bf16.mxu0 0
      %874 = vmatpush1.bf16.msra.mxu0 %v852
      %875 = vmatprep.subr.bf16.mxu0 0
      %876 = vmatpush2.bf16.msra.mxu0 0
      %877 = vmatprep.subr.bf16.mxu0 0
      %878 = vmatpush2.bf16.msra.mxu0 0
      %879 = vmatprep.subr.bf16.mxu0 0
      %880 = vmatpush2.bf16.msra.mxu0 0
      %881 = vmatprep.subr.bf16.mxu0 0
      %882 = vmatpush2.bf16.msra.mxu0 0
      %883 = vmatprep.subr.bf16.mxu0 0
      %884 = vmatpush2.bf16.msra.mxu0 0
      %885 = vmatprep.subr.bf16.mxu0 0
      %886 = vmatpush2.bf16.msra.mxu0 0
      %887 = vmatprep.subr.bf16.mxu0 0
      %888 = vmatpush2.bf16.msra.mxu0 0
      %889 = vmatprep.subr.bf16.mxu0 0
      %890 = vmatpush2.bf16.msra.mxu0 0
      %891 = vmatprep.mubr.bf16.mxu0 0
      %892 = vmatmul.mubr.bf16.gmra.mxu0 %v857
      %v893 = vpop.f32.mrf.mxu0
      %v894 = vadd.f32 %v842, %v893
      %v895 = vpop.f32.mrf.mxu0
      %v896 = vpop.f32.mrf.mxu0
      %v897 = vadd.f32 %v842, %v896
      %v898 = vpop.f32.mrf.mxu0
      %899 = vdwg.mxu0
      %901 = vrot.lane.b32.xlu0 %v894, 96
      %v902 = vpop.permute.xlu0 %901
      %vm903 = vcmask 64512
      %v904 = vsel %vm903, %v894, 0
      %v906 = vsel %vm903, %v902, 0
      %908 = vmatprep.subr.mxu0 0.0
      %909 = vmatpush1.xpose.msra.mxu0 0.0
      %910 = vmatprep.subr.mxu0 0.0
      %911 = vmatpush1.xpose.msra.mxu0 0.0
      %912 = vmatprep.subr.mxu0 0.0
      %913 = vmatpush1.xpose.msra.mxu0 0.0
      %914 = vmatprep.subr.mxu0 0.0
      %915 = vmatpush1.xpose.msra.mxu0 0.0
      %916 = vmatprep.subr.mxu0 0.0
      %917 = vmatpush1.xpose.msra.mxu0 0.0
      %918 = vmatprep.subr.mxu0 0.0
      %919 = vmatpush1.xpose.msra.mxu0 0.0
      %920 = vmatprep.subr.mxu0 0.0
      %921 = vmatpush1.xpose.msra.mxu0 0.0
      %922 = vmatprep.subr.mxu0 0.0
      %923 = vmatpush1.xpose.msra.mxu0 0.0
      %924 = vmatprep.subr.mxu0 0.0
      %925 = vmatpush1.xpose.msra.mxu0 0.0
      %926 = vmatprep.subr.mxu0 0.0
      %927 = vmatpush1.xpose.msra.mxu0 0.0
      %928 = vmatprep.subr.mxu0 0.0
      %929 = vmatpush1.xpose.msra.mxu0 0.0
      %930 = vmatprep.subr.mxu0 0.0
      %931 = vmatpush1.xpose.msra.mxu0 0.0
      %932 = vmatprep.subr.mxu0 0.0
      %933 = vmatpush1.xpose.msra.mxu0 0.0
      %934 = vmatprep.subr.mxu0 0.0
      %935 = vmatpush1.xpose.msra.mxu0 0.0
      %936 = vmatprep.subr.mxu0 0.0
      %937 = vmatpush1.xpose.msra.mxu0 0.0
      %938 = vmatprep.subr.mxu0 0.0
      %939 = vmatpush1.xpose.msra.mxu0 %v906
      %940 = vmatprep.subr.mxu0 0.0
      %941 = vmatpush2.xpose.msra.mxu0 0.0
      %942 = vmatprep.subr.mxu0 0.0
      %943 = vmatpush2.xpose.msra.mxu0 0.0
      %944 = vmatprep.subr.mxu0 0.0
      %945 = vmatpush2.xpose.msra.mxu0 0.0
      %946 = vmatprep.subr.mxu0 0.0
      %947 = vmatpush2.xpose.msra.mxu0 0.0
      %948 = vmatprep.subr.mxu0 0.0
      %949 = vmatpush2.xpose.msra.mxu0 0.0
      %950 = vmatprep.subr.mxu0 0.0
      %951 = vmatpush2.xpose.msra.mxu0 0.0
      %952 = vmatprep.subr.mxu0 0.0
      %953 = vmatpush2.xpose.msra.mxu0 0.0
      %954 = vmatprep.subr.mxu0 0.0
      %955 = vmatpush2.xpose.msra.mxu0 0.0
      %956 = vmatprep.subr.mxu0 0.0
      %957 = vmatpush2.xpose.msra.mxu0 0.0
      %958 = vmatprep.subr.mxu0 0.0
      %959 = vmatpush2.xpose.msra.mxu0 0.0
      %960 = vmatprep.subr.mxu0 0.0
      %961 = vmatpush2.xpose.msra.mxu0 0.0
      %962 = vmatprep.subr.mxu0 0.0
      %963 = vmatpush2.xpose.msra.mxu0 0.0
      %964 = vmatprep.subr.mxu0 0.0
      %965 = vmatpush2.xpose.msra.mxu0 0.0
      %966 = vmatprep.subr.mxu0 0.0
      %967 = vmatpush2.xpose.msra.mxu0 0.0
      %968 = vmatprep.subr.mxu0 0.0
      %969 = vmatpush2.xpose.msra.mxu0 0.0
      %970 = vmatprep.subr.mxu0 0.0
      %971 = vmatpush2.xpose.msra.mxu0 0.0
      %972 = vmatprep.mubr.f32.mxu0 0.0
      %973 = vmatmul.mubr.f32.gmra.mxu0 %v904
      %v974 = vpop.f32.mrf.mxu0
      %v975 = vadd.f32 0.0, %v974
      %v976 = vpop.f32.mrf.mxu0
      %977 = vdwg.mxu0
      %979 = vrot.lane.b32.xlu0 %v897, 96
      %v980 = vpop.permute.xlu0 %979
      %v981 = vsel %vm903, %v897, 0
      %v983 = vsel %vm903, %v980, 0
      %985 = vmatprep.subr.mxu0 0.0
      %986 = vmatpush1.xpose.msra.mxu0 0.0
      %987 = vmatprep.subr.mxu0 0.0
      %988 = vmatpush1.xpose.msra.mxu0 0.0
      %989 = vmatprep.subr.mxu0 0.0
      %990 = vmatpush1.xpose.msra.mxu0 0.0
      %991 = vmatprep.subr.mxu0 0.0
      %992 = vmatpush1.xpose.msra.mxu0 0.0
      %993 = vmatprep.subr.mxu0 0.0
      %994 = vmatpush1.xpose.msra.mxu0 0.0
      %995 = vmatprep.subr.mxu0 0.0
      %996 = vmatpush1.xpose.msra.mxu0 0.0
      %997 = vmatprep.subr.mxu0 0.0
      %998 = vmatpush1.xpose.msra.mxu0 0.0
      %999 = vmatprep.subr.mxu0 0.0
      %1000 = vmatpush1.xpose.msra.mxu0 0.0
      %1001 = vmatprep.subr.mxu0 0.0
      %1002 = vmatpush1.xpose.msra.mxu0 0.0
      %1003 = vmatprep.subr.mxu0 0.0
      %1004 = vmatpush1.xpose.msra.mxu0 0.0
      %1005 = vmatprep.subr.mxu0 0.0
      %1006 = vmatpush1.xpose.msra.mxu0 0.0
      %1007 = vmatprep.subr.mxu0 0.0
      %1008 = vmatpush1.xpose.msra.mxu0 0.0
      %1009 = vmatprep.subr.mxu0 0.0
      %1010 = vmatpush1.xpose.msra.mxu0 0.0
      %1011 = vmatprep.subr.mxu0 0.0
      %1012 = vmatpush1.xpose.msra.mxu0 0.0
      %1013 = vmatprep.subr.mxu0 0.0
      %1014 = vmatpush1.xpose.msra.mxu0 0.0
      %1015 = vmatprep.subr.mxu0 0.0
      %1016 = vmatpush1.xpose.msra.mxu0 %v983
      %1017 = vmatprep.subr.mxu0 0.0
      %1018 = vmatpush2.xpose.msra.mxu0 0.0
      %1019 = vmatprep.subr.mxu0 0.0
      %1020 = vmatpush2.xpose.msra.mxu0 0.0
      %1021 = vmatprep.subr.mxu0 0.0
      %1022 = vmatpush2.xpose.msra.mxu0 0.0
      %1023 = vmatprep.subr.mxu0 0.0
      %1024 = vmatpush2.xpose.msra.mxu0 0.0
      %1025 = vmatprep.subr.mxu0 0.0
      %1026 = vmatpush2.xpose.msra.mxu0 0.0
      %1027 = vmatprep.subr.mxu0 0.0
      %1028 = vmatpush2.xpose.msra.mxu0 0.0
      %1029 = vmatprep.subr.mxu0 0.0
      %1030 = vmatpush2.xpose.msra.mxu0 0.0
      %1031 = vmatprep.subr.mxu0 0.0
      %1032 = vmatpush2.xpose.msra.mxu0 0.0
      %1033 = vmatprep.subr.mxu0 0.0
      %1034 = vmatpush2.xpose.msra.mxu0 0.0
      %1035 = vmatprep.subr.mxu0 0.0
      %1036 = vmatpush2.xpose.msra.mxu0 0.0
      %1037 = vmatprep.subr.mxu0 0.0
      %1038 = vmatpush2.xpose.msra.mxu0 0.0
      %1039 = vmatprep.subr.mxu0 0.0
      %1040 = vmatpush2.xpose.msra.mxu0 0.0
      %1041 = vmatprep.subr.mxu0 0.0
      %1042 = vmatpush2.xpose.msra.mxu0 0.0
      %1043 = vmatprep.subr.mxu0 0.0
      %1044 = vmatpush2.xpose.msra.mxu0 0.0
      %1045 = vmatprep.subr.mxu0 0.0
      %1046 = vmatpush2.xpose.msra.mxu0 0.0
      %1047 = vmatprep.subr.mxu0 0.0
      %1048 = vmatpush2.xpose.msra.mxu0 0.0
      %1049 = vmatprep.mubr.f32.mxu0 0.0
      %1050 = vmatmul.mubr.f32.gmra.mxu0 %v981
      %v1051 = vpop.f32.mrf.mxu0
      %v1052 = vadd.f32 0.0, %v1051
      %v1053 = vpop.f32.mrf.mxu0
      %1054 = vdwg.mxu0
      %v1055 = vmul.f32 %v975, 0.35355338
      %v1056 = vmul.f32 %v1052, 0.35355338
      %v1059 = vlaneseq
      %v1060 = vshrl.u32 %v1059, 7
      %v1061 = vsub.s32 0, %v1060
      %v1062 = vrot.slane %v830, %v1061
      %v1063 = vlaneseq
      %v1064 = vshrl.u32 %v1063, 7
      %v1065 = vsub.s32 0, %v1064
      %v1066 = vrot.slane %v831, %v1065
      %v1069 = vadd.f32 %v1055, %v1062
      %v1070 = vadd.f32 %v1056, %v1066
      %1071 = vrot.lane.b32.xlu0 %v894, 120
      %v1072 = vpop.permute.xlu0 %1071
      %1073 = vrot.lane.b32.xlu0 %v894, 88
      %v1074 = vpop.permute.xlu0 %1073
      %v1075 = vsel %vm903, %v1072, 0
      %v1077 = vsel %vm903, %v1074, 0
      %1079 = vmatprep.subr.mxu0 0.0
      %1080 = vmatpush1.xpose.msra.mxu0 0.0
      %1081 = vmatprep.subr.mxu0 0.0
      %1082 = vmatpush1.xpose.msra.mxu0 0.0
      %1083 = vmatprep.subr.mxu0 0.0
      %1084 = vmatpush1.xpose.msra.mxu0 0.0
      %1085 = vmatprep.subr.mxu0 0.0
      %1086 = vmatpush1.xpose.msra.mxu0 0.0
      %1087 = vmatprep.subr.mxu0 0.0
      %1088 = vmatpush1.xpose.msra.mxu0 0.0
      %1089 = vmatprep.subr.mxu0 0.0
      %1090 = vmatpush1.xpose.msra.mxu0 0.0
      %1091 = vmatprep.subr.mxu0 0.0
      %1092 = vmatpush1.xpose.msra.mxu0 0.0
      %1093 = vmatprep.subr.mxu0 0.0
      %1094 = vmatpush1.xpose.msra.mxu0 0.0
      %1095 = vmatprep.subr.mxu0 0.0
      %1096 = vmatpush1.xpose.msra.mxu0 0.0
      %1097 = vmatprep.subr.mxu0 0.0
      %1098 = vmatpush1.xpose.msra.mxu0 0.0
      %1099 = vmatprep.subr.mxu0 0.0
      %1100 = vmatpush1.xpose.msra.mxu0 0.0
      %1101 = vmatprep.subr.mxu0 0.0
      %1102 = vmatpush1.xpose.msra.mxu0 0.0
      %1103 = vmatprep.subr.mxu0 0.0
      %1104 = vmatpush1.xpose.msra.mxu0 0.0
      %1105 = vmatprep.subr.mxu0 0.0
      %1106 = vmatpush1.xpose.msra.mxu0 0.0
      %1107 = vmatprep.subr.mxu0 0.0
      %1108 = vmatpush1.xpose.msra.mxu0 0.0
      %1109 = vmatprep.subr.mxu0 0.0
      %1110 = vmatpush1.xpose.msra.mxu0 %v1077
      %1111 = vmatprep.subr.mxu0 0.0
      %1112 = vmatpush2.xpose.msra.mxu0 0.0
      %1113 = vmatprep.subr.mxu0 0.0
      %1114 = vmatpush2.xpose.msra.mxu0 0.0
      %1115 = vmatprep.subr.mxu0 0.0
      %1116 = vmatpush2.xpose.msra.mxu0 0.0
      %1117 = vmatprep.subr.mxu0 0.0
      %1118 = vmatpush2.xpose.msra.mxu0 0.0
      %1119 = vmatprep.subr.mxu0 0.0
      %1120 = vmatpush2.xpose.msra.mxu0 0.0
      %1121 = vmatprep.subr.mxu0 0.0
      %1122 = vmatpush2.xpose.msra.mxu0 0.0
      %1123 = vmatprep.subr.mxu0 0.0
      %1124 = vmatpush2.xpose.msra.mxu0 0.0
      %1125 = vmatprep.subr.mxu0 0.0
      %1126 = vmatpush2.xpose.msra.mxu0 0.0
      %1127 = vmatprep.subr.mxu0 0.0
      %1128 = vmatpush2.xpose.msra.mxu0 0.0
      %1129 = vmatprep.subr.mxu0 0.0
      %1130 = vmatpush2.xpose.msra.mxu0 0.0
      %1131 = vmatprep.subr.mxu0 0.0
      %1132 = vmatpush2.xpose.msra.mxu0 0.0
      %1133 = vmatprep.subr.mxu0 0.0
      %1134 = vmatpush2.xpose.msra.mxu0 0.0
      %1135 = vmatprep.subr.mxu0 0.0
      %1136 = vmatpush2.xpose.msra.mxu0 0.0
      %1137 = vmatprep.subr.mxu0 0.0
      %1138 = vmatpush2.xpose.msra.mxu0 0.0
      %1139 = vmatprep.subr.mxu0 0.0
      %1140 = vmatpush2.xpose.msra.mxu0 0.0
      %1141 = vmatprep.subr.mxu0 0.0
      %1142 = vmatpush2.xpose.msra.mxu0 0.0
      %1143 = vmatprep.mubr.f32.mxu0 0.0
      %1144 = vmatmul.mubr.f32.gmra.mxu0 %v1075
      %v1145 = vpop.f32.mrf.mxu0
      %v1146 = vadd.f32 0.0, %v1145
      %v1147 = vpop.f32.mrf.mxu0
      %1148 = vdwg.mxu0
      %1149 = vrot.lane.b32.xlu0 %v897, 120
      %v1150 = vpop.permute.xlu0 %1149
      %1151 = vrot.lane.b32.xlu0 %v897, 88
      %v1152 = vpop.permute.xlu0 %1151
      %v1153 = vsel %vm903, %v1150, 0
      %v1155 = vsel %vm903, %v1152, 0
      %1157 = vmatprep.subr.mxu0 0.0
      %1158 = vmatpush1.xpose.msra.mxu0 0.0
      %1159 = vmatprep.subr.mxu0 0.0
      %1160 = vmatpush1.xpose.msra.mxu0 0.0
      %1161 = vmatprep.subr.mxu0 0.0
      %1162 = vmatpush1.xpose.msra.mxu0 0.0
      %1163 = vmatprep.subr.mxu0 0.0
      %1164 = vmatpush1.xpose.msra.mxu0 0.0
      %1165 = vmatprep.subr.mxu0 0.0
      %1166 = vmatpush1.xpose.msra.mxu0 0.0
      %1167 = vmatprep.subr.mxu0 0.0
      %1168 = vmatpush1.xpose.msra.mxu0 0.0
      %1169 = vmatprep.subr.mxu0 0.0
      %1170 = vmatpush1.xpose.msra.mxu0 0.0
      %1171 = vmatprep.subr.mxu0 0.0
      %1172 = vmatpush1.xpose.msra.mxu0 0.0
      %1173 = vmatprep.subr.mxu0 0.0
      %1174 = vmatpush1.xpose.msra.mxu0 0.0
      %1175 = vmatprep.subr.mxu0 0.0
      %1176 = vmatpush1.xpose.msra.mxu0 0.0
      %1177 = vmatprep.subr.mxu0 0.0
      %1178 = vmatpush1.xpose.msra.mxu0 0.0
      %1179 = vmatprep.subr.mxu0 0.0
      %1180 = vmatpush1.xpose.msra.mxu0 0.0
      %1181 = vmatprep.subr.mxu0 0.0
      %1182 = vmatpush1.xpose.msra.mxu0 0.0
      %1183 = vmatprep.subr.mxu0 0.0
      %1184 = vmatpush1.xpose.msra.mxu0 0.0
      %1185 = vmatprep.subr.mxu0 0.0
      %1186 = vmatpush1.xpose.msra.mxu0 0.0
      %1187 = vmatprep.subr.mxu0 0.0
      %1188 = vmatpush1.xpose.msra.mxu0 %v1155
      %1189 = vmatprep.subr.mxu0 0.0
      %1190 = vmatpush2.xpose.msra.mxu0 0.0
      %1191 = vmatprep.subr.mxu0 0.0
      %1192 = vmatpush2.xpose.msra.mxu0 0.0
      %1193 = vmatprep.subr.mxu0 0.0
      %1194 = vmatpush2.xpose.msra.mxu0 0.0
      %1195 = vmatprep.subr.mxu0 0.0
      %1196 = vmatpush2.xpose.msra.mxu0 0.0
      %1197 = vmatprep.subr.mxu0 0.0
      %1198 = vmatpush2.xpose.msra.mxu0 0.0
      %1199 = vmatprep.subr.mxu0 0.0
      %1200 = vmatpush2.xpose.msra.mxu0 0.0
      %1201 = vmatprep.subr.mxu0 0.0
      %1202 = vmatpush2.xpose.msra.mxu0 0.0
      %1203 = vmatprep.subr.mxu0 0.0
      %1204 = vmatpush2.xpose.msra.mxu0 0.0
      %1205 = vmatprep.subr.mxu0 0.0
      %1206 = vmatpush2.xpose.msra.mxu0 0.0
      %1207 = vmatprep.subr.mxu0 0.0
      %1208 = vmatpush2.xpose.msra.mxu0 0.0
      %1209 = vmatprep.subr.mxu0 0.0
      %1210 = vmatpush2.xpose.msra.mxu0 0.0
      %1211 = vmatprep.subr.mxu0 0.0
      %1212 = vmatpush2.xpose.msra.mxu0 0.0
      %1213 = vmatprep.subr.mxu0 0.0
      %1214 = vmatpush2.xpose.msra.mxu0 0.0
      %1215 = vmatprep.subr.mxu0 0.0
      %1216 = vmatpush2.xpose.msra.mxu0 0.0
      %1217 = vmatprep.subr.mxu0 0.0
      %1218 = vmatpush2.xpose.msra.mxu0 0.0
      %1219 = vmatprep.subr.mxu0 0.0
      %1220 = vmatpush2.xpose.msra.mxu0 0.0
      %1221 = vmatprep.mubr.f32.mxu0 0.0
      %1222 = vmatmul.mubr.f32.gmra.mxu0 %v1153
      %v1223 = vpop.f32.mrf.mxu0
      %v1224 = vadd.f32 0.0, %v1223
      %v1225 = vpop.f32.mrf.mxu0
      %1226 = vdwg.mxu0
      %v1227 = vmul.f32 %v1146, 0.35355338
      %v1228 = vmul.f32 %v1224, 0.35355338
      %v1229 = vadd.f32 %v1227, %v1062
      %v1230 = vadd.f32 %v1228, %v1066
      %1231 = vrot.lane.b32.xlu0 %v894, 112
      %v1232 = vpop.permute.xlu0 %1231
      %1233 = vrot.lane.b32.xlu0 %v894, 80
      %v1234 = vpop.permute.xlu0 %1233
      %v1235 = vsel %vm903, %v1232, 0
      %v1237 = vsel %vm903, %v1234, 0
      %1239 = vmatprep.subr.mxu0 0.0
      %1240 = vmatpush1.xpose.msra.mxu0 0.0
      %1241 = vmatprep.subr.mxu0 0.0
      %1242 = vmatpush1.xpose.msra.mxu0 0.0
      %1243 = vmatprep.subr.mxu0 0.0
      %1244 = vmatpush1.xpose.msra.mxu0 0.0
      %1245 = vmatprep.subr.mxu0 0.0
      %1246 = vmatpush1.xpose.msra.mxu0 0.0
      %1247 = vmatprep.subr.mxu0 0.0
      %1248 = vmatpush1.xpose.msra.mxu0 0.0
      %1249 = vmatprep.subr.mxu0 0.0
      %1250 = vmatpush1.xpose.msra.mxu0 0.0
      %1251 = vmatprep.subr.mxu0 0.0
      %1252 = vmatpush1.xpose.msra.mxu0 0.0
      %1253 = vmatprep.subr.mxu0 0.0
      %1254 = vmatpush1.xpose.msra.mxu0 0.0
      %1255 = vmatprep.subr.mxu0 0.0
      %1256 = vmatpush1.xpose.msra.mxu0 0.0
      %1257 = vmatprep.subr.mxu0 0.0
      %1258 = vmatpush1.xpose.msra.mxu0 0.0
      %1259 = vmatprep.subr.mxu0 0.0
      %1260 = vmatpush1.xpose.msra.mxu0 0.0
      %1261 = vmatprep.subr.mxu0 0.0
      %1262 = vmatpush1.xpose.msra.mxu0 0.0
      %1263 = vmatprep.subr.mxu0 0.0
      %1264 = vmatpush1.xpose.msra.mxu0 0.0
      %1265 = vmatprep.subr.mxu0 0.0
      %1266 = vmatpush1.xpose.msra.mxu0 0.0
      %1267 = vmatprep.subr.mxu0 0.0
      %1268 = vmatpush1.xpose.msra.mxu0 0.0
      %1269 = vmatprep.subr.mxu0 0.0
      %1270 = vmatpush1.xpose.msra.mxu0 %v1237
      %1271 = vmatprep.subr.mxu0 0.0
      %1272 = vmatpush2.xpose.msra.mxu0 0.0
      %1273 = vmatprep.subr.mxu0 0.0
      %1274 = vmatpush2.xpose.msra.mxu0 0.0
      %1275 = vmatprep.subr.mxu0 0.0
      %1276 = vmatpush2.xpose.msra.mxu0 0.0
      %1277 = vmatprep.subr.mxu0 0.0
      %1278 = vmatpush2.xpose.msra.mxu0 0.0
      %1279 = vmatprep.subr.mxu0 0.0
      %1280 = vmatpush2.xpose.msra.mxu0 0.0
      %1281 = vmatprep.subr.mxu0 0.0
      %1282 = vmatpush2.xpose.msra.mxu0 0.0
      %1283 = vmatprep.subr.mxu0 0.0
      %1284 = vmatpush2.xpose.msra.mxu0 0.0
      %1285 = vmatprep.subr.mxu0 0.0
      %1286 = vmatpush2.xpose.msra.mxu0 0.0
      %1287 = vmatprep.subr.mxu0 0.0
      %1288 = vmatpush2.xpose.msra.mxu0 0.0
      %1289 = vmatprep.subr.mxu0 0.0
      %1290 = vmatpush2.xpose.msra.mxu0 0.0
      %1291 = vmatprep.subr.mxu0 0.0
      %1292 = vmatpush2.xpose.msra.mxu0 0.0
      %1293 = vmatprep.subr.mxu0 0.0
      %1294 = vmatpush2.xpose.msra.mxu0 0.0
      %1295 = vmatprep.subr.mxu0 0.0
      %1296 = vmatpush2.xpose.msra.mxu0 0.0
      %1297 = vmatprep.subr.mxu0 0.0
      %1298 = vmatpush2.xpose.msra.mxu0 0.0
      %1299 = vmatprep.subr.mxu0 0.0
      %1300 = vmatpush2.xpose.msra.mxu0 0.0
      %1301 = vmatprep.subr.mxu0 0.0
      %1302 = vmatpush2.xpose.msra.mxu0 0.0
      %1303 = vmatprep.mubr.f32.mxu0 0.0
      %1304 = vmatmul.mubr.f32.gmra.mxu0 %v1235
      %v1305 = vpop.f32.mrf.mxu0
      %v1306 = vadd.f32 0.0, %v1305
      %v1307 = vpop.f32.mrf.mxu0
      %1308 = vdwg.mxu0
      %1309 = vrot.lane.b32.xlu0 %v897, 112
      %v1310 = vpop.permute.xlu0 %1309
      %1311 = vrot.lane.b32.xlu0 %v897, 80
      %v1312 = vpop.permute.xlu0 %1311
      %v1313 = vsel %vm903, %v1310, 0
      %v1315 = vsel %vm903, %v1312, 0
      %1317 = vmatprep.subr.mxu0 0.0
      %1318 = vmatpush1.xpose.msra.mxu0 0.0
      %1319 = vmatprep.subr.mxu0 0.0
      %1320 = vmatpush1.xpose.msra.mxu0 0.0
      %1321 = vmatprep.subr.mxu0 0.0
      %1322 = vmatpush1.xpose.msra.mxu0 0.0
      %1323 = vmatprep.subr.mxu0 0.0
      %1324 = vmatpush1.xpose.msra.mxu0 0.0
      %1325 = vmatprep.subr.mxu0 0.0
      %1326 = vmatpush1.xpose.msra.mxu0 0.0
      %1327 = vmatprep.subr.mxu0 0.0
      %1328 = vmatpush1.xpose.msra.mxu0 0.0
      %1329 = vmatprep.subr.mxu0 0.0
      %1330 = vmatpush1.xpose.msra.mxu0 0.0
      %1331 = vmatprep.subr.mxu0 0.0
      %1332 = vmatpush1.xpose.msra.mxu0 0.0
      %1333 = vmatprep.subr.mxu0 0.0
      %1334 = vmatpush1.xpose.msra.mxu0 0.0
      %1335 = vmatprep.subr.mxu0 0.0
      %1336 = vmatpush1.xpose.msra.mxu0 0.0
      %1337 = vmatprep.subr.mxu0 0.0
      %1338 = vmatpush1.xpose.msra.mxu0 0.0
      %1339 = vmatprep.subr.mxu0 0.0
      %1340 = vmatpush1.xpose.msra.mxu0 0.0
      %1341 = vmatprep.subr.mxu0 0.0
      %1342 = vmatpush1.xpose.msra.mxu0 0.0
      %1343 = vmatprep.subr.mxu0 0.0
      %1344 = vmatpush1.xpose.msra.mxu0 0.0
      %1345 = vmatprep.subr.mxu0 0.0
      %1346 = vmatpush1.xpose.msra.mxu0 0.0
      %1347 = vmatprep.subr.mxu0 0.0
      %1348 = vmatpush1.xpose.msra.mxu0 %v1315
      %1349 = vmatprep.subr.mxu0 0.0
      %1350 = vmatpush2.xpose.msra.mxu0 0.0
      %1351 = vmatprep.subr.mxu0 0.0
      %1352 = vmatpush2.xpose.msra.mxu0 0.0
      %1353 = vmatprep.subr.mxu0 0.0
      %1354 = vmatpush2.xpose.msra.mxu0 0.0
      %1355 = vmatprep.subr.mxu0 0.0
      %1356 = vmatpush2.xpose.msra.mxu0 0.0
      %1357 = vmatprep.subr.mxu0 0.0
      %1358 = vmatpush2.xpose.msra.mxu0 0.0
      %1359 = vmatprep.subr.mxu0 0.0
      %1360 = vmatpush2.xpose.msra.mxu0 0.0
      %1361 = vmatprep.subr.mxu0 0.0
      %1362 = vmatpush2.xpose.msra.mxu0 0.0
      %1363 = vmatprep.subr.mxu0 0.0
      %1364 = vmatpush2.xpose.msra.mxu0 0.0
      %1365 = vmatprep.subr.mxu0 0.0
      %1366 = vmatpush2.xpose.msra.mxu0 0.0
      %1367 = vmatprep.subr.mxu0 0.0
      %1368 = vmatpush2.xpose.msra.mxu0 0.0
      %1369 = vmatprep.subr.mxu0 0.0
      %1370 = vmatpush2.xpose.msra.mxu0 0.0
      %1371 = vmatprep.subr.mxu0 0.0
      %1372 = vmatpush2.xpose.msra.mxu0 0.0
      %1373 = vmatprep.subr.mxu0 0.0
      %1374 = vmatpush2.xpose.msra.mxu0 0.0
      %1375 = vmatprep.subr.mxu0 0.0
      %1376 = vmatpush2.xpose.msra.mxu0 0.0
      %1377 = vmatprep.subr.mxu0 0.0
      %1378 = vmatpush2.xpose.msra.mxu0 0.0
      %1379 = vmatprep.subr.mxu0 0.0
      %1380 = vmatpush2.xpose.msra.mxu0 0.0
      %1381 = vmatprep.mubr.f32.mxu0 0.0
      %1382 = vmatmul.mubr.f32.gmra.mxu0 %v1313
      %v1383 = vpop.f32.mrf.mxu0
      %v1384 = vadd.f32 0.0, %v1383
      %v1385 = vpop.f32.mrf.mxu0
      %1386 = vdwg.mxu0
      %v1387 = vmul.f32 %v1306, 0.35355338
      %v1388 = vmul.f32 %v1384, 0.35355338
      %v1389 = vadd.f32 %v1387, %v1062
      %v1390 = vadd.f32 %v1388, %v1066
      %1391 = vrot.lane.b32.xlu0 %v894, 104
      %v1392 = vpop.permute.xlu0 %1391
      %1393 = vrot.lane.b32.xlu0 %v894, 72
      %v1394 = vpop.permute.xlu0 %1393
      %v1395 = vsel %vm903, %v1392, 0
      %v1397 = vsel %vm903, %v1394, 0
      %1399 = vmatprep.subr.mxu0 0.0
      %1400 = vmatpush1.xpose.msra.mxu0 0.0
      %1401 = vmatprep.subr.mxu0 0.0
      %1402 = vmatpush1.xpose.msra.mxu0 0.0
      %1403 = vmatprep.subr.mxu0 0.0
      %1404 = vmatpush1.xpose.msra.mxu0 0.0
      %1405 = vmatprep.subr.mxu0 0.0
      %1406 = vmatpush1.xpose.msra.mxu0 0.0
      %1407 = vmatprep.subr.mxu0 0.0
      %1408 = vmatpush1.xpose.msra.mxu0 0.0
      %1409 = vmatprep.subr.mxu0 0.0
      %1410 = vmatpush1.xpose.msra.mxu0 0.0
      %1411 = vmatprep.subr.mxu0 0.0
      %1412 = vmatpush1.xpose.msra.mxu0 0.0
      %1413 = vmatprep.subr.mxu0 0.0
      %1414 = vmatpush1.xpose.msra.mxu0 0.0
      %1415 = vmatprep.subr.mxu0 0.0
      %1416 = vmatpush1.xpose.msra.mxu0 0.0
      %1417 = vmatprep.subr.mxu0 0.0
      %1418 = vmatpush1.xpose.msra.mxu0 0.0
      %1419 = vmatprep.subr.mxu0 0.0
      %1420 = vmatpush1.xpose.msra.mxu0 0.0
      %1421 = vmatprep.subr.mxu0 0.0
      %1422 = vmatpush1.xpose.msra.mxu0 0.0
      %1423 = vmatprep.subr.mxu0 0.0
      %1424 = vmatpush1.xpose.msra.mxu0 0.0
      %1425 = vmatprep.subr.mxu0 0.0
      %1426 = vmatpush1.xpose.msra.mxu0 0.0
      %1427 = vmatprep.subr.mxu0 0.0
      %1428 = vmatpush1.xpose.msra.mxu0 0.0
      %1429 = vmatprep.subr.mxu0 0.0
      %1430 = vmatpush1.xpose.msra.mxu0 %v1397
      %1431 = vmatprep.subr.mxu0 0.0
      %1432 = vmatpush2.xpose.msra.mxu0 0.0
      %1433 = vmatprep.subr.mxu0 0.0
      %1434 = vmatpush2.xpose.msra.mxu0 0.0
      %1435 = vmatprep.subr.mxu0 0.0
      %1436 = vmatpush2.xpose.msra.mxu0 0.0
      %1437 = vmatprep.subr.mxu0 0.0
      %1438 = vmatpush2.xpose.msra.mxu0 0.0
      %1439 = vmatprep.subr.mxu0 0.0
      %1440 = vmatpush2.xpose.msra.mxu0 0.0
      %1441 = vmatprep.subr.mxu0 0.0
      %1442 = vmatpush2.xpose.msra.mxu0 0.0
      %1443 = vmatprep.subr.mxu0 0.0
      %1444 = vmatpush2.xpose.msra.mxu0 0.0
      %1445 = vmatprep.subr.mxu0 0.0
      %1446 = vmatpush2.xpose.msra.mxu0 0.0
      %1447 = vmatprep.subr.mxu0 0.0
      %1448 = vmatpush2.xpose.msra.mxu0 0.0
      %1449 = vmatprep.subr.mxu0 0.0
      %1450 = vmatpush2.xpose.msra.mxu0 0.0
      %1451 = vmatprep.subr.mxu0 0.0
      %1452 = vmatpush2.xpose.msra.mxu0 0.0
      %1453 = vmatprep.subr.mxu0 0.0
      %1454 = vmatpush2.xpose.msra.mxu0 0.0
      %1455 = vmatprep.subr.mxu0 0.0
      %1456 = vmatpush2.xpose.msra.mxu0 0.0
      %1457 = vmatprep.subr.mxu0 0.0
      %1458 = vmatpush2.xpose.msra.mxu0 0.0
      %1459 = vmatprep.subr.mxu0 0.0
      %1460 = vmatpush2.xpose.msra.mxu0 0.0
      %1461 = vmatprep.subr.mxu0 0.0
      %1462 = vmatpush2.xpose.msra.mxu0 0.0
      %1463 = vmatprep.mubr.f32.mxu0 0.0
      %1464 = vmatmul.mubr.f32.gmra.mxu0 %v1395
      %v1465 = vpop.f32.mrf.mxu0
      %v1466 = vadd.f32 0.0, %v1465
      %v1467 = vpop.f32.mrf.mxu0
      %1468 = vdwg.mxu0
      %1469 = vrot.lane.b32.xlu0 %v897, 104
      %v1470 = vpop.permute.xlu0 %1469
      %1471 = vrot.lane.b32.xlu0 %v897, 72
      %v1472 = vpop.permute.xlu0 %1471
      %v1473 = vsel %vm903, %v1470, 0
      %v1475 = vsel %vm903, %v1472, 0
      %1477 = vmatprep.subr.mxu0 0.0
      %1478 = vmatpush1.xpose.msra.mxu0 0.0
      %1479 = vmatprep.subr.mxu0 0.0
      %1480 = vmatpush1.xpose.msra.mxu0 0.0
      %1481 = vmatprep.subr.mxu0 0.0
      %1482 = vmatpush1.xpose.msra.mxu0 0.0
      %1483 = vmatprep.subr.mxu0 0.0
      %1484 = vmatpush1.xpose.msra.mxu0 0.0
      %1485 = vmatprep.subr.mxu0 0.0
      %1486 = vmatpush1.xpose.msra.mxu0 0.0
      %1487 = vmatprep.subr.mxu0 0.0
      %1488 = vmatpush1.xpose.msra.mxu0 0.0
      %1489 = vmatprep.subr.mxu0 0.0
      %1490 = vmatpush1.xpose.msra.mxu0 0.0
      %1491 = vmatprep.subr.mxu0 0.0
      %1492 = vmatpush1.xpose.msra.mxu0 0.0
      %1493 = vmatprep.subr.mxu0 0.0
      %1494 = vmatpush1.xpose.msra.mxu0 0.0
      %1495 = vmatprep.subr.mxu0 0.0
      %1496 = vmatpush1.xpose.msra.mxu0 0.0
      %1497 = vmatprep.subr.mxu0 0.0
      %1498 = vmatpush1.xpose.msra.mxu0 0.0
      %1499 = vmatprep.subr.mxu0 0.0
      %1500 = vmatpush1.xpose.msra.mxu0 0.0
      %1501 = vmatprep.subr.mxu0 0.0
      %1502 = vmatpush1.xpose.msra.mxu0 0.0
      %1503 = vmatprep.subr.mxu0 0.0
      %1504 = vmatpush1.xpose.msra.mxu0 0.0
      %1505 = vmatprep.subr.mxu0 0.0
      %1506 = vmatpush1.xpose.msra.mxu0 0.0
      %1507 = vmatprep.subr.mxu0 0.0
      %1508 = vmatpush1.xpose.msra.mxu0 %v1475
      %1509 = vmatprep.subr.mxu0 0.0
      %1510 = vmatpush2.xpose.msra.mxu0 0.0
      %1511 = vmatprep.subr.mxu0 0.0
      %1512 = vmatpush2.xpose.msra.mxu0 0.0
      %1513 = vmatprep.subr.mxu0 0.0
      %1514 = vmatpush2.xpose.msra.mxu0 0.0
      %1515 = vmatprep.subr.mxu0 0.0
      %1516 = vmatpush2.xpose.msra.mxu0 0.0
      %1517 = vmatprep.subr.mxu0 0.0
      %1518 = vmatpush2.xpose.msra.mxu0 0.0
      %1519 = vmatprep.subr.mxu0 0.0
      %1520 = vmatpush2.xpose.msra.mxu0 0.0
      %1521 = vmatprep.subr.mxu0 0.0
      %1522 = vmatpush2.xpose.msra.mxu0 0.0
      %1523 = vmatprep.subr.mxu0 0.0
      %1524 = vmatpush2.xpose.msra.mxu0 0.0
      %1525 = vmatprep.subr.mxu0 0.0
      %1526 = vmatpush2.xpose.msra.mxu0 0.0
      %1527 = vmatprep.subr.mxu0 0.0
      %1528 = vmatpush2.xpose.msra.mxu0 0.0
      %1529 = vmatprep.subr.mxu0 0.0
      %1530 = vmatpush2.xpose.msra.mxu0 0.0
      %1531 = vmatprep.subr.mxu0 0.0
      %1532 = vmatpush2.xpose.msra.mxu0 0.0
      %1533 = vmatprep.subr.mxu0 0.0
      %1534 = vmatpush2.xpose.msra.mxu0 0.0
      %1535 = vmatprep.subr.mxu0 0.0
      %1536 = vmatpush2.xpose.msra.mxu0 0.0
      %1537 = vmatprep.subr.mxu0 0.0
      %1538 = vmatpush2.xpose.msra.mxu0 0.0
      %1539 = vmatprep.subr.mxu0 0.0
      %1540 = vmatpush2.xpose.msra.mxu0 0.0
      %1541 = vmatprep.mubr.f32.mxu0 0.0
      %1542 = vmatmul.mubr.f32.gmra.mxu0 %v1473
      %v1543 = vpop.f32.mrf.mxu0
      %v1544 = vadd.f32 0.0, %v1543
      %v1545 = vpop.f32.mrf.mxu0
      %1546 = vdwg.mxu0
      %v1547 = vmul.f32 %v1466, 0.35355338
      %v1548 = vmul.f32 %v1544, 0.35355338
      %v1549 = vadd.f32 %v1547, %v1062
      %v1550 = vadd.f32 %v1548, %v1066
      %v1551 = vsel %vm903, %v1069, -inf
      %1552 = vmax.xlane.f32.xlu0 %v1551
      %v1553 = vpop.xlane.xlu0 %1552
      %v1554 = vsel %vm903, %v1229, -inf
      %1555 = vmax.xlane.f32.xlu0 %v1554
      %v1556 = vpop.xlane.xlu0 %1555
      %v1557 = vsel %vm903, %v1389, -inf
      %1558 = vmax.xlane.f32.xlu0 %v1557
      %v1559 = vpop.xlane.xlu0 %1558
      %v1560 = vsel %vm903, %v1549, -inf
      %1561 = vmax.xlane.f32.xlu0 %v1560
      %v1562 = vpop.xlane.xlu0 %1561
      %v1563 = vsel %vm903, %v1070, -inf
      %1564 = vmax.xlane.f32.xlu0 %v1563
      %v1565 = vpop.xlane.xlu0 %1564
      %v1566 = vsel %vm903, %v1230, -inf
      %1567 = vmax.xlane.f32.xlu0 %v1566
      %v1568 = vpop.xlane.xlu0 %1567
      %v1569 = vsel %vm903, %v1390, -inf
      %1570 = vmax.xlane.f32.xlu0 %v1569
      %v1571 = vpop.xlane.xlu0 %1570
      %v1572 = vsel %vm903, %v1550, -inf
      %1573 = vmax.xlane.f32.xlu0 %v1572
      %v1574 = vpop.xlane.xlu0 %1573
      %v1575 = vsub.f32 %v1069, %v1553
      %v1576 = vsub.f32 %v1229, %v1556
      %v1577 = vsub.f32 %v1389, %v1559
      %v1578 = vsub.f32 %v1549, %v1562
      %v1579 = vsub.f32 %v1070, %v1565
      %v1580 = vsub.f32 %v1230, %v1568
      %v1581 = vsub.f32 %v1390, %v1571
      %v1582 = vsub.f32 %v1550, %v1574
      %v1583 = vmul.f32 %v1575, 1.442695
      %v1584 = vpow.pop %v1583
      %v1585 = vmul.f32 %v1576, 1.442695
      %v1586 = vpow.pop %v1585
      %v1587 = vmul.f32 %v1577, 1.442695
      %v1588 = vpow.pop %v1587
      %v1589 = vmul.f32 %v1578, 1.442695
      %v1590 = vpow.pop %v1589
      %v1591 = vmul.f32 %v1579, 1.442695
      %v1592 = vpow.pop %v1591
      %v1593 = vmul.f32 %v1580, 1.442695
      %v1594 = vpow.pop %v1593
      %v1595 = vmul.f32 %v1581, 1.442695
      %v1596 = vpow.pop %v1595
      %v1597 = vmul.f32 %v1582, 1.442695
      %v1598 = vpow.pop %v1597
      %v1599 = vsel %vm903, %v1584, 0.0
      %1600 = vadd.xlane.f32.xlu0 %v1599
      %v1601 = vpop.xlane.xlu0 %1600
      %v1602 = vsel %vm903, %v1586, 0.0
      %1603 = vadd.xlane.f32.xlu0 %v1602
      %v1604 = vpop.xlane.xlu0 %1603
      %v1605 = vsel %vm903, %v1588, 0.0
      %1606 = vadd.xlane.f32.xlu0 %v1605
      %v1607 = vpop.xlane.xlu0 %1606
      %v1608 = vsel %vm903, %v1590, 0.0
      %1609 = vadd.xlane.f32.xlu0 %v1608
      %v1610 = vpop.xlane.xlu0 %1609
      %v1611 = vsel %vm903, %v1592, 0.0
      %1612 = vadd.xlane.f32.xlu0 %v1611
      %v1613 = vpop.xlane.xlu0 %1612
      %v1614 = vsel %vm903, %v1594, 0.0
      %1615 = vadd.xlane.f32.xlu0 %v1614
      %v1616 = vpop.xlane.xlu0 %1615
      %v1617 = vsel %vm903, %v1596, 0.0
      %1618 = vadd.xlane.f32.xlu0 %v1617
      %v1619 = vpop.xlane.xlu0 %1618
      %v1620 = vsel %vm903, %v1598, 0.0
      %1621 = vadd.xlane.f32.xlu0 %v1620
      %v1622 = vpop.xlane.xlu0 %1621
      %v1623 = vrcp.pop %v1601
      %v1624 = vrcp.pop %v1604
      %v1625 = vrcp.pop %v1607
      %v1626 = vrcp.pop %v1610
      %v1627 = vrcp.pop %v1613
      %v1628 = vrcp.pop %v1616
      %v1629 = vrcp.pop %v1619
      %v1630 = vrcp.pop %v1622
      %v1631 = vmul.f32 %v1584, %v1623
      %v1632 = vmul.f32 %v1586, %v1624
      %v1633 = vmul.f32 %v1588, %v1625
      %v1634 = vmul.f32 %v1590, %v1626
      %v1635 = vmul.f32 %v1592, %v1627
      %v1636 = vmul.f32 %v1594, %v1628
      %v1637 = vmul.f32 %v1596, %v1629
      %v1638 = vmul.f32 %v1598, %v1630
      %1639 = vrot.lane.b32.xlu0 %v894, 64
      %v1640 = vpop.permute.xlu0 %1639
      %v1643 = vsel %vm903, %v1631, 0
      %1645 = vmatprep.subr.mxu0 0.0
      %1646 = vmatpush1.msra.mxu0 0.0
      %1647 = vmatprep.subr.mxu0 0.0
      %1648 = vmatpush1.msra.mxu0 0.0
      %1649 = vmatprep.subr.mxu0 0.0
      %1650 = vmatpush1.msra.mxu0 0.0
      %1651 = vmatprep.subr.mxu0 0.0
      %1652 = vmatpush1.msra.mxu0 0.0
      %1653 = vmatprep.subr.mxu0 0.0
      %1654 = vmatpush1.msra.mxu0 0.0
      %1655 = vmatprep.subr.mxu0 0.0
      %1656 = vmatpush1.msra.mxu0 0.0
      %1657 = vmatprep.subr.mxu0 0.0
      %1658 = vmatpush1.msra.mxu0 0.0
      %1659 = vmatprep.subr.mxu0 0.0
      %1660 = vmatpush1.msra.mxu0 0.0
      %1661 = vmatprep.subr.mxu0 0.0
      %1662 = vmatpush1.msra.mxu0 0.0
      %1663 = vmatprep.subr.mxu0 0.0
      %1664 = vmatpush1.msra.mxu0 0.0
      %1665 = vmatprep.subr.mxu0 0.0
      %1666 = vmatpush1.msra.mxu0 0.0
      %1667 = vmatprep.subr.mxu0 0.0
      %1668 = vmatpush1.msra.mxu0 0.0
      %1669 = vmatprep.subr.mxu0 0.0
      %1670 = vmatpush1.msra.mxu0 0.0
      %1671 = vmatprep.subr.mxu0 0.0
      %1672 = vmatpush1.msra.mxu0 0.0
      %1673 = vmatprep.subr.mxu0 0.0
      %1674 = vmatpush1.msra.mxu0 0.0
      %1675 = vmatprep.subr.mxu0 0.0
      %1676 = vmatpush1.msra.mxu0 %v1640
      %1677 = vmatprep.subr.mxu0 0.0
      %1678 = vmatpush2.msra.mxu0 0.0
      %1679 = vmatprep.subr.mxu0 0.0
      %1680 = vmatpush2.msra.mxu0 0.0
      %1681 = vmatprep.subr.mxu0 0.0
      %1682 = vmatpush2.msra.mxu0 0.0
      %1683 = vmatprep.subr.mxu0 0.0
      %1684 = vmatpush2.msra.mxu0 0.0
      %1685 = vmatprep.subr.mxu0 0.0
      %1686 = vmatpush2.msra.mxu0 0.0
      %1687 = vmatprep.subr.mxu0 0.0
      %1688 = vmatpush2.msra.mxu0 0.0
      %1689 = vmatprep.subr.mxu0 0.0
      %1690 = vmatpush2.msra.mxu0 0.0
      %1691 = vmatprep.subr.mxu0 0.0
      %1692 = vmatpush2.msra.mxu0 0.0
      %1693 = vmatprep.subr.mxu0 0.0
      %1694 = vmatpush2.msra.mxu0 0.0
      %1695 = vmatprep.subr.mxu0 0.0
      %1696 = vmatpush2.msra.mxu0 0.0
      %1697 = vmatprep.subr.mxu0 0.0
      %1698 = vmatpush2.msra.mxu0 0.0
      %1699 = vmatprep.subr.mxu0 0.0
      %1700 = vmatpush2.msra.mxu0 0.0
      %1701 = vmatprep.subr.mxu0 0.0
      %1702 = vmatpush2.msra.mxu0 0.0
      %1703 = vmatprep.subr.mxu0 0.0
      %1704 = vmatpush2.msra.mxu0 0.0
      %1705 = vmatprep.subr.mxu0 0.0
      %1706 = vmatpush2.msra.mxu0 0.0
      %1707 = vmatprep.subr.mxu0 0.0
      %1708 = vmatpush2.msra.mxu0 0.0
      %1709 = vmatprep.mubr.f32.mxu0 0.0
      %1710 = vmatmul.mubr.f32.gmra.mxu0 %v1643
      %v1711 = vpop.f32.mrf.mxu0
      %v1712 = vadd.f32 0.0, %v1711
      %v1713 = vpop.f32.mrf.mxu0
      %1714 = vdwg.mxu0
      %1715 = vrot.lane.b32.xlu0 %v897, 64
      %v1716 = vpop.permute.xlu0 %1715
      %v1719 = vsel %vm903, %v1635, 0
      %1721 = vmatprep.subr.mxu0 0.0
      %1722 = vmatpush1.msra.mxu0 0.0
      %1723 = vmatprep.subr.mxu0 0.0
      %1724 = vmatpush1.msra.mxu0 0.0
      %1725 = vmatprep.subr.mxu0 0.0
      %1726 = vmatpush1.msra.mxu0 0.0
      %1727 = vmatprep.subr.mxu0 0.0
      %1728 = vmatpush1.msra.mxu0 0.0
      %1729 = vmatprep.subr.mxu0 0.0
      %1730 = vmatpush1.msra.mxu0 0.0
      %1731 = vmatprep.subr.mxu0 0.0
      %1732 = vmatpush1.msra.mxu0 0.0
      %1733 = vmatprep.subr.mxu0 0.0
      %1734 = vmatpush1.msra.mxu0 0.0
      %1735 = vmatprep.subr.mxu0 0.0
      %1736 = vmatpush1.msra.mxu0 0.0
      %1737 = vmatprep.subr.mxu0 0.0
      %1738 = vmatpush1.msra.mxu0 0.0
      %1739 = vmatprep.subr.mxu0 0.0
      %1740 = vmatpush1.msra.mxu0 0.0
      %1741 = vmatprep.subr.mxu0 0.0
      %1742 = vmatpush1.msra.mxu0 0.0
      %1743 = vmatprep.subr.mxu0 0.0
      %1744 = vmatpush1.msra.mxu0 0.0
      %1745 = vmatprep.subr.mxu0 0.0
      %1746 = vmatpush1.msra.mxu0 0.0
      %1747 = vmatprep.subr.mxu0 0.0
      %1748 = vmatpush1.msra.mxu0 0.0
      %1749 = vmatprep.subr.mxu0 0.0
      %1750 = vmatpush1.msra.mxu0 0.0
      %1751 = vmatprep.subr.mxu0 0.0
      %1752 = vmatpush1.msra.mxu0 %v1716
      %1753 = vmatprep.subr.mxu0 0.0
      %1754 = vmatpush2.msra.mxu0 0.0
      %1755 = vmatprep.subr.mxu0 0.0
      %1756 = vmatpush2.msra.mxu0 0.0
      %1757 = vmatprep.subr.mxu0 0.0
      %1758 = vmatpush2.msra.mxu0 0.0
      %1759 = vmatprep.subr.mxu0 0.0
      %1760 = vmatpush2.msra.mxu0 0.0
      %1761 = vmatprep.subr.mxu0 0.0
      %1762 = vmatpush2.msra.mxu0 0.0
      %1763 = vmatprep.subr.mxu0 0.0
      %1764 = vmatpush2.msra.mxu0 0.0
      %1765 = vmatprep.subr.mxu0 0.0
      %1766 = vmatpush2.msra.mxu0 0.0
      %1767 = vmatprep.subr.mxu0 0.0
      %1768 = vmatpush2.msra.mxu0 0.0
      %1769 = vmatprep.subr.mxu0 0.0
      %1770 = vmatpush2.msra.mxu0 0.0
      %1771 = vmatprep.subr.mxu0 0.0
      %1772 = vmatpush2.msra.mxu0 0.0
      %1773 = vmatprep.subr.mxu0 0.0
      %1774 = vmatpush2.msra.mxu0 0.0
      %1775 = vmatprep.subr.mxu0 0.0
      %1776 = vmatpush2.msra.mxu0 0.0
      %1777 = vmatprep.subr.mxu0 0.0
      %1778 = vmatpush2.msra.mxu0 0.0
      %1779 = vmatprep.subr.mxu0 0.0
      %1780 = vmatpush2.msra.mxu0 0.0
      %1781 = vmatprep.subr.mxu0 0.0
      %1782 = vmatpush2.msra.mxu0 0.0
      %1783 = vmatprep.subr.mxu0 0.0
      %1784 = vmatpush2.msra.mxu0 0.0
      %1785 = vmatprep.mubr.f32.mxu0 0.0
      %1786 = vmatmul.mubr.f32.gmra.mxu0 %v1719
      %v1787 = vpop.f32.mrf.mxu0
      %v1788 = vadd.f32 0.0, %v1787
      %v1789 = vpop.f32.mrf.mxu0
      %1790 = vdwg.mxu0
      %1791 = vrot.lane.b32.xlu0 %v894, 56
      %v1792 = vpop.permute.xlu0 %1791
      %v1795 = vsel %vm903, %v1632, 0
      %1797 = vmatprep.subr.mxu0 0.0
      %1798 = vmatpush1.msra.mxu0 0.0
      %1799 = vmatprep.subr.mxu0 0.0
      %1800 = vmatpush1.msra.mxu0 0.0
      %1801 = vmatprep.subr.mxu0 0.0
      %1802 = vmatpush1.msra.mxu0 0.0
      %1803 = vmatprep.subr.mxu0 0.0
      %1804 = vmatpush1.msra.mxu0 0.0
      %1805 = vmatprep.subr.mxu0 0.0
      %1806 = vmatpush1.msra.mxu0 0.0
      %1807 = vmatprep.subr.mxu0 0.0
      %1808 = vmatpush1.msra.mxu0 0.0
      %1809 = vmatprep.subr.mxu0 0.0
      %1810 = vmatpush1.msra.mxu0 0.0
      %1811 = vmatprep.subr.mxu0 0.0
      %1812 = vmatpush1.msra.mxu0 0.0
      %1813 = vmatprep.subr.mxu0 0.0
      %1814 = vmatpush1.msra.mxu0 0.0
      %1815 = vmatprep.subr.mxu0 0.0
      %1816 = vmatpush1.msra.mxu0 0.0
      %1817 = vmatprep.subr.mxu0 0.0
      %1818 = vmatpush1.msra.mxu0 0.0
      %1819 = vmatprep.subr.mxu0 0.0
      %1820 = vmatpush1.msra.mxu0 0.0
      %1821 = vmatprep.subr.mxu0 0.0
      %1822 = vmatpush1.msra.mxu0 0.0
      %1823 = vmatprep.subr.mxu0 0.0
      %1824 = vmatpush1.msra.mxu0 0.0
      %1825 = vmatprep.subr.mxu0 0.0
      %1826 = vmatpush1.msra.mxu0 0.0
      %1827 = vmatprep.subr.mxu0 0.0
      %1828 = vmatpush1.msra.mxu0 %v1792
      %1829 = vmatprep.subr.mxu0 0.0
      %1830 = vmatpush2.msra.mxu0 0.0
      %1831 = vmatprep.subr.mxu0 0.0
      %1832 = vmatpush2.msra.mxu0 0.0
      %1833 = vmatprep.subr.mxu0 0.0
      %1834 = vmatpush2.msra.mxu0 0.0
      %1835 = vmatprep.subr.mxu0 0.0
      %1836 = vmatpush2.msra.mxu0 0.0
      %1837 = vmatprep.subr.mxu0 0.0
      %1838 = vmatpush2.msra.mxu0 0.0
      %1839 = vmatprep.subr.mxu0 0.0
      %1840 = vmatpush2.msra.mxu0 0.0
      %1841 = vmatprep.subr.mxu0 0.0
      %1842 = vmatpush2.msra.mxu0 0.0
      %1843 = vmatprep.subr.mxu0 0.0
      %1844 = vmatpush2.msra.mxu0 0.0
      %1845 = vmatprep.subr.mxu0 0.0
      %1846 = vmatpush2.msra.mxu0 0.0
      %1847 = vmatprep.subr.mxu0 0.0
      %1848 = vmatpush2.msra.mxu0 0.0
      %1849 = vmatprep.subr.mxu0 0.0
      %1850 = vmatpush2.msra.mxu0 0.0
      %1851 = vmatprep.subr.mxu0 0.0
      %1852 = vmatpush2.msra.mxu0 0.0
      %1853 = vmatprep.subr.mxu0 0.0
      %1854 = vmatpush2.msra.mxu0 0.0
      %1855 = vmatprep.subr.mxu0 0.0
      %1856 = vmatpush2.msra.mxu0 0.0
      %1857 = vmatprep.subr.mxu0 0.0
      %1858 = vmatpush2.msra.mxu0 0.0
      %1859 = vmatprep.subr.mxu0 0.0
      %1860 = vmatpush2.msra.mxu0 0.0
      %1861 = vmatprep.mubr.f32.mxu0 0.0
      %1862 = vmatmul.mubr.f32.gmra.mxu0 %v1795
      %v1863 = vpop.f32.mrf.mxu0
      %v1864 = vadd.f32 0.0, %v1863
      %v1865 = vpop.f32.mrf.mxu0
      %1866 = vdwg.mxu0
      %1867 = vrot.lane.b32.xlu0 %v897, 56
      %v1868 = vpop.permute.xlu0 %1867
      %v1871 = vsel %vm903, %v1636, 0
      %1873 = vmatprep.subr.mxu0 0.0
      %1874 = vmatpush1.msra.mxu0 0.0
      %1875 = vmatprep.subr.mxu0 0.0
      %1876 = vmatpush1.msra.mxu0 0.0
      %1877 = vmatprep.subr.mxu0 0.0
      %1878 = vmatpush1.msra.mxu0 0.0
      %1879 = vmatprep.subr.mxu0 0.0
      %1880 = vmatpush1.msra.mxu0 0.0
      %1881 = vmatprep.subr.mxu0 0.0
      %1882 = vmatpush1.msra.mxu0 0.0
      %1883 = vmatprep.subr.mxu0 0.0
      %1884 = vmatpush1.msra.mxu0 0.0
      %1885 = vmatprep.subr.mxu0 0.0
      %1886 = vmatpush1.msra.mxu0 0.0
      %1887 = vmatprep.subr.mxu0 0.0
      %1888 = vmatpush1.msra.mxu0 0.0
      %1889 = vmatprep.subr.mxu0 0.0
      %1890 = vmatpush1.msra.mxu0 0.0
      %1891 = vmatprep.subr.mxu0 0.0
      %1892 = vmatpush1.msra.mxu0 0.0
      %1893 = vmatprep.subr.mxu0 0.0
      %1894 = vmatpush1.msra.mxu0 0.0
      %1895 = vmatprep.subr.mxu0 0.0
      %1896 = vmatpush1.msra.mxu0 0.0
      %1897 = vmatprep.subr.mxu0 0.0
      %1898 = vmatpush1.msra.mxu0 0.0
      %1899 = vmatprep.subr.mxu0 0.0
      %1900 = vmatpush1.msra.mxu0 0.0
      %1901 = vmatprep.subr.mxu0 0.0
      %1902 = vmatpush1.msra.mxu0 0.0
      %1903 = vmatprep.subr.mxu0 0.0
      %1904 = vmatpush1.msra.mxu0 %v1868
      %1905 = vmatprep.subr.mxu0 0.0
      %1906 = vmatpush2.msra.mxu0 0.0
      %1907 = vmatprep.subr.mxu0 0.0
      %1908 = vmatpush2.msra.mxu0 0.0
      %1909 = vmatprep.subr.mxu0 0.0
      %1910 = vmatpush2.msra.mxu0 0.0
      %1911 = vmatprep.subr.mxu0 0.0
      %1912 = vmatpush2.msra.mxu0 0.0
      %1913 = vmatprep.subr.mxu0 0.0
      %1914 = vmatpush2.msra.mxu0 0.0
      %1915 = vmatprep.subr.mxu0 0.0
      %1916 = vmatpush2.msra.mxu0 0.0
      %1917 = vmatprep.subr.mxu0 0.0
      %1918 = vmatpush2.msra.mxu0 0.0
      %1919 = vmatprep.subr.mxu0 0.0
      %1920 = vmatpush2.msra.mxu0 0.0
      %1921 = vmatprep.subr.mxu0 0.0
      %1922 = vmatpush2.msra.mxu0 0.0
      %1923 = vmatprep.subr.mxu0 0.0
      %1924 = vmatpush2.msra.mxu0 0.0
      %1925 = vmatprep.subr.mxu0 0.0
      %1926 = vmatpush2.msra.mxu0 0.0
      %1927 = vmatprep.subr.mxu0 0.0
      %1928 = vmatpush2.msra.mxu0 0.0
      %1929 = vmatprep.subr.mxu0 0.0
      %1930 = vmatpush2.msra.mxu0 0.0
      %1931 = vmatprep.subr.mxu0 0.0
      %1932 = vmatpush2.msra.mxu0 0.0
      %1933 = vmatprep.subr.mxu0 0.0
      %1934 = vmatpush2.msra.mxu0 0.0
      %1935 = vmatprep.subr.mxu0 0.0
      %1936 = vmatpush2.msra.mxu0 0.0
      %1937 = vmatprep.mubr.f32.mxu0 0.0
      %1938 = vmatmul.mubr.f32.gmra.mxu0 %v1871
      %v1939 = vpop.f32.mrf.mxu0
      %v1940 = vadd.f32 0.0, %v1939
      %v1941 = vpop.f32.mrf.mxu0
      %1942 = vdwg.mxu0
      %1943 = vrot.lane.b32.xlu0 %v894, 48
      %v1944 = vpop.permute.xlu0 %1943
      %v1947 = vsel %vm903, %v1633, 0
      %1949 = vmatprep.subr.mxu0 0.0
      %1950 = vmatpush1.msra.mxu0 0.0
      %1951 = vmatprep.subr.mxu0 0.0
      %1952 = vmatpush1.msra.mxu0 0.0
      %1953 = vmatprep.subr.mxu0 0.0
      %1954 = vmatpush1.msra.mxu0 0.0
      %1955 = vmatprep.subr.mxu0 0.0
      %1956 = vmatpush1.msra.mxu0 0.0
      %1957 = vmatprep.subr.mxu0 0.0
      %1958 = vmatpush1.msra.mxu0 0.0
      %1959 = vmatprep.subr.mxu0 0.0
      %1960 = vmatpush1.msra.mxu0 0.0
      %1961 = vmatprep.subr.mxu0 0.0
      %1962 = vmatpush1.msra.mxu0 0.0
      %1963 = vmatprep.subr.mxu0 0.0
      %1964 = vmatpush1.msra.mxu0 0.0
      %1965 = vmatprep.subr.mxu0 0.0
      %1966 = vmatpush1.msra.mxu0 0.0
      %1967 = vmatprep.subr.mxu0 0.0
      %1968 = vmatpush1.msra.mxu0 0.0
      %1969 = vmatprep.subr.mxu0 0.0
      %1970 = vmatpush1.msra.mxu0 0.0
      %1971 = vmatprep.subr.mxu0 0.0
      %1972 = vmatpush1.msra.mxu0 0.0
      %1973 = vmatprep.subr.mxu0 0.0
      %1974 = vmatpush1.msra.mxu0 0.0
      %1975 = vmatprep.subr.mxu0 0.0
      %1976 = vmatpush1.msra.mxu0 0.0
      %1977 = vmatprep.subr.mxu0 0.0
      %1978 = vmatpush1.msra.mxu0 0.0
      %1979 = vmatprep.subr.mxu0 0.0
      %1980 = vmatpush1.msra.mxu0 %v1944
      %1981 = vmatprep.subr.mxu0 0.0
      %1982 = vmatpush2.msra.mxu0 0.0
      %1983 = vmatprep.subr.mxu0 0.0
      %1984 = vmatpush2.msra.mxu0 0.0
      %1985 = vmatprep.subr.mxu0 0.0
      %1986 = vmatpush2.msra.mxu0 0.0
      %1987 = vmatprep.subr.mxu0 0.0
      %1988 = vmatpush2.msra.mxu0 0.0
      %1989 = vmatprep.subr.mxu0 0.0
      %1990 = vmatpush2.msra.mxu0 0.0
      %1991 = vmatprep.subr.mxu0 0.0
      %1992 = vmatpush2.msra.mxu0 0.0
      %1993 = vmatprep.subr.mxu0 0.0
      %1994 = vmatpush2.msra.mxu0 0.0
      %1995 = vmatprep.subr.mxu0 0.0
      %1996 = vmatpush2.msra.mxu0 0.0
      %1997 = vmatprep.subr.mxu0 0.0
      %1998 = vmatpush2.msra.mxu0 0.0
      %1999 = vmatprep.subr.mxu0 0.0
      %2000 = vmatpush2.msra.mxu0 0.0
      %2001 = vmatprep.subr.mxu0 0.0
      %2002 = vmatpush2.msra.mxu0 0.0
      %2003 = vmatprep.subr.mxu0 0.0
      %2004 = vmatpush2.msra.mxu0 0.0
      %2005 = vmatprep.subr.mxu0 0.0
      %2006 = vmatpush2.msra.mxu0 0.0
      %2007 = vmatprep.subr.mxu0 0.0
      %2008 = vmatpush2.msra.mxu0 0.0
      %2009 = vmatprep.subr.mxu0 0.0
      %2010 = vmatpush2.msra.mxu0 0.0
      %2011 = vmatprep.subr.mxu0 0.0
      %2012 = vmatpush2.msra.mxu0 0.0
      %2013 = vmatprep.mubr.f32.mxu0 0.0
      %2014 = vmatmul.mubr.f32.gmra.mxu0 %v1947
      %v2015 = vpop.f32.mrf.mxu0
      %v2016 = vadd.f32 0.0, %v2015
      %v2017 = vpop.f32.mrf.mxu0
      %2018 = vdwg.mxu0
      %2019 = vrot.lane.b32.xlu0 %v897, 48
      %v2020 = vpop.permute.xlu0 %2019
      %v2023 = vsel %vm903, %v1637, 0
      %2025 = vmatprep.subr.mxu0 0.0
      %2026 = vmatpush1.msra.mxu0 0.0
      %2027 = vmatprep.subr.mxu0 0.0
      %2028 = vmatpush1.msra.mxu0 0.0
      %2029 = vmatprep.subr.mxu0 0.0
      %2030 = vmatpush1.msra.mxu0 0.0
      %2031 = vmatprep.subr.mxu0 0.0
      %2032 = vmatpush1.msra.mxu0 0.0
      %2033 = vmatprep.subr.mxu0 0.0
      %2034 = vmatpush1.msra.mxu0 0.0
      %2035 = vmatprep.subr.mxu0 0.0
      %2036 = vmatpush1.msra.mxu0 0.0
      %2037 = vmatprep.subr.mxu0 0.0
      %2038 = vmatpush1.msra.mxu0 0.0
      %2039 = vmatprep.subr.mxu0 0.0
      %2040 = vmatpush1.msra.mxu0 0.0
      %2041 = vmatprep.subr.mxu0 0.0
      %2042 = vmatpush1.msra.mxu0 0.0
      %2043 = vmatprep.subr.mxu0 0.0
      %2044 = vmatpush1.msra.mxu0 0.0
      %2045 = vmatprep.subr.mxu0 0.0
      %2046 = vmatpush1.msra.mxu0 0.0
      %2047 = vmatprep.subr.mxu0 0.0
      %2048 = vmatpush1.msra.mxu0 0.0
      %2049 = vmatprep.subr.mxu0 0.0
      %2050 = vmatpush1.msra.mxu0 0.0
      %2051 = vmatprep.subr.mxu0 0.0
      %2052 = vmatpush1.msra.mxu0 0.0
      %2053 = vmatprep.subr.mxu0 0.0
      %2054 = vmatpush1.msra.mxu0 0.0
      %2055 = vmatprep.subr.mxu0 0.0
      %2056 = vmatpush1.msra.mxu0 %v2020
      %2057 = vmatprep.subr.mxu0 0.0
      %2058 = vmatpush2.msra.mxu0 0.0
      %2059 = vmatprep.subr.mxu0 0.0
      %2060 = vmatpush2.msra.mxu0 0.0
      %2061 = vmatprep.subr.mxu0 0.0
      %2062 = vmatpush2.msra.mxu0 0.0
      %2063 = vmatprep.subr.mxu0 0.0
      %2064 = vmatpush2.msra.mxu0 0.0
      %2065 = vmatprep.subr.mxu0 0.0
      %2066 = vmatpush2.msra.mxu0 0.0
      %2067 = vmatprep.subr.mxu0 0.0
      %2068 = vmatpush2.msra.mxu0 0.0
      %2069 = vmatprep.subr.mxu0 0.0
      %2070 = vmatpush2.msra.mxu0 0.0
      %2071 = vmatprep.subr.mxu0 0.0
      %2072 = vmatpush2.msra.mxu0 0.0
      %2073 = vmatprep.subr.mxu0 0.0
      %2074 = vmatpush2.msra.mxu0 0.0
      %2075 = vmatprep.subr.mxu0 0.0
      %2076 = vmatpush2.msra.mxu0 0.0
      %2077 = vmatprep.subr.mxu0 0.0
      %2078 = vmatpush2.msra.mxu0 0.0
      %2079 = vmatprep.subr.mxu0 0.0
      %2080 = vmatpush2.msra.mxu0 0.0
      %2081 = vmatprep.subr.mxu0 0.0
      %2082 = vmatpush2.msra.mxu0 0.0
      %2083 = vmatprep.subr.mxu0 0.0
      %2084 = vmatpush2.msra.mxu0 0.0
      %2085 = vmatprep.subr.mxu0 0.0
      %2086 = vmatpush2.msra.mxu0 0.0
      %2087 = vmatprep.subr.mxu0 0.0
      %2088 = vmatpush2.msra.mxu0 0.0
      %2089 = vmatprep.mubr.f32.mxu0 0.0
      %2090 = vmatmul.mubr.f32.gmra.mxu0 %v2023
      %v2091 = vpop.f32.mrf.mxu0
      %v2092 = vadd.f32 0.0, %v2091
      %v2093 = vpop.f32.mrf.mxu0
      %2094 = vdwg.mxu0
      %2095 = vrot.lane.b32.xlu0 %v894, 40
      %v2096 = vpop.permute.xlu0 %2095
      %v2099 = vsel %vm903, %v1634, 0
      %2101 = vmatprep.subr.mxu0 0.0
      %2102 = vmatpush1.msra.mxu0 0.0
      %2103 = vmatprep.subr.mxu0 0.0
      %2104 = vmatpush1.msra.mxu0 0.0
      %2105 = vmatprep.subr.mxu0 0.0
      %2106 = vmatpush1.msra.mxu0 0.0
      %2107 = vmatprep.subr.mxu0 0.0
      %2108 = vmatpush1.msra.mxu0 0.0
      %2109 = vmatprep.subr.mxu0 0.0
      %2110 = vmatpush1.msra.mxu0 0.0
      %2111 = vmatprep.subr.mxu0 0.0
      %2112 = vmatpush1.msra.mxu0 0.0
      %2113 = vmatprep.subr.mxu0 0.0
      %2114 = vmatpush1.msra.mxu0 0.0
      %2115 = vmatprep.subr.mxu0 0.0
      %2116 = vmatpush1.msra.mxu0 0.0
      %2117 = vmatprep.subr.mxu0 0.0
      %2118 = vmatpush1.msra.mxu0 0.0
      %2119 = vmatprep.subr.mxu0 0.0
      %2120 = vmatpush1.msra.mxu0 0.0
      %2121 = vmatprep.subr.mxu0 0.0
      %2122 = vmatpush1.msra.mxu0 0.0
      %2123 = vmatprep.subr.mxu0 0.0
      %2124 = vmatpush1.msra.mxu0 0.0
      %2125 = vmatprep.subr.mxu0 0.0
      %2126 = vmatpush1.msra.mxu0 0.0
      %2127 = vmatprep.subr.mxu0 0.0
      %2128 = vmatpush1.msra.mxu0 0.0
      %2129 = vmatprep.subr.mxu0 0.0
      %2130 = vmatpush1.msra.mxu0 0.0
      %2131 = vmatprep.subr.mxu0 0.0
      %2132 = vmatpush1.msra.mxu0 %v2096
      %2133 = vmatprep.subr.mxu0 0.0
      %2134 = vmatpush2.msra.mxu0 0.0
      %2135 = vmatprep.subr.mxu0 0.0
      %2136 = vmatpush2.msra.mxu0 0.0
      %2137 = vmatprep.subr.mxu0 0.0
      %2138 = vmatpush2.msra.mxu0 0.0
      %2139 = vmatprep.subr.mxu0 0.0
      %2140 = vmatpush2.msra.mxu0 0.0
      %2141 = vmatprep.subr.mxu0 0.0
      %2142 = vmatpush2.msra.mxu0 0.0
      %2143 = vmatprep.subr.mxu0 0.0
      %2144 = vmatpush2.msra.mxu0 0.0
      %2145 = vmatprep.subr.mxu0 0.0
      %2146 = vmatpush2.msra.mxu0 0.0
      %2147 = vmatprep.subr.mxu0 0.0
      %2148 = vmatpush2.msra.mxu0 0.0
      %2149 = vmatprep.subr.mxu0 0.0
      %2150 = vmatpush2.msra.mxu0 0.0
      %2151 = vmatprep.subr.mxu0 0.0
      %2152 = vmatpush2.msra.mxu0 0.0
      %2153 = vmatprep.subr.mxu0 0.0
      %2154 = vmatpush2.msra.mxu0 0.0
      %2155 = vmatprep.subr.mxu0 0.0
      %2156 = vmatpush2.msra.mxu0 0.0
      %2157 = vmatprep.subr.mxu0 0.0
      %2158 = vmatpush2.msra.mxu0 0.0
      %2159 = vmatprep.subr.mxu0 0.0
      %2160 = vmatpush2.msra.mxu0 0.0
      %2161 = vmatprep.subr.mxu0 0.0
      %2162 = vmatpush2.msra.mxu0 0.0
      %2163 = vmatprep.subr.mxu0 0.0
      %2164 = vmatpush2.msra.mxu0 0.0
      %2165 = vmatprep.mubr.f32.mxu0 0.0
      %2166 = vmatmul.mubr.f32.gmra.mxu0 %v2099
      %v2167 = vpop.f32.mrf.mxu0
      %v2168 = vadd.f32 0.0, %v2167
      %v2169 = vpop.f32.mrf.mxu0
      %2170 = vdwg.mxu0
      %2171 = vrot.lane.b32.xlu0 %v897, 40
      %v2172 = vpop.permute.xlu0 %2171
      %v2175 = vsel %vm903, %v1638, 0
      %2177 = vmatprep.subr.mxu0 0.0
      %2178 = vmatpush1.msra.mxu0 0.0
      %2179 = vmatprep.subr.mxu0 0.0
      %2180 = vmatpush1.msra.mxu0 0.0
      %2181 = vmatprep.subr.mxu0 0.0
      %2182 = vmatpush1.msra.mxu0 0.0
      %2183 = vmatprep.subr.mxu0 0.0
      %2184 = vmatpush1.msra.mxu0 0.0
      %2185 = vmatprep.subr.mxu0 0.0
      %2186 = vmatpush1.msra.mxu0 0.0
      %2187 = vmatprep.subr.mxu0 0.0
      %2188 = vmatpush1.msra.mxu0 0.0
      %2189 = vmatprep.subr.mxu0 0.0
      %2190 = vmatpush1.msra.mxu0 0.0
      %2191 = vmatprep.subr.mxu0 0.0
      %2192 = vmatpush1.msra.mxu0 0.0
      %2193 = vmatprep.subr.mxu0 0.0
      %2194 = vmatpush1.msra.mxu0 0.0
      %2195 = vmatprep.subr.mxu0 0.0
      %2196 = vmatpush1.msra.mxu0 0.0
      %2197 = vmatprep.subr.mxu0 0.0
      %2198 = vmatpush1.msra.mxu0 0.0
      %2199 = vmatprep.subr.mxu0 0.0
      %2200 = vmatpush1.msra.mxu0 0.0
      %2201 = vmatprep.subr.mxu0 0.0
      %2202 = vmatpush1.msra.mxu0 0.0
      %2203 = vmatprep.subr.mxu0 0.0
      %2204 = vmatpush1.msra.mxu0 0.0
      %2205 = vmatprep.subr.mxu0 0.0
      %2206 = vmatpush1.msra.mxu0 0.0
      %2207 = vmatprep.subr.mxu0 0.0
      %2208 = vmatpush1.msra.mxu0 %v2172
      %2209 = vmatprep.subr.mxu0 0.0
      %2210 = vmatpush2.msra.mxu0 0.0
      %2211 = vmatprep.subr.mxu0 0.0
      %2212 = vmatpush2.msra.mxu0 0.0
      %2213 = vmatprep.subr.mxu0 0.0
      %2214 = vmatpush2.msra.mxu0 0.0
      %2215 = vmatprep.subr.mxu0 0.0
      %2216 = vmatpush2.msra.mxu0 0.0
      %2217 = vmatprep.subr.mxu0 0.0
      %2218 = vmatpush2.msra.mxu0 0.0
      %2219 = vmatprep.subr.mxu0 0.0
      %2220 = vmatpush2.msra.mxu0 0.0
      %2221 = vmatprep.subr.mxu0 0.0
      %2222 = vmatpush2.msra.mxu0 0.0
      %2223 = vmatprep.subr.mxu0 0.0
      %2224 = vmatpush2.msra.mxu0 0.0
      %2225 = vmatprep.subr.mxu0 0.0
      %2226 = vmatpush2.msra.mxu0 0.0
      %2227 = vmatprep.subr.mxu0 0.0
      %2228 = vmatpush2.msra.mxu0 0.0
      %2229 = vmatprep.subr.mxu0 0.0
      %2230 = vmatpush2.msra.mxu0 0.0
      %2231 = vmatprep.subr.mxu0 0.0
      %2232 = vmatpush2.msra.mxu0 0.0
      %2233 = vmatprep.subr.mxu0 0.0
      %2234 = vmatpush2.msra.mxu0 0.0
      %2235 = vmatprep.subr.mxu0 0.0
      %2236 = vmatpush2.msra.mxu0 0.0
      %2237 = vmatprep.subr.mxu0 0.0
      %2238 = vmatpush2.msra.mxu0 0.0
      %2239 = vmatprep.subr.mxu0 0.0
      %2240 = vmatpush2.msra.mxu0 0.0
      %2241 = vmatprep.mubr.f32.mxu0 0.0
      %2242 = vmatmul.mubr.f32.gmra.mxu0 %v2175
      %v2243 = vpop.f32.mrf.mxu0
      %v2244 = vadd.f32 0.0, %v2243
      %v2245 = vpop.f32.mrf.mxu0
      %2246 = vdwg.mxu0
      %2249 = vrot.lane.b32.xlu0 %v1864, 8
      %v2250 = vpop.permute.xlu0 %2249
      %2251 = vrot.lane.b32.xlu0 %v1940, 8
      %v2252 = vpop.permute.xlu0 %2251
      %2257 = vrot.lane.b32.xlu0 %v2016, 16
      %v2258 = vpop.permute.xlu0 %2257
      %2259 = vrot.lane.b32.xlu0 %v2092, 16
      %v2260 = vpop.permute.xlu0 %2259
      %2265 = vrot.lane.b32.xlu0 %v2168, 24
      %v2266 = vpop.permute.xlu0 %2265
      %2267 = vrot.lane.b32.xlu0 %v2244, 24
      %v2268 = vpop.permute.xlu0 %2267
      %v2271 = vsel %vm903, %v1712, %v2250
      %v2272 = vsel %vm903, %v1788, %v2252
      %vm2273 = vcmask 130048
      %v2274 = vsel %vm2273, %v2271, %v2258
      %v2275 = vsel %vm2273, %v2272, %v2260
      %vm2276 = vcmask 195584
      %v2277 = vsel %vm2276, %v2274, %v2266
      %v2278 = vsel %vm2276, %v2275, %v2268
      %v2279 = vpack.c.bf16 %v2278, %v2277
      %v2280 = vld [vmem:[%s738] sm:$0xf]
      %v2281 = vld [vmem:[%s738 + $0x4] sm:$0xf]
      %v2282 = vld [vmem:[%s738 + $0x8] sm:$0xf]
      %v2283 = vld [vmem:[%s738 + $0xc] sm:$0xf]
      %v2284 = vld [vmem:[%s742] sm:$0x1]
      %v2286 = vlaneseq
      %v2287 = vshrl.u32 %v2286, 7
      %v2288 = vsub.s32 0, %v2287
      %v2289 = vrot.slane %v2284, %v2288
      %v2295 = vunpack.c.l.b16 %v2280
      %v2296 = vunpack.c.l.b16 %v2281
      %v2297 = vunpack.c.l.b16 %v2282
      %v2298 = vunpack.c.l.b16 %v2283
      %v2299 = vpack.c.b16 %v2296, %v2295
      %v2300 = vpack.c.b16 %v2298, %v2297
      %v2304 = vsel %vm786, %v2279, 0
      %2306 = vmatprep.subr.bf16.mxu0 0
      %2307 = vmatpush1.bf16.msra.mxu0 0
      %2308 = vmatprep.subr.bf16.mxu0 0
      %2309 = vmatpush1.bf16.msra.mxu0 0
      %2310 = vmatprep.subr.bf16.mxu0 0
      %2311 = vmatpush1.bf16.msra.mxu0 0
      %2312 = vmatprep.subr.bf16.mxu0 0
      %2313 = vmatpush1.bf16.msra.mxu0 0
      %2314 = vmatprep.subr.bf16.mxu0 0
      %2315 = vmatpush1.bf16.msra.mxu0 0
      %2316 = vmatprep.subr.bf16.mxu0 0
      %2317 = vmatpush1.bf16.msra.mxu0 0
      %2318 = vmatprep.subr.bf16.mxu0 0
      %2319 = vmatpush1.bf16.msra.mxu0 %v2300
      %2320 = vmatprep.subr.bf16.mxu0 0
      %2321 = vmatpush1.bf16.msra.mxu0 %v2299
      %2322 = vmatprep.subr.bf16.mxu0 0
      %2323 = vmatpush2.bf16.msra.mxu0 0
      %2324 = vmatprep.subr.bf16.mxu0 0
      %2325 = vmatpush2.bf16.msra.mxu0 0
      %2326 = vmatprep.subr.bf16.mxu0 0
      %2327 = vmatpush2.bf16.msra.mxu0 0
      %2328 = vmatprep.subr.bf16.mxu0 0
      %2329 = vmatpush2.bf16.msra.mxu0 0
      %2330 = vmatprep.subr.bf16.mxu0 0
      %2331 = vmatpush2.bf16.msra.mxu0 0
      %2332 = vmatprep.subr.bf16.mxu0 0
      %2333 = vmatpush2.bf16.msra.mxu0 0
      %2334 = vmatprep.subr.bf16.mxu0 0
      %2335 = vmatpush2.bf16.msra.mxu0 0
      %2336 = vmatprep.subr.bf16.mxu0 0
      %2337 = vmatpush2.bf16.msra.mxu0 0
      %2338 = vmatprep.mubr.bf16.mxu0 0
      %2339 = vmatmul.mubr.bf16.gmra.mxu0 %v2304
      %v2340 = vpop.f32.mrf.mxu0
      %v2341 = vadd.f32 %v2289, %v2340
      %v2342 = vpop.f32.mrf.mxu0
      %v2343 = vpop.f32.mrf.mxu0
      %v2344 = vadd.f32 %v2289, %v2343
      %v2345 = vpop.f32.mrf.mxu0
      %2346 = vdwg.mxu0
      %v2347 = vadd.f32 %v828, %v2341
      %v2348 = vadd.f32 %v829, %v2344
      %v2349 = vld [vmem:[%s746] sm:$0x1]
      %v2350 = vld [vmem:[%s750] sm:$0x1]
      %v2351 = vsel %vm786, %v2347, 0.0
      %2352 = vadd.xlane.f32.xlu0 %v2351
      %v2353 = vpop.xlane.xlu0 %2352
      %v2354 = vsel %vm786, %v2348, 0.0
      %2355 = vadd.xlane.f32.xlu0 %v2354
      %v2356 = vpop.xlane.xlu0 %2355
      %v2357 = vmul.f32 %v2353, %v793
      %v2358 = vmul.f32 %v2356, %v793
      %v2359 = vsub.f32 %v2347, %v2357
      %v2360 = vsub.f32 %v2348, %v2358
      %v2361 = vmul.f32 %v2359, %v2359
      %v2362 = vmul.f32 %v2360, %v2360
      %v2363 = vsel %vm786, %v2361, 0.0
      %2364 = vadd.xlane.f32.xlu0 %v2363
      %v2365 = vpop.xlane.xlu0 %2364
      %v2366 = vsel %vm786, %v2362, 0.0
      %2367 = vadd.xlane.f32.xlu0 %v2366
      %v2368 = vpop.xlane.xlu0 %2367
      %v2369 = vmul.f32 %v2365, %v793
      %v2370 = vmul.f32 %v2368, %v793
      %v2371 = vadd.f32 %v2369, 1e-07
      %v2372 = vadd.f32 %v2370, 1e-07
      %v2373 = vrsqrt.pop %v2371
      %v2374 = vrsqrt.pop %v2372
      %v2375 = vmul.f32 %v2359, %v2373
      %v2376 = vmul.f32 %v2360, %v2374
      %v2378 = vlaneseq
      %v2379 = vshrl.u32 %v2378, 7
      %v2380 = vsub.s32 0, %v2379
      %v2381 = vrot.slane %v2349, %v2380
      %v2383 = vmul.f32 %v2375, %v2381
      %v2384 = vmul.f32 %v2376, %v2381
      %v2386 = vlaneseq
      %v2387 = vshrl.u32 %v2386, 7
      %v2388 = vsub.s32 0, %v2387
      %v2389 = vrot.slane %v2350, %v2388
      %v2391 = vadd.f32 %v2383, %v2389
      %v2392 = vadd.f32 %v2384, %v2389
      %v2393 = vpack.c.bf16 %v2392, %v2391
      %v2394 = vld [vmem:[%s755] sm:$0xf]
      %v2395 = vld [vmem:[%s755 + $0x4] sm:$0xf]
      %v2396 = vld [vmem:[%s755 + $0x8] sm:$0xf]
      %v2397 = vld [vmem:[%s755 + $0xc] sm:$0xf]
      %v2398 = vld [vmem:[%s759] sm:$0x1]
      %v2400 = vlaneseq
      %v2401 = vshrl.u32 %v2400, 7
      %v2402 = vsub.s32 0, %v2401
      %v2403 = vrot.slane %v2398, %v2402
      %v2409 = vunpack.c.l.b16 %v2394
      %v2410 = vunpack.c.l.b16 %v2395
      %v2411 = vunpack.c.l.b16 %v2396
      %v2412 = vunpack.c.l.b16 %v2397
      %v2413 = vpack.c.b16 %v2410, %v2409
      %v2414 = vpack.c.b16 %v2412, %v2411
      %v2418 = vsel %vm786, %v2393, 0
      %2420 = vmatprep.subr.bf16.mxu0 0
      %2421 = vmatpush1.bf16.msra.mxu0 0
      %2422 = vmatprep.subr.bf16.mxu0 0
      %2423 = vmatpush1.bf16.msra.mxu0 0
      %2424 = vmatprep.subr.bf16.mxu0 0
      %2425 = vmatpush1.bf16.msra.mxu0 0
      %2426 = vmatprep.subr.bf16.mxu0 0
      %2427 = vmatpush1.bf16.msra.mxu0 0
      %2428 = vmatprep.subr.bf16.mxu0 0
      %2429 = vmatpush1.bf16.msra.mxu0 0
      %2430 = vmatprep.subr.bf16.mxu0 0
      %2431 = vmatpush1.bf16.msra.mxu0 0
      %2432 = vmatprep.subr.bf16.mxu0 0
      %2433 = vmatpush1.bf16.msra.mxu0 %v2414
      %2434 = vmatprep.subr.bf16.mxu0 0
      %2435 = vmatpush1.bf16.msra.mxu0 %v2413
      %2436 = vmatprep.subr.bf16.mxu0 0
      %2437 = vmatpush2.bf16.msra.mxu0 0
      %2438 = vmatprep.subr.bf16.mxu0 0
      %2439 = vmatpush2.bf16.msra.mxu0 0
      %2440 = vmatprep.subr.bf16.mxu0 0
      %2441 = vmatpush2.bf16.msra.mxu0 0
      %2442 = vmatprep.subr.bf16.mxu0 0
      %2443 = vmatpush2.bf16.msra.mxu0 0
      %2444 = vmatprep.subr.bf16.mxu0 0
      %2445 = vmatpush2.bf16.msra.mxu0 0
      %2446 = vmatprep.subr.bf16.mxu0 0
      %2447 = vmatpush2.bf16.msra.mxu0 0
      %2448 = vmatprep.subr.bf16.mxu0 0
      %2449 = vmatpush2.bf16.msra.mxu0 0
      %2450 = vmatprep.subr.bf16.mxu0 0
      %2451 = vmatpush2.bf16.msra.mxu0 0
      %2452 = vmatprep.mubr.bf16.mxu0 0
      %2453 = vmatmul.mubr.bf16.gmra.mxu0 %v2418
      %v2454 = vpop.f32.mrf.mxu0
      %v2455 = vadd.f32 %v2403, %v2454
      %v2456 = vpop.f32.mrf.mxu0
      %v2457 = vpop.f32.mrf.mxu0
      %v2458 = vadd.f32 %v2403, %v2457
      %v2459 = vpop.f32.mrf.mxu0
      %2460 = vdwg.mxu0
      %v2461 = vmul.f32 %v2455, 0.5
      %v2462 = vmul.f32 %v2458, 0.5
      %v2463 = vmul.f32 %v2455, 0.044715
      %v2464 = vmul.f32 %v2458, 0.044715
      %v2465 = vmul.f32 %v2463, %v2455
      %v2466 = vmul.f32 %v2464, %v2458
      %v2467 = vmul.f32 %v2465, %v2455
      %v2468 = vmul.f32 %v2466, %v2458
      %v2469 = vadd.f32 %v2455, %v2467
      %v2470 = vadd.f32 %v2458, %v2468
      %v2471 = vmul.f32 %v2469, 0.7978846
      %v2472 = vmul.f32 %v2470, 0.7978846
      %v2473 = vtanh.pop %v2471
      %v2474 = vtanh.pop %v2472
      %v2475 = vadd.f32 %v2473, 1.0
      %v2476 = vadd.f32 %v2474, 1.0
      %v2477 = vmul.f32 %v2461, %v2475
      %v2478 = vmul.f32 %v2462, %v2476
      %v2479 = vpack.c.bf16 %v2478, %v2477
      %v2480 = vld [vmem:[%s764] sm:$0xf]
      %v2481 = vld [vmem:[%s764 + $0x4] sm:$0xf]
      %v2482 = vld [vmem:[%s764 + $0x8] sm:$0xf]
      %v2483 = vld [vmem:[%s764 + $0xc] sm:$0xf]
      %v2484 = vld [vmem:[%s764 + $0x10] sm:$0xf]
      %v2485 = vld [vmem:[%s764 + $0x14] sm:$0xf]
      %v2486 = vld [vmem:[%s764 + $0x18] sm:$0xf]
      %v2487 = vld [vmem:[%s764 + $0x1c] sm:$0xf]
      %v2488 = vld [vmem:[%s768] sm:$0x1]
      %v2490 = vlaneseq
      %v2491 = vshrl.u32 %v2490, 7
      %v2492 = vsub.s32 0, %v2491
      %v2493 = vrot.slane %v2488, %v2492
      %v2503 = vunpack.c.l.b16 %v2480
      %v2504 = vunpack.c.l.b16 %v2481
      %v2505 = vunpack.c.l.b16 %v2482
      %v2506 = vunpack.c.l.b16 %v2483
      %v2507 = vunpack.c.l.b16 %v2484
      %v2508 = vunpack.c.l.b16 %v2485
      %v2509 = vunpack.c.l.b16 %v2486
      %v2510 = vunpack.c.l.b16 %v2487
      %v2511 = vpack.c.b16 %v2504, %v2503
      %v2512 = vpack.c.b16 %v2506, %v2505
      %v2513 = vpack.c.b16 %v2508, %v2507
      %v2514 = vpack.c.b16 %v2510, %v2509
      %vm2519 = vcmask 523264
      %v2521 = vsel %vm2519, %v2479, 0
      %2523 = vmatprep.subr.bf16.mxu0 0
      %2524 = vmatpush1.bf16.msra.mxu0 0
      %2525 = vmatprep.subr.bf16.mxu0 0
      %2526 = vmatpush1.bf16.msra.mxu0 0
      %2527 = vmatprep.subr.bf16.mxu0 0
      %2528 = vmatpush1.bf16.msra.mxu0 0
      %2529 = vmatprep.subr.bf16.mxu0 0
      %2530 = vmatpush1.bf16.msra.mxu0 0
      %2531 = vmatprep.subr.bf16.mxu0 0
      %2532 = vmatpush1.bf16.msra.mxu0 %v2514
      %2533 = vmatprep.subr.bf16.mxu0 0
      %2534 = vmatpush1.bf16.msra.mxu0 %v2513
      %2535 = vmatprep.subr.bf16.mxu0 0
      %2536 = vmatpush1.bf16.msra.mxu0 %v2512
      %2537 = vmatprep.subr.bf16.mxu0 0
      %2538 = vmatpush1.bf16.msra.mxu0 %v2511
      %2539 = vmatprep.subr.bf16.mxu0 0
      %2540 = vmatpush2.bf16.msra.mxu0 0
      %2541 = vmatprep.subr.bf16.mxu0 0
      %2542 = vmatpush2.bf16.msra.mxu0 0
      %2543 = vmatprep.subr.bf16.mxu0 0
      %2544 = vmatpush2.bf16.msra.mxu0 0
      %2545 = vmatprep.subr.bf16.mxu0 0
      %2546 = vmatpush2.bf16.msra.mxu0 0
      %2547 = vmatprep.subr.bf16.mxu0 0
      %2548 = vmatpush2.bf16.msra.mxu0 0
      %2549 = vmatprep.subr.bf16.mxu0 0
      %2550 = vmatpush2.bf16.msra.mxu0 0
      %2551 = vmatprep.subr.bf16.mxu0 0
      %2552 = vmatpush2.bf16.msra.mxu0 0
      %2553 = vmatprep.subr.bf16.mxu0 0
      %2554 = vmatpush2.bf16.msra.mxu0 0
      %2555 = vmatprep.mubr.bf16.mxu0 0
      %2556 = vmatmul.mubr.bf16.gmra.mxu0 %v2521
      %v2557 = vpop.f32.mrf.mxu0
      %v2558 = vadd.f32 %v2493, %v2557
      %v2559 = vpop.f32.mrf.mxu0
      %v2560 = vpop.f32.mrf.mxu0
      %v2561 = vadd.f32 %v2493, %v2560
      %v2562 = vpop.f32.mrf.mxu0
      %2563 = vdwg.mxu0
      %v2564 = vadd.f32 %v2391, %v2558
      %v2565 = vadd.f32 %v2392, %v2561
      %v2566 = vld [vmem:[%s772] sm:$0x1]
      %v2567 = vld [vmem:[%s776] sm:$0x1]
      %v2568 = vsel %vm786, %v2564, 0.0
      %2569 = vadd.xlane.f32.xlu0 %v2568
      %v2570 = vpop.xlane.xlu0 %2569
      %v2571 = vsel %vm786, %v2565, 0.0
      %2572 = vadd.xlane.f32.xlu0 %v2571
      %v2573 = vpop.xlane.xlu0 %2572
      %v2574 = vmul.f32 %v2570, %v793
      %v2575 = vmul.f32 %v2573, %v793
      %v2576 = vsub.f32 %v2564, %v2574
      %v2577 = vsub.f32 %v2565, %v2575
      %v2578 = vmul.f32 %v2576, %v2576
      %v2579 = vmul.f32 %v2577, %v2577
      %v2580 = vsel %vm786, %v2578, 0.0
      %2581 = vadd.xlane.f32.xlu0 %v2580
      %v2582 = vpop.xlane.xlu0 %2581
      %v2583 = vsel %vm786, %v2579, 0.0
      %2584 = vadd.xlane.f32.xlu0 %v2583
      %v2585 = vpop.xlane.xlu0 %2584
      %v2586 = vmul.f32 %v2582, %v793
      %v2587 = vmul.f32 %v2585, %v793
      %v2588 = vadd.f32 %v2586, 1e-07
      %v2589 = vadd.f32 %v2587, 1e-07
      %v2590 = vrsqrt.pop %v2588
      %v2591 = vrsqrt.pop %v2589
      %v2592 = vmul.f32 %v2576, %v2590
      %v2593 = vmul.f32 %v2577, %v2591
      %v2595 = vlaneseq
      %v2596 = vshrl.u32 %v2595, 7
      %v2597 = vsub.s32 0, %v2596
      %v2598 = vrot.slane %v2566, %v2597
      %v2600 = vmul.f32 %v2592, %v2598
      %v2601 = vmul.f32 %v2593, %v2598
      %v2603 = vlaneseq
      %v2604 = vshrl.u32 %v2603, 7
      %v2605 = vsub.s32 0, %v2604
      %v2606 = vrot.slane %v2567, %v2605
      %v2608 = vadd.f32 %v2600, %v2606
      %v2609 = vadd.f32 %v2601, %v2606
      %v2610 = vpack.c.bf16 %v2609, %v2608
      %s2611 = scalar_lea.vmem %s729, 16
      %v2612 = vld [vmem:[%s2611] sm:$0xf]
      %v2613 = vld [vmem:[%s2611 + $0x4] sm:$0xf]
      %v2614 = vld [vmem:[%s2611 + $0x8] sm:$0xf]
      %v2615 = vld [vmem:[%s2611 + $0xc] sm:$0xf]
      %s2616 = scalar_lea.vmem %s733, 1
      %v2617 = vld [vmem:[%s2616] sm:$0x1]
      %v2619 = vlaneseq
      %v2620 = vshrl.u32 %v2619, 7
      %v2621 = vsub.s32 0, %v2620
      %v2622 = vrot.slane %v2617, %v2621
      %v2628 = vunpack.c.l.b16 %v2612
      %v2629 = vunpack.c.l.b16 %v2613
      %v2630 = vunpack.c.l.b16 %v2614
      %v2631 = vunpack.c.l.b16 %v2615
      %v2632 = vpack.c.b16 %v2629, %v2628
      %v2633 = vpack.c.b16 %v2631, %v2630
      %v2637 = vsel %vm786, %v2610, 0
      %2639 = vmatprep.subr.bf16.mxu0 0
      %2640 = vmatpush1.bf16.msra.mxu0 0
      %2641 = vmatprep.subr.bf16.mxu0 0
      %2642 = vmatpush1.bf16.msra.mxu0 0
      %2643 = vmatprep.subr.bf16.mxu0 0
      %2644 = vmatpush1.bf16.msra.mxu0 0
      %2645 = vmatprep.subr.bf16.mxu0 0
      %2646 = vmatpush1.bf16.msra.mxu0 0
      %2647 = vmatprep.subr.bf16.mxu0 0
      %2648 = vmatpush1.bf16.msra.mxu0 0
      %2649 = vmatprep.subr.bf16.mxu0 0
      %2650 = vmatpush1.bf16.msra.mxu0 0
      %2651 = vmatprep.subr.bf16.mxu0 0
      %2652 = vmatpush1.bf16.msra.mxu0 %v2633
      %2653 = vmatprep.subr.bf16.mxu0 0
      %2654 = vmatpush1.bf16.msra.mxu0 %v2632
      %2655 = vmatprep.subr.bf16.mxu0 0
      %2656 = vmatpush2.bf16.msra.mxu0 0
      %2657 = vmatprep.subr.bf16.mxu0 0
      %2658 = vmatpush2.bf16.msra.mxu0 0
      %2659 = vmatprep.subr.bf16.mxu0 0
      %2660 = vmatpush2.bf16.msra.mxu0 0
      %2661 = vmatprep.subr.bf16.mxu0 0
      %2662 = vmatpush2.bf16.msra.mxu0 0
      %2663 = vmatprep.subr.bf16.mxu0 0
      %2664 = vmatpush2.bf16.msra.mxu0 0
      %2665 = vmatprep.subr.bf16.mxu0 0
      %2666 = vmatpush2.bf16.msra.mxu0 0
      %2667 = vmatprep.subr.bf16.mxu0 0
      %2668 = vmatpush2.bf16.msra.mxu0 0
      %2669 = vmatprep.subr.bf16.mxu0 0
      %2670 = vmatpush2.bf16.msra.mxu0 0
      %2671 = vmatprep.mubr.bf16.mxu0 0
      %2672 = vmatmul.mubr.bf16.gmra.mxu0 %v2637
      %v2673 = vpop.f32.mrf.mxu0
      %v2674 = vadd.f32 %v2622, %v2673
      %v2675 = vpop.f32.mrf.mxu0
      %v2676 = vpop.f32.mrf.mxu0
      %v2677 = vadd.f32 %v2622, %v2676
      %v2678 = vpop.f32.mrf.mxu0
      %2679 = vdwg.mxu0
      %2681 = vrot.lane.b32.xlu0 %v2674, 96
      %v2682 = vpop.permute.xlu0 %2681
      %v2683 = vsel %vm903, %v2674, 0
      %v2685 = vsel %vm903, %v2682, 0
      %2687 = vmatprep.subr.mxu0 0.0
      %2688 = vmatpush1.xpose.msra.mxu0 0.0
      %2689 = vmatprep.subr.mxu0 0.0
      %2690 = vmatpush1.xpose.msra.mxu0 0.0
      %2691 = vmatprep.subr.mxu0 0.0
      %2692 = vmatpush1.xpose.msra.mxu0 0.0
      %2693 = vmatprep.subr.mxu0 0.0
      %2694 = vmatpush1.xpose.msra.mxu0 0.0
      %2695 = vmatprep.subr.mxu0 0.0
      %2696 = vmatpush1.xpose.msra.mxu0 0.0
      %2697 = vmatprep.subr.mxu0 0.0
      %2698 = vmatpush1.xpose.msra.mxu0 0.0
      %2699 = vmatprep.subr.mxu0 0.0
      %2700 = vmatpush1.xpose.msra.mxu0 0.0
      %2701 = vmatprep.subr.mxu0 0.0
      %2702 = vmatpush1.xpose.msra.mxu0 0.0
      %2703 = vmatprep.subr.mxu0 0.0
      %2704 = vmatpush1.xpose.msra.mxu0 0.0
      %2705 = vmatprep.subr.mxu0 0.0
      %2706 = vmatpush1.xpose.msra.mxu0 0.0
      %2707 = vmatprep.subr.mxu0 0.0
      %2708 = vmatpush1.xpose.msra.mxu0 0.0
      %2709 = vmatprep.subr.mxu0 0.0
      %2710 = vmatpush1.xpose.msra.mxu0 0.0
      %2711 = vmatprep.subr.mxu0 0.0
      %2712 = vmatpush1.xpose.msra.mxu0 0.0
      %2713 = vmatprep.subr.mxu0 0.0
      %2714 = vmatpush1.xpose.msra.mxu0 0.0
      %2715 = vmatprep.subr.mxu0 0.0
      %2716 = vmatpush1.xpose.msra.mxu0 0.0
      %2717 = vmatprep.subr.mxu0 0.0
      %2718 = vmatpush1.xpose.msra.mxu0 %v2685
      %2719 = vmatprep.subr.mxu0 0.0
      %2720 = vmatpush2.xpose.msra.mxu0 0.0
      %2721 = vmatprep.subr.mxu0 0.0
      %2722 = vmatpush2.xpose.msra.mxu0 0.0
      %2723 = vmatprep.subr.mxu0 0.0
      %2724 = vmatpush2.xpose.msra.mxu0 0.0
      %2725 = vmatprep.subr.mxu0 0.0
      %2726 = vmatpush2.xpose.msra.mxu0 0.0
      %2727 = vmatprep.subr.mxu0 0.0
      %2728 = vmatpush2.xpose.msra.mxu0 0.0
      %2729 = vmatprep.subr.mxu0 0.0
      %2730 = vmatpush2.xpose.msra.mxu0 0.0
      %2731 = vmatprep.subr.mxu0 0.0
      %2732 = vmatpush2.xpose.msra.mxu0 0.0
      %2733 = vmatprep.subr.mxu0 0.0
      %2734 = vmatpush2.xpose.msra.mxu0 0.0
      %2735 = vmatprep.subr.mxu0 0.0
      %2736 = vmatpush2.xpose.msra.mxu0 0.0
      %2737 = vmatprep.subr.mxu0 0.0
      %2738 = vmatpush2.xpose.msra.mxu0 0.0
      %2739 = vmatprep.subr.mxu0 0.0
      %2740 = vmatpush2.xpose.msra.mxu0 0.0
      %2741 = vmatprep.subr.mxu0 0.0
      %2742 = vmatpush2.xpose.msra.mxu0 0.0
      %2743 = vmatprep.subr.mxu0 0.0
      %2744 = vmatpush2.xpose.msra.mxu0 0.0
      %2745 = vmatprep.subr.mxu0 0.0
      %2746 = vmatpush2.xpose.msra.mxu0 0.0
      %2747 = vmatprep.subr.mxu0 0.0
      %2748 = vmatpush2.xpose.msra.mxu0 0.0
      %2749 = vmatprep.subr.mxu0 0.0
      %2750 = vmatpush2.xpose.msra.mxu0 0.0
      %2751 = vmatprep.mubr.f32.mxu0 0.0
      %2752 = vmatmul.mubr.f32.gmra.mxu0 %v2683
      %v2753 = vpop.f32.mrf.mxu0
      %v2754 = vadd.f32 0.0, %v2753
      %v2755 = vpop.f32.mrf.mxu0
      %2756 = vdwg.mxu0
      %2758 = vrot.lane.b32.xlu0 %v2677, 96
      %v2759 = vpop.permute.xlu0 %2758
      %v2760 = vsel %vm903, %v2677, 0
      %v2762 = vsel %vm903, %v2759, 0
      %2764 = vmatprep.subr.mxu0 0.0
      %2765 = vmatpush1.xpose.msra.mxu0 0.0
      %2766 = vmatprep.subr.mxu0 0.0
      %2767 = vmatpush1.xpose.msra.mxu0 0.0
      %2768 = vmatprep.subr.mxu0 0.0
      %2769 = vmatpush1.xpose.msra.mxu0 0.0
      %2770 = vmatprep.subr.mxu0 0.0
      %2771 = vmatpush1.xpose.msra.mxu0 0.0
      %2772 = vmatprep.subr.mxu0 0.0
      %2773 = vmatpush1.xpose.msra.mxu0 0.0
      %2774 = vmatprep.subr.mxu0 0.0
      %2775 = vmatpush1.xpose.msra.mxu0 0.0
      %2776 = vmatprep.subr.mxu0 0.0
      %2777 = vmatpush1.xpose.msra.mxu0 0.0
      %2778 = vmatprep.subr.mxu0 0.0
      %2779 = vmatpush1.xpose.msra.mxu0 0.0
      %2780 = vmatprep.subr.mxu0 0.0
      %2781 = vmatpush1.xpose.msra.mxu0 0.0
      %2782 = vmatprep.subr.mxu0 0.0
      %2783 = vmatpush1.xpose.msra.mxu0 0.0
      %2784 = vmatprep.subr.mxu0 0.0
      %2785 = vmatpush1.xpose.msra.mxu0 0.0
      %2786 = vmatprep.subr.mxu0 0.0
      %2787 = vmatpush1.xpose.msra.mxu0 0.0
      %2788 = vmatprep.subr.mxu0 0.0
      %2789 = vmatpush1.xpose.msra.mxu0 0.0
      %2790 = vmatprep.subr.mxu0 0.0
      %2791 = vmatpush1.xpose.msra.mxu0 0.0
      %2792 = vmatprep.subr.mxu0 0.0
      %2793 = vmatpush1.xpose.msra.mxu0 0.0
      %2794 = vmatprep.subr.mxu0 0.0
      %2795 = vmatpush1.xpose.msra.mxu0 %v2762
      %2796 = vmatprep.subr.mxu0 0.0
      %2797 = vmatpush2.xpose.msra.mxu0 0.0
      %2798 = vmatprep.subr.mxu0 0.0
      %2799 = vmatpush2.xpose.msra.mxu0 0.0
      %2800 = vmatprep.subr.mxu0 0.0
      %2801 = vmatpush2.xpose.msra.mxu0 0.0
      %2802 = vmatprep.subr.mxu0 0.0
      %2803 = vmatpush2.xpose.msra.mxu0 0.0
      %2804 = vmatprep.subr.mxu0 0.0
      %2805 = vmatpush2.xpose.msra.mxu0 0.0
      %2806 = vmatprep.subr.mxu0 0.0
      %2807 = vmatpush2.xpose.msra.mxu0 0.0
      %2808 = vmatprep.subr.mxu0 0.0
      %2809 = vmatpush2.xpose.msra.mxu0 0.0
      %2810 = vmatprep.subr.mxu0 0.0
      %2811 = vmatpush2.xpose.msra.mxu0 0.0
      %2812 = vmatprep.subr.mxu0 0.0
      %2813 = vmatpush2.xpose.msra.mxu0 0.0
      %2814 = vmatprep.subr.mxu0 0.0
      %2815 = vmatpush2.xpose.msra.mxu0 0.0
      %2816 = vmatprep.subr.mxu0 0.0
      %2817 = vmatpush2.xpose.msra.mxu0 0.0
      %2818 = vmatprep.subr.mxu0 0.0
      %2819 = vmatpush2.xpose.msra.mxu0 0.0
      %2820 = vmatprep.subr.mxu0 0.0
      %2821 = vmatpush2.xpose.msra.mxu0 0.0
      %2822 = vmatprep.subr.mxu0 0.0
      %2823 = vmatpush2.xpose.msra.mxu0 0.0
      %2824 = vmatprep.subr.mxu0 0.0
      %2825 = vmatpush2.xpose.msra.mxu0 0.0
      %2826 = vmatprep.subr.mxu0 0.0
      %2827 = vmatpush2.xpose.msra.mxu0 0.0
      %2828 = vmatprep.mubr.f32.mxu0 0.0
      %2829 = vmatmul.mubr.f32.gmra.mxu0 %v2760
      %v2830 = vpop.f32.mrf.mxu0
      %v2831 = vadd.f32 0.0, %v2830
      %v2832 = vpop.f32.mrf.mxu0
      %2833 = vdwg.mxu0
      %v2834 = vmul.f32 %v2754, 0.35355338
      %v2835 = vmul.f32 %v2831, 0.35355338
      %v2836 = vadd.f32 %v2834, %v1062
      %v2837 = vadd.f32 %v2835, %v1066
      %2838 = vrot.lane.b32.xlu0 %v2674, 120
      %v2839 = vpop.permute.xlu0 %2838
      %2840 = vrot.lane.b32.xlu0 %v2674, 88
      %v2841 = vpop.permute.xlu0 %2840
      %v2842 = vsel %vm903, %v2839, 0
      %v2844 = vsel %vm903, %v2841, 0
      %2846 = vmatprep.subr.mxu0 0.0
      %2847 = vmatpush1.xpose.msra.mxu0 0.0
      %2848 = vmatprep.subr.mxu0 0.0
      %2849 = vmatpush1.xpose.msra.mxu0 0.0
      %2850 = vmatprep.subr.mxu0 0.0
      %2851 = vmatpush1.xpose.msra.mxu0 0.0
      %2852 = vmatprep.subr.mxu0 0.0
      %2853 = vmatpush1.xpose.msra.mxu0 0.0
      %2854 = vmatprep.subr.mxu0 0.0
      %2855 = vmatpush1.xpose.msra.mxu0 0.0
      %2856 = vmatprep.subr.mxu0 0.0
      %2857 = vmatpush1.xpose.msra.mxu0 0.0
      %2858 = vmatprep.subr.mxu0 0.0
      %2859 = vmatpush1.xpose.msra.mxu0 0.0
      %2860 = vmatprep.subr.mxu0 0.0
      %2861 = vmatpush1.xpose.msra.mxu0 0.0
      %2862 = vmatprep.subr.mxu0 0.0
      %2863 = vmatpush1.xpose.msra.mxu0 0.0
      %2864 = vmatprep.subr.mxu0 0.0
      %2865 = vmatpush1.xpose.msra.mxu0 0.0
      %2866 = vmatprep.subr.mxu0 0.0
      %2867 = vmatpush1.xpose.msra.mxu0 0.0
      %2868 = vmatprep.subr.mxu0 0.0
      %2869 = vmatpush1.xpose.msra.mxu0 0.0
      %2870 = vmatprep.subr.mxu0 0.0
      %2871 = vmatpush1.xpose.msra.mxu0 0.0
      %2872 = vmatprep.subr.mxu0 0.0
      %2873 = vmatpush1.xpose.msra.mxu0 0.0
      %2874 = vmatprep.subr.mxu0 0.0
      %2875 = vmatpush1.xpose.msra.mxu0 0.0
      %2876 = vmatprep.subr.mxu0 0.0
      %2877 = vmatpush1.xpose.msra.mxu0 %v2844
      %2878 = vmatprep.subr.mxu0 0.0
      %2879 = vmatpush2.xpose.msra.mxu0 0.0
      %2880 = vmatprep.subr.mxu0 0.0
      %2881 = vmatpush2.xpose.msra.mxu0 0.0
      %2882 = vmatprep.subr.mxu0 0.0
      %2883 = vmatpush2.xpose.msra.mxu0 0.0
      %2884 = vmatprep.subr.mxu0 0.0
      %2885 = vmatpush2.xpose.msra.mxu0 0.0
      %2886 = vmatprep.subr.mxu0 0.0
      %2887 = vmatpush2.xpose.msra.mxu0 0.0
      %2888 = vmatprep.subr.mxu0 0.0
      %2889 = vmatpush2.xpose.msra.mxu0 0.0
      %2890 = vmatprep.subr.mxu0 0.0
      %2891 = vmatpush2.xpose.msra.mxu0 0.0
      %2892 = vmatprep.subr.mxu0 0.0
      %2893 = vmatpush2.xpose.msra.mxu0 0.0
      %2894 = vmatprep.subr.mxu0 0.0
      %2895 = vmatpush2.xpose.msra.mxu0 0.0
      %2896 = vmatprep.subr.mxu0 0.0
      %2897 = vmatpush2.xpose.msra.mxu0 0.0
      %2898 = vmatprep.subr.mxu0 0.0
      %2899 = vmatpush2.xpose.msra.mxu0 0.0
      %2900 = vmatprep.subr.mxu0 0.0
      %2901 = vmatpush2.xpose.msra.mxu0 0.0
      %2902 = vmatprep.subr.mxu0 0.0
      %2903 = vmatpush2.xpose.msra.mxu0 0.0
      %2904 = vmatprep.subr.mxu0 0.0
      %2905 = vmatpush2.xpose.msra.mxu0 0.0
      %2906 = vmatprep.subr.mxu0 0.0
      %2907 = vmatpush2.xpose.msra.mxu0 0.0
      %2908 = vmatprep.subr.mxu0 0.0
      %2909 = vmatpush2.xpose.msra.mxu0 0.0
      %2910 = vmatprep.mubr.f32.mxu0 0.0
      %2911 = vmatmul.mubr.f32.gmra.mxu0 %v2842
      %v2912 = vpop.f32.mrf.mxu0
      %v2913 = vadd.f32 0.0, %v2912
      %v2914 = vpop.f32.mrf.mxu0
      %2915 = vdwg.mxu0
      %2916 = vrot.lane.b32.xlu0 %v2677, 120
      %v2917 = vpop.permute.xlu0 %2916
      %2918 = vrot.lane.b32.xlu0 %v2677, 88
      %v2919 = vpop.permute.xlu0 %2918
      %v2920 = vsel %vm903, %v2917, 0
      %v2922 = vsel %vm903, %v2919, 0
      %2924 = vmatprep.subr.mxu0 0.0
      %2925 = vmatpush1.xpose.msra.mxu0 0.0
      %2926 = vmatprep.subr.mxu0 0.0
      %2927 = vmatpush1.xpose.msra.mxu0 0.0
      %2928 = vmatprep.subr.mxu0 0.0
      %2929 = vmatpush1.xpose.msra.mxu0 0.0
      %2930 = vmatprep.subr.mxu0 0.0
      %2931 = vmatpush1.xpose.msra.mxu0 0.0
      %2932 = vmatprep.subr.mxu0 0.0
      %2933 = vmatpush1.xpose.msra.mxu0 0.0
      %2934 = vmatprep.subr.mxu0 0.0
      %2935 = vmatpush1.xpose.msra.mxu0 0.0
      %2936 = vmatprep.subr.mxu0 0.0
      %2937 = vmatpush1.xpose.msra.mxu0 0.0
      %2938 = vmatprep.subr.mxu0 0.0
      %2939 = vmatpush1.xpose.msra.mxu0 0.0
      %2940 = vmatprep.subr.mxu0 0.0
      %2941 = vmatpush1.xpose.msra.mxu0 0.0
      %2942 = vmatprep.subr.mxu0 0.0
      %2943 = vmatpush1.xpose.msra.mxu0 0.0
      %2944 = vmatprep.subr.mxu0 0.0
      %2945 = vmatpush1.xpose.msra.mxu0 0.0
      %2946 = vmatprep.subr.mxu0 0.0
      %2947 = vmatpush1.xpose.msra.mxu0 0.0
      %2948 = vmatprep.subr.mxu0 0.0
      %2949 = vmatpush1.xpose.msra.mxu0 0.0
      %2950 = vmatprep.subr.mxu0 0.0
      %2951 = vmatpush1.xpose.msra.mxu0 0.0
      %2952 = vmatprep.subr.mxu0 0.0
      %2953 = vmatpush1.xpose.msra.mxu0 0.0
      %2954 = vmatprep.subr.mxu0 0.0
      %2955 = vmatpush1.xpose.msra.mxu0 %v2922
      %2956 = vmatprep.subr.mxu0 0.0
      %2957 = vmatpush2.xpose.msra.mxu0 0.0
      %2958 = vmatprep.subr.mxu0 0.0
      %2959 = vmatpush2.xpose.msra.mxu0 0.0
      %2960 = vmatprep.subr.mxu0 0.0
      %2961 = vmatpush2.xpose.msra.mxu0 0.0
      %2962 = vmatprep.subr.mxu0 0.0
      %2963 = vmatpush2.xpose.msra.mxu0 0.0
      %2964 = vmatprep.subr.mxu0 0.0
      %2965 = vmatpush2.xpose.msra.mxu0 0.0
      %2966 = vmatprep.subr.mxu0 0.0
      %2967 = vmatpush2.xpose.msra.mxu0 0.0
      %2968 = vmatprep.subr.mxu0 0.0
      %2969 = vmatpush2.xpose.msra.mxu0 0.0
      %2970 = vmatprep.subr.mxu0 0.0
      %2971 = vmatpush2.xpose.msra.mxu0 0.0
      %2972 = vmatprep.subr.mxu0 0.0
      %2973 = vmatpush2.xpose.msra.mxu0 0.0
      %2974 = vmatprep.subr.mxu0 0.0
      %2975 = vmatpush2.xpose.msra.mxu0 0.0
      %2976 = vmatprep.subr.mxu0 0.0
      %2977 = vmatpush2.xpose.msra.mxu0 0.0
      %2978 = vmatprep.subr.mxu0 0.0
      %2979 = vmatpush2.xpose.msra.mxu0 0.0
      %2980 = vmatprep.subr.mxu0 0.0
      %2981 = vmatpush2.xpose.msra.mxu0 0.0
      %2982 = vmatprep.subr.mxu0 0.0
      %2983 = vmatpush2.xpose.msra.mxu0 0.0
      %2984 = vmatprep.subr.mxu0 0.0
      %2985 = vmatpush2.xpose.msra.mxu0 0.0
      %2986 = vmatprep.subr.mxu0 0.0
      %2987 = vmatpush2.xpose.msra.mxu0 0.0
      %2988 = vmatprep.mubr.f32.mxu0 0.0
      %2989 = vmatmul.mubr.f32.gmra.mxu0 %v2920
      %v2990 = vpop.f32.mrf.mxu0
      %v2991 = vadd.f32 0.0, %v2990
      %v2992 = vpop.f32.mrf.mxu0
      %2993 = vdwg.mxu0
      %v2994 = vmul.f32 %v2913, 0.35355338
      %v2995 = vmul.f32 %v2991, 0.35355338
      %v2996 = vadd.f32 %v2994, %v1062
      %v2997 = vadd.f32 %v2995, %v1066
      %2998 = vrot.lane.b32.xlu0 %v2674, 112
      %v2999 = vpop.permute.xlu0 %2998
      %3000 = vrot.lane.b32.xlu0 %v2674, 80
      %v3001 = vpop.permute.xlu0 %3000
      %v3002 = vsel %vm903, %v2999, 0
      %v3004 = vsel %vm903, %v3001, 0
      %3006 = vmatprep.subr.mxu0 0.0
      %3007 = vmatpush1.xpose.msra.mxu0 0.0
      %3008 = vmatprep.subr.mxu0 0.0
      %3009 = vmatpush1.xpose.msra.mxu0 0.0
      %3010 = vmatprep.subr.mxu0 0.0
      %3011 = vmatpush1.xpose.msra.mxu0 0.0
      %3012 = vmatprep.subr.mxu0 0.0
      %3013 = vmatpush1.xpose.msra.mxu0 0.0
      %3014 = vmatprep.subr.mxu0 0.0
      %3015 = vmatpush1.xpose.msra.mxu0 0.0
      %3016 = vmatprep.subr.mxu0 0.0
      %3017 = vmatpush1.xpose.msra.mxu0 0.0
      %3018 = vmatprep.subr.mxu0 0.0
      %3019 = vmatpush1.xpose.msra.mxu0 0.0
      %3020 = vmatprep.subr.mxu0 0.0
      %3021 = vmatpush1.xpose.msra.mxu0 0.0
      %3022 = vmatprep.subr.mxu0 0.0
      %3023 = vmatpush1.xpose.msra.mxu0 0.0
      %3024 = vmatprep.subr.mxu0 0.0
      %3025 = vmatpush1.xpose.msra.mxu0 0.0
      %3026 = vmatprep.subr.mxu0 0.0
      %3027 = vmatpush1.xpose.msra.mxu0 0.0
      %3028 = vmatprep.subr.mxu0 0.0
      %3029 = vmatpush1.xpose.msra.mxu0 0.0
      %3030 = vmatprep.subr.mxu0 0.0
      %3031 = vmatpush1.xpose.msra.mxu0 0.0
      %3032 = vmatprep.subr.mxu0 0.0
      %3033 = vmatpush1.xpose.msra.mxu0 0.0
      %3034 = vmatprep.subr.mxu0 0.0
      %3035 = vmatpush1.xpose.msra.mxu0 0.0
      %3036 = vmatprep.subr.mxu0 0.0
      %3037 = vmatpush1.xpose.msra.mxu0 %v3004
      %3038 = vmatprep.subr.mxu0 0.0
      %3039 = vmatpush2.xpose.msra.mxu0 0.0
      %3040 = vmatprep.subr.mxu0 0.0
      %3041 = vmatpush2.xpose.msra.mxu0 0.0
      %3042 = vmatprep.subr.mxu0 0.0
      %3043 = vmatpush2.xpose.msra.mxu0 0.0
      %3044 = vmatprep.subr.mxu0 0.0
      %3045 = vmatpush2.xpose.msra.mxu0 0.0
      %3046 = vmatprep.subr.mxu0 0.0
      %3047 = vmatpush2.xpose.msra.mxu0 0.0
      %3048 = vmatprep.subr.mxu0 0.0
      %3049 = vmatpush2.xpose.msra.mxu0 0.0
      %3050 = vmatprep.subr.mxu0 0.0
      %3051 = vmatpush2.xpose.msra.mxu0 0.0
      %3052 = vmatprep.subr.mxu0 0.0
      %3053 = vmatpush2.xpose.msra.mxu0 0.0
      %3054 = vmatprep.subr.mxu0 0.0
      %3055 = vmatpush2.xpose.msra.mxu0 0.0
      %3056 = vmatprep.subr.mxu0 0.0
      %3057 = vmatpush2.xpose.msra.mxu0 0.0
      %3058 = vmatprep.subr.mxu0 0.0
      %3059 = vmatpush2.xpose.msra.mxu0 0.0
      %3060 = vmatprep.subr.mxu0 0.0
      %3061 = vmatpush2.xpose.msra.mxu0 0.0
      %3062 = vmatprep.subr.mxu0 0.0
      %3063 = vmatpush2.xpose.msra.mxu0 0.0
      %3064 = vmatprep.subr.mxu0 0.0
      %3065 = vmatpush2.xpose.msra.mxu0 0.0
      %3066 = vmatprep.subr.mxu0 0.0
      %3067 = vmatpush2.xpose.msra.mxu0 0.0
      %3068 = vmatprep.subr.mxu0 0.0
      %3069 = vmatpush2.xpose.msra.mxu0 0.0
      %3070 = vmatprep.mubr.f32.mxu0 0.0
      %3071 = vmatmul.mubr.f32.gmra.mxu0 %v3002
      %v3072 = vpop.f32.mrf.mxu0
      %v3073 = vadd.f32 0.0, %v3072
      %v3074 = vpop.f32.mrf.mxu0
      %3075 = vdwg.mxu0
      %3076 = vrot.lane.b32.xlu0 %v2677, 112
      %v3077 = vpop.permute.xlu0 %3076
      %3078 = vrot.lane.b32.xlu0 %v2677, 80
      %v3079 = vpop.permute.xlu0 %3078
      %v3080 = vsel %vm903, %v3077, 0
      %v3082 = vsel %vm903, %v3079, 0
      %3084 = vmatprep.subr.mxu0 0.0
      %3085 = vmatpush1.xpose.msra.mxu0 0.0
      %3086 = vmatprep.subr.mxu0 0.0
      %3087 = vmatpush1.xpose.msra.mxu0 0.0
      %3088 = vmatprep.subr.mxu0 0.0
      %3089 = vmatpush1.xpose.msra.mxu0 0.0
      %3090 = vmatprep.subr.mxu0 0.0
      %3091 = vmatpush1.xpose.msra.mxu0 0.0
      %3092 = vmatprep.subr.mxu0 0.0
      %3093 = vmatpush1.xpose.msra.mxu0 0.0
      %3094 = vmatprep.subr.mxu0 0.0
      %3095 = vmatpush1.xpose.msra.mxu0 0.0
      %3096 = vmatprep.subr.mxu0 0.0
      %3097 = vmatpush1.xpose.msra.mxu0 0.0
      %3098 = vmatprep.subr.mxu0 0.0
      %3099 = vmatpush1.xpose.msra.mxu0 0.0
      %3100 = vmatprep.subr.mxu0 0.0
      %3101 = vmatpush1.xpose.msra.mxu0 0.0
      %3102 = vmatprep.subr.mxu0 0.0
      %3103 = vmatpush1.xpose.msra.mxu0 0.0
      %3104 = vmatprep.subr.mxu0 0.0
      %3105 = vmatpush1.xpose.msra.mxu0 0.0
      %3106 = vmatprep.subr.mxu0 0.0
      %3107 = vmatpush1.xpose.msra.mxu0 0.0
      %3108 = vmatprep.subr.mxu0 0.0
      %3109 = vmatpush1.xpose.msra.mxu0 0.0
      %3110 = vmatprep.subr.mxu0 0.0
      %3111 = vmatpush1.xpose.msra.mxu0 0.0
      %3112 = vmatprep.subr.mxu0 0.0
      %3113 = vmatpush1.xpose.msra.mxu0 0.0
      %3114 = vmatprep.subr.mxu0 0.0
      %3115 = vmatpush1.xpose.msra.mxu0 %v3082
      %3116 = vmatprep.subr.mxu0 0.0
      %3117 = vmatpush2.xpose.msra.mxu0 0.0
      %3118 = vmatprep.subr.mxu0 0.0
      %3119 = vmatpush2.xpose.msra.mxu0 0.0
      %3120 = vmatprep.subr.mxu0 0.0
      %3121 = vmatpush2.xpose.msra.mxu0 0.0
      %3122 = vmatprep.subr.mxu0 0.0
      %3123 = vmatpush2.xpose.msra.mxu0 0.0
      %3124 = vmatprep.subr.mxu0 0.0
      %3125 = vmatpush2.xpose.msra.mxu0 0.0
      %3126 = vmatprep.subr.mxu0 0.0
      %3127 = vmatpush2.xpose.msra.mxu0 0.0
      %3128 = vmatprep.subr.mxu0 0.0
      %3129 = vmatpush2.xpose.msra.mxu0 0.0
      %3130 = vmatprep.subr.mxu0 0.0
      %3131 = vmatpush2.xpose.msra.mxu0 0.0
      %3132 = vmatprep.subr.mxu0 0.0
      %3133 = vmatpush2.xpose.msra.mxu0 0.0
      %3134 = vmatprep.subr.mxu0 0.0
      %3135 = vmatpush2.xpose.msra.mxu0 0.0
      %3136 = vmatprep.subr.mxu0 0.0
      %3137 = vmatpush2.xpose.msra.mxu0 0.0
      %3138 = vmatprep.subr.mxu0 0.0
      %3139 = vmatpush2.xpose.msra.mxu0 0.0
      %3140 = vmatprep.subr.mxu0 0.0
      %3141 = vmatpush2.xpose.msra.mxu0 0.0
      %3142 = vmatprep.subr.mxu0 0.0
      %3143 = vmatpush2.xpose.msra.mxu0 0.0
      %3144 = vmatprep.subr.mxu0 0.0
      %3145 = vmatpush2.xpose.msra.mxu0 0.0
      %3146 = vmatprep.subr.mxu0 0.0
      %3147 = vmatpush2.xpose.msra.mxu0 0.0
      %3148 = vmatprep.mubr.f32.mxu0 0.0
      %3149 = vmatmul.mubr.f32.gmra.mxu0 %v3080
      %v3150 = vpop.f32.mrf.mxu0
      %v3151 = vadd.f32 0.0, %v3150
      %v3152 = vpop.f32.mrf.mxu0
      %3153 = vdwg.mxu0
      %v3154 = vmul.f32 %v3073, 0.35355338
      %v3155 = vmul.f32 %v3151, 0.35355338
      %v3156 = vadd.f32 %v3154, %v1062
      %v3157 = vadd.f32 %v3155, %v1066
      %3158 = vrot.lane.b32.xlu0 %v2674, 104
      %v3159 = vpop.permute.xlu0 %3158
      %3160 = vrot.lane.b32.xlu0 %v2674, 72
      %v3161 = vpop.permute.xlu0 %3160
      %v3162 = vsel %vm903, %v3159, 0
      %v3164 = vsel %vm903, %v3161, 0
      %3166 = vmatprep.subr.mxu0 0.0
      %3167 = vmatpush1.xpose.msra.mxu0 0.0
      %3168 = vmatprep.subr.mxu0 0.0
      %3169 = vmatpush1.xpose.msra.mxu0 0.0
      %3170 = vmatprep.subr.mxu0 0.0
      %3171 = vmatpush1.xpose.msra.mxu0 0.0
      %3172 = vmatprep.subr.mxu0 0.0
      %3173 = vmatpush1.xpose.msra.mxu0 0.0
      %3174 = vmatprep.subr.mxu0 0.0
      %3175 = vmatpush1.xpose.msra.mxu0 0.0
      %3176 = vmatprep.subr.mxu0 0.0
      %3177 = vmatpush1.xpose.msra.mxu0 0.0
      %3178 = vmatprep.subr.mxu0 0.0
      %3179 = vmatpush1.xpose.msra.mxu0 0.0
      %3180 = vmatprep.subr.mxu0 0.0
      %3181 = vmatpush1.xpose.msra.mxu0 0.0
      %3182 = vmatprep.subr.mxu0 0.0
      %3183 = vmatpush1.xpose.msra.mxu0 0.0
      %3184 = vmatprep.subr.mxu0 0.0
      %3185 = vmatpush1.xpose.msra.mxu0 0.0
      %3186 = vmatprep.subr.mxu0 0.0
      %3187 = vmatpush1.xpose.msra.mxu0 0.0
      %3188 = vmatprep.subr.mxu0 0.0
      %3189 = vmatpush1.xpose.msra.mxu0 0.0
      %3190 = vmatprep.subr.mxu0 0.0
      %3191 = vmatpush1.xpose.msra.mxu0 0.0
      %3192 = vmatprep.subr.mxu0 0.0
      %3193 = vmatpush1.xpose.msra.mxu0 0.0
      %3194 = vmatprep.subr.mxu0 0.0
      %3195 = vmatpush1.xpose.msra.mxu0 0.0
      %3196 = vmatprep.subr.mxu0 0.0
      %3197 = vmatpush1.xpose.msra.mxu0 %v3164
      %3198 = vmatprep.subr.mxu0 0.0
      %3199 = vmatpush2.xpose.msra.mxu0 0.0
      %3200 = vmatprep.subr.mxu0 0.0
      %3201 = vmatpush2.xpose.msra.mxu0 0.0
      %3202 = vmatprep.subr.mxu0 0.0
      %3203 = vmatpush2.xpose.msra.mxu0 0.0
      %3204 = vmatprep.subr.mxu0 0.0
      %3205 = vmatpush2.xpose.msra.mxu0 0.0
      %3206 = vmatprep.subr.mxu0 0.0
      %3207 = vmatpush2.xpose.msra.mxu0 0.0
      %3208 = vmatprep.subr.mxu0 0.0
      %3209 = vmatpush2.xpose.msra.mxu0 0.0
      %3210 = vmatprep.subr.mxu0 0.0
      %3211 = vmatpush2.xpose.msra.mxu0 0.0
      %3212 = vmatprep.subr.mxu0 0.0
      %3213 = vmatpush2.xpose.msra.mxu0 0.0
      %3214 = vmatprep.subr.mxu0 0.0
      %3215 = vmatpush2.xpose.msra.mxu0 0.0
      %3216 = vmatprep.subr.mxu0 0.0
      %3217 = vmatpush2.xpose.msra.mxu0 0.0
      %3218 = vmatprep.subr.mxu0 0.0
      %3219 = vmatpush2.xpose.msra.mxu0 0.0
      %3220 = vmatprep.subr.mxu0 0.0
      %3221 = vmatpush2.xpose.msra.mxu0 0.0
      %3222 = vmatprep.subr.mxu0 0.0
      %3223 = vmatpush2.xpose.msra.mxu0 0.0
      %3224 = vmatprep.subr.mxu0 0.0
      %3225 = vmatpush2.xpose.msra.mxu0 0.0
      %3226 = vmatprep.subr.mxu0 0.0
      %3227 = vmatpush2.xpose.msra.mxu0 0.0
      %3228 = vmatprep.subr.mxu0 0.0
      %3229 = vmatpush2.xpose.msra.mxu0 0.0
      %3230 = vmatprep.mubr.f32.mxu0 0.0
      %3231 = vmatmul.mubr.f32.gmra.mxu0 %v3162
      %v3232 = vpop.f32.mrf.mxu0
      %v3233 = vadd.f32 0.0, %v3232
      %v3234 = vpop.f32.mrf.mxu0
      %3235 = vdwg.mxu0
      %3236 = vrot.lane.b32.xlu0 %v2677, 104
      %v3237 = vpop.permute.xlu0 %3236
      %3238 = vrot.lane.b32.xlu0 %v2677, 72
      %v3239 = vpop.permute.xlu0 %3238
      %v3240 = vsel %vm903, %v3237, 0
      %v3242 = vsel %vm903, %v3239, 0
      %3244 = vmatprep.subr.mxu0 0.0
      %3245 = vmatpush1.xpose.msra.mxu0 0.0
      %3246 = vmatprep.subr.mxu0 0.0
      %3247 = vmatpush1.xpose.msra.mxu0 0.0
      %3248 = vmatprep.subr.mxu0 0.0
      %3249 = vmatpush1.xpose.msra.mxu0 0.0
      %3250 = vmatprep.subr.mxu0 0.0
      %3251 = vmatpush1.xpose.msra.mxu0 0.0
      %3252 = vmatprep.subr.mxu0 0.0
      %3253 = vmatpush1.xpose.msra.mxu0 0.0
      %3254 = vmatprep.subr.mxu0 0.0
      %3255 = vmatpush1.xpose.msra.mxu0 0.0
      %3256 = vmatprep.subr.mxu0 0.0
      %3257 = vmatpush1.xpose.msra.mxu0 0.0
      %3258 = vmatprep.subr.mxu0 0.0
      %3259 = vmatpush1.xpose.msra.mxu0 0.0
      %3260 = vmatprep.subr.mxu0 0.0
      %3261 = vmatpush1.xpose.msra.mxu0 0.0
      %3262 = vmatprep.subr.mxu0 0.0
      %3263 = vmatpush1.xpose.msra.mxu0 0.0
      %3264 = vmatprep.subr.mxu0 0.0
      %3265 = vmatpush1.xpose.msra.mxu0 0.0
      %3266 = vmatprep.subr.mxu0 0.0
      %3267 = vmatpush1.xpose.msra.mxu0 0.0
      %3268 = vmatprep.subr.mxu0 0.0
      %3269 = vmatpush1.xpose.msra.mxu0 0.0
      %3270 = vmatprep.subr.mxu0 0.0
      %3271 = vmatpush1.xpose.msra.mxu0 0.0
      %3272 = vmatprep.subr.mxu0 0.0
      %3273 = vmatpush1.xpose.msra.mxu0 0.0
      %3274 = vmatprep.subr.mxu0 0.0
      %3275 = vmatpush1.xpose.msra.mxu0 %v3242
      %3276 = vmatprep.subr.mxu0 0.0
      %3277 = vmatpush2.xpose.msra.mxu0 0.0
      %3278 = vmatprep.subr.mxu0 0.0
      %3279 = vmatpush2.xpose.msra.mxu0 0.0
      %3280 = vmatprep.subr.mxu0 0.0
      %3281 = vmatpush2.xpose.msra.mxu0 0.0
      %3282 = vmatprep.subr.mxu0 0.0
      %3283 = vmatpush2.xpose.msra.mxu0 0.0
      %3284 = vmatprep.subr.mxu0 0.0
      %3285 = vmatpush2.xpose.msra.mxu0 0.0
      %3286 = vmatprep.subr.mxu0 0.0
      %3287 = vmatpush2.xpose.msra.mxu0 0.0
      %3288 = vmatprep.subr.mxu0 0.0
      %3289 = vmatpush2.xpose.msra.mxu0 0.0
      %3290 = vmatprep.subr.mxu0 0.0
      %3291 = vmatpush2.xpose.msra.mxu0 0.0
      %3292 = vmatprep.subr.mxu0 0.0
      %3293 = vmatpush2.xpose.msra.mxu0 0.0
      %3294 = vmatprep.subr.mxu0 0.0
      %3295 = vmatpush2.xpose.msra.mxu0 0.0
      %3296 = vmatprep.subr.mxu0 0.0
      %3297 = vmatpush2.xpose.msra.mxu0 0.0
      %3298 = vmatprep.subr.mxu0 0.0
      %3299 = vmatpush2.xpose.msra.mxu0 0.0
      %3300 = vmatprep.subr.mxu0 0.0
      %3301 = vmatpush2.xpose.msra.mxu0 0.0
      %3302 = vmatprep.subr.mxu0 0.0
      %3303 = vmatpush2.xpose.msra.mxu0 0.0
      %3304 = vmatprep.subr.mxu0 0.0
      %3305 = vmatpush2.xpose.msra.mxu0 0.0
      %3306 = vmatprep.subr.mxu0 0.0
      %3307 = vmatpush2.xpose.msra.mxu0 0.0
      %3308 = vmatprep.mubr.f32.mxu0 0.0
      %3309 = vmatmul.mubr.f32.gmra.mxu0 %v3240
      %v3310 = vpop.f32.mrf.mxu0
      %v3311 = vadd.f32 0.0, %v3310
      %v3312 = vpop.f32.mrf.mxu0
      %3313 = vdwg.mxu0
      %v3314 = vmul.f32 %v3233, 0.35355338
      %v3315 = vmul.f32 %v3311, 0.35355338
      %v3316 = vadd.f32 %v3314, %v1062
      %v3317 = vadd.f32 %v3315, %v1066
      %v3318 = vsel %vm903, %v2836, -inf
      %3319 = vmax.xlane.f32.xlu0 %v3318
      %v3320 = vpop.xlane.xlu0 %3319
      %v3321 = vsel %vm903, %v2996, -inf
      %3322 = vmax.xlane.f32.xlu0 %v3321
      %v3323 = vpop.xlane.xlu0 %3322
      %v3324 = vsel %vm903, %v3156, -inf
      %3325 = vmax.xlane.f32.xlu0 %v3324
      %v3326 = vpop.xlane.xlu0 %3325
      %v3327 = vsel %vm903, %v3316, -inf
      %3328 = vmax.xlane.f32.xlu0 %v3327
      %v3329 = vpop.xlane.xlu0 %3328
      %v3330 = vsel %vm903, %v2837, -inf
      %3331 = vmax.xlane.f32.xlu0 %v3330
      %v3332 = vpop.xlane.xlu0 %3331
      %v3333 = vsel %vm903, %v2997, -inf
      %3334 = vmax.xlane.f32.xlu0 %v3333
      %v3335 = vpop.xlane.xlu0 %3334
      %v3336 = vsel %vm903, %v3157, -inf
      %3337 = vmax.xlane.f32.xlu0 %v3336
      %v3338 = vpop.xlane.xlu0 %3337
      %v3339 = vsel %vm903, %v3317, -inf
      %3340 = vmax.xlane.f32.xlu0 %v3339
      %v3341 = vpop.xlane.xlu0 %3340
      %v3342 = vsub.f32 %v2836, %v3320
      %v3343 = vsub.f32 %v2996, %v3323
      %v3344 = vsub.f32 %v3156, %v3326
      %v3345 = vsub.f32 %v3316, %v3329
      %v3346 = vsub.f32 %v2837, %v3332
      %v3347 = vsub.f32 %v2997, %v3335
      %v3348 = vsub.f32 %v3157, %v3338
      %v3349 = vsub.f32 %v3317, %v3341
      %v3350 = vmul.f32 %v3342, 1.442695
      %v3351 = vpow.pop %v3350
      %v3352 = vmul.f32 %v3343, 1.442695
      %v3353 = vpow.pop %v3352
      %v3354 = vmul.f32 %v3344, 1.442695
      %v3355 = vpow.pop %v3354
      %v3356 = vmul.f32 %v3345, 1.442695
      %v3357 = vpow.pop %v3356
      %v3358 = vmul.f32 %v3346, 1.442695
      %v3359 = vpow.pop %v3358
      %v3360 = vmul.f32 %v3347, 1.442695
      %v3361 = vpow.pop %v3360
      %v3362 = vmul.f32 %v3348, 1.442695
      %v3363 = vpow.pop %v3362
      %v3364 = vmul.f32 %v3349, 1.442695
      %v3365 = vpow.pop %v3364
      %v3366 = vsel %vm903, %v3351, 0.0
      %3367 = vadd.xlane.f32.xlu0 %v3366
      %v3368 = vpop.xlane.xlu0 %3367
      %v3369 = vsel %vm903, %v3353, 0.0
      %3370 = vadd.xlane.f32.xlu0 %v3369
      %v3371 = vpop.xlane.xlu0 %3370
      %v3372 = vsel %vm903, %v3355, 0.0
      %3373 = vadd.xlane.f32.xlu0 %v3372
      %v3374 = vpop.xlane.xlu0 %3373
      %v3375 = vsel %vm903, %v3357, 0.0
      %3376 = vadd.xlane.f32.xlu0 %v3375
      %v3377 = vpop.xlane.xlu0 %3376
      %v3378 = vsel %vm903, %v3359, 0.0
      %3379 = vadd.xlane.f32.xlu0 %v3378
      %v3380 = vpop.xlane.xlu0 %3379
      %v3381 = vsel %vm903, %v3361, 0.0
      %3382 = vadd.xlane.f32.xlu0 %v3381
      %v3383 = vpop.xlane.xlu0 %3382
      %v3384 = vsel %vm903, %v3363, 0.0
      %3385 = vadd.xlane.f32.xlu0 %v3384
      %v3386 = vpop.xlane.xlu0 %3385
      %v3387 = vsel %vm903, %v3365, 0.0
      %3388 = vadd.xlane.f32.xlu0 %v3387
      %v3389 = vpop.xlane.xlu0 %3388
      %v3390 = vrcp.pop %v3368
      %v3391 = vrcp.pop %v3371
      %v3392 = vrcp.pop %v3374
      %v3393 = vrcp.pop %v3377
      %v3394 = vrcp.pop %v3380
      %v3395 = vrcp.pop %v3383
      %v3396 = vrcp.pop %v3386
      %v3397 = vrcp.pop %v3389
      %v3398 = vmul.f32 %v3351, %v3390
      %v3399 = vmul.f32 %v3353, %v3391
      %v3400 = vmul.f32 %v3355, %v3392
      %v3401 = vmul.f32 %v3357, %v3393
      %v3402 = vmul.f32 %v3359, %v3394
      %v3403 = vmul.f32 %v3361, %v3395
      %v3404 = vmul.f32 %v3363, %v3396
      %v3405 = vmul.f32 %v3365, %v3397
      %3406 = vrot.lane.b32.xlu0 %v2674, 64
      %v3407 = vpop.permute.xlu0 %3406
      %v3410 = vsel %vm903, %v3398, 0
      %3412 = vmatprep.subr.mxu0 0.0
      %3413 = vmatpush1.msra.mxu0 0.0
      %3414 = vmatprep.subr.mxu0 0.0
      %3415 = vmatpush1.msra.mxu0 0.0
      %3416 = vmatprep.subr.mxu0 0.0
      %3417 = vmatpush1.msra.mxu0 0.0
      %3418 = vmatprep.subr.mxu0 0.0
      %3419 = vmatpush1.msra.mxu0 0.0
      %3420 = vmatprep.subr.mxu0 0.0
      %3421 = vmatpush1.msra.mxu0 0.0
      %3422 = vmatprep.subr.mxu0 0.0
      %3423 = vmatpush1.msra.mxu0 0.0
      %3424 = vmatprep.subr.mxu0 0.0
      %3425 = vmatpush1.msra.mxu0 0.0
      %3426 = vmatprep.subr.mxu0 0.0
      %3427 = vmatpush1.msra.mxu0 0.0
      %3428 = vmatprep.subr.mxu0 0.0
      %3429 = vmatpush1.msra.mxu0 0.0
      %3430 = vmatprep.subr.mxu0 0.0
      %3431 = vmatpush1.msra.mxu0 0.0
      %3432 = vmatprep.subr.mxu0 0.0
      %3433 = vmatpush1.msra.mxu0 0.0
      %3434 = vmatprep.subr.mxu0 0.0
      %3435 = vmatpush1.msra.mxu0 0.0
      %3436 = vmatprep.subr.mxu0 0.0
      %3437 = vmatpush1.msra.mxu0 0.0
      %3438 = vmatprep.subr.mxu0 0.0
      %3439 = vmatpush1.msra.mxu0 0.0
      %3440 = vmatprep.subr.mxu0 0.0
      %3441 = vmatpush1.msra.mxu0 0.0
      %3442 = vmatprep.subr.mxu0 0.0
      %3443 = vmatpush1.msra.mxu0 %v3407
      %3444 = vmatprep.subr.mxu0 0.0
      %3445 = vmatpush2.msra.mxu0 0.0
      %3446 = vmatprep.subr.mxu0 0.0
      %3447 = vmatpush2.msra.mxu0 0.0
      %3448 = vmatprep.subr.mxu0 0.0
      %3449 = vmatpush2.msra.mxu0 0.0
      %3450 = vmatprep.subr.mxu0 0.0
      %3451 = vmatpush2.msra.mxu0 0.0
      %3452 = vmatprep.subr.mxu0 0.0
      %3453 = vmatpush2.msra.mxu0 0.0
      %3454 = vmatprep.subr.mxu0 0.0
      %3455 = vmatpush2.msra.mxu0 0.0
      %3456 = vmatprep.subr.mxu0 0.0
      %3457 = vmatpush2.msra.mxu0 0.0
      %3458 = vmatprep.subr.mxu0 0.0
      %3459 = vmatpush2.msra.mxu0 0.0
      %3460 = vmatprep.subr.mxu0 0.0
      %3461 = vmatpush2.msra.mxu0 0.0
      %3462 = vmatprep.subr.mxu0 0.0
      %3463 = vmatpush2.msra.mxu0 0.0
      %3464 = vmatprep.subr.mxu0 0.0
      %3465 = vmatpush2.msra.mxu0 0.0
      %3466 = vmatprep.subr.mxu0 0.0
      %3467 = vmatpush2.msra.mxu0 0.0
      %3468 = vmatprep.subr.mxu0 0.0
      %3469 = vmatpush2.msra.mxu0 0.0
      %3470 = vmatprep.subr.mxu0 0.0
      %3471 = vmatpush2.msra.mxu0 0.0
      %3472 = vmatprep.subr.mxu0 0.0
      %3473 = vmatpush2.msra.mxu0 0.0
      %3474 = vmatprep.subr.mxu0 0.0
      %3475 = vmatpush2.msra.mxu0 0.0
      %3476 = vmatprep.mubr.f32.mxu0 0.0
      %3477 = vmatmul.mubr.f32.gmra.mxu0 %v3410
      %v3478 = vpop.f32.mrf.mxu0
      %v3479 = vadd.f32 0.0, %v3478
      %v3480 = vpop.f32.mrf.mxu0
      %3481 = vdwg.mxu0
      %3482 = vrot.lane.b32.xlu0 %v2677, 64
      %v3483 = vpop.permute.xlu0 %3482
      %v3486 = vsel %vm903, %v3402, 0
      %3488 = vmatprep.subr.mxu0 0.0
      %3489 = vmatpush1.msra.mxu0 0.0
      %3490 = vmatprep.subr.mxu0 0.0
      %3491 = vmatpush1.msra.mxu0 0.0
      %3492 = vmatprep.subr.mxu0 0.0
      %3493 = vmatpush1.msra.mxu0 0.0
      %3494 = vmatprep.subr.mxu0 0.0
      %3495 = vmatpush1.msra.mxu0 0.0
      %3496 = vmatprep.subr.mxu0 0.0
      %3497 = vmatpush1.msra.mxu0 0.0
      %3498 = vmatprep.subr.mxu0 0.0
      %3499 = vmatpush1.msra.mxu0 0.0
      %3500 = vmatprep.subr.mxu0 0.0
      %3501 = vmatpush1.msra.mxu0 0.0
      %3502 = vmatprep.subr.mxu0 0.0
      %3503 = vmatpush1.msra.mxu0 0.0
      %3504 = vmatprep.subr.mxu0 0.0
      %3505 = vmatpush1.msra.mxu0 0.0
      %3506 = vmatprep.subr.mxu0 0.0
      %3507 = vmatpush1.msra.mxu0 0.0
      %3508 = vmatprep.subr.mxu0 0.0
      %3509 = vmatpush1.msra.mxu0 0.0
      %3510 = vmatprep.subr.mxu0 0.0
      %3511 = vmatpush1.msra.mxu0 0.0
      %3512 = vmatprep.subr.mxu0 0.0
      %3513 = vmatpush1.msra.mxu0 0.0
      %3514 = vmatprep.subr.mxu0 0.0
      %3515 = vmatpush1.msra.mxu0 0.0
      %3516 = vmatprep.subr.mxu0 0.0
      %3517 = vmatpush1.msra.mxu0 0.0
      %3518 = vmatprep.subr.mxu0 0.0
      %3519 = vmatpush1.msra.mxu0 %v3483
      %3520 = vmatprep.subr.mxu0 0.0
      %3521 = vmatpush2.msra.mxu0 0.0
      %3522 = vmatprep.subr.mxu0 0.0
      %3523 = vmatpush2.msra.mxu0 0.0
      %3524 = vmatprep.subr.mxu0 0.0
      %3525 = vmatpush2.msra.mxu0 0.0
      %3526 = vmatprep.subr.mxu0 0.0
      %3527 = vmatpush2.msra.mxu0 0.0
      %3528 = vmatprep.subr.mxu0 0.0
      %3529 = vmatpush2.msra.mxu0 0.0
      %3530 = vmatprep.subr.mxu0 0.0
      %3531 = vmatpush2.msra.mxu0 0.0
      %3532 = vmatprep.subr.mxu0 0.0
      %3533 = vmatpush2.msra.mxu0 0.0
      %3534 = vmatprep.subr.mxu0 0.0
      %3535 = vmatpush2.msra.mxu0 0.0
      %3536 = vmatprep.subr.mxu0 0.0
      %3537 = vmatpush2.msra.mxu0 0.0
      %3538 = vmatprep.subr.mxu0 0.0
      %3539 = vmatpush2.msra.mxu0 0.0
      %3540 = vmatprep.subr.mxu0 0.0
      %3541 = vmatpush2.msra.mxu0 0.0
      %3542 = vmatprep.subr.mxu0 0.0
      %3543 = vmatpush2.msra.mxu0 0.0
      %3544 = vmatprep.subr.mxu0 0.0
      %3545 = vmatpush2.msra.mxu0 0.0
      %3546 = vmatprep.subr.mxu0 0.0
      %3547 = vmatpush2.msra.mxu0 0.0
      %3548 = vmatprep.subr.mxu0 0.0
      %3549 = vmatpush2.msra.mxu0 0.0
      %3550 = vmatprep.subr.mxu0 0.0
      %3551 = vmatpush2.msra.mxu0 0.0
      %3552 = vmatprep.mubr.f32.mxu0 0.0
      %3553 = vmatmul.mubr.f32.gmra.mxu0 %v3486
      %v3554 = vpop.f32.mrf.mxu0
      %v3555 = vadd.f32 0.0, %v3554
      %v3556 = vpop.f32.mrf.mxu0
      %3557 = vdwg.mxu0
      %3558 = vrot.lane.b32.xlu0 %v2674, 56
      %v3559 = vpop.permute.xlu0 %3558
      %v3562 = vsel %vm903, %v3399, 0
      %3564 = vmatprep.subr.mxu0 0.0
      %3565 = vmatpush1.msra.mxu0 0.0
      %3566 = vmatprep.subr.mxu0 0.0
      %3567 = vmatpush1.msra.mxu0 0.0
      %3568 = vmatprep.subr.mxu0 0.0
      %3569 = vmatpush1.msra.mxu0 0.0
      %3570 = vmatprep.subr.mxu0 0.0
      %3571 = vmatpush1.msra.mxu0 0.0
      %3572 = vmatprep.subr.mxu0 0.0
      %3573 = vmatpush1.msra.mxu0 0.0
      %3574 = vmatprep.subr.mxu0 0.0
      %3575 = vmatpush1.msra.mxu0 0.0
      %3576 = vmatprep.subr.mxu0 0.0
      %3577 = vmatpush1.msra.mxu0 0.0
      %3578 = vmatprep.subr.mxu0 0.0
      %3579 = vmatpush1.msra.mxu0 0.0
      %3580 = vmatprep.subr.mxu0 0.0
      %3581 = vmatpush1.msra.mxu0 0.0
      %3582 = vmatprep.subr.mxu0 0.0
      %3583 = vmatpush1.msra.mxu0 0.0
      %3584 = vmatprep.subr.mxu0 0.0
      %3585 = vmatpush1.msra.mxu0 0.0
      %3586 = vmatprep.subr.mxu0 0.0
      %3587 = vmatpush1.msra.mxu0 0.0
      %3588 = vmatprep.subr.mxu0 0.0
      %3589 = vmatpush1.msra.mxu0 0.0
      %3590 = vmatprep.subr.mxu0 0.0
      %3591 = vmatpush1.msra.mxu0 0.0
      %3592 = vmatprep.subr.mxu0 0.0
      %3593 = vmatpush1.msra.mxu0 0.0
      %3594 = vmatprep.subr.mxu0 0.0
      %3595 = vmatpush1.msra.mxu0 %v3559
      %3596 = vmatprep.subr.mxu0 0.0
      %3597 = vmatpush2.msra.mxu0 0.0
      %3598 = vmatprep.subr.mxu0 0.0
      %3599 = vmatpush2.msra.mxu0 0.0
      %3600 = vmatprep.subr.mxu0 0.0
      %3601 = vmatpush2.msra.mxu0 0.0
      %3602 = vmatprep.subr.mxu0 0.0
      %3603 = vmatpush2.msra.mxu0 0.0
      %3604 = vmatprep.subr.mxu0 0.0
      %3605 = vmatpush2.msra.mxu0 0.0
      %3606 = vmatprep.subr.mxu0 0.0
      %3607 = vmatpush2.msra.mxu0 0.0
      %3608 = vmatprep.subr.mxu0 0.0
      %3609 = vmatpush2.msra.mxu0 0.0
      %3610 = vmatprep.subr.mxu0 0.0
      %3611 = vmatpush2.msra.mxu0 0.0
      %3612 = vmatprep.subr.mxu0 0.0
      %3613 = vmatpush2.msra.mxu0 0.0
      %3614 = vmatprep.subr.mxu0 0.0
      %3615 = vmatpush2.msra.mxu0 0.0
      %3616 = vmatprep.subr.mxu0 0.0
      %3617 = vmatpush2.msra.mxu0 0.0
      %3618 = vmatprep.subr.mxu0 0.0
      %3619 = vmatpush2.msra.mxu0 0.0
      %3620 = vmatprep.subr.mxu0 0.0
      %3621 = vmatpush2.msra.mxu0 0.0
      %3622 = vmatprep.subr.mxu0 0.0
      %3623 = vmatpush2.msra.mxu0 0.0
      %3624 = vmatprep.subr.mxu0 0.0
      %3625 = vmatpush2.msra.mxu0 0.0
      %3626 = vmatprep.subr.mxu0 0.0
      %3627 = vmatpush2.msra.mxu0 0.0
      %3628 = vmatprep.mubr.f32.mxu0 0.0
      %3629 = vmatmul.mubr.f32.gmra.mxu0 %v3562
      %v3630 = vpop.f32.mrf.mxu0
      %v3631 = vadd.f32 0.0, %v3630
      %v3632 = vpop.f32.mrf.mxu0
      %3633 = vdwg.mxu0
      %3634 = vrot.lane.b32.xlu0 %v2677, 56
      %v3635 = vpop.permute.xlu0 %3634
      %v3638 = vsel %vm903, %v3403, 0
      %3640 = vmatprep.subr.mxu0 0.0
      %3641 = vmatpush1.msra.mxu0 0.0
      %3642 = vmatprep.subr.mxu0 0.0
      %3643 = vmatpush1.msra.mxu0 0.0
      %3644 = vmatprep.subr.mxu0 0.0
      %3645 = vmatpush1.msra.mxu0 0.0
      %3646 = vmatprep.subr.mxu0 0.0
      %3647 = vmatpush1.msra.mxu0 0.0
      %3648 = vmatprep.subr.mxu0 0.0
      %3649 = vmatpush1.msra.mxu0 0.0
      %3650 = vmatprep.subr.mxu0 0.0
      %3651 = vmatpush1.msra.mxu0 0.0
      %3652 = vmatprep.subr.mxu0 0.0
      %3653 = vmatpush1.msra.mxu0 0.0
      %3654 = vmatprep.subr.mxu0 0.0
      %3655 = vmatpush1.msra.mxu0 0.0
      %3656 = vmatprep.subr.mxu0 0.0
      %3657 = vmatpush1.msra.mxu0 0.0
      %3658 = vmatprep.subr.mxu0 0.0
      %3659 = vmatpush1.msra.mxu0 0.0
      %3660 = vmatprep.subr.mxu0 0.0
      %3661 = vmatpush1.msra.mxu0 0.0
      %3662 = vmatprep.subr.mxu0 0.0
      %3663 = vmatpush1.msra.mxu0 0.0
      %3664 = vmatprep.subr.mxu0 0.0
      %3665 = vmatpush1.msra.mxu0 0.0
      %3666 = vmatprep.subr.mxu0 0.0
      %3667 = vmatpush1.msra.mxu0 0.0
      %3668 = vmatprep.subr.mxu0 0.0
      %3669 = vmatpush1.msra.mxu0 0.0
      %3670 = vmatprep.subr.mxu0 0.0
      %3671 = vmatpush1.msra.mxu0 %v3635
      %3672 = vmatprep.subr.mxu0 0.0
      %3673 = vmatpush2.msra.mxu0 0.0
      %3674 = vmatprep.subr.mxu0 0.0
      %3675 = vmatpush2.msra.mxu0 0.0
      %3676 = vmatprep.subr.mxu0 0.0
      %3677 = vmatpush2.msra.mxu0 0.0
      %3678 = vmatprep.subr.mxu0 0.0
      %3679 = vmatpush2.msra.mxu0 0.0
      %3680 = vmatprep.subr.mxu0 0.0
      %3681 = vmatpush2.msra.mxu0 0.0
      %3682 = vmatprep.subr.mxu0 0.0
      %3683 = vmatpush2.msra.mxu0 0.0
      %3684 = vmatprep.subr.mxu0 0.0
      %3685 = vmatpush2.msra.mxu0 0.0
      %3686 = vmatprep.subr.mxu0 0.0
      %3687 = vmatpush2.msra.mxu0 0.0
      %3688 = vmatprep.subr.mxu0 0.0
      %3689 = vmatpush2.msra.mxu0 0.0
      %3690 = vmatprep.subr.mxu0 0.0
      %3691 = vmatpush2.msra.mxu0 0.0
      %3692 = vmatprep.subr.mxu0 0.0
      %3693 = vmatpush2.msra.mxu0 0.0
      %3694 = vmatprep.subr.mxu0 0.0
      %3695 = vmatpush2.msra.mxu0 0.0
      %3696 = vmatprep.subr.mxu0 0.0
      %3697 = vmatpush2.msra.mxu0 0.0
      %3698 = vmatprep.subr.mxu0 0.0
      %3699 = vmatpush2.msra.mxu0 0.0
      %3700 = vmatprep.subr.mxu0 0.0
      %3701 = vmatpush2.msra.mxu0 0.0
      %3702 = vmatprep.subr.mxu0 0.0
      %3703 = vmatpush2.msra.mxu0 0.0
      %3704 = vmatprep.mubr.f32.mxu0 0.0
      %3705 = vmatmul.mubr.f32.gmra.mxu0 %v3638
      %v3706 = vpop.f32.mrf.mxu0
      %v3707 = vadd.f32 0.0, %v3706
      %v3708 = vpop.f32.mrf.mxu0
      %3709 = vdwg.mxu0
      %3710 = vrot.lane.b32.xlu0 %v2674, 48
      %v3711 = vpop.permute.xlu0 %3710
      %v3714 = vsel %vm903, %v3400, 0
      %3716 = vmatprep.subr.mxu0 0.0
      %3717 = vmatpush1.msra.mxu0 0.0
      %3718 = vmatprep.subr.mxu0 0.0
      %3719 = vmatpush1.msra.mxu0 0.0
      %3720 = vmatprep.subr.mxu0 0.0
      %3721 = vmatpush1.msra.mxu0 0.0
      %3722 = vmatprep.subr.mxu0 0.0
      %3723 = vmatpush1.msra.mxu0 0.0
      %3724 = vmatprep.subr.mxu0 0.0
      %3725 = vmatpush1.msra.mxu0 0.0
      %3726 = vmatprep.subr.mxu0 0.0
      %3727 = vmatpush1.msra.mxu0 0.0
      %3728 = vmatprep.subr.mxu0 0.0
      %3729 = vmatpush1.msra.mxu0 0.0
      %3730 = vmatprep.subr.mxu0 0.0
      %3731 = vmatpush1.msra.mxu0 0.0
      %3732 = vmatprep.subr.mxu0 0.0
      %3733 = vmatpush1.msra.mxu0 0.0
      %3734 = vmatprep.subr.mxu0 0.0
      %3735 = vmatpush1.msra.mxu0 0.0
      %3736 = vmatprep.subr.mxu0 0.0
      %3737 = vmatpush1.msra.mxu0 0.0
      %3738 = vmatprep.subr.mxu0 0.0
      %3739 = vmatpush1.msra.mxu0 0.0
      %3740 = vmatprep.subr.mxu0 0.0
      %3741 = vmatpush1.msra.mxu0 0.0
      %3742 = vmatprep.subr.mxu0 0.0
      %3743 = vmatpush1.msra.mxu0 0.0
      %3744 = vmatprep.subr.mxu0 0.0
      %3745 = vmatpush1.msra.mxu0 0.0
      %3746 = vmatprep.subr.mxu0 0.0
      %3747 = vmatpush1.msra.mxu0 %v3711
      %3748 = vmatprep.subr.mxu0 0.0
      %3749 = vmatpush2.msra.mxu0 0.0
      %3750 = vmatprep.subr.mxu0 0.0
      %3751 = vmatpush2.msra.mxu0 0.0
      %3752 = vmatprep.subr.mxu0 0.0
      %3753 = vmatpush2.msra.mxu0 0.0
      %3754 = vmatprep.subr.mxu0 0.0
      %3755 = vmatpush2.msra.mxu0 0.0
      %3756 = vmatprep.subr.mxu0 0.0
      %3757 = vmatpush2.msra.mxu0 0.0
      %3758 = vmatprep.subr.mxu0 0.0
      %3759 = vmatpush2.msra.mxu0 0.0
      %3760 = vmatprep.subr.mxu0 0.0
      %3761 = vmatpush2.msra.mxu0 0.0
      %3762 = vmatprep.subr.mxu0 0.0
      %3763 = vmatpush2.msra.mxu0 0.0
      %3764 = vmatprep.subr.mxu0 0.0
      %3765 = vmatpush2.msra.mxu0 0.0
      %3766 = vmatprep.subr.mxu0 0.0
      %3767 = vmatpush2.msra.mxu0 0.0
      %3768 = vmatprep.subr.mxu0 0.0
      %3769 = vmatpush2.msra.mxu0 0.0
      %3770 = vmatprep.subr.mxu0 0.0
      %3771 = vmatpush2.msra.mxu0 0.0
      %3772 = vmatprep.subr.mxu0 0.0
      %3773 = vmatpush2.msra.mxu0 0.0
      %3774 = vmatprep.subr.mxu0 0.0
      %3775 = vmatpush2.msra.mxu0 0.0
      %3776 = vmatprep.subr.mxu0 0.0
      %3777 = vmatpush2.msra.mxu0 0.0
      %3778 = vmatprep.subr.mxu0 0.0
      %3779 = vmatpush2.msra.mxu0 0.0
      %3780 = vmatprep.mubr.f32.mxu0 0.0
      %3781 = vmatmul.mubr.f32.gmra.mxu0 %v3714
      %v3782 = vpop.f32.mrf.mxu0
      %v3783 = vadd.f32 0.0, %v3782
      %v3784 = vpop.f32.mrf.mxu0
      %3785 = vdwg.mxu0
      %3786 = vrot.lane.b32.xlu0 %v2677, 48
      %v3787 = vpop.permute.xlu0 %3786
      %v3790 = vsel %vm903, %v3404, 0
      %3792 = vmatprep.subr.mxu0 0.0
      %3793 = vmatpush1.msra.mxu0 0.0
      %3794 = vmatprep.subr.mxu0 0.0
      %3795 = vmatpush1.msra.mxu0 0.0
      %3796 = vmatprep.subr.mxu0 0.0
      %3797 = vmatpush1.msra.mxu0 0.0
      %3798 = vmatprep.subr.mxu0 0.0
      %3799 = vmatpush1.msra.mxu0 0.0
      %3800 = vmatprep.subr.mxu0 0.0
      %3801 = vmatpush1.msra.mxu0 0.0
      %3802 = vmatprep.subr.mxu0 0.0
      %3803 = vmatpush1.msra.mxu0 0.0
      %3804 = vmatprep.subr.mxu0 0.0
      %3805 = vmatpush1.msra.mxu0 0.0
      %3806 = vmatprep.subr.mxu0 0.0
      %3807 = vmatpush1.msra.mxu0 0.0
      %3808 = vmatprep.subr.mxu0 0.0
      %3809 = vmatpush1.msra.mxu0 0.0
      %3810 = vmatprep.subr.mxu0 0.0
      %3811 = vmatpush1.msra.mxu0 0.0
      %3812 = vmatprep.subr.mxu0 0.0
      %3813 = vmatpush1.msra.mxu0 0.0
      %3814 = vmatprep.subr.mxu0 0.0
      %3815 = vmatpush1.msra.mxu0 0.0
      %3816 = vmatprep.subr.mxu0 0.0
      %3817 = vmatpush1.msra.mxu0 0.0
      %3818 = vmatprep.subr.mxu0 0.0
      %3819 = vmatpush1.msra.mxu0 0.0
      %3820 = vmatprep.subr.mxu0 0.0
      %3821 = vmatpush1.msra.mxu0 0.0
      %3822 = vmatprep.subr.mxu0 0.0
      %3823 = vmatpush1.msra.mxu0 %v3787
      %3824 = vmatprep.subr.mxu0 0.0
      %3825 = vmatpush2.msra.mxu0 0.0
      %3826 = vmatprep.subr.mxu0 0.0
      %3827 = vmatpush2.msra.mxu0 0.0
      %3828 = vmatprep.subr.mxu0 0.0
      %3829 = vmatpush2.msra.mxu0 0.0
      %3830 = vmatprep.subr.mxu0 0.0
      %3831 = vmatpush2.msra.mxu0 0.0
      %3832 = vmatprep.subr.mxu0 0.0
      %3833 = vmatpush2.msra.mxu0 0.0
      %3834 = vmatprep.subr.mxu0 0.0
      %3835 = vmatpush2.msra.mxu0 0.0
      %3836 = vmatprep.subr.mxu0 0.0
      %3837 = vmatpush2.msra.mxu0 0.0
      %3838 = vmatprep.subr.mxu0 0.0
      %3839 = vmatpush2.msra.mxu0 0.0
      %3840 = vmatprep.subr.mxu0 0.0
      %3841 = vmatpush2.msra.mxu0 0.0
      %3842 = vmatprep.subr.mxu0 0.0
      %3843 = vmatpush2.msra.mxu0 0.0
      %3844 = vmatprep.subr.mxu0 0.0
      %3845 = vmatpush2.msra.mxu0 0.0
      %3846 = vmatprep.subr.mxu0 0.0
      %3847 = vmatpush2.msra.mxu0 0.0
      %3848 = vmatprep.subr.mxu0 0.0
      %3849 = vmatpush2.msra.mxu0 0.0
      %3850 = vmatprep.subr.mxu0 0.0
      %3851 = vmatpush2.msra.mxu0 0.0
      %3852 = vmatprep.subr.mxu0 0.0
      %3853 = vmatpush2.msra.mxu0 0.0
      %3854 = vmatprep.subr.mxu0 0.0
      %3855 = vmatpush2.msra.mxu0 0.0
      %3856 = vmatprep.mubr.f32.mxu0 0.0
      %3857 = vmatmul.mubr.f32.gmra.mxu0 %v3790
      %v3858 = vpop.f32.mrf.mxu0
      %v3859 = vadd.f32 0.0, %v3858
      %v3860 = vpop.f32.mrf.mxu0
      %3861 = vdwg.mxu0
      %3862 = vrot.lane.b32.xlu0 %v2674, 40
      %v3863 = vpop.permute.xlu0 %3862
      %v3866 = vsel %vm903, %v3401, 0
      %3868 = vmatprep.subr.mxu0 0.0
      %3869 = vmatpush1.msra.mxu0 0.0
      %3870 = vmatprep.subr.mxu0 0.0
      %3871 = vmatpush1.msra.mxu0 0.0
      %3872 = vmatprep.subr.mxu0 0.0
      %3873 = vmatpush1.msra.mxu0 0.0
      %3874 = vmatprep.subr.mxu0 0.0
      %3875 = vmatpush1.msra.mxu0 0.0
      %3876 = vmatprep.subr.mxu0 0.0
      %3877 = vmatpush1.msra.mxu0 0.0
      %3878 = vmatprep.subr.mxu0 0.0
      %3879 = vmatpush1.msra.mxu0 0.0
      %3880 = vmatprep.subr.mxu0 0.0
      %3881 = vmatpush1.msra.mxu0 0.0
      %3882 = vmatprep.subr.mxu0 0.0
      %3883 = vmatpush1.msra.mxu0 0.0
      %3884 = vmatprep.subr.mxu0 0.0
      %3885 = vmatpush1.msra.mxu0 0.0
      %3886 = vmatprep.subr.mxu0 0.0
      %3887 = vmatpush1.msra.mxu0 0.0
      %3888 = vmatprep.subr.mxu0 0.0
      %3889 = vmatpush1.msra.mxu0 0.0
      %3890 = vmatprep.subr.mxu0 0.0
      %3891 = vmatpush1.msra.mxu0 0.0
      %3892 = vmatprep.subr.mxu0 0.0
      %3893 = vmatpush1.msra.mxu0 0.0
      %3894 = vmatprep.subr.mxu0 0.0
      %3895 = vmatpush1.msra.mxu0 0.0
      %3896 = vmatprep.subr.mxu0 0.0
      %3897 = vmatpush1.msra.mxu0 0.0
      %3898 = vmatprep.subr.mxu0 0.0
      %3899 = vmatpush1.msra.mxu0 %v3863
      %3900 = vmatprep.subr.mxu0 0.0
      %3901 = vmatpush2.msra.mxu0 0.0
      %3902 = vmatprep.subr.mxu0 0.0
      %3903 = vmatpush2.msra.mxu0 0.0
      %3904 = vmatprep.subr.mxu0 0.0
      %3905 = vmatpush2.msra.mxu0 0.0
      %3906 = vmatprep.subr.mxu0 0.0
      %3907 = vmatpush2.msra.mxu0 0.0
      %3908 = vmatprep.subr.mxu0 0.0
      %3909 = vmatpush2.msra.mxu0 0.0
      %3910 = vmatprep.subr.mxu0 0.0
      %3911 = vmatpush2.msra.mxu0 0.0
      %3912 = vmatprep.subr.mxu0 0.0
      %3913 = vmatpush2.msra.mxu0 0.0
      %3914 = vmatprep.subr.mxu0 0.0
      %3915 = vmatpush2.msra.mxu0 0.0
      %3916 = vmatprep.subr.mxu0 0.0
      %3917 = vmatpush2.msra.mxu0 0.0
      %3918 = vmatprep.subr.mxu0 0.0
      %3919 = vmatpush2.msra.mxu0 0.0
      %3920 = vmatprep.subr.mxu0 0.0
      %3921 = vmatpush2.msra.mxu0 0.0
      %3922 = vmatprep.subr.mxu0 0.0
      %3923 = vmatpush2.msra.mxu0 0.0
      %3924 = vmatprep.subr.mxu0 0.0
      %3925 = vmatpush2.msra.mxu0 0.0
      %3926 = vmatprep.subr.mxu0 0.0
      %3927 = vmatpush2.msra.mxu0 0.0
      %3928 = vmatprep.subr.mxu0 0.0
      %3929 = vmatpush2.msra.mxu0 0.0
      %3930 = vmatprep.subr.mxu0 0.0
      %3931 = vmatpush2.msra.mxu0 0.0
      %3932 = vmatprep.mubr.f32.mxu0 0.0
      %3933 = vmatmul.mubr.f32.gmra.mxu0 %v3866
      %v3934 = vpop.f32.mrf.mxu0
      %v3935 = vadd.f32 0.0, %v3934
      %v3936 = vpop.f32.mrf.mxu0
      %3937 = vdwg.mxu0
      %3938 = vrot.lane.b32.xlu0 %v2677, 40
      %v3939 = vpop.permute.xlu0 %3938
      %v3942 = vsel %vm903, %v3405, 0
      %3944 = vmatprep.subr.mxu0 0.0
      %3945 = vmatpush1.msra.mxu0 0.0
      %3946 = vmatprep.subr.mxu0 0.0
      %3947 = vmatpush1.msra.mxu0 0.0
      %3948 = vmatprep.subr.mxu0 0.0
      %3949 = vmatpush1.msra.mxu0 0.0
      %3950 = vmatprep.subr.mxu0 0.0
      %3951 = vmatpush1.msra.mxu0 0.0
      %3952 = vmatprep.subr.mxu0 0.0
      %3953 = vmatpush1.msra.mxu0 0.0
      %3954 = vmatprep.subr.mxu0 0.0
      %3955 = vmatpush1.msra.mxu0 0.0
      %3956 = vmatprep.subr.mxu0 0.0
      %3957 = vmatpush1.msra.mxu0 0.0
      %3958 = vmatprep.subr.mxu0 0.0
      %3959 = vmatpush1.msra.mxu0 0.0
      %3960 = vmatprep.subr.mxu0 0.0
      %3961 = vmatpush1.msra.mxu0 0.0
      %3962 = vmatprep.subr.mxu0 0.0
      %3963 = vmatpush1.msra.mxu0 0.0
      %3964 = vmatprep.subr.mxu0 0.0
      %3965 = vmatpush1.msra.mxu0 0.0
      %3966 = vmatprep.subr.mxu0 0.0
      %3967 = vmatpush1.msra.mxu0 0.0
      %3968 = vmatprep.subr.mxu0 0.0
      %3969 = vmatpush1.msra.mxu0 0.0
      %3970 = vmatprep.subr.mxu0 0.0
      %3971 = vmatpush1.msra.mxu0 0.0
      %3972 = vmatprep.subr.mxu0 0.0
      %3973 = vmatpush1.msra.mxu0 0.0
      %3974 = vmatprep.subr.mxu0 0.0
      %3975 = vmatpush1.msra.mxu0 %v3939
      %3976 = vmatprep.subr.mxu0 0.0
      %3977 = vmatpush2.msra.mxu0 0.0
      %3978 = vmatprep.subr.mxu0 0.0
      %3979 = vmatpush2.msra.mxu0 0.0
      %3980 = vmatprep.subr.mxu0 0.0
      %3981 = vmatpush2.msra.mxu0 0.0
      %3982 = vmatprep.subr.mxu0 0.0
      %3983 = vmatpush2.msra.mxu0 0.0
      %3984 = vmatprep.subr.mxu0 0.0
      %3985 = vmatpush2.msra.mxu0 0.0
      %3986 = vmatprep.subr.mxu0 0.0
      %3987 = vmatpush2.msra.mxu0 0.0
      %3988 = vmatprep.subr.mxu0 0.0
      %3989 = vmatpush2.msra.mxu0 0.0
      %3990 = vmatprep.subr.mxu0 0.0
      %3991 = vmatpush2.msra.mxu0 0.0
      %3992 = vmatprep.subr.mxu0 0.0
      %3993 = vmatpush2.msra.mxu0 0.0
      %3994 = vmatprep.subr.mxu0 0.0
      %3995 = vmatpush2.msra.mxu0 0.0
      %3996 = vmatprep.subr.mxu0 0.0
      %3997 = vmatpush2.msra.mxu0 0.0
      %3998 = vmatprep.subr.mxu0 0.0
      %3999 = vmatpush2.msra.mxu0 0.0
      %4000 = vmatprep.subr.mxu0 0.0
      %4001 = vmatpush2.msra.mxu0 0.0
      %4002 = vmatprep.subr.mxu0 0.0
      %4003 = vmatpush2.msra.mxu0 0.0
      %4004 = vmatprep.subr.mxu0 0.0
      %4005 = vmatpush2.msra.mxu0 0.0
      %4006 = vmatprep.subr.mxu0 0.0
      %4007 = vmatpush2.msra.mxu0 0.0
      %4008 = vmatprep.mubr.f32.mxu0 0.0
      %4009 = vmatmul.mubr.f32.gmra.mxu0 %v3942
      %v4010 = vpop.f32.mrf.mxu0
      %v4011 = vadd.f32 0.0, %v4010
      %v4012 = vpop.f32.mrf.mxu0
      %4013 = vdwg.mxu0
      %4016 = vrot.lane.b32.xlu0 %v3631, 8
      %v4017 = vpop.permute.xlu0 %4016
      %4018 = vrot.lane.b32.xlu0 %v3707, 8
      %v4019 = vpop.permute.xlu0 %4018
      %4024 = vrot.lane.b32.xlu0 %v3783, 16
      %v4025 = vpop.permute.xlu0 %4024
      %4026 = vrot.lane.b32.xlu0 %v3859, 16
      %v4027 = vpop.permute.xlu0 %4026
      %4032 = vrot.lane.b32.xlu0 %v3935, 24
      %v4033 = vpop.permute.xlu0 %4032
      %4034 = vrot.lane.b32.xlu0 %v4011, 24
      %v4035 = vpop.permute.xlu0 %4034
      %v4038 = vsel %vm903, %v3479, %v4017
      %v4039 = vsel %vm903, %v3555, %v4019
      %v4040 = vsel %vm2273, %v4038, %v4025
      %v4041 = vsel %vm2273, %v4039, %v4027
      %v4042 = vsel %vm2276, %v4040, %v4033
      %v4043 = vsel %vm2276, %v4041, %v4035
      %v4044 = vpack.c.bf16 %v4043, %v4042
      %s4045 = scalar_lea.vmem %s738, 16
      %v4046 = vld [vmem:[%s4045] sm:$0xf]
      %v4047 = vld [vmem:[%s4045 + $0x4] sm:$0xf]
      %v4048 = vld [vmem:[%s4045 + $0x8] sm:$0xf]
      %v4049 = vld [vmem:[%s4045 + $0xc] sm:$0xf]
      %s4050 = scalar_lea.vmem %s742, 1
      %v4051 = vld [vmem:[%s4050] sm:$0x1]
      %v4053 = vlaneseq
      %v4054 = vshrl.u32 %v4053, 7
      %v4055 = vsub.s32 0, %v4054
      %v4056 = vrot.slane %v4051, %v4055
      %v4062 = vunpack.c.l.b16 %v4046
      %v4063 = vunpack.c.l.b16 %v4047
      %v4064 = vunpack.c.l.b16 %v4048
      %v4065 = vunpack.c.l.b16 %v4049
      %v4066 = vpack.c.b16 %v4063, %v4062
      %v4067 = vpack.c.b16 %v4065, %v4064
      %v4071 = vsel %vm786, %v4044, 0
      %4073 = vmatprep.subr.bf16.mxu0 0
      %4074 = vmatpush1.bf16.msra.mxu0 0
      %4075 = vmatprep.subr.bf16.mxu0 0
      %4076 = vmatpush1.bf16.msra.mxu0 0
      %4077 = vmatprep.subr.bf16.mxu0 0
      %4078 = vmatpush1.bf16.msra.mxu0 0
      %4079 = vmatprep.subr.bf16.mxu0 0
      %4080 = vmatpush1.bf16.msra.mxu0 0
      %4081 = vmatprep.subr.bf16.mxu0 0
      %4082 = vmatpush1.bf16.msra.mxu0 0
      %4083 = vmatprep.subr.bf16.mxu0 0
      %4084 = vmatpush1.bf16.msra.mxu0 0
      %4085 = vmatprep.subr.bf16.mxu0 0
      %4086 = vmatpush1.bf16.msra.mxu0 %v4067
      %4087 = vmatprep.subr.bf16.mxu0 0
      %4088 = vmatpush1.bf16.msra.mxu0 %v4066
      %4089 = vmatprep.subr.bf16.mxu0 0
      %4090 = vmatpush2.bf16.msra.mxu0 0
      %4091 = vmatprep.subr.bf16.mxu0 0
      %4092 = vmatpush2.bf16.msra.mxu0 0
      %4093 = vmatprep.subr.bf16.mxu0 0
      %4094 = vmatpush2.bf16.msra.mxu0 0
      %4095 = vmatprep.subr.bf16.mxu0 0
      %4096 = vmatpush2.bf16.msra.mxu0 0
      %4097 = vmatprep.subr.bf16.mxu0 0
      %4098 = vmatpush2.bf16.msra.mxu0 0
      %4099 = vmatprep.subr.bf16.mxu0 0
      %4100 = vmatpush2.bf16.msra.mxu0 0
      %4101 = vmatprep.subr.bf16.mxu0 0
      %4102 = vmatpush2.bf16.msra.mxu0 0
      %4103 = vmatprep.subr.bf16.mxu0 0
      %4104 = vmatpush2.bf16.msra.mxu0 0
      %4105 = vmatprep.mubr.bf16.mxu0 0
      %4106 = vmatmul.mubr.bf16.gmra.mxu0 %v4071
      %v4107 = vpop.f32.mrf.mxu0
      %v4108 = vadd.f32 %v4056, %v4107
      %v4109 = vpop.f32.mrf.mxu0
      %v4110 = vpop.f32.mrf.mxu0
      %v4111 = vadd.f32 %v4056, %v4110
      %v4112 = vpop.f32.mrf.mxu0
      %4113 = vdwg.mxu0
      %v4114 = vadd.f32 %v2608, %v4108
      %v4115 = vadd.f32 %v2609, %v4111
      %s4116 = scalar_lea.vmem %s746, 1
      %v4117 = vld [vmem:[%s4116] sm:$0x1]
      %s4118 = scalar_lea.vmem %s750, 1
      %v4119 = vld [vmem:[%s4118] sm:$0x1]
      %v4120 = vsel %vm786, %v4114, 0.0
      %4121 = vadd.xlane.f32.xlu0 %v4120
      %v4122 = vpop.xlane.xlu0 %4121
      %v4123 = vsel %vm786, %v4115, 0.0
      %4124 = vadd.xlane.f32.xlu0 %v4123
      %v4125 = vpop.xlane.xlu0 %4124
      %v4126 = vmul.f32 %v4122, %v793
      %v4127 = vmul.f32 %v4125, %v793
      %v4128 = vsub.f32 %v4114, %v4126
      %v4129 = vsub.f32 %v4115, %v4127
      %v4130 = vmul.f32 %v4128, %v4128
      %v4131 = vmul.f32 %v4129, %v4129
      %v4132 = vsel %vm786, %v4130, 0.0
      %4133 = vadd.xlane.f32.xlu0 %v4132
      %v4134 = vpop.xlane.xlu0 %4133
      %v4135 = vsel %vm786, %v4131, 0.0
      %4136 = vadd.xlane.f32.xlu0 %v4135
      %v4137 = vpop.xlane.xlu0 %4136
      %v4138 = vmul.f32 %v4134, %v793
      %v4139 = vmul.f32 %v4137, %v793
      %v4140 = vadd.f32 %v4138, 1e-07
      %v4141 = vadd.f32 %v4139, 1e-07
      %v4142 = vrsqrt.pop %v4140
      %v4143 = vrsqrt.pop %v4141
      %v4144 = vmul.f32 %v4128, %v4142
      %v4145 = vmul.f32 %v4129, %v4143
      %v4147 = vlaneseq
      %v4148 = vshrl.u32 %v4147, 7
      %v4149 = vsub.s32 0, %v4148
      %v4150 = vrot.slane %v4117, %v4149
      %v4152 = vmul.f32 %v4144, %v4150
      %v4153 = vmul.f32 %v4145, %v4150
      %v4155 = vlaneseq
      %v4156 = vshrl.u32 %v4155, 7
      %v4157 = vsub.s32 0, %v4156
      %v4158 = vrot.slane %v4119, %v4157
      %v4160 = vadd.f32 %v4152, %v4158
      %v4161 = vadd.f32 %v4153, %v4158
      %v4162 = vpack.c.bf16 %v4161, %v4160
      %s4163 = scalar_lea.vmem %s755, 16
      %v4164 = vld [vmem:[%s4163] sm:$0xf]
      %v4165 = vld [vmem:[%s4163 + $0x4] sm:$0xf]
      %v4166 = vld [vmem:[%s4163 + $0x8] sm:$0xf]
      %v4167 = vld [vmem:[%s4163 + $0xc] sm:$0xf]
      %s4168 = scalar_lea.vmem %s759, 1
      %v4169 = vld [vmem:[%s4168] sm:$0x1]
      %v4171 = vlaneseq
      %v4172 = vshrl.u32 %v4171, 7
      %v4173 = vsub.s32 0, %v4172
      %v4174 = vrot.slane %v4169, %v4173
      %v4180 = vunpack.c.l.b16 %v4164
      %v4181 = vunpack.c.l.b16 %v4165
      %v4182 = vunpack.c.l.b16 %v4166
      %v4183 = vunpack.c.l.b16 %v4167
      %v4184 = vpack.c.b16 %v4181, %v4180
      %v4185 = vpack.c.b16 %v4183, %v4182
      %v4189 = vsel %vm786, %v4162, 0
      %4191 = vmatprep.subr.bf16.mxu0 0
      %4192 = vmatpush1.bf16.msra.mxu0 0
      %4193 = vmatprep.subr.bf16.mxu0 0
      %4194 = vmatpush1.bf16.msra.mxu0 0
      %4195 = vmatprep.subr.bf16.mxu0 0
      %4196 = vmatpush1.bf16.msra.mxu0 0
      %4197 = vmatprep.subr.bf16.mxu0 0
      %4198 = vmatpush1.bf16.msra.mxu0 0
      %4199 = vmatprep.subr.bf16.mxu0 0
      %4200 = vmatpush1.bf16.msra.mxu0 0
      %4201 = vmatprep.subr.bf16.mxu0 0
      %4202 = vmatpush1.bf16.msra.mxu0 0
      %4203 = vmatprep.subr.bf16.mxu0 0
      %4204 = vmatpush1.bf16.msra.mxu0 %v4185
      %4205 = vmatprep.subr.bf16.mxu0 0
      %4206 = vmatpush1.bf16.msra.mxu0 %v4184
      %4207 = vmatprep.subr.bf16.mxu0 0
      %4208 = vmatpush2.bf16.msra.mxu0 0
      %4209 = vmatprep.subr.bf16.mxu0 0
      %4210 = vmatpush2.bf16.msra.mxu0 0
      %4211 = vmatprep.subr.bf16.mxu0 0
      %4212 = vmatpush2.bf16.msra.mxu0 0
      %4213 = vmatprep.subr.bf16.mxu0 0
      %4214 = vmatpush2.bf16.msra.mxu0 0
      %4215 = vmatprep.subr.bf16.mxu0 0
      %4216 = vmatpush2.bf16.msra.mxu0 0
      %4217 = vmatprep.subr.bf16.mxu0 0
      %4218 = vmatpush2.bf16.msra.mxu0 0
      %4219 = vmatprep.subr.bf16.mxu0 0
      %4220 = vmatpush2.bf16.msra.mxu0 0
      %4221 = vmatprep.subr.bf16.mxu0 0
      %4222 = vmatpush2.bf16.msra.mxu0 0
      %4223 = vmatprep.mubr.bf16.mxu0 0
      %4224 = vmatmul.mubr.bf16.gmra.mxu0 %v4189
      %v4225 = vpop.f32.mrf.mxu0
      %v4226 = vadd.f32 %v4174, %v4225
      %v4227 = vpop.f32.mrf.mxu0
      %v4228 = vpop.f32.mrf.mxu0
      %v4229 = vadd.f32 %v4174, %v4228
      %v4230 = vpop.f32.mrf.mxu0
      %4231 = vdwg.mxu0
      %v4232 = vmul.f32 %v4226, 0.5
      %v4233 = vmul.f32 %v4229, 0.5
      %v4234 = vmul.f32 %v4226, 0.044715
      %v4235 = vmul.f32 %v4229, 0.044715
      %v4236 = vmul.f32 %v4234, %v4226
      %v4237 = vmul.f32 %v4235, %v4229
      %v4238 = vmul.f32 %v4236, %v4226
      %v4239 = vmul.f32 %v4237, %v4229
      %v4240 = vadd.f32 %v4226, %v4238
      %v4241 = vadd.f32 %v4229, %v4239
      %v4242 = vmul.f32 %v4240, 0.7978846
      %v4243 = vmul.f32 %v4241, 0.7978846
      %v4244 = vtanh.pop %v4242
      %v4245 = vtanh.pop %v4243
      %v4246 = vadd.f32 %v4244, 1.0
      %v4247 = vadd.f32 %v4245, 1.0
      %v4248 = vmul.f32 %v4232, %v4246
      %v4249 = vmul.f32 %v4233, %v4247
      %v4250 = vpack.c.bf16 %v4249, %v4248
      %s4251 = scalar_lea.vmem %s764, 32
      %v4252 = vld [vmem:[%s4251] sm:$0xf]
      %v4253 = vld [vmem:[%s4251 + $0x4] sm:$0xf]
      %v4254 = vld [vmem:[%s4251 + $0x8] sm:$0xf]
      %v4255 = vld [vmem:[%s4251 + $0xc] sm:$0xf]
      %v4256 = vld [vmem:[%s4251 + $0x10] sm:$0xf]
      %v4257 = vld [vmem:[%s4251 + $0x14] sm:$0xf]
      %v4258 = vld [vmem:[%s4251 + $0x18] sm:$0xf]
      %v4259 = vld [vmem:[%s4251 + $0x1c] sm:$0xf]
      %s4260 = scalar_lea.vmem %s768, 1
      %v4261 = vld [vmem:[%s4260] sm:$0x1]
      %v4263 = vlaneseq
      %v4264 = vshrl.u32 %v4263, 7
      %v4265 = vsub.s32 0, %v4264
      %v4266 = vrot.slane %v4261, %v4265
      %v4276 = vunpack.c.l.b16 %v4252
      %v4277 = vunpack.c.l.b16 %v4253
      %v4278 = vunpack.c.l.b16 %v4254
      %v4279 = vunpack.c.l.b16 %v4255
      %v4280 = vunpack.c.l.b16 %v4256
      %v4281 = vunpack.c.l.b16 %v4257
      %v4282 = vunpack.c.l.b16 %v4258
      %v4283 = vunpack.c.l.b16 %v4259
      %v4284 = vpack.c.b16 %v4277, %v4276
      %v4285 = vpack.c.b16 %v4279, %v4278
      %v4286 = vpack.c.b16 %v4281, %v4280
      %v4287 = vpack.c.b16 %v4283, %v4282
      %v4293 = vsel %vm2519, %v4250, 0
      %4295 = vmatprep.subr.bf16.mxu0 0
      %4296 = vmatpush1.bf16.msra.mxu0 0
      %4297 = vmatprep.subr.bf16.mxu0 0
      %4298 = vmatpush1.bf16.msra.mxu0 0
      %4299 = vmatprep.subr.bf16.mxu0 0
      %4300 = vmatpush1.bf16.msra.mxu0 0
      %4301 = vmatprep.subr.bf16.mxu0 0
      %4302 = vmatpush1.bf16.msra.mxu0 0
      %4303 = vmatprep.subr.bf16.mxu0 0
      %4304 = vmatpush1.bf16.msra.mxu0 %v4287
      %4305 = vmatprep.subr.bf16.mxu0 0
      %4306 = vmatpush1.bf16.msra.mxu0 %v4286
      %4307 = vmatprep.subr.bf16.mxu0 0
      %4308 = vmatpush1.bf16.msra.mxu0 %v4285
      %4309 = vmatprep.subr.bf16.mxu0 0
      %4310 = vmatpush1.bf16.msra.mxu0 %v4284
      %4311 = vmatprep.subr.bf16.mxu0 0
      %4312 = vmatpush2.bf16.msra.mxu0 0
      %4313 = vmatprep.subr.bf16.mxu0 0
      %4314 = vmatpush2.bf16.msra.mxu0 0
      %4315 = vmatprep.subr.bf16.mxu0 0
      %4316 = vmatpush2.bf16.msra.mxu0 0
      %4317 = vmatprep.subr.bf16.mxu0 0
      %4318 = vmatpush2.bf16.msra.mxu0 0
      %4319 = vmatprep.subr.bf16.mxu0 0
      %4320 = vmatpush2.bf16.msra.mxu0 0
      %4321 = vmatprep.subr.bf16.mxu0 0
      %4322 = vmatpush2.bf16.msra.mxu0 0
      %4323 = vmatprep.subr.bf16.mxu0 0
      %4324 = vmatpush2.bf16.msra.mxu0 0
      %4325 = vmatprep.subr.bf16.mxu0 0
      %4326 = vmatpush2.bf16.msra.mxu0 0
      %4327 = vmatprep.mubr.bf16.mxu0 0
      %4328 = vmatmul.mubr.bf16.gmra.mxu0 %v4293
      %v4329 = vpop.f32.mrf.mxu0
      %v4330 = vadd.f32 %v4266, %v4329
      %v4331 = vpop.f32.mrf.mxu0
      %v4332 = vpop.f32.mrf.mxu0
      %v4333 = vadd.f32 %v4266, %v4332
      %v4334 = vpop.f32.mrf.mxu0
      %4335 = vdwg.mxu0
      %v4336 = vadd.f32 %v4160, %v4330
      %v4337 = vadd.f32 %v4161, %v4333
      %s4338 = scalar_lea.vmem %s772, 1
      %v4339 = vld [vmem:[%s4338] sm:$0x1]
      %s4340 = scalar_lea.vmem %s776, 1
      %v4341 = vld [vmem:[%s4340] sm:$0x1]
      %v4342 = vsel %vm786, %v4336, 0.0
      %4343 = vadd.xlane.f32.xlu0 %v4342
      %v4344 = vpop.xlane.xlu0 %4343
      %v4345 = vsel %vm786, %v4337, 0.0
      %4346 = vadd.xlane.f32.xlu0 %v4345
      %v4347 = vpop.xlane.xlu0 %4346
      %v4348 = vmul.f32 %v4344, %v793
      %v4349 = vmul.f32 %v4347, %v793
      %v4350 = vsub.f32 %v4336, %v4348
      %v4351 = vsub.f32 %v4337, %v4349
      %v4352 = vmul.f32 %v4350, %v4350
      %v4353 = vmul.f32 %v4351, %v4351
      %v4354 = vsel %vm786, %v4352, 0.0
      %4355 = vadd.xlane.f32.xlu0 %v4354
      %v4356 = vpop.xlane.xlu0 %4355
      %v4357 = vsel %vm786, %v4353, 0.0
      %4358 = vadd.xlane.f32.xlu0 %v4357
      %v4359 = vpop.xlane.xlu0 %4358
      %v4360 = vmul.f32 %v4356, %v793
      %v4361 = vmul.f32 %v4359, %v793
      %v4362 = vadd.f32 %v4360, 1e-07
      %v4363 = vadd.f32 %v4361, 1e-07
      %v4364 = vrsqrt.pop %v4362
      %v4365 = vrsqrt.pop %v4363
      %v4366 = vmul.f32 %v4350, %v4364
      %v4367 = vmul.f32 %v4351, %v4365
      %v4369 = vlaneseq
      %v4370 = vshrl.u32 %v4369, 7
      %v4371 = vsub.s32 0, %v4370
      %v4372 = vrot.slane %v4339, %v4371
      %v4374 = vmul.f32 %v4366, %v4372
      %v4375 = vmul.f32 %v4367, %v4372
      %v4377 = vlaneseq
      %v4378 = vshrl.u32 %v4377, 7
      %v4379 = vsub.s32 0, %v4378
      %v4380 = vrot.slane %v4341, %v4379
      %v4382 = vadd.f32 %v4374, %v4380
      %v4383 = vadd.f32 %v4375, %v4380
      %v4384 = vpack.c.bf16 %v4383, %v4382
      %s4385 = scalar_lea.vmem %s729, 32
      %v4386 = vld [vmem:[%s4385] sm:$0xf]
      %v4387 = vld [vmem:[%s4385 + $0x4] sm:$0xf]
      %v4388 = vld [vmem:[%s4385 + $0x8] sm:$0xf]
      %v4389 = vld [vmem:[%s4385 + $0xc] sm:$0xf]
      %s4390 = scalar_lea.vmem %s733, 2
      %v4391 = vld [vmem:[%s4390] sm:$0x1]
      %v4393 = vlaneseq
      %v4394 = vshrl.u32 %v4393, 7
      %v4395 = vsub.s32 0, %v4394
      %v4396 = vrot.slane %v4391, %v4395
      %v4402 = vunpack.c.l.b16 %v4386
      %v4403 = vunpack.c.l.b16 %v4387
      %v4404 = vunpack.c.l.b16 %v4388
      %v4405 = vunpack.c.l.b16 %v4389
      %v4406 = vpack.c.b16 %v4403, %v4402
      %v4407 = vpack.c.b16 %v4405, %v4404
      %v4411 = vsel %vm786, %v4384, 0
      %4413 = vmatprep.subr.bf16.mxu0 0
      %4414 = vmatpush1.bf16.msra.mxu0 0
      %4415 = vmatprep.subr.bf16.mxu0 0
      %4416 = vmatpush1.bf16.msra.mxu0 0
      %4417 = vmatprep.subr.bf16.mxu0 0
      %4418 = vmatpush1.bf16.msra.mxu0 0
      %4419 = vmatprep.subr.bf16.mxu0 0
      %4420 = vmatpush1.bf16.msra.mxu0 0
      %4421 = vmatprep.subr.bf16.mxu0 0
      %4422 = vmatpush1.bf16.msra.mxu0 0
      %4423 = vmatprep.subr.bf16.mxu0 0
      %4424 = vmatpush1.bf16.msra.mxu0 0
      %4425 = vmatprep.subr.bf16.mxu0 0
      %4426 = vmatpush1.bf16.msra.mxu0 %v4407
      %4427 = vmatprep.subr.bf16.mxu0 0
      %4428 = vmatpush1.bf16.msra.mxu0 %v4406
      %4429 = vmatprep.subr.bf16.mxu0 0
      %4430 = vmatpush2.bf16.msra.mxu0 0
      %4431 = vmatprep.subr.bf16.mxu0 0
      %4432 = vmatpush2.bf16.msra.mxu0 0
      %4433 = vmatprep.subr.bf16.mxu0 0
      %4434 = vmatpush2.bf16.msra.mxu0 0
      %4435 = vmatprep.subr.bf16.mxu0 0
      %4436 = vmatpush2.bf16.msra.mxu0 0
      %4437 = vmatprep.subr.bf16.mxu0 0
      %4438 = vmatpush2.bf16.msra.mxu0 0
      %4439 = vmatprep.subr.bf16.mxu0 0
      %4440 = vmatpush2.bf16.msra.mxu0 0
      %4441 = vmatprep.subr.bf16.mxu0 0
      %4442 = vmatpush2.bf16.msra.mxu0 0
      %4443 = vmatprep.subr.bf16.mxu0 0
      %4444 = vmatpush2.bf16.msra.mxu0 0
      %4445 = vmatprep.mubr.bf16.mxu0 0
      %4446 = vmatmul.mubr.bf16.gmra.mxu0 %v4411
      %v4447 = vpop.f32.mrf.mxu0
      %v4448 = vadd.f32 %v4396, %v4447
      %v4449 = vpop.f32.mrf.mxu0
      %v4450 = vpop.f32.mrf.mxu0
      %v4451 = vadd.f32 %v4396, %v4450
      %v4452 = vpop.f32.mrf.mxu0
      %4453 = vdwg.mxu0
      %4455 = vrot.lane.b32.xlu0 %v4448, 96
      %v4456 = vpop.permute.xlu0 %4455
      %v4457 = vsel %vm903, %v4448, 0
      %v4459 = vsel %vm903, %v4456, 0
      %4461 = vmatprep.subr.mxu0 0.0
      %4462 = vmatpush1.xpose.msra.mxu0 0.0
      %4463 = vmatprep.subr.mxu0 0.0
      %4464 = vmatpush1.xpose.msra.mxu0 0.0
      %4465 = vmatprep.subr.mxu0 0.0
      %4466 = vmatpush1.xpose.msra.mxu0 0.0
      %4467 = vmatprep.subr.mxu0 0.0
      %4468 = vmatpush1.xpose.msra.mxu0 0.0
      %4469 = vmatprep.subr.mxu0 0.0
      %4470 = vmatpush1.xpose.msra.mxu0 0.0
      %4471 = vmatprep.subr.mxu0 0.0
      %4472 = vmatpush1.xpose.msra.mxu0 0.0
      %4473 = vmatprep.subr.mxu0 0.0
      %4474 = vmatpush1.xpose.msra.mxu0 0.0
      %4475 = vmatprep.subr.mxu0 0.0
      %4476 = vmatpush1.xpose.msra.mxu0 0.0
      %4477 = vmatprep.subr.mxu0 0.0
      %4478 = vmatpush1.xpose.msra.mxu0 0.0
      %4479 = vmatprep.subr.mxu0 0.0
      %4480 = vmatpush1.xpose.msra.mxu0 0.0
      %4481 = vmatprep.subr.mxu0 0.0
      %4482 = vmatpush1.xpose.msra.mxu0 0.0
      %4483 = vmatprep.subr.mxu0 0.0
      %4484 = vmatpush1.xpose.msra.mxu0 0.0
      %4485 = vmatprep.subr.mxu0 0.0
      %4486 = vmatpush1.xpose.msra.mxu0 0.0
      %4487 = vmatprep.subr.mxu0 0.0
      %4488 = vmatpush1.xpose.msra.mxu0 0.0
      %4489 = vmatprep.subr.mxu0 0.0
      %4490 = vmatpush1.xpose.msra.mxu0 0.0
      %4491 = vmatprep.subr.mxu0 0.0
      %4492 = vmatpush1.xpose.msra.mxu0 %v4459
      %4493 = vmatprep.subr.mxu0 0.0
      %4494 = vmatpush2.xpose.msra.mxu0 0.0
      %4495 = vmatprep.subr.mxu0 0.0
      %4496 = vmatpush2.xpose.msra.mxu0 0.0
      %4497 = vmatprep.subr.mxu0 0.0
      %4498 = vmatpush2.xpose.msra.mxu0 0.0
      %4499 = vmatprep.subr.mxu0 0.0
      %4500 = vmatpush2.xpose.msra.mxu0 0.0
      %4501 = vmatprep.subr.mxu0 0.0
      %4502 = vmatpush2.xpose.msra.mxu0 0.0
      %4503 = vmatprep.subr.mxu0 0.0
      %4504 = vmatpush2.xpose.msra.mxu0 0.0
      %4505 = vmatprep.subr.mxu0 0.0
      %4506 = vmatpush2.xpose.msra.mxu0 0.0
      %4507 = vmatprep.subr.mxu0 0.0
      %4508 = vmatpush2.xpose.msra.mxu0 0.0
      %4509 = vmatprep.subr.mxu0 0.0
      %4510 = vmatpush2.xpose.msra.mxu0 0.0
      %4511 = vmatprep.subr.mxu0 0.0
      %4512 = vmatpush2.xpose.msra.mxu0 0.0
      %4513 = vmatprep.subr.mxu0 0.0
      %4514 = vmatpush2.xpose.msra.mxu0 0.0
      %4515 = vmatprep.subr.mxu0 0.0
      %4516 = vmatpush2.xpose.msra.mxu0 0.0
      %4517 = vmatprep.subr.mxu0 0.0
      %4518 = vmatpush2.xpose.msra.mxu0 0.0
      %4519 = vmatprep.subr.mxu0 0.0
      %4520 = vmatpush2.xpose.msra.mxu0 0.0
      %4521 = vmatprep.subr.mxu0 0.0
      %4522 = vmatpush2.xpose.msra.mxu0 0.0
      %4523 = vmatprep.subr.mxu0 0.0
      %4524 = vmatpush2.xpose.msra.mxu0 0.0
      %4525 = vmatprep.mubr.f32.mxu0 0.0
      %4526 = vmatmul.mubr.f32.gmra.mxu0 %v4457
      %v4527 = vpop.f32.mrf.mxu0
      %v4528 = vadd.f32 0.0, %v4527
      %v4529 = vpop.f32.mrf.mxu0
      %4530 = vdwg.mxu0
      %4532 = vrot.lane.b32.xlu0 %v4451, 96
      %v4533 = vpop.permute.xlu0 %4532
      %v4534 = vsel %vm903, %v4451, 0
      %v4536 = vsel %vm903, %v4533, 0
      %4538 = vmatprep.subr.mxu0 0.0
      %4539 = vmatpush1.xpose.msra.mxu0 0.0
      %4540 = vmatprep.subr.mxu0 0.0
      %4541 = vmatpush1.xpose.msra.mxu0 0.0
      %4542 = vmatprep.subr.mxu0 0.0
      %4543 = vmatpush1.xpose.msra.mxu0 0.0
      %4544 = vmatprep.subr.mxu0 0.0
      %4545 = vmatpush1.xpose.msra.mxu0 0.0
      %4546 = vmatprep.subr.mxu0 0.0
      %4547 = vmatpush1.xpose.msra.mxu0 0.0
      %4548 = vmatprep.subr.mxu0 0.0
      %4549 = vmatpush1.xpose.msra.mxu0 0.0
      %4550 = vmatprep.subr.mxu0 0.0
      %4551 = vmatpush1.xpose.msra.mxu0 0.0
      %4552 = vmatprep.subr.mxu0 0.0
      %4553 = vmatpush1.xpose.msra.mxu0 0.0
      %4554 = vmatprep.subr.mxu0 0.0
      %4555 = vmatpush1.xpose.msra.mxu0 0.0
      %4556 = vmatprep.subr.mxu0 0.0
      %4557 = vmatpush1.xpose.msra.mxu0 0.0
      %4558 = vmatprep.subr.mxu0 0.0
      %4559 = vmatpush1.xpose.msra.mxu0 0.0
      %4560 = vmatprep.subr.mxu0 0.0
      %4561 = vmatpush1.xpose.msra.mxu0 0.0
      %4562 = vmatprep.subr.mxu0 0.0
      %4563 = vmatpush1.xpose.msra.mxu0 0.0
      %4564 = vmatprep.subr.mxu0 0.0
      %4565 = vmatpush1.xpose.msra.mxu0 0.0
      %4566 = vmatprep.subr.mxu0 0.0
      %4567 = vmatpush1.xpose.msra.mxu0 0.0
      %4568 = vmatprep.subr.mxu0 0.0
      %4569 = vmatpush1.xpose.msra.mxu0 %v4536
      %4570 = vmatprep.subr.mxu0 0.0
      %4571 = vmatpush2.xpose.msra.mxu0 0.0
      %4572 = vmatprep.subr.mxu0 0.0
      %4573 = vmatpush2.xpose.msra.mxu0 0.0
      %4574 = vmatprep.subr.mxu0 0.0
      %4575 = vmatpush2.xpose.msra.mxu0 0.0
      %4576 = vmatprep.subr.mxu0 0.0
      %4577 = vmatpush2.xpose.msra.mxu0 0.0
      %4578 = vmatprep.subr.mxu0 0.0
      %4579 = vmatpush2.xpose.msra.mxu0 0.0
      %4580 = vmatprep.subr.mxu0 0.0
      %4581 = vmatpush2.xpose.msra.mxu0 0.0
      %4582 = vmatprep.subr.mxu0 0.0
      %4583 = vmatpush2.xpose.msra.mxu0 0.0
      %4584 = vmatprep.subr.mxu0 0.0
      %4585 = vmatpush2.xpose.msra.mxu0 0.0
      %4586 = vmatprep.subr.mxu0 0.0
      %4587 = vmatpush2.xpose.msra.mxu0 0.0
      %4588 = vmatprep.subr.mxu0 0.0
      %4589 = vmatpush2.xpose.msra.mxu0 0.0
      %4590 = vmatprep.subr.mxu0 0.0
      %4591 = vmatpush2.xpose.msra.mxu0 0.0
      %4592 = vmatprep.subr.mxu0 0.0
      %4593 = vmatpush2.xpose.msra.mxu0 0.0
      %4594 = vmatprep.subr.mxu0 0.0
      %4595 = vmatpush2.xpose.msra.mxu0 0.0
      %4596 = vmatprep.subr.mxu0 0.0
      %4597 = vmatpush2.xpose.msra.mxu0 0.0
      %4598 = vmatprep.subr.mxu0 0.0
      %4599 = vmatpush2.xpose.msra.mxu0 0.0
      %4600 = vmatprep.subr.mxu0 0.0
      %4601 = vmatpush2.xpose.msra.mxu0 0.0
      %4602 = vmatprep.mubr.f32.mxu0 0.0
      %4603 = vmatmul.mubr.f32.gmra.mxu0 %v4534
      %v4604 = vpop.f32.mrf.mxu0
      %v4605 = vadd.f32 0.0, %v4604
      %v4606 = vpop.f32.mrf.mxu0
      %4607 = vdwg.mxu0
      %v4608 = vmul.f32 %v4528, 0.35355338
      %v4609 = vmul.f32 %v4605, 0.35355338
      %v4610 = vadd.f32 %v4608, %v1062
      %v4611 = vadd.f32 %v4609, %v1066
      %4612 = vrot.lane.b32.xlu0 %v4448, 120
      %v4613 = vpop.permute.xlu0 %4612
      %4614 = vrot.lane.b32.xlu0 %v4448, 88
      %v4615 = vpop.permute.xlu0 %4614
      %v4616 = vsel %vm903, %v4613, 0
      %v4618 = vsel %vm903, %v4615, 0
      %4620 = vmatprep.subr.mxu0 0.0
      %4621 = vmatpush1.xpose.msra.mxu0 0.0
      %4622 = vmatprep.subr.mxu0 0.0
      %4623 = vmatpush1.xpose.msra.mxu0 0.0
      %4624 = vmatprep.subr.mxu0 0.0
      %4625 = vmatpush1.xpose.msra.mxu0 0.0
      %4626 = vmatprep.subr.mxu0 0.0
      %4627 = vmatpush1.xpose.msra.mxu0 0.0
      %4628 = vmatprep.subr.mxu0 0.0
      %4629 = vmatpush1.xpose.msra.mxu0 0.0
      %4630 = vmatprep.subr.mxu0 0.0
      %4631 = vmatpush1.xpose.msra.mxu0 0.0
      %4632 = vmatprep.subr.mxu0 0.0
      %4633 = vmatpush1.xpose.msra.mxu0 0.0
      %4634 = vmatprep.subr.mxu0 0.0
      %4635 = vmatpush1.xpose.msra.mxu0 0.0
      %4636 = vmatprep.subr.mxu0 0.0
      %4637 = vmatpush1.xpose.msra.mxu0 0.0
      %4638 = vmatprep.subr.mxu0 0.0
      %4639 = vmatpush1.xpose.msra.mxu0 0.0
      %4640 = vmatprep.subr.mxu0 0.0
      %4641 = vmatpush1.xpose.msra.mxu0 0.0
      %4642 = vmatprep.subr.mxu0 0.0
      %4643 = vmatpush1.xpose.msra.mxu0 0.0
      %4644 = vmatprep.subr.mxu0 0.0
      %4645 = vmatpush1.xpose.msra.mxu0 0.0
      %4646 = vmatprep.subr.mxu0 0.0
      %4647 = vmatpush1.xpose.msra.mxu0 0.0
      %4648 = vmatprep.subr.mxu0 0.0
      %4649 = vmatpush1.xpose.msra.mxu0 0.0
      %4650 = vmatprep.subr.mxu0 0.0
      %4651 = vmatpush1.xpose.msra.mxu0 %v4618
      %4652 = vmatprep.subr.mxu0 0.0
      %4653 = vmatpush2.xpose.msra.mxu0 0.0
      %4654 = vmatprep.subr.mxu0 0.0
      %4655 = vmatpush2.xpose.msra.mxu0 0.0
      %4656 = vmatprep.subr.mxu0 0.0
      %4657 = vmatpush2.xpose.msra.mxu0 0.0
      %4658 = vmatprep.subr.mxu0 0.0
      %4659 = vmatpush2.xpose.msra.mxu0 0.0
      %4660 = vmatprep.subr.mxu0 0.0
      %4661 = vmatpush2.xpose.msra.mxu0 0.0
      %4662 = vmatprep.subr.mxu0 0.0
      %4663 = vmatpush2.xpose.msra.mxu0 0.0
      %4664 = vmatprep.subr.mxu0 0.0
      %4665 = vmatpush2.xpose.msra.mxu0 0.0
      %4666 = vmatprep.subr.mxu0 0.0
      %4667 = vmatpush2.xpose.msra.mxu0 0.0
      %4668 = vmatprep.subr.mxu0 0.0
      %4669 = vmatpush2.xpose.msra.mxu0 0.0
      %4670 = vmatprep.subr.mxu0 0.0
      %4671 = vmatpush2.xpose.msra.mxu0 0.0
      %4672 = vmatprep.subr.mxu0 0.0
      %4673 = vmatpush2.xpose.msra.mxu0 0.0
      %4674 = vmatprep.subr.mxu0 0.0
      %4675 = vmatpush2.xpose.msra.mxu0 0.0
      %4676 = vmatprep.subr.mxu0 0.0
      %4677 = vmatpush2.xpose.msra.mxu0 0.0
      %4678 = vmatprep.subr.mxu0 0.0
      %4679 = vmatpush2.xpose.msra.mxu0 0.0
      %4680 = vmatprep.subr.mxu0 0.0
      %4681 = vmatpush2.xpose.msra.mxu0 0.0
      %4682 = vmatprep.subr.mxu0 0.0
      %4683 = vmatpush2.xpose.msra.mxu0 0.0
      %4684 = vmatprep.mubr.f32.mxu0 0.0
      %4685 = vmatmul.mubr.f32.gmra.mxu0 %v4616
      %v4686 = vpop.f32.mrf.mxu0
      %v4687 = vadd.f32 0.0, %v4686
      %v4688 = vpop.f32.mrf.mxu0
      %4689 = vdwg.mxu0
      %4690 = vrot.lane.b32.xlu0 %v4451, 120
      %v4691 = vpop.permute.xlu0 %4690
      %4692 = vrot.lane.b32.xlu0 %v4451, 88
      %v4693 = vpop.permute.xlu0 %4692
      %v4694 = vsel %vm903, %v4691, 0
      %v4696 = vsel %vm903, %v4693, 0
      %4698 = vmatprep.subr.mxu0 0.0
      %4699 = vmatpush1.xpose.msra.mxu0 0.0
      %4700 = vmatprep.subr.mxu0 0.0
      %4701 = vmatpush1.xpose.msra.mxu0 0.0
      %4702 = vmatprep.subr.mxu0 0.0
      %4703 = vmatpush1.xpose.msra.mxu0 0.0
      %4704 = vmatprep.subr.mxu0 0.0
      %4705 = vmatpush1.xpose.msra.mxu0 0.0
      %4706 = vmatprep.subr.mxu0 0.0
      %4707 = vmatpush1.xpose.msra.mxu0 0.0
      %4708 = vmatprep.subr.mxu0 0.0
      %4709 = vmatpush1.xpose.msra.mxu0 0.0
      %4710 = vmatprep.subr.mxu0 0.0
      %4711 = vmatpush1.xpose.msra.mxu0 0.0
      %4712 = vmatprep.subr.mxu0 0.0
      %4713 = vmatpush1.xpose.msra.mxu0 0.0
      %4714 = vmatprep.subr.mxu0 0.0
      %4715 = vmatpush1.xpose.msra.mxu0 0.0
      %4716 = vmatprep.subr.mxu0 0.0
      %4717 = vmatpush1.xpose.msra.mxu0 0.0
      %4718 = vmatprep.subr.mxu0 0.0
      %4719 = vmatpush1.xpose.msra.mxu0 0.0
      %4720 = vmatprep.subr.mxu0 0.0
      %4721 = vmatpush1.xpose.msra.mxu0 0.0
      %4722 = vmatprep.subr.mxu0 0.0
      %4723 = vmatpush1.xpose.msra.mxu0 0.0
      %4724 = vmatprep.subr.mxu0 0.0
      %4725 = vmatpush1.xpose.msra.mxu0 0.0
      %4726 = vmatprep.subr.mxu0 0.0
      %4727 = vmatpush1.xpose.msra.mxu0 0.0
      %4728 = vmatprep.subr.mxu0 0.0
      %4729 = vmatpush1.xpose.msra.mxu0 %v4696
      %4730 = vmatprep.subr.mxu0 0.0
      %4731 = vmatpush2.xpose.msra.mxu0 0.0
      %4732 = vmatprep.subr.mxu0 0.0
      %4733 = vmatpush2.xpose.msra.mxu0 0.0
      %4734 = vmatprep.subr.mxu0 0.0
      %4735 = vmatpush2.xpose.msra.mxu0 0.0
      %4736 = vmatprep.subr.mxu0 0.0
      %4737 = vmatpush2.xpose.msra.mxu0 0.0
      %4738 = vmatprep.subr.mxu0 0.0
      %4739 = vmatpush2.xpose.msra.mxu0 0.0
      %4740 = vmatprep.subr.mxu0 0.0
      %4741 = vmatpush2.xpose.msra.mxu0 0.0
      %4742 = vmatprep.subr.mxu0 0.0
      %4743 = vmatpush2.xpose.msra.mxu0 0.0
      %4744 = vmatprep.subr.mxu0 0.0
      %4745 = vmatpush2.xpose.msra.mxu0 0.0
      %4746 = vmatprep.subr.mxu0 0.0
      %4747 = vmatpush2.xpose.msra.mxu0 0.0
      %4748 = vmatprep.subr.mxu0 0.0
      %4749 = vmatpush2.xpose.msra.mxu0 0.0
      %4750 = vmatprep.subr.mxu0 0.0
      %4751 = vmatpush2.xpose.msra.mxu0 0.0
      %4752 = vmatprep.subr.mxu0 0.0
      %4753 = vmatpush2.xpose.msra.mxu0 0.0
      %4754 = vmatprep.subr.mxu0 0.0
      %4755 = vmatpush2.xpose.msra.mxu0 0.0
      %4756 = vmatprep.subr.mxu0 0.0
      %4757 = vmatpush2.xpose.msra.mxu0 0.0
      %4758 = vmatprep.subr.mxu0 0.0
      %4759 = vmatpush2.xpose.msra.mxu0 0.0
      %4760 = vmatprep.subr.mxu0 0.0
      %4761 = vmatpush2.xpose.msra.mxu0 0.0
      %4762 = vmatprep.mubr.f32.mxu0 0.0
      %4763 = vmatmul.mubr.f32.gmra.mxu0 %v4694
      %v4764 = vpop.f32.mrf.mxu0
      %v4765 = vadd.f32 0.0, %v4764
      %v4766 = vpop.f32.mrf.mxu0
      %4767 = vdwg.mxu0
      %v4768 = vmul.f32 %v4687, 0.35355338
      %v4769 = vmul.f32 %v4765, 0.35355338
      %v4770 = vadd.f32 %v4768, %v1062
      %v4771 = vadd.f32 %v4769, %v1066
      %4772 = vrot.lane.b32.xlu0 %v4448, 112
      %v4773 = vpop.permute.xlu0 %4772
      %4774 = vrot.lane.b32.xlu0 %v4448, 80
      %v4775 = vpop.permute.xlu0 %4774
      %v4776 = vsel %vm903, %v4773, 0
      %v4778 = vsel %vm903, %v4775, 0
      %4780 = vmatprep.subr.mxu0 0.0
      %4781 = vmatpush1.xpose.msra.mxu0 0.0
      %4782 = vmatprep.subr.mxu0 0.0
      %4783 = vmatpush1.xpose.msra.mxu0 0.0
      %4784 = vmatprep.subr.mxu0 0.0
      %4785 = vmatpush1.xpose.msra.mxu0 0.0
      %4786 = vmatprep.subr.mxu0 0.0
      %4787 = vmatpush1.xpose.msra.mxu0 0.0
      %4788 = vmatprep.subr.mxu0 0.0
      %4789 = vmatpush1.xpose.msra.mxu0 0.0
      %4790 = vmatprep.subr.mxu0 0.0
      %4791 = vmatpush1.xpose.msra.mxu0 0.0
      %4792 = vmatprep.subr.mxu0 0.0
      %4793 = vmatpush1.xpose.msra.mxu0 0.0
      %4794 = vmatprep.subr.mxu0 0.0
      %4795 = vmatpush1.xpose.msra.mxu0 0.0
      %4796 = vmatprep.subr.mxu0 0.0
      %4797 = vmatpush1.xpose.msra.mxu0 0.0
      %4798 = vmatprep.subr.mxu0 0.0
      %4799 = vmatpush1.xpose.msra.mxu0 0.0
      %4800 = vmatprep.subr.mxu0 0.0
      %4801 = vmatpush1.xpose.msra.mxu0 0.0
      %4802 = vmatprep.subr.mxu0 0.0
      %4803 = vmatpush1.xpose.msra.mxu0 0.0
      %4804 = vmatprep.subr.mxu0 0.0
      %4805 = vmatpush1.xpose.msra.mxu0 0.0
      %4806 = vmatprep.subr.mxu0 0.0
      %4807 = vmatpush1.xpose.msra.mxu0 0.0
      %4808 = vmatprep.subr.mxu0 0.0
      %4809 = vmatpush1.xpose.msra.mxu0 0.0
      %4810 = vmatprep.subr.mxu0 0.0
      %4811 = vmatpush1.xpose.msra.mxu0 %v4778
      %4812 = vmatprep.subr.mxu0 0.0
      %4813 = vmatpush2.xpose.msra.mxu0 0.0
      %4814 = vmatprep.subr.mxu0 0.0
      %4815 = vmatpush2.xpose.msra.mxu0 0.0
      %4816 = vmatprep.subr.mxu0 0.0
      %4817 = vmatpush2.xpose.msra.mxu0 0.0
      %4818 = vmatprep.subr.mxu0 0.0
      %4819 = vmatpush2.xpose.msra.mxu0 0.0
      %4820 = vmatprep.subr.mxu0 0.0
      %4821 = vmatpush2.xpose.msra.mxu0 0.0
      %4822 = vmatprep.subr.mxu0 0.0
      %4823 = vmatpush2.xpose.msra.mxu0 0.0
      %4824 = vmatprep.subr.mxu0 0.0
      %4825 = vmatpush2.xpose.msra.mxu0 0.0
      %4826 = vmatprep.subr.mxu0 0.0
      %4827 = vmatpush2.xpose.msra.mxu0 0.0
      %4828 = vmatprep.subr.mxu0 0.0
      %4829 = vmatpush2.xpose.msra.mxu0 0.0
      %4830 = vmatprep.subr.mxu0 0.0
      %4831 = vmatpush2.xpose.msra.mxu0 0.0
      %4832 = vmatprep.subr.mxu0 0.0
      %4833 = vmatpush2.xpose.msra.mxu0 0.0
      %4834 = vmatprep.subr.mxu0 0.0
      %4835 = vmatpush2.xpose.msra.mxu0 0.0
      %4836 = vmatprep.subr.mxu0 0.0
      %4837 = vmatpush2.xpose.msra.mxu0 0.0
      %4838 = vmatprep.subr.mxu0 0.0
      %4839 = vmatpush2.xpose.msra.mxu0 0.0
      %4840 = vmatprep.subr.mxu0 0.0
      %4841 = vmatpush2.xpose.msra.mxu0 0.0
      %4842 = vmatprep.subr.mxu0 0.0
      %4843 = vmatpush2.xpose.msra.mxu0 0.0
      %4844 = vmatprep.mubr.f32.mxu0 0.0
      %4845 = vmatmul.mubr.f32.gmra.mxu0 %v4776
      %v4846 = vpop.f32.mrf.mxu0
      %v4847 = vadd.f32 0.0, %v4846
      %v4848 = vpop.f32.mrf.mxu0
      %4849 = vdwg.mxu0
      %4850 = vrot.lane.b32.xlu0 %v4451, 112
      %v4851 = vpop.permute.xlu0 %4850
      %4852 = vrot.lane.b32.xlu0 %v4451, 80
      %v4853 = vpop.permute.xlu0 %4852
      %v4854 = vsel %vm903, %v4851, 0
      %v4856 = vsel %vm903, %v4853, 0
      %4858 = vmatprep.subr.mxu0 0.0
      %4859 = vmatpush1.xpose.msra.mxu0 0.0
      %4860 = vmatprep.subr.mxu0 0.0
      %4861 = vmatpush1.xpose.msra.mxu0 0.0
      %4862 = vmatprep.subr.mxu0 0.0
      %4863 = vmatpush1.xpose.msra.mxu0 0.0
      %4864 = vmatprep.subr.mxu0 0.0
      %4865 = vmatpush1.xpose.msra.mxu0 0.0
      %4866 = vmatprep.subr.mxu0 0.0
      %4867 = vmatpush1.xpose.msra.mxu0 0.0
      %4868 = vmatprep.subr.mxu0 0.0
      %4869 = vmatpush1.xpose.msra.mxu0 0.0
      %4870 = vmatprep.subr.mxu0 0.0
      %4871 = vmatpush1.xpose.msra.mxu0 0.0
      %4872 = vmatprep.subr.mxu0 0.0
      %4873 = vmatpush1.xpose.msra.mxu0 0.0
      %4874 = vmatprep.subr.mxu0 0.0
      %4875 = vmatpush1.xpose.msra.mxu0 0.0
      %4876 = vmatprep.subr.mxu0 0.0
      %4877 = vmatpush1.xpose.msra.mxu0 0.0
      %4878 = vmatprep.subr.mxu0 0.0
      %4879 = vmatpush1.xpose.msra.mxu0 0.0
      %4880 = vmatprep.subr.mxu0 0.0
      %4881 = vmatpush1.xpose.msra.mxu0 0.0
      %4882 = vmatprep.subr.mxu0 0.0
      %4883 = vmatpush1.xpose.msra.mxu0 0.0
      %4884 = vmatprep.subr.mxu0 0.0
      %4885 = vmatpush1.xpose.msra.mxu0 0.0
      %4886 = vmatprep.subr.mxu0 0.0
      %4887 = vmatpush1.xpose.msra.mxu0 0.0
      %4888 = vmatprep.subr.mxu0 0.0
      %4889 = vmatpush1.xpose.msra.mxu0 %v4856
      %4890 = vmatprep.subr.mxu0 0.0
      %4891 = vmatpush2.xpose.msra.mxu0 0.0
      %4892 = vmatprep.subr.mxu0 0.0
      %4893 = vmatpush2.xpose.msra.mxu0 0.0
      %4894 = vmatprep.subr.mxu0 0.0
      %4895 = vmatpush2.xpose.msra.mxu0 0.0
      %4896 = vmatprep.subr.mxu0 0.0
      %4897 = vmatpush2.xpose.msra.mxu0 0.0
      %4898 = vmatprep.subr.mxu0 0.0
      %4899 = vmatpush2.xpose.msra.mxu0 0.0
      %4900 = vmatprep.subr.mxu0 0.0
      %4901 = vmatpush2.xpose.msra.mxu0 0.0
      %4902 = vmatprep.subr.mxu0 0.0
      %4903 = vmatpush2.xpose.msra.mxu0 0.0
      %4904 = vmatprep.subr.mxu0 0.0
      %4905 = vmatpush2.xpose.msra.mxu0 0.0
      %4906 = vmatprep.subr.mxu0 0.0
      %4907 = vmatpush2.xpose.msra.mxu0 0.0
      %4908 = vmatprep.subr.mxu0 0.0
      %4909 = vmatpush2.xpose.msra.mxu0 0.0
      %4910 = vmatprep.subr.mxu0 0.0
      %4911 = vmatpush2.xpose.msra.mxu0 0.0
      %4912 = vmatprep.subr.mxu0 0.0
      %4913 = vmatpush2.xpose.msra.mxu0 0.0
      %4914 = vmatprep.subr.mxu0 0.0
      %4915 = vmatpush2.xpose.msra.mxu0 0.0
      %4916 = vmatprep.subr.mxu0 0.0
      %4917 = vmatpush2.xpose.msra.mxu0 0.0
      %4918 = vmatprep.subr.mxu0 0.0
      %4919 = vmatpush2.xpose.msra.mxu0 0.0
      %4920 = vmatprep.subr.mxu0 0.0
      %4921 = vmatpush2.xpose.msra.mxu0 0.0
      %4922 = vmatprep.mubr.f32.mxu0 0.0
      %4923 = vmatmul.mubr.f32.gmra.mxu0 %v4854
      %v4924 = vpop.f32.mrf.mxu0
      %v4925 = vadd.f32 0.0, %v4924
      %v4926 = vpop.f32.mrf.mxu0
      %4927 = vdwg.mxu0
      %v4928 = vmul.f32 %v4847, 0.35355338
      %v4929 = vmul.f32 %v4925, 0.35355338
      %v4930 = vadd.f32 %v4928, %v1062
      %v4931 = vadd.f32 %v4929, %v1066
      %4932 = vrot.lane.b32.xlu0 %v4448, 104
      %v4933 = vpop.permute.xlu0 %4932
      %4934 = vrot.lane.b32.xlu0 %v4448, 72
      %v4935 = vpop.permute.xlu0 %4934
      %v4936 = vsel %vm903, %v4933, 0
      %v4938 = vsel %vm903, %v4935, 0
      %4940 = vmatprep.subr.mxu0 0.0
      %4941 = vmatpush1.xpose.msra.mxu0 0.0
      %4942 = vmatprep.subr.mxu0 0.0
      %4943 = vmatpush1.xpose.msra.mxu0 0.0
      %4944 = vmatprep.subr.mxu0 0.0
      %4945 = vmatpush1.xpose.msra.mxu0 0.0
      %4946 = vmatprep.subr.mxu0 0.0
      %4947 = vmatpush1.xpose.msra.mxu0 0.0
      %4948 = vmatprep.subr.mxu0 0.0
      %4949 = vmatpush1.xpose.msra.mxu0 0.0
      %4950 = vmatprep.subr.mxu0 0.0
      %4951 = vmatpush1.xpose.msra.mxu0 0.0
      %4952 = vmatprep.subr.mxu0 0.0
      %4953 = vmatpush1.xpose.msra.mxu0 0.0
      %4954 = vmatprep.subr.mxu0 0.0
      %4955 = vmatpush1.xpose.msra.mxu0 0.0
      %4956 = vmatprep.subr.mxu0 0.0
      %4957 = vmatpush1.xpose.msra.mxu0 0.0
      %4958 = vmatprep.subr.mxu0 0.0
      %4959 = vmatpush1.xpose.msra.mxu0 0.0
      %4960 = vmatprep.subr.mxu0 0.0
      %4961 = vmatpush1.xpose.msra.mxu0 0.0
      %4962 = vmatprep.subr.mxu0 0.0
      %4963 = vmatpush1.xpose.msra.mxu0 0.0
      %4964 = vmatprep.subr.mxu0 0.0
      %4965 = vmatpush1.xpose.msra.mxu0 0.0
      %4966 = vmatprep.subr.mxu0 0.0
      %4967 = vmatpush1.xpose.msra.mxu0 0.0
      %4968 = vmatprep.subr.mxu0 0.0
      %4969 = vmatpush1.xpose.msra.mxu0 0.0
      %4970 = vmatprep.subr.mxu0 0.0
      %4971 = vmatpush1.xpose.msra.mxu0 %v4938
      %4972 = vmatprep.subr.mxu0 0.0
      %4973 = vmatpush2.xpose.msra.mxu0 0.0
      %4974 = vmatprep.subr.mxu0 0.0
      %4975 = vmatpush2.xpose.msra.mxu0 0.0
      %4976 = vmatprep.subr.mxu0 0.0
      %4977 = vmatpush2.xpose.msra.mxu0 0.0
      %4978 = vmatprep.subr.mxu0 0.0
      %4979 = vmatpush2.xpose.msra.mxu0 0.0
      %4980 = vmatprep.subr.mxu0 0.0
      %4981 = vmatpush2.xpose.msra.mxu0 0.0
      %4982 = vmatprep.subr.mxu0 0.0
      %4983 = vmatpush2.xpose.msra.mxu0 0.0
      %4984 = vmatprep.subr.mxu0 0.0
      %4985 = vmatpush2.xpose.msra.mxu0 0.0
      %4986 = vmatprep.subr.mxu0 0.0
      %4987 = vmatpush2.xpose.msra.mxu0 0.0
      %4988 = vmatprep.subr.mxu0 0.0
      %4989 = vmatpush2.xpose.msra.mxu0 0.0
      %4990 = vmatprep.subr.mxu0 0.0
      %4991 = vmatpush2.xpose.msra.mxu0 0.0
      %4992 = vmatprep.subr.mxu0 0.0
      %4993 = vmatpush2.xpose.msra.mxu0 0.0
      %4994 = vmatprep.subr.mxu0 0.0
      %4995 = vmatpush2.xpose.msra.mxu0 0.0
      %4996 = vmatprep.subr.mxu0 0.0
      %4997 = vmatpush2.xpose.msra.mxu0 0.0
      %4998 = vmatprep.subr.mxu0 0.0
      %4999 = vmatpush2.xpose.msra.mxu0 0.0
      %5000 = vmatprep.subr.mxu0 0.0
      %5001 = vmatpush2.xpose.msra.mxu0 0.0
      %5002 = vmatprep.subr.mxu0 0.0
      %5003 = vmatpush2.xpose.msra.mxu0 0.0
      %5004 = vmatprep.mubr.f32.mxu0 0.0
      %5005 = vmatmul.mubr.f32.gmra.mxu0 %v4936
      %v5006 = vpop.f32.mrf.mxu0
      %v5007 = vadd.f32 0.0, %v5006
      %v5008 = vpop.f32.mrf.mxu0
      %5009 = vdwg.mxu0
      %5010 = vrot.lane.b32.xlu0 %v4451, 104
      %v5011 = vpop.permute.xlu0 %5010
      %5012 = vrot.lane.b32.xlu0 %v4451, 72
      %v5013 = vpop.permute.xlu0 %5012
      %v5014 = vsel %vm903, %v5011, 0
      %v5016 = vsel %vm903, %v5013, 0
      %5018 = vmatprep.subr.mxu0 0.0
      %5019 = vmatpush1.xpose.msra.mxu0 0.0
      %5020 = vmatprep.subr.mxu0 0.0
      %5021 = vmatpush1.xpose.msra.mxu0 0.0
      %5022 = vmatprep.subr.mxu0 0.0
      %5023 = vmatpush1.xpose.msra.mxu0 0.0
      %5024 = vmatprep.subr.mxu0 0.0
      %5025 = vmatpush1.xpose.msra.mxu0 0.0
      %5026 = vmatprep.subr.mxu0 0.0
      %5027 = vmatpush1.xpose.msra.mxu0 0.0
      %5028 = vmatprep.subr.mxu0 0.0
      %5029 = vmatpush1.xpose.msra.mxu0 0.0
      %5030 = vmatprep.subr.mxu0 0.0
      %5031 = vmatpush1.xpose.msra.mxu0 0.0
      %5032 = vmatprep.subr.mxu0 0.0
      %5033 = vmatpush1.xpose.msra.mxu0 0.0
      %5034 = vmatprep.subr.mxu0 0.0
      %5035 = vmatpush1.xpose.msra.mxu0 0.0
      %5036 = vmatprep.subr.mxu0 0.0
      %5037 = vmatpush1.xpose.msra.mxu0 0.0
      %5038 = vmatprep.subr.mxu0 0.0
      %5039 = vmatpush1.xpose.msra.mxu0 0.0
      %5040 = vmatprep.subr.mxu0 0.0
      %5041 = vmatpush1.xpose.msra.mxu0 0.0
      %5042 = vmatprep.subr.mxu0 0.0
      %5043 = vmatpush1.xpose.msra.mxu0 0.0
      %5044 = vmatprep.subr.mxu0 0.0
      %5045 = vmatpush1.xpose.msra.mxu0 0.0
      %5046 = vmatprep.subr.mxu0 0.0
      %5047 = vmatpush1.xpose.msra.mxu0 0.0
      %5048 = vmatprep.subr.mxu0 0.0
      %5049 = vmatpush1.xpose.msra.mxu0 %v5016
      %5050 = vmatprep.subr.mxu0 0.0
      %5051 = vmatpush2.xpose.msra.mxu0 0.0
      %5052 = vmatprep.subr.mxu0 0.0
      %5053 = vmatpush2.xpose.msra.mxu0 0.0
      %5054 = vmatprep.subr.mxu0 0.0
      %5055 = vmatpush2.xpose.msra.mxu0 0.0
      %5056 = vmatprep.subr.mxu0 0.0
      %5057 = vmatpush2.xpose.msra.mxu0 0.0
      %5058 = vmatprep.subr.mxu0 0.0
      %5059 = vmatpush2.xpose.msra.mxu0 0.0
      %5060 = vmatprep.subr.mxu0 0.0
      %5061 = vmatpush2.xpose.msra.mxu0 0.0
      %5062 = vmatprep.subr.mxu0 0.0
      %5063 = vmatpush2.xpose.msra.mxu0 0.0
      %5064 = vmatprep.subr.mxu0 0.0
      %5065 = vmatpush2.xpose.msra.mxu0 0.0
      %5066 = vmatprep.subr.mxu0 0.0
      %5067 = vmatpush2.xpose.msra.mxu0 0.0
      %5068 = vmatprep.subr.mxu0 0.0
      %5069 = vmatpush2.xpose.msra.mxu0 0.0
      %5070 = vmatprep.subr.mxu0 0.0
      %5071 = vmatpush2.xpose.msra.mxu0 0.0
      %5072 = vmatprep.subr.mxu0 0.0
      %5073 = vmatpush2.xpose.msra.mxu0 0.0
      %5074 = vmatprep.subr.mxu0 0.0
      %5075 = vmatpush2.xpose.msra.mxu0 0.0
      %5076 = vmatprep.subr.mxu0 0.0
      %5077 = vmatpush2.xpose.msra.mxu0 0.0
      %5078 = vmatprep.subr.mxu0 0.0
      %5079 = vmatpush2.xpose.msra.mxu0 0.0
      %5080 = vmatprep.subr.mxu0 0.0
      %5081 = vmatpush2.xpose.msra.mxu0 0.0
      %5082 = vmatprep.mubr.f32.mxu0 0.0
      %5083 = vmatmul.mubr.f32.gmra.mxu0 %v5014
      %v5084 = vpop.f32.mrf.mxu0
      %v5085 = vadd.f32 0.0, %v5084
      %v5086 = vpop.f32.mrf.mxu0
      %5087 = vdwg.mxu0
      %v5088 = vmul.f32 %v5007, 0.35355338
      %v5089 = vmul.f32 %v5085, 0.35355338
      %v5090 = vadd.f32 %v5088, %v1062
      %v5091 = vadd.f32 %v5089, %v1066
      %v5092 = vsel %vm903, %v4610, -inf
      %5093 = vmax.xlane.f32.xlu0 %v5092
      %v5094 = vpop.xlane.xlu0 %5093
      %v5095 = vsel %vm903, %v4770, -inf
      %5096 = vmax.xlane.f32.xlu0 %v5095
      %v5097 = vpop.xlane.xlu0 %5096
      %v5098 = vsel %vm903, %v4930, -inf
      %5099 = vmax.xlane.f32.xlu0 %v5098
      %v5100 = vpop.xlane.xlu0 %5099
      %v5101 = vsel %vm903, %v5090, -inf
      %5102 = vmax.xlane.f32.xlu0 %v5101
      %v5103 = vpop.xlane.xlu0 %5102
      %v5104 = vsel %vm903, %v4611, -inf
      %5105 = vmax.xlane.f32.xlu0 %v5104
      %v5106 = vpop.xlane.xlu0 %5105
      %v5107 = vsel %vm903, %v4771, -inf
      %5108 = vmax.xlane.f32.xlu0 %v5107
      %v5109 = vpop.xlane.xlu0 %5108
      %v5110 = vsel %vm903, %v4931, -inf
      %5111 = vmax.xlane.f32.xlu0 %v5110
      %v5112 = vpop.xlane.xlu0 %5111
      %v5113 = vsel %vm903, %v5091, -inf
      %5114 = vmax.xlane.f32.xlu0 %v5113
      %v5115 = vpop.xlane.xlu0 %5114
      %v5116 = vsub.f32 %v4610, %v5094
      %v5117 = vsub.f32 %v4770, %v5097
      %v5118 = vsub.f32 %v4930, %v5100
      %v5119 = vsub.f32 %v5090, %v5103
      %v5120 = vsub.f32 %v4611, %v5106
      %v5121 = vsub.f32 %v4771, %v5109
      %v5122 = vsub.f32 %v4931, %v5112
      %v5123 = vsub.f32 %v5091, %v5115
      %v5124 = vmul.f32 %v5116, 1.442695
      %v5125 = vpow.pop %v5124
      %v5126 = vmul.f32 %v5117, 1.442695
      %v5127 = vpow.pop %v5126
      %v5128 = vmul.f32 %v5118, 1.442695
      %v5129 = vpow.pop %v5128
      %v5130 = vmul.f32 %v5119, 1.442695
      %v5131 = vpow.pop %v5130
      %v5132 = vmul.f32 %v5120, 1.442695
      %v5133 = vpow.pop %v5132
      %v5134 = vmul.f32 %v5121, 1.442695
      %v5135 = vpow.pop %v5134
      %v5136 = vmul.f32 %v5122, 1.442695
      %v5137 = vpow.pop %v5136
      %v5138 = vmul.f32 %v5123, 1.442695
      %v5139 = vpow.pop %v5138
      %v5140 = vsel %vm903, %v5125, 0.0
      %5141 = vadd.xlane.f32.xlu0 %v5140
      %v5142 = vpop.xlane.xlu0 %5141
      %v5143 = vsel %vm903, %v5127, 0.0
      %5144 = vadd.xlane.f32.xlu0 %v5143
      %v5145 = vpop.xlane.xlu0 %5144
      %v5146 = vsel %vm903, %v5129, 0.0
      %5147 = vadd.xlane.f32.xlu0 %v5146
      %v5148 = vpop.xlane.xlu0 %5147
      %v5149 = vsel %vm903, %v5131, 0.0
      %5150 = vadd.xlane.f32.xlu0 %v5149
      %v5151 = vpop.xlane.xlu0 %5150
      %v5152 = vsel %vm903, %v5133, 0.0
      %5153 = vadd.xlane.f32.xlu0 %v5152
      %v5154 = vpop.xlane.xlu0 %5153
      %v5155 = vsel %vm903, %v5135, 0.0
      %5156 = vadd.xlane.f32.xlu0 %v5155
      %v5157 = vpop.xlane.xlu0 %5156
      %v5158 = vsel %vm903, %v5137, 0.0
      %5159 = vadd.xlane.f32.xlu0 %v5158
      %v5160 = vpop.xlane.xlu0 %5159
      %v5161 = vsel %vm903, %v5139, 0.0
      %5162 = vadd.xlane.f32.xlu0 %v5161
      %v5163 = vpop.xlane.xlu0 %5162
      %v5164 = vrcp.pop %v5142
      %v5165 = vrcp.pop %v5145
      %v5166 = vrcp.pop %v5148
      %v5167 = vrcp.pop %v5151
      %v5168 = vrcp.pop %v5154
      %v5169 = vrcp.pop %v5157
      %v5170 = vrcp.pop %v5160
      %v5171 = vrcp.pop %v5163
      %v5172 = vmul.f32 %v5125, %v5164
      %v5173 = vmul.f32 %v5127, %v5165
      %v5174 = vmul.f32 %v5129, %v5166
      %v5175 = vmul.f32 %v5131, %v5167
      %v5176 = vmul.f32 %v5133, %v5168
      %v5177 = vmul.f32 %v5135, %v5169
      %v5178 = vmul.f32 %v5137, %v5170
      %v5179 = vmul.f32 %v5139, %v5171
      %5180 = vrot.lane.b32.xlu0 %v4448, 64
      %v5181 = vpop.permute.xlu0 %5180
      %v5184 = vsel %vm903, %v5172, 0
      %5186 = vmatprep.subr.mxu0 0.0
      %5187 = vmatpush1.msra.mxu0 0.0
      %5188 = vmatprep.subr.mxu0 0.0
      %5189 = vmatpush1.msra.mxu0 0.0
      %5190 = vmatprep.subr.mxu0 0.0
      %5191 = vmatpush1.msra.mxu0 0.0
      %5192 = vmatprep.subr.mxu0 0.0
      %5193 = vmatpush1.msra.mxu0 0.0
      %5194 = vmatprep.subr.mxu0 0.0
      %5195 = vmatpush1.msra.mxu0 0.0
      %5196 = vmatprep.subr.mxu0 0.0
      %5197 = vmatpush1.msra.mxu0 0.0
      %5198 = vmatprep.subr.mxu0 0.0
      %5199 = vmatpush1.msra.mxu0 0.0
      %5200 = vmatprep.subr.mxu0 0.0
      %5201 = vmatpush1.msra.mxu0 0.0
      %5202 = vmatprep.subr.mxu0 0.0
      %5203 = vmatpush1.msra.mxu0 0.0
      %5204 = vmatprep.subr.mxu0 0.0
      %5205 = vmatpush1.msra.mxu0 0.0
      %5206 = vmatprep.subr.mxu0 0.0
      %5207 = vmatpush1.msra.mxu0 0.0
      %5208 = vmatprep.subr.mxu0 0.0
      %5209 = vmatpush1.msra.mxu0 0.0
      %5210 = vmatprep.subr.mxu0 0.0
      %5211 = vmatpush1.msra.mxu0 0.0
      %5212 = vmatprep.subr.mxu0 0.0
      %5213 = vmatpush1.msra.mxu0 0.0
      %5214 = vmatprep.subr.mxu0 0.0
      %5215 = vmatpush1.msra.mxu0 0.0
      %5216 = vmatprep.subr.mxu0 0.0
      %5217 = vmatpush1.msra.mxu0 %v5181
      %5218 = vmatprep.subr.mxu0 0.0
      %5219 = vmatpush2.msra.mxu0 0.0
      %5220 = vmatprep.subr.mxu0 0.0
      %5221 = vmatpush2.msra.mxu0 0.0
      %5222 = vmatprep.subr.mxu0 0.0
      %5223 = vmatpush2.msra.mxu0 0.0
      %5224 = vmatprep.subr.mxu0 0.0
      %5225 = vmatpush2.msra.mxu0 0.0
      %5226 = vmatprep.subr.mxu0 0.0
      %5227 = vmatpush2.msra.mxu0 0.0
      %5228 = vmatprep.subr.mxu0 0.0
      %5229 = vmatpush2.msra.mxu0 0.0
      %5230 = vmatprep.subr.mxu0 0.0
      %5231 = vmatpush2.msra.mxu0 0.0
      %5232 = vmatprep.subr.mxu0 0.0
      %5233 = vmatpush2.msra.mxu0 0.0
      %5234 = vmatprep.subr.mxu0 0.0
      %5235 = vmatpush2.msra.mxu0 0.0
      %5236 = vmatprep.subr.mxu0 0.0
      %5237 = vmatpush2.msra.mxu0 0.0
      %5238 = vmatprep.subr.mxu0 0.0
      %5239 = vmatpush2.msra.mxu0 0.0
      %5240 = vmatprep.subr.mxu0 0.0
      %5241 = vmatpush2.msra.mxu0 0.0
      %5242 = vmatprep.subr.mxu0 0.0
      %5243 = vmatpush2.msra.mxu0 0.0
      %5244 = vmatprep.subr.mxu0 0.0
      %5245 = vmatpush2.msra.mxu0 0.0
      %5246 = vmatprep.subr.mxu0 0.0
      %5247 = vmatpush2.msra.mxu0 0.0
      %5248 = vmatprep.subr.mxu0 0.0
      %5249 = vmatpush2.msra.mxu0 0.0
      %5250 = vmatprep.mubr.f32.mxu0 0.0
      %5251 = vmatmul.mubr.f32.gmra.mxu0 %v5184
      %v5252 = vpop.f32.mrf.mxu0
      %v5253 = vadd.f32 0.0, %v5252
      %v5254 = vpop.f32.mrf.mxu0
      %5255 = vdwg.mxu0
      %5256 = vrot.lane.b32.xlu0 %v4451, 64
      %v5257 = vpop.permute.xlu0 %5256
      %v5260 = vsel %vm903, %v5176, 0
      %5262 = vmatprep.subr.mxu0 0.0
      %5263 = vmatpush1.msra.mxu0 0.0
      %5264 = vmatprep.subr.mxu0 0.0
      %5265 = vmatpush1.msra.mxu0 0.0
      %5266 = vmatprep.subr.mxu0 0.0
      %5267 = vmatpush1.msra.mxu0 0.0
      %5268 = vmatprep.subr.mxu0 0.0
      %5269 = vmatpush1.msra.mxu0 0.0
      %5270 = vmatprep.subr.mxu0 0.0
      %5271 = vmatpush1.msra.mxu0 0.0
      %5272 = vmatprep.subr.mxu0 0.0
      %5273 = vmatpush1.msra.mxu0 0.0
      %5274 = vmatprep.subr.mxu0 0.0
      %5275 = vmatpush1.msra.mxu0 0.0
      %5276 = vmatprep.subr.mxu0 0.0
      %5277 = vmatpush1.msra.mxu0 0.0
      %5278 = vmatprep.subr.mxu0 0.0
      %5279 = vmatpush1.msra.mxu0 0.0
      %5280 = vmatprep.subr.mxu0 0.0
      %5281 = vmatpush1.msra.mxu0 0.0
      %5282 = vmatprep.subr.mxu0 0.0
      %5283 = vmatpush1.msra.mxu0 0.0
      %5284 = vmatprep.subr.mxu0 0.0
      %5285 = vmatpush1.msra.mxu0 0.0
      %5286 = vmatprep.subr.mxu0 0.0
      %5287 = vmatpush1.msra.mxu0 0.0
      %5288 = vmatprep.subr.mxu0 0.0
      %5289 = vmatpush1.msra.mxu0 0.0
      %5290 = vmatprep.subr.mxu0 0.0
      %5291 = vmatpush1.msra.mxu0 0.0
      %5292 = vmatprep.subr.mxu0 0.0
      %5293 = vmatpush1.msra.mxu0 %v5257
      %5294 = vmatprep.subr.mxu0 0.0
      %5295 = vmatpush2.msra.mxu0 0.0
      %5296 = vmatprep.subr.mxu0 0.0
      %5297 = vmatpush2.msra.mxu0 0.0
      %5298 = vmatprep.subr.mxu0 0.0
      %5299 = vmatpush2.msra.mxu0 0.0
      %5300 = vmatprep.subr.mxu0 0.0
      %5301 = vmatpush2.msra.mxu0 0.0
      %5302 = vmatprep.subr.mxu0 0.0
      %5303 = vmatpush2.msra.mxu0 0.0
      %5304 = vmatprep.subr.mxu0 0.0
      %5305 = vmatpush2.msra.mxu0 0.0
      %5306 = vmatprep.subr.mxu0 0.0
      %5307 = vmatpush2.msra.mxu0 0.0
      %5308 = vmatprep.subr.mxu0 0.0
      %5309 = vmatpush2.msra.mxu0 0.0
      %5310 = vmatprep.subr.mxu0 0.0
      %5311 = vmatpush2.msra.mxu0 0.0
      %5312 = vmatprep.subr.mxu0 0.0
      %5313 = vmatpush2.msra.mxu0 0.0
      %5314 = vmatprep.subr.mxu0 0.0
      %5315 = vmatpush2.msra.mxu0 0.0
      %5316 = vmatprep.subr.mxu0 0.0
      %5317 = vmatpush2.msra.mxu0 0.0
      %5318 = vmatprep.subr.mxu0 0.0
      %5319 = vmatpush2.msra.mxu0 0.0
      %5320 = vmatprep.subr.mxu0 0.0
      %5321 = vmatpush2.msra.mxu0 0.0
      %5322 = vmatprep.subr.mxu0 0.0
      %5323 = vmatpush2.msra.mxu0 0.0
      %5324 = vmatprep.subr.mxu0 0.0
      %5325 = vmatpush2.msra.mxu0 0.0
      %5326 = vmatprep.mubr.f32.mxu0 0.0
      %5327 = vmatmul.mubr.f32.gmra.mxu0 %v5260
      %v5328 = vpop.f32.mrf.mxu0
      %v5329 = vadd.f32 0.0, %v5328
      %v5330 = vpop.f32.mrf.mxu0
      %5331 = vdwg.mxu0
      %5332 = vrot.lane.b32.xlu0 %v4448, 56
      %v5333 = vpop.permute.xlu0 %5332
      %v5336 = vsel %vm903, %v5173, 0
      %5338 = vmatprep.subr.mxu0 0.0
      %5339 = vmatpush1.msra.mxu0 0.0
      %5340 = vmatprep.subr.mxu0 0.0
      %5341 = vmatpush1.msra.mxu0 0.0
      %5342 = vmatprep.subr.mxu0 0.0
      %5343 = vmatpush1.msra.mxu0 0.0
      %5344 = vmatprep.subr.mxu0 0.0
      %5345 = vmatpush1.msra.mxu0 0.0
      %5346 = vmatprep.subr.mxu0 0.0
      %5347 = vmatpush1.msra.mxu0 0.0
      %5348 = vmatprep.subr.mxu0 0.0
      %5349 = vmatpush1.msra.mxu0 0.0
      %5350 = vmatprep.subr.mxu0 0.0
      %5351 = vmatpush1.msra.mxu0 0.0
      %5352 = vmatprep.subr.mxu0 0.0
      %5353 = vmatpush1.msra.mxu0 0.0
      %5354 = vmatprep.subr.mxu0 0.0
      %5355 = vmatpush1.msra.mxu0 0.0
      %5356 = vmatprep.subr.mxu0 0.0
      %5357 = vmatpush1.msra.mxu0 0.0
      %5358 = vmatprep.subr.mxu0 0.0
      %5359 = vmatpush1.msra.mxu0 0.0
      %5360 = vmatprep.subr.mxu0 0.0
      %5361 = vmatpush1.msra.mxu0 0.0
      %5362 = vmatprep.subr.mxu0 0.0
      %5363 = vmatpush1.msra.mxu0 0.0
      %5364 = vmatprep.subr.mxu0 0.0
      %5365 = vmatpush1.msra.mxu0 0.0
      %5366 = vmatprep.subr.mxu0 0.0
      %5367 = vmatpush1.msra.mxu0 0.0
      %5368 = vmatprep.subr.mxu0 0.0
      %5369 = vmatpush1.msra.mxu0 %v5333
      %5370 = vmatprep.subr.mxu0 0.0
      %5371 = vmatpush2.msra.mxu0 0.0
      %5372 = vmatprep.subr.mxu0 0.0
      %5373 = vmatpush2.msra.mxu0 0.0
      %5374 = vmatprep.subr.mxu0 0.0
      %5375 = vmatpush2.msra.mxu0 0.0
      %5376 = vmatprep.subr.mxu0 0.0
      %5377 = vmatpush2.msra.mxu0 0.0
      %5378 = vmatprep.subr.mxu0 0.0
      %5379 = vmatpush2.msra.mxu0 0.0
      %5380 = vmatprep.subr.mxu0 0.0
      %5381 = vmatpush2.msra.mxu0 0.0
      %5382 = vmatprep.subr.mxu0 0.0
      %5383 = vmatpush2.msra.mxu0 0.0
      %5384 = vmatprep.subr.mxu0 0.0
      %5385 = vmatpush2.msra.mxu0 0.0
      %5386 = vmatprep.subr.mxu0 0.0
      %5387 = vmatpush2.msra.mxu0 0.0
      %5388 = vmatprep.subr.mxu0 0.0
      %5389 = vmatpush2.msra.mxu0 0.0
      %5390 = vmatprep.subr.mxu0 0.0
      %5391 = vmatpush2.msra.mxu0 0.0
      %5392 = vmatprep.subr.mxu0 0.0
      %5393 = vmatpush2.msra.mxu0 0.0
      %5394 = vmatprep.subr.mxu0 0.0
      %5395 = vmatpush2.msra.mxu0 0.0
      %5396 = vmatprep.subr.mxu0 0.0
      %5397 = vmatpush2.msra.mxu0 0.0
      %5398 = vmatprep.subr.mxu0 0.0
      %5399 = vmatpush2.msra.mxu0 0.0
      %5400 = vmatprep.subr.mxu0 0.0
      %5401 = vmatpush2.msra.mxu0 0.0
      %5402 = vmatprep.mubr.f32.mxu0 0.0
      %5403 = vmatmul.mubr.f32.gmra.mxu0 %v5336
      %v5404 = vpop.f32.mrf.mxu0
      %v5405 = vadd.f32 0.0, %v5404
      %v5406 = vpop.f32.mrf.mxu0
      %5407 = vdwg.mxu0
      %5408 = vrot.lane.b32.xlu0 %v4451, 56
      %v5409 = vpop.permute.xlu0 %5408
      %v5412 = vsel %vm903, %v5177, 0
      %5414 = vmatprep.subr.mxu0 0.0
      %5415 = vmatpush1.msra.mxu0 0.0
      %5416 = vmatprep.subr.mxu0 0.0
      %5417 = vmatpush1.msra.mxu0 0.0
      %5418 = vmatprep.subr.mxu0 0.0
      %5419 = vmatpush1.msra.mxu0 0.0
      %5420 = vmatprep.subr.mxu0 0.0
      %5421 = vmatpush1.msra.mxu0 0.0
      %5422 = vmatprep.subr.mxu0 0.0
      %5423 = vmatpush1.msra.mxu0 0.0
      %5424 = vmatprep.subr.mxu0 0.0
      %5425 = vmatpush1.msra.mxu0 0.0
      %5426 = vmatprep.subr.mxu0 0.0
      %5427 = vmatpush1.msra.mxu0 0.0
      %5428 = vmatprep.subr.mxu0 0.0
      %5429 = vmatpush1.msra.mxu0 0.0
      %5430 = vmatprep.subr.mxu0 0.0
      %5431 = vmatpush1.msra.mxu0 0.0
      %5432 = vmatprep.subr.mxu0 0.0
      %5433 = vmatpush1.msra.mxu0 0.0
      %5434 = vmatprep.subr.mxu0 0.0
      %5435 = vmatpush1.msra.mxu0 0.0
      %5436 = vmatprep.subr.mxu0 0.0
      %5437 = vmatpush1.msra.mxu0 0.0
      %5438 = vmatprep.subr.mxu0 0.0
      %5439 = vmatpush1.msra.mxu0 0.0
      %5440 = vmatprep.subr.mxu0 0.0
      %5441 = vmatpush1.msra.mxu0 0.0
      %5442 = vmatprep.subr.mxu0 0.0
      %5443 = vmatpush1.msra.mxu0 0.0
      %5444 = vmatprep.subr.mxu0 0.0
      %5445 = vmatpush1.msra.mxu0 %v5409
      %5446 = vmatprep.subr.mxu0 0.0
      %5447 = vmatpush2.msra.mxu0 0.0
      %5448 = vmatprep.subr.mxu0 0.0
      %5449 = vmatpush2.msra.mxu0 0.0
      %5450 = vmatprep.subr.mxu0 0.0
      %5451 = vmatpush2.msra.mxu0 0.0
      %5452 = vmatprep.subr.mxu0 0.0
      %5453 = vmatpush2.msra.mxu0 0.0
      %5454 = vmatprep.subr.mxu0 0.0
      %5455 = vmatpush2.msra.mxu0 0.0
      %5456 = vmatprep.subr.mxu0 0.0
      %5457 = vmatpush2.msra.mxu0 0.0
      %5458 = vmatprep.subr.mxu0 0.0
      %5459 = vmatpush2.msra.mxu0 0.0
      %5460 = vmatprep.subr.mxu0 0.0
      %5461 = vmatpush2.msra.mxu0 0.0
      %5462 = vmatprep.subr.mxu0 0.0
      %5463 = vmatpush2.msra.mxu0 0.0
      %5464 = vmatprep.subr.mxu0 0.0
      %5465 = vmatpush2.msra.mxu0 0.0
      %5466 = vmatprep.subr.mxu0 0.0
      %5467 = vmatpush2.msra.mxu0 0.0
      %5468 = vmatprep.subr.mxu0 0.0
      %5469 = vmatpush2.msra.mxu0 0.0
      %5470 = vmatprep.subr.mxu0 0.0
      %5471 = vmatpush2.msra.mxu0 0.0
      %5472 = vmatprep.subr.mxu0 0.0
      %5473 = vmatpush2.msra.mxu0 0.0
      %5474 = vmatprep.subr.mxu0 0.0
      %5475 = vmatpush2.msra.mxu0 0.0
      %5476 = vmatprep.subr.mxu0 0.0
      %5477 = vmatpush2.msra.mxu0 0.0
      %5478 = vmatprep.mubr.f32.mxu0 0.0
      %5479 = vmatmul.mubr.f32.gmra.mxu0 %v5412
      %v5480 = vpop.f32.mrf.mxu0
      %v5481 = vadd.f32 0.0, %v5480
      %v5482 = vpop.f32.mrf.mxu0
      %5483 = vdwg.mxu0
      %5484 = vrot.lane.b32.xlu0 %v4448, 48
      %v5485 = vpop.permute.xlu0 %5484
      %v5488 = vsel %vm903, %v5174, 0
      %5490 = vmatprep.subr.mxu0 0.0
      %5491 = vmatpush1.msra.mxu0 0.0
      %5492 = vmatprep.subr.mxu0 0.0
      %5493 = vmatpush1.msra.mxu0 0.0
      %5494 = vmatprep.subr.mxu0 0.0
      %5495 = vmatpush1.msra.mxu0 0.0
      %5496 = vmatprep.subr.mxu0 0.0
      %5497 = vmatpush1.msra.mxu0 0.0
      %5498 = vmatprep.subr.mxu0 0.0
      %5499 = vmatpush1.msra.mxu0 0.0
      %5500 = vmatprep.subr.mxu0 0.0
      %5501 = vmatpush1.msra.mxu0 0.0
      %5502 = vmatprep.subr.mxu0 0.0
      %5503 = vmatpush1.msra.mxu0 0.0
      %5504 = vmatprep.subr.mxu0 0.0
      %5505 = vmatpush1.msra.mxu0 0.0
      %5506 = vmatprep.subr.mxu0 0.0
      %5507 = vmatpush1.msra.mxu0 0.0
      %5508 = vmatprep.subr.mxu0 0.0
      %5509 = vmatpush1.msra.mxu0 0.0
      %5510 = vmatprep.subr.mxu0 0.0
      %5511 = vmatpush1.msra.mxu0 0.0
      %5512 = vmatprep.subr.mxu0 0.0
      %5513 = vmatpush1.msra.mxu0 0.0
      %5514 = vmatprep.subr.mxu0 0.0
      %5515 = vmatpush1.msra.mxu0 0.0
      %5516 = vmatprep.subr.mxu0 0.0
      %5517 = vmatpush1.msra.mxu0 0.0
      %5518 = vmatprep.subr.mxu0 0.0
      %5519 = vmatpush1.msra.mxu0 0.0
      %5520 = vmatprep.subr.mxu0 0.0
      %5521 = vmatpush1.msra.mxu0 %v5485
      %5522 = vmatprep.subr.mxu0 0.0
      %5523 = vmatpush2.msra.mxu0 0.0
      %5524 = vmatprep.subr.mxu0 0.0
      %5525 = vmatpush2.msra.mxu0 0.0
      %5526 = vmatprep.subr.mxu0 0.0
      %5527 = vmatpush2.msra.mxu0 0.0
      %5528 = vmatprep.subr.mxu0 0.0
      %5529 = vmatpush2.msra.mxu0 0.0
      %5530 = vmatprep.subr.mxu0 0.0
      %5531 = vmatpush2.msra.mxu0 0.0
      %5532 = vmatprep.subr.mxu0 0.0
      %5533 = vmatpush2.msra.mxu0 0.0
      %5534 = vmatprep.subr.mxu0 0.0
      %5535 = vmatpush2.msra.mxu0 0.0
      %5536 = vmatprep.subr.mxu0 0.0
      %5537 = vmatpush2.msra.mxu0 0.0
      %5538 = vmatprep.subr.mxu0 0.0
      %5539 = vmatpush2.msra.mxu0 0.0
      %5540 = vmatprep.subr.mxu0 0.0
      %5541 = vmatpush2.msra.mxu0 0.0
      %5542 = vmatprep.subr.mxu0 0.0
      %5543 = vmatpush2.msra.mxu0 0.0
      %5544 = vmatprep.subr.mxu0 0.0
      %5545 = vmatpush2.msra.mxu0 0.0
      %5546 = vmatprep.subr.mxu0 0.0
      %5547 = vmatpush2.msra.mxu0 0.0
      %5548 = vmatprep.subr.mxu0 0.0
      %5549 = vmatpush2.msra.mxu0 0.0
      %5550 = vmatprep.subr.mxu0 0.0
      %5551 = vmatpush2.msra.mxu0 0.0
      %5552 = vmatprep.subr.mxu0 0.0
      %5553 = vmatpush2.msra.mxu0 0.0
      %5554 = vmatprep.mubr.f32.mxu0 0.0
      %5555 = vmatmul.mubr.f32.gmra.mxu0 %v5488
      %v5556 = vpop.f32.mrf.mxu0
      %v5557 = vadd.f32 0.0, %v5556
      %v5558 = vpop.f32.mrf.mxu0
      %5559 = vdwg.mxu0
      %5560 = vrot.lane.b32.xlu0 %v4451, 48
      %v5561 = vpop.permute.xlu0 %5560
      %v5564 = vsel %vm903, %v5178, 0
      %5566 = vmatprep.subr.mxu0 0.0
      %5567 = vmatpush1.msra.mxu0 0.0
      %5568 = vmatprep.subr.mxu0 0.0
      %5569 = vmatpush1.msra.mxu0 0.0
      %5570 = vmatprep.subr.mxu0 0.0
      %5571 = vmatpush1.msra.mxu0 0.0
      %5572 = vmatprep.subr.mxu0 0.0
      %5573 = vmatpush1.msra.mxu0 0.0
      %5574 = vmatprep.subr.mxu0 0.0
      %5575 = vmatpush1.msra.mxu0 0.0
      %5576 = vmatprep.subr.mxu0 0.0
      %5577 = vmatpush1.msra.mxu0 0.0
      %5578 = vmatprep.subr.mxu0 0.0
      %5579 = vmatpush1.msra.mxu0 0.0
      %5580 = vmatprep.subr.mxu0 0.0
      %5581 = vmatpush1.msra.mxu0 0.0
      %5582 = vmatprep.subr.mxu0 0.0
      %5583 = vmatpush1.msra.mxu0 0.0
      %5584 = vmatprep.subr.mxu0 0.0
      %5585 = vmatpush1.msra.mxu0 0.0
      %5586 = vmatprep.subr.mxu0 0.0
      %5587 = vmatpush1.msra.mxu0 0.0
      %5588 = vmatprep.subr.mxu0 0.0
      %5589 = vmatpush1.msra.mxu0 0.0
      %5590 = vmatprep.subr.mxu0 0.0
      %5591 = vmatpush1.msra.mxu0 0.0
      %5592 = vmatprep.subr.mxu0 0.0
      %5593 = vmatpush1.msra.mxu0 0.0
      %5594 = vmatprep.subr.mxu0 0.0
      %5595 = vmatpush1.msra.mxu0 0.0
      %5596 = vmatprep.subr.mxu0 0.0
      %5597 = vmatpush1.msra.mxu0 %v5561
      %5598 = vmatprep.subr.mxu0 0.0
      %5599 = vmatpush2.msra.mxu0 0.0
      %5600 = vmatprep.subr.mxu0 0.0
      %5601 = vmatpush2.msra.mxu0 0.0
      %5602 = vmatprep.subr.mxu0 0.0
      %5603 = vmatpush2.msra.mxu0 0.0
      %5604 = vmatprep.subr.mxu0 0.0
      %5605 = vmatpush2.msra.mxu0 0.0
      %5606 = vmatprep.subr.mxu0 0.0
      %5607 = vmatpush2.msra.mxu0 0.0
      %5608 = vmatprep.subr.mxu0 0.0
      %5609 = vmatpush2.msra.mxu0 0.0
      %5610 = vmatprep.subr.mxu0 0.0
      %5611 = vmatpush2.msra.mxu0 0.0
      %5612 = vmatprep.subr.mxu0 0.0
      %5613 = vmatpush2.msra.mxu0 0.0
      %5614 = vmatprep.subr.mxu0 0.0
      %5615 = vmatpush2.msra.mxu0 0.0
      %5616 = vmatprep.subr.mxu0 0.0
      %5617 = vmatpush2.msra.mxu0 0.0
      %5618 = vmatprep.subr.mxu0 0.0
      %5619 = vmatpush2.msra.mxu0 0.0
      %5620 = vmatprep.subr.mxu0 0.0
      %5621 = vmatpush2.msra.mxu0 0.0
      %5622 = vmatprep.subr.mxu0 0.0
      %5623 = vmatpush2.msra.mxu0 0.0
      %5624 = vmatprep.subr.mxu0 0.0
      %5625 = vmatpush2.msra.mxu0 0.0
      %5626 = vmatprep.subr.mxu0 0.0
      %5627 = vmatpush2.msra.mxu0 0.0
      %5628 = vmatprep.subr.mxu0 0.0
      %5629 = vmatpush2.msra.mxu0 0.0
      %5630 = vmatprep.mubr.f32.mxu0 0.0
      %5631 = vmatmul.mubr.f32.gmra.mxu0 %v5564
      %v5632 = vpop.f32.mrf.mxu0
      %v5633 = vadd.f32 0.0, %v5632
      %v5634 = vpop.f32.mrf.mxu0
      %5635 = vdwg.mxu0
      %5636 = vrot.lane.b32.xlu0 %v4448, 40
      %v5637 = vpop.permute.xlu0 %5636
      %v5640 = vsel %vm903, %v5175, 0
      %5642 = vmatprep.subr.mxu0 0.0
      %5643 = vmatpush1.msra.mxu0 0.0
      %5644 = vmatprep.subr.mxu0 0.0
      %5645 = vmatpush1.msra.mxu0 0.0
      %5646 = vmatprep.subr.mxu0 0.0
      %5647 = vmatpush1.msra.mxu0 0.0
      %5648 = vmatprep.subr.mxu0 0.0
      %5649 = vmatpush1.msra.mxu0 0.0
      %5650 = vmatprep.subr.mxu0 0.0
      %5651 = vmatpush1.msra.mxu0 0.0
      %5652 = vmatprep.subr.mxu0 0.0
      %5653 = vmatpush1.msra.mxu0 0.0
      %5654 = vmatprep.subr.mxu0 0.0
      %5655 = vmatpush1.msra.mxu0 0.0
      %5656 = vmatprep.subr.mxu0 0.0
      %5657 = vmatpush1.msra.mxu0 0.0
      %5658 = vmatprep.subr.mxu0 0.0
      %5659 = vmatpush1.msra.mxu0 0.0
      %5660 = vmatprep.subr.mxu0 0.0
      %5661 = vmatpush1.msra.mxu0 0.0
      %5662 = vmatprep.subr.mxu0 0.0
      %5663 = vmatpush1.msra.mxu0 0.0
      %5664 = vmatprep.subr.mxu0 0.0
      %5665 = vmatpush1.msra.mxu0 0.0
      %5666 = vmatprep.subr.mxu0 0.0
      %5667 = vmatpush1.msra.mxu0 0.0
      %5668 = vmatprep.subr.mxu0 0.0
      %5669 = vmatpush1.msra.mxu0 0.0
      %5670 = vmatprep.subr.mxu0 0.0
      %5671 = vmatpush1.msra.mxu0 0.0
      %5672 = vmatprep.subr.mxu0 0.0
      %5673 = vmatpush1.msra.mxu0 %v5637
      %5674 = vmatprep.subr.mxu0 0.0
      %5675 = vmatpush2.msra.mxu0 0.0
      %5676 = vmatprep.subr.mxu0 0.0
      %5677 = vmatpush2.msra.mxu0 0.0
      %5678 = vmatprep.subr.mxu0 0.0
      %5679 = vmatpush2.msra.mxu0 0.0
      %5680 = vmatprep.subr.mxu0 0.0
      %5681 = vmatpush2.msra.mxu0 0.0
      %5682 = vmatprep.subr.mxu0 0.0
      %5683 = vmatpush2.msra.mxu0 0.0
      %5684 = vmatprep.subr.mxu0 0.0
      %5685 = vmatpush2.msra.mxu0 0.0
      %5686 = vmatprep.subr.mxu0 0.0
      %5687 = vmatpush2.msra.mxu0 0.0
      %5688 = vmatprep.subr.mxu0 0.0
      %5689 = vmatpush2.msra.mxu0 0.0
      %5690 = vmatprep.subr.mxu0 0.0
      %5691 = vmatpush2.msra.mxu0 0.0
      %5692 = vmatprep.subr.mxu0 0.0
      %5693 = vmatpush2.msra.mxu0 0.0
      %5694 = vmatprep.subr.mxu0 0.0
      %5695 = vmatpush2.msra.mxu0 0.0
      %5696 = vmatprep.subr.mxu0 0.0
      %5697 = vmatpush2.msra.mxu0 0.0
      %5698 = vmatprep.subr.mxu0 0.0
      %5699 = vmatpush2.msra.mxu0 0.0
      %5700 = vmatprep.subr.mxu0 0.0
      %5701 = vmatpush2.msra.mxu0 0.0
      %5702 = vmatprep.subr.mxu0 0.0
      %5703 = vmatpush2.msra.mxu0 0.0
      %5704 = vmatprep.subr.mxu0 0.0
      %5705 = vmatpush2.msra.mxu0 0.0
      %5706 = vmatprep.mubr.f32.mxu0 0.0
      %5707 = vmatmul.mubr.f32.gmra.mxu0 %v5640
      %v5708 = vpop.f32.mrf.mxu0
      %v5709 = vadd.f32 0.0, %v5708
      %v5710 = vpop.f32.mrf.mxu0
      %5711 = vdwg.mxu0
      %5712 = vrot.lane.b32.xlu0 %v4451, 40
      %v5713 = vpop.permute.xlu0 %5712
      %v5716 = vsel %vm903, %v5179, 0
      %5718 = vmatprep.subr.mxu0 0.0
      %5719 = vmatpush1.msra.mxu0 0.0
      %5720 = vmatprep.subr.mxu0 0.0
      %5721 = vmatpush1.msra.mxu0 0.0
      %5722 = vmatprep.subr.mxu0 0.0
      %5723 = vmatpush1.msra.mxu0 0.0
      %5724 = vmatprep.subr.mxu0 0.0
      %5725 = vmatpush1.msra.mxu0 0.0
      %5726 = vmatprep.subr.mxu0 0.0
      %5727 = vmatpush1.msra.mxu0 0.0
      %5728 = vmatprep.subr.mxu0 0.0
      %5729 = vmatpush1.msra.mxu0 0.0
      %5730 = vmatprep.subr.mxu0 0.0
      %5731 = vmatpush1.msra.mxu0 0.0
      %5732 = vmatprep.subr.mxu0 0.0
      %5733 = vmatpush1.msra.mxu0 0.0
      %5734 = vmatprep.subr.mxu0 0.0
      %5735 = vmatpush1.msra.mxu0 0.0
      %5736 = vmatprep.subr.mxu0 0.0
      %5737 = vmatpush1.msra.mxu0 0.0
      %5738 = vmatprep.subr.mxu0 0.0
      %5739 = vmatpush1.msra.mxu0 0.0
      %5740 = vmatprep.subr.mxu0 0.0
      %5741 = vmatpush1.msra.mxu0 0.0
      %5742 = vmatprep.subr.mxu0 0.0
      %5743 = vmatpush1.msra.mxu0 0.0
      %5744 = vmatprep.subr.mxu0 0.0
      %5745 = vmatpush1.msra.mxu0 0.0
      %5746 = vmatprep.subr.mxu0 0.0
      %5747 = vmatpush1.msra.mxu0 0.0
      %5748 = vmatprep.subr.mxu0 0.0
      %5749 = vmatpush1.msra.mxu0 %v5713
      %5750 = vmatprep.subr.mxu0 0.0
      %5751 = vmatpush2.msra.mxu0 0.0
      %5752 = vmatprep.subr.mxu0 0.0
      %5753 = vmatpush2.msra.mxu0 0.0
      %5754 = vmatprep.subr.mxu0 0.0
      %5755 = vmatpush2.msra.mxu0 0.0
      %5756 = vmatprep.subr.mxu0 0.0
      %5757 = vmatpush2.msra.mxu0 0.0
      %5758 = vmatprep.subr.mxu0 0.0
      %5759 = vmatpush2.msra.mxu0 0.0
      %5760 = vmatprep.subr.mxu0 0.0
      %5761 = vmatpush2.msra.mxu0 0.0
      %5762 = vmatprep.subr.mxu0 0.0
      %5763 = vmatpush2.msra.mxu0 0.0
      %5764 = vmatprep.subr.mxu0 0.0
      %5765 = vmatpush2.msra.mxu0 0.0
      %5766 = vmatprep.subr.mxu0 0.0
      %5767 = vmatpush2.msra.mxu0 0.0
      %5768 = vmatprep.subr.mxu0 0.0
      %5769 = vmatpush2.msra.mxu0 0.0
      %5770 = vmatprep.subr.mxu0 0.0
      %5771 = vmatpush2.msra.mxu0 0.0
      %5772 = vmatprep.subr.mxu0 0.0
      %5773 = vmatpush2.msra.mxu0 0.0
      %5774 = vmatprep.subr.mxu0 0.0
      %5775 = vmatpush2.msra.mxu0 0.0
      %5776 = vmatprep.subr.mxu0 0.0
      %5777 = vmatpush2.msra.mxu0 0.0
      %5778 = vmatprep.subr.mxu0 0.0
      %5779 = vmatpush2.msra.mxu0 0.0
      %5780 = vmatprep.subr.mxu0 0.0
      %5781 = vmatpush2.msra.mxu0 0.0
      %5782 = vmatprep.mubr.f32.mxu0 0.0
      %5783 = vmatmul.mubr.f32.gmra.mxu0 %v5716
      %v5784 = vpop.f32.mrf.mxu0
      %v5785 = vadd.f32 0.0, %v5784
      %v5786 = vpop.f32.mrf.mxu0
      %5787 = vdwg.mxu0
      %5790 = vrot.lane.b32.xlu0 %v5405, 8
      %v5791 = vpop.permute.xlu0 %5790
      %5792 = vrot.lane.b32.xlu0 %v5481, 8
      %v5793 = vpop.permute.xlu0 %5792
      %5798 = vrot.lane.b32.xlu0 %v5557, 16
      %v5799 = vpop.permute.xlu0 %5798
      %5800 = vrot.lane.b32.xlu0 %v5633, 16
      %v5801 = vpop.permute.xlu0 %5800
      %5806 = vrot.lane.b32.xlu0 %v5709, 24
      %v5807 = vpop.permute.xlu0 %5806
      %5808 = vrot.lane.b32.xlu0 %v5785, 24
      %v5809 = vpop.permute.xlu0 %5808
      %v5812 = vsel %vm903, %v5253, %v5791
      %v5813 = vsel %vm903, %v5329, %v5793
      %v5814 = vsel %vm2273, %v5812, %v5799
      %v5815 = vsel %vm2273, %v5813, %v5801
      %v5816 = vsel %vm2276, %v5814, %v5807
      %v5817 = vsel %vm2276, %v5815, %v5809
      %v5818 = vpack.c.bf16 %v5817, %v5816
      %s5819 = scalar_lea.vmem %s738, 32
      %v5820 = vld [vmem:[%s5819] sm:$0xf]
      %v5821 = vld [vmem:[%s5819 + $0x4] sm:$0xf]
      %v5822 = vld [vmem:[%s5819 + $0x8] sm:$0xf]
      %v5823 = vld [vmem:[%s5819 + $0xc] sm:$0xf]
      %s5824 = scalar_lea.vmem %s742, 2
      %v5825 = vld [vmem:[%s5824] sm:$0x1]
      %v5827 = vlaneseq
      %v5828 = vshrl.u32 %v5827, 7
      %v5829 = vsub.s32 0, %v5828
      %v5830 = vrot.slane %v5825, %v5829
      %v5836 = vunpack.c.l.b16 %v5820
      %v5837 = vunpack.c.l.b16 %v5821
      %v5838 = vunpack.c.l.b16 %v5822
      %v5839 = vunpack.c.l.b16 %v5823
      %v5840 = vpack.c.b16 %v5837, %v5836
      %v5841 = vpack.c.b16 %v5839, %v5838
      %v5845 = vsel %vm786, %v5818, 0
      %5847 = vmatprep.subr.bf16.mxu0 0
      %5848 = vmatpush1.bf16.msra.mxu0 0
      %5849 = vmatprep.subr.bf16.mxu0 0
      %5850 = vmatpush1.bf16.msra.mxu0 0
      %5851 = vmatprep.subr.bf16.mxu0 0
      %5852 = vmatpush1.bf16.msra.mxu0 0
      %5853 = vmatprep.subr.bf16.mxu0 0
      %5854 = vmatpush1.bf16.msra.mxu0 0
      %5855 = vmatprep.subr.bf16.mxu0 0
      %5856 = vmatpush1.bf16.msra.mxu0 0
      %5857 = vmatprep.subr.bf16.mxu0 0
      %5858 = vmatpush1.bf16.msra.mxu0 0
      %5859 = vmatprep.subr.bf16.mxu0 0
      %5860 = vmatpush1.bf16.msra.mxu0 %v5841
      %5861 = vmatprep.subr.bf16.mxu0 0
      %5862 = vmatpush1.bf16.msra.mxu0 %v5840
      %5863 = vmatprep.subr.bf16.mxu0 0
      %5864 = vmatpush2.bf16.msra.mxu0 0
      %5865 = vmatprep.subr.bf16.mxu0 0
      %5866 = vmatpush2.bf16.msra.mxu0 0
      %5867 = vmatprep.subr.bf16.mxu0 0
      %5868 = vmatpush2.bf16.msra.mxu0 0
      %5869 = vmatprep.subr.bf16.mxu0 0
      %5870 = vmatpush2.bf16.msra.mxu0 0
      %5871 = vmatprep.subr.bf16.mxu0 0
      %5872 = vmatpush2.bf16.msra.mxu0 0
      %5873 = vmatprep.subr.bf16.mxu0 0
      %5874 = vmatpush2.bf16.msra.mxu0 0
      %5875 = vmatprep.subr.bf16.mxu0 0
      %5876 = vmatpush2.bf16.msra.mxu0 0
      %5877 = vmatprep.subr.bf16.mxu0 0
      %5878 = vmatpush2.bf16.msra.mxu0 0
      %5879 = vmatprep.mubr.bf16.mxu0 0
      %5880 = vmatmul.mubr.bf16.gmra.mxu0 %v5845
      %v5881 = vpop.f32.mrf.mxu0
      %v5882 = vadd.f32 %v5830, %v5881
      %v5883 = vpop.f32.mrf.mxu0
      %v5884 = vpop.f32.mrf.mxu0
      %v5885 = vadd.f32 %v5830, %v5884
      %v5886 = vpop.f32.mrf.mxu0
      %5887 = vdwg.mxu0
      %v5888 = vadd.f32 %v4382, %v5882
      %v5889 = vadd.f32 %v4383, %v5885
      %s5890 = scalar_lea.vmem %s746, 2
      %v5891 = vld [vmem:[%s5890] sm:$0x1]
      %s5892 = scalar_lea.vmem %s750, 2
      %v5893 = vld [vmem:[%s5892] sm:$0x1]
      %v5894 = vsel %vm786, %v5888, 0.0
      %5895 = vadd.xlane.f32.xlu0 %v5894
      %v5896 = vpop.xlane.xlu0 %5895
      %v5897 = vsel %vm786, %v5889, 0.0
      %5898 = vadd.xlane.f32.xlu0 %v5897
      %v5899 = vpop.xlane.xlu0 %5898
      %v5900 = vmul.f32 %v5896, %v793
      %v5901 = vmul.f32 %v5899, %v793
      %v5902 = vsub.f32 %v5888, %v5900
      %v5903 = vsub.f32 %v5889, %v5901
      %v5904 = vmul.f32 %v5902, %v5902
      %v5905 = vmul.f32 %v5903, %v5903
      %v5906 = vsel %vm786, %v5904, 0.0
      %5907 = vadd.xlane.f32.xlu0 %v5906
      %v5908 = vpop.xlane.xlu0 %5907
      %v5909 = vsel %vm786, %v5905, 0.0
      %5910 = vadd.xlane.f32.xlu0 %v5909
      %v5911 = vpop.xlane.xlu0 %5910
      %v5912 = vmul.f32 %v5908, %v793
      %v5913 = vmul.f32 %v5911, %v793
      %v5914 = vadd.f32 %v5912, 1e-07
      %v5915 = vadd.f32 %v5913, 1e-07
      %v5916 = vrsqrt.pop %v5914
      %v5917 = vrsqrt.pop %v5915
      %v5918 = vmul.f32 %v5902, %v5916
      %v5919 = vmul.f32 %v5903, %v5917
      %v5921 = vlaneseq
      %v5922 = vshrl.u32 %v5921, 7
      %v5923 = vsub.s32 0, %v5922
      %v5924 = vrot.slane %v5891, %v5923
      %v5926 = vmul.f32 %v5918, %v5924
      %v5927 = vmul.f32 %v5919, %v5924
      %v5929 = vlaneseq
      %v5930 = vshrl.u32 %v5929, 7
      %v5931 = vsub.s32 0, %v5930
      %v5932 = vrot.slane %v5893, %v5931
      %v5934 = vadd.f32 %v5926, %v5932
      %v5935 = vadd.f32 %v5927, %v5932
      %v5936 = vpack.c.bf16 %v5935, %v5934
      %s5937 = scalar_lea.vmem %s755, 32
      %v5938 = vld [vmem:[%s5937] sm:$0xf]
      %v5939 = vld [vmem:[%s5937 + $0x4] sm:$0xf]
      %v5940 = vld [vmem:[%s5937 + $0x8] sm:$0xf]
      %v5941 = vld [vmem:[%s5937 + $0xc] sm:$0xf]
      %s5942 = scalar_lea.vmem %s759, 2
      %v5943 = vld [vmem:[%s5942] sm:$0x1]
      %v5945 = vlaneseq
      %v5946 = vshrl.u32 %v5945, 7
      %v5947 = vsub.s32 0, %v5946
      %v5948 = vrot.slane %v5943, %v5947
      %v5954 = vunpack.c.l.b16 %v5938
      %v5955 = vunpack.c.l.b16 %v5939
      %v5956 = vunpack.c.l.b16 %v5940
      %v5957 = vunpack.c.l.b16 %v5941
      %v5958 = vpack.c.b16 %v5955, %v5954
      %v5959 = vpack.c.b16 %v5957, %v5956
      %v5963 = vsel %vm786, %v5936, 0
      %5965 = vmatprep.subr.bf16.mxu0 0
      %5966 = vmatpush1.bf16.msra.mxu0 0
      %5967 = vmatprep.subr.bf16.mxu0 0
      %5968 = vmatpush1.bf16.msra.mxu0 0
      %5969 = vmatprep.subr.bf16.mxu0 0
      %5970 = vmatpush1.bf16.msra.mxu0 0
      %5971 = vmatprep.subr.bf16.mxu0 0
      %5972 = vmatpush1.bf16.msra.mxu0 0
      %5973 = vmatprep.subr.bf16.mxu0 0
      %5974 = vmatpush1.bf16.msra.mxu0 0
      %5975 = vmatprep.subr.bf16.mxu0 0
      %5976 = vmatpush1.bf16.msra.mxu0 0
      %5977 = vmatprep.subr.bf16.mxu0 0
      %5978 = vmatpush1.bf16.msra.mxu0 %v5959
      %5979 = vmatprep.subr.bf16.mxu0 0
      %5980 = vmatpush1.bf16.msra.mxu0 %v5958
      %5981 = vmatprep.subr.bf16.mxu0 0
      %5982 = vmatpush2.bf16.msra.mxu0 0
      %5983 = vmatprep.subr.bf16.mxu0 0
      %5984 = vmatpush2.bf16.msra.mxu0 0
      %5985 = vmatprep.subr.bf16.mxu0 0
      %5986 = vmatpush2.bf16.msra.mxu0 0
      %5987 = vmatprep.subr.bf16.mxu0 0
      %5988 = vmatpush2.bf16.msra.mxu0 0
      %5989 = vmatprep.subr.bf16.mxu0 0
      %5990 = vmatpush2.bf16.msra.mxu0 0
      %5991 = vmatprep.subr.bf16.mxu0 0
      %5992 = vmatpush2.bf16.msra.mxu0 0
      %5993 = vmatprep.subr.bf16.mxu0 0
      %5994 = vmatpush2.bf16.msra.mxu0 0
      %5995 = vmatprep.subr.bf16.mxu0 0
      %5996 = vmatpush2.bf16.msra.mxu0 0
      %5997 = vmatprep.mubr.bf16.mxu0 0
      %5998 = vmatmul.mubr.bf16.gmra.mxu0 %v5963
      %v5999 = vpop.f32.mrf.mxu0
      %v6000 = vadd.f32 %v5948, %v5999
      %v6001 = vpop.f32.mrf.mxu0
      %v6002 = vpop.f32.mrf.mxu0
      %v6003 = vadd.f32 %v5948, %v6002
      %v6004 = vpop.f32.mrf.mxu0
      %6005 = vdwg.mxu0
      %v6006 = vmul.f32 %v6000, 0.5
      %v6007 = vmul.f32 %v6003, 0.5
      %v6008 = vmul.f32 %v6000, 0.044715
      %v6009 = vmul.f32 %v6003, 0.044715
      %v6010 = vmul.f32 %v6008, %v6000
      %v6011 = vmul.f32 %v6009, %v6003
      %v6012 = vmul.f32 %v6010, %v6000
      %v6013 = vmul.f32 %v6011, %v6003
      %v6014 = vadd.f32 %v6000, %v6012
      %v6015 = vadd.f32 %v6003, %v6013
      %v6016 = vmul.f32 %v6014, 0.7978846
      %v6017 = vmul.f32 %v6015, 0.7978846
      %v6018 = vtanh.pop %v6016
      %v6019 = vtanh.pop %v6017
      %v6020 = vadd.f32 %v6018, 1.0
      %v6021 = vadd.f32 %v6019, 1.0
      %v6022 = vmul.f32 %v6006, %v6020
      %v6023 = vmul.f32 %v6007, %v6021
      %v6024 = vpack.c.bf16 %v6023, %v6022
      %s6025 = scalar_lea.vmem %s764, 64
      %v6026 = vld [vmem:[%s6025] sm:$0xf]
      %v6027 = vld [vmem:[%s6025 + $0x4] sm:$0xf]
      %v6028 = vld [vmem:[%s6025 + $0x8] sm:$0xf]
      %v6029 = vld [vmem:[%s6025 + $0xc] sm:$0xf]
      %v6030 = vld [vmem:[%s6025 + $0x10] sm:$0xf]
      %v6031 = vld [vmem:[%s6025 + $0x14] sm:$0xf]
      %v6032 = vld [vmem:[%s6025 + $0x18] sm:$0xf]
      %v6033 = vld [vmem:[%s6025 + $0x1c] sm:$0xf]
      %s6034 = scalar_lea.vmem %s768, 2
      %v6035 = vld [vmem:[%s6034] sm:$0x1]
      %v6037 = vlaneseq
      %v6038 = vshrl.u32 %v6037, 7
      %v6039 = vsub.s32 0, %v6038
      %v6040 = vrot.slane %v6035, %v6039
      %v6050 = vunpack.c.l.b16 %v6026
      %v6051 = vunpack.c.l.b16 %v6027
      %v6052 = vunpack.c.l.b16 %v6028
      %v6053 = vunpack.c.l.b16 %v6029
      %v6054 = vunpack.c.l.b16 %v6030
      %v6055 = vunpack.c.l.b16 %v6031
      %v6056 = vunpack.c.l.b16 %v6032
      %v6057 = vunpack.c.l.b16 %v6033
      %v6058 = vpack.c.b16 %v6051, %v6050
      %v6059 = vpack.c.b16 %v6053, %v6052
      %v6060 = vpack.c.b16 %v6055, %v6054
      %v6061 = vpack.c.b16 %v6057, %v6056
      %v6067 = vsel %vm2519, %v6024, 0
      %6069 = vmatprep.subr.bf16.mxu0 0
      %6070 = vmatpush1.bf16.msra.mxu0 0
      %6071 = vmatprep.subr.bf16.mxu0 0
      %6072 = vmatpush1.bf16.msra.mxu0 0
      %6073 = vmatprep.subr.bf16.mxu0 0
      %6074 = vmatpush1.bf16.msra.mxu0 0
      %6075 = vmatprep.subr.bf16.mxu0 0
      %6076 = vmatpush1.bf16.msra.mxu0 0
      %6077 = vmatprep.subr.bf16.mxu0 0
      %6078 = vmatpush1.bf16.msra.mxu0 %v6061
      %6079 = vmatprep.subr.bf16.mxu0 0
      %6080 = vmatpush1.bf16.msra.mxu0 %v6060
      %6081 = vmatprep.subr.bf16.mxu0 0
      %6082 = vmatpush1.bf16.msra.mxu0 %v6059
      %6083 = vmatprep.subr.bf16.mxu0 0
      %6084 = vmatpush1.bf16.msra.mxu0 %v6058
      %6085 = vmatprep.subr.bf16.mxu0 0
      %6086 = vmatpush2.bf16.msra.mxu0 0
      %6087 = vmatprep.subr.bf16.mxu0 0
      %6088 = vmatpush2.bf16.msra.mxu0 0
      %6089 = vmatprep.subr.bf16.mxu0 0
      %6090 = vmatpush2.bf16.msra.mxu0 0
      %6091 = vmatprep.subr.bf16.mxu0 0
      %6092 = vmatpush2.bf16.msra.mxu0 0
      %6093 = vmatprep.subr.bf16.mxu0 0
      %6094 = vmatpush2.bf16.msra.mxu0 0
      %6095 = vmatprep.subr.bf16.mxu0 0
      %6096 = vmatpush2.bf16.msra.mxu0 0
      %6097 = vmatprep.subr.bf16.mxu0 0
      %6098 = vmatpush2.bf16.msra.mxu0 0
      %6099 = vmatprep.subr.bf16.mxu0 0
      %6100 = vmatpush2.bf16.msra.mxu0 0
      %6101 = vmatprep.mubr.bf16.mxu0 0
      %6102 = vmatmul.mubr.bf16.gmra.mxu0 %v6067
      %v6103 = vpop.f32.mrf.mxu0
      %v6104 = vadd.f32 %v6040, %v6103
      %v6105 = vpop.f32.mrf.mxu0
      %v6106 = vpop.f32.mrf.mxu0
      %v6107 = vadd.f32 %v6040, %v6106
      %v6108 = vpop.f32.mrf.mxu0
      %6109 = vdwg.mxu0
      %v6110 = vadd.f32 %v5934, %v6104
      %v6111 = vadd.f32 %v5935, %v6107
      %s6112 = scalar_lea.vmem %s772, 2
      %v6113 = vld [vmem:[%s6112] sm:$0x1]
      %s6114 = scalar_lea.vmem %s776, 2
      %v6115 = vld [vmem:[%s6114] sm:$0x1]
      %v6116 = vsel %vm786, %v6110, 0.0
      %6117 = vadd.xlane.f32.xlu0 %v6116
      %v6118 = vpop.xlane.xlu0 %6117
      %v6119 = vsel %vm786, %v6111, 0.0
      %6120 = vadd.xlane.f32.xlu0 %v6119
      %v6121 = vpop.xlane.xlu0 %6120
      %v6122 = vmul.f32 %v6118, %v793
      %v6123 = vmul.f32 %v6121, %v793
      %v6124 = vsub.f32 %v6110, %v6122
      %v6125 = vsub.f32 %v6111, %v6123
      %v6126 = vmul.f32 %v6124, %v6124
      %v6127 = vmul.f32 %v6125, %v6125
      %v6128 = vsel %vm786, %v6126, 0.0
      %6129 = vadd.xlane.f32.xlu0 %v6128
      %v6130 = vpop.xlane.xlu0 %6129
      %v6131 = vsel %vm786, %v6127, 0.0
      %6132 = vadd.xlane.f32.xlu0 %v6131
      %v6133 = vpop.xlane.xlu0 %6132
      %v6134 = vmul.f32 %v6130, %v793
      %v6135 = vmul.f32 %v6133, %v793
      %v6136 = vadd.f32 %v6134, 1e-07
      %v6137 = vadd.f32 %v6135, 1e-07
      %v6138 = vrsqrt.pop %v6136
      %v6139 = vrsqrt.pop %v6137
      %v6140 = vmul.f32 %v6124, %v6138
      %v6141 = vmul.f32 %v6125, %v6139
      %v6143 = vlaneseq
      %v6144 = vshrl.u32 %v6143, 7
      %v6145 = vsub.s32 0, %v6144
      %v6146 = vrot.slane %v6113, %v6145
      %v6148 = vmul.f32 %v6140, %v6146
      %v6149 = vmul.f32 %v6141, %v6146
      %v6151 = vlaneseq
      %v6152 = vshrl.u32 %v6151, 7
      %v6153 = vsub.s32 0, %v6152
      %v6154 = vrot.slane %v6115, %v6153
      %v6156 = vadd.f32 %v6148, %v6154
      %v6157 = vadd.f32 %v6149, %v6154
      %v6158 = vpack.c.bf16 %v6157, %v6156
      %s6159 = scalar_lea.vmem %s729, 48
      %v6160 = vld [vmem:[%s6159] sm:$0xf]
      %v6161 = vld [vmem:[%s6159 + $0x4] sm:$0xf]
      %v6162 = vld [vmem:[%s6159 + $0x8] sm:$0xf]
      %v6163 = vld [vmem:[%s6159 + $0xc] sm:$0xf]
      %s6164 = scalar_lea.vmem %s733, 3
      %v6165 = vld [vmem:[%s6164] sm:$0x1]
      %v6167 = vlaneseq
      %v6168 = vshrl.u32 %v6167, 7
      %v6169 = vsub.s32 0, %v6168
      %v6170 = vrot.slane %v6165, %v6169
      %v6176 = vunpack.c.l.b16 %v6160
      %v6177 = vunpack.c.l.b16 %v6161
      %v6178 = vunpack.c.l.b16 %v6162
      %v6179 = vunpack.c.l.b16 %v6163
      %v6180 = vpack.c.b16 %v6177, %v6176
      %v6181 = vpack.c.b16 %v6179, %v6178
      %v6185 = vsel %vm786, %v6158, 0
      %6187 = vmatprep.subr.bf16.mxu0 0
      %6188 = vmatpush1.bf16.msra.mxu0 0
      %6189 = vmatprep.subr.bf16.mxu0 0
      %6190 = vmatpush1.bf16.msra.mxu0 0
      %6191 = vmatprep.subr.bf16.mxu0 0
      %6192 = vmatpush1.bf16.msra.mxu0 0
      %6193 = vmatprep.subr.bf16.mxu0 0
      %6194 = vmatpush1.bf16.msra.mxu0 0
      %6195 = vmatprep.subr.bf16.mxu0 0
      %6196 = vmatpush1.bf16.msra.mxu0 0
      %6197 = vmatprep.subr.bf16.mxu0 0
      %6198 = vmatpush1.bf16.msra.mxu0 0
      %6199 = vmatprep.subr.bf16.mxu0 0
      %6200 = vmatpush1.bf16.msra.mxu0 %v6181
      %6201 = vmatprep.subr.bf16.mxu0 0
      %6202 = vmatpush1.bf16.msra.mxu0 %v6180
      %6203 = vmatprep.subr.bf16.mxu0 0
      %6204 = vmatpush2.bf16.msra.mxu0 0
      %6205 = vmatprep.subr.bf16.mxu0 0
      %6206 = vmatpush2.bf16.msra.mxu0 0
      %6207 = vmatprep.subr.bf16.mxu0 0
      %6208 = vmatpush2.bf16.msra.mxu0 0
      %6209 = vmatprep.subr.bf16.mxu0 0
      %6210 = vmatpush2.bf16.msra.mxu0 0
      %6211 = vmatprep.subr.bf16.mxu0 0
      %6212 = vmatpush2.bf16.msra.mxu0 0
      %6213 = vmatprep.subr.bf16.mxu0 0
      %6214 = vmatpush2.bf16.msra.mxu0 0
      %6215 = vmatprep.subr.bf16.mxu0 0
      %6216 = vmatpush2.bf16.msra.mxu0 0
      %6217 = vmatprep.subr.bf16.mxu0 0
      %6218 = vmatpush2.bf16.msra.mxu0 0
      %6219 = vmatprep.mubr.bf16.mxu0 0
      %6220 = vmatmul.mubr.bf16.gmra.mxu0 %v6185
      %v6221 = vpop.f32.mrf.mxu0
      %v6222 = vadd.f32 %v6170, %v6221
      %v6223 = vpop.f32.mrf.mxu0
      %v6224 = vpop.f32.mrf.mxu0
      %v6225 = vadd.f32 %v6170, %v6224
      %v6226 = vpop.f32.mrf.mxu0
      %6227 = vdwg.mxu0
      %6229 = vrot.lane.b32.xlu0 %v6222, 96
      %v6230 = vpop.permute.xlu0 %6229
      %v6231 = vsel %vm903, %v6222, 0
      %v6233 = vsel %vm903, %v6230, 0
      %6235 = vmatprep.subr.mxu0 0.0
      %6236 = vmatpush1.xpose.msra.mxu0 0.0
      %6237 = vmatprep.subr.mxu0 0.0
      %6238 = vmatpush1.xpose.msra.mxu0 0.0
      %6239 = vmatprep.subr.mxu0 0.0
      %6240 = vmatpush1.xpose.msra.mxu0 0.0
      %6241 = vmatprep.subr.mxu0 0.0
      %6242 = vmatpush1.xpose.msra.mxu0 0.0
      %6243 = vmatprep.subr.mxu0 0.0
      %6244 = vmatpush1.xpose.msra.mxu0 0.0
      %6245 = vmatprep.subr.mxu0 0.0
      %6246 = vmatpush1.xpose.msra.mxu0 0.0
      %6247 = vmatprep.subr.mxu0 0.0
      %6248 = vmatpush1.xpose.msra.mxu0 0.0
      %6249 = vmatprep.subr.mxu0 0.0
      %6250 = vmatpush1.xpose.msra.mxu0 0.0
      %6251 = vmatprep.subr.mxu0 0.0
      %6252 = vmatpush1.xpose.msra.mxu0 0.0
      %6253 = vmatprep.subr.mxu0 0.0
      %6254 = vmatpush1.xpose.msra.mxu0 0.0
      %6255 = vmatprep.subr.mxu0 0.0
      %6256 = vmatpush1.xpose.msra.mxu0 0.0
      %6257 = vmatprep.subr.mxu0 0.0
      %6258 = vmatpush1.xpose.msra.mxu0 0.0
      %6259 = vmatprep.subr.mxu0 0.0
      %6260 = vmatpush1.xpose.msra.mxu0 0.0
      %6261 = vmatprep.subr.mxu0 0.0
      %6262 = vmatpush1.xpose.msra.mxu0 0.0
      %6263 = vmatprep.subr.mxu0 0.0
      %6264 = vmatpush1.xpose.msra.mxu0 0.0
      %6265 = vmatprep.subr.mxu0 0.0
      %6266 = vmatpush1.xpose.msra.mxu0 %v6233
      %6267 = vmatprep.subr.mxu0 0.0
      %6268 = vmatpush2.xpose.msra.mxu0 0.0
      %6269 = vmatprep.subr.mxu0 0.0
      %6270 = vmatpush2.xpose.msra.mxu0 0.0
      %6271 = vmatprep.subr.mxu0 0.0
      %6272 = vmatpush2.xpose.msra.mxu0 0.0
      %6273 = vmatprep.subr.mxu0 0.0
      %6274 = vmatpush2.xpose.msra.mxu0 0.0
      %6275 = vmatprep.subr.mxu0 0.0
      %6276 = vmatpush2.xpose.msra.mxu0 0.0
      %6277 = vmatprep.subr.mxu0 0.0
      %6278 = vmatpush2.xpose.msra.mxu0 0.0
      %6279 = vmatprep.subr.mxu0 0.0
      %6280 = vmatpush2.xpose.msra.mxu0 0.0
      %6281 = vmatprep.subr.mxu0 0.0
      %6282 = vmatpush2.xpose.msra.mxu0 0.0
      %6283 = vmatprep.subr.mxu0 0.0
      %6284 = vmatpush2.xpose.msra.mxu0 0.0
      %6285 = vmatprep.subr.mxu0 0.0
      %6286 = vmatpush2.xpose.msra.mxu0 0.0
      %6287 = vmatprep.subr.mxu0 0.0
      %6288 = vmatpush2.xpose.msra.mxu0 0.0
      %6289 = vmatprep.subr.mxu0 0.0
      %6290 = vmatpush2.xpose.msra.mxu0 0.0
      %6291 = vmatprep.subr.mxu0 0.0
      %6292 = vmatpush2.xpose.msra.mxu0 0.0
      %6293 = vmatprep.subr.mxu0 0.0
      %6294 = vmatpush2.xpose.msra.mxu0 0.0
      %6295 = vmatprep.subr.mxu0 0.0
      %6296 = vmatpush2.xpose.msra.mxu0 0.0
      %6297 = vmatprep.subr.mxu0 0.0
      %6298 = vmatpush2.xpose.msra.mxu0 0.0
      %6299 = vmatprep.mubr.f32.mxu0 0.0
      %6300 = vmatmul.mubr.f32.gmra.mxu0 %v6231
      %v6301 = vpop.f32.mrf.mxu0
      %v6302 = vadd.f32 0.0, %v6301
      %v6303 = vpop.f32.mrf.mxu0
      %6304 = vdwg.mxu0
      %6306 = vrot.lane.b32.xlu0 %v6225, 96
      %v6307 = vpop.permute.xlu0 %6306
      %v6308 = vsel %vm903, %v6225, 0
      %v6310 = vsel %vm903, %v6307, 0
      %6312 = vmatprep.subr.mxu0 0.0
      %6313 = vmatpush1.xpose.msra.mxu0 0.0
      %6314 = vmatprep.subr.mxu0 0.0
      %6315 = vmatpush1.xpose.msra.mxu0 0.0
      %6316 = vmatprep.subr.mxu0 0.0
      %6317 = vmatpush1.xpose.msra.mxu0 0.0
      %6318 = vmatprep.subr.mxu0 0.0
      %6319 = vmatpush1.xpose.msra.mxu0 0.0
      %6320 = vmatprep.subr.mxu0 0.0
      %6321 = vmatpush1.xpose.msra.mxu0 0.0
      %6322 = vmatprep.subr.mxu0 0.0
      %6323 = vmatpush1.xpose.msra.mxu0 0.0
      %6324 = vmatprep.subr.mxu0 0.0
      %6325 = vmatpush1.xpose.msra.mxu0 0.0
      %6326 = vmatprep.subr.mxu0 0.0
      %6327 = vmatpush1.xpose.msra.mxu0 0.0
      %6328 = vmatprep.subr.mxu0 0.0
      %6329 = vmatpush1.xpose.msra.mxu0 0.0
      %6330 = vmatprep.subr.mxu0 0.0
      %6331 = vmatpush1.xpose.msra.mxu0 0.0
      %6332 = vmatprep.subr.mxu0 0.0
      %6333 = vmatpush1.xpose.msra.mxu0 0.0
      %6334 = vmatprep.subr.mxu0 0.0
      %6335 = vmatpush1.xpose.msra.mxu0 0.0
      %6336 = vmatprep.subr.mxu0 0.0
      %6337 = vmatpush1.xpose.msra.mxu0 0.0
      %6338 = vmatprep.subr.mxu0 0.0
      %6339 = vmatpush1.xpose.msra.mxu0 0.0
      %6340 = vmatprep.subr.mxu0 0.0
      %6341 = vmatpush1.xpose.msra.mxu0 0.0
      %6342 = vmatprep.subr.mxu0 0.0
      %6343 = vmatpush1.xpose.msra.mxu0 %v6310
      %6344 = vmatprep.subr.mxu0 0.0
      %6345 = vmatpush2.xpose.msra.mxu0 0.0
      %6346 = vmatprep.subr.mxu0 0.0
      %6347 = vmatpush2.xpose.msra.mxu0 0.0
      %6348 = vmatprep.subr.mxu0 0.0
      %6349 = vmatpush2.xpose.msra.mxu0 0.0
      %6350 = vmatprep.subr.mxu0 0.0
      %6351 = vmatpush2.xpose.msra.mxu0 0.0
      %6352 = vmatprep.subr.mxu0 0.0
      %6353 = vmatpush2.xpose.msra.mxu0 0.0
      %6354 = vmatprep.subr.mxu0 0.0
      %6355 = vmatpush2.xpose.msra.mxu0 0.0
      %6356 = vmatprep.subr.mxu0 0.0
      %6357 = vmatpush2.xpose.msra.mxu0 0.0
      %6358 = vmatprep.subr.mxu0 0.0
      %6359 = vmatpush2.xpose.msra.mxu0 0.0
      %6360 = vmatprep.subr.mxu0 0.0
      %6361 = vmatpush2.xpose.msra.mxu0 0.0
      %6362 = vmatprep.subr.mxu0 0.0
      %6363 = vmatpush2.xpose.msra.mxu0 0.0
      %6364 = vmatprep.subr.mxu0 0.0
      %6365 = vmatpush2.xpose.msra.mxu0 0.0
      %6366 = vmatprep.subr.mxu0 0.0
      %6367 = vmatpush2.xpose.msra.mxu0 0.0
      %6368 = vmatprep.subr.mxu0 0.0
      %6369 = vmatpush2.xpose.msra.mxu0 0.0
      %6370 = vmatprep.subr.mxu0 0.0
      %6371 = vmatpush2.xpose.msra.mxu0 0.0
      %6372 = vmatprep.subr.mxu0 0.0
      %6373 = vmatpush2.xpose.msra.mxu0 0.0
      %6374 = vmatprep.subr.mxu0 0.0
      %6375 = vmatpush2.xpose.msra.mxu0 0.0
      %6376 = vmatprep.mubr.f32.mxu0 0.0
      %6377 = vmatmul.mubr.f32.gmra.mxu0 %v6308
      %v6378 = vpop.f32.mrf.mxu0
      %v6379 = vadd.f32 0.0, %v6378
      %v6380 = vpop.f32.mrf.mxu0
      %6381 = vdwg.mxu0
      %v6382 = vmul.f32 %v6302, 0.35355338
      %v6383 = vmul.f32 %v6379, 0.35355338
      %v6384 = vadd.f32 %v6382, %v1062
      %v6385 = vadd.f32 %v6383, %v1066
      %6386 = vrot.lane.b32.xlu0 %v6222, 120
      %v6387 = vpop.permute.xlu0 %6386
      %6388 = vrot.lane.b32.xlu0 %v6222, 88
      %v6389 = vpop.permute.xlu0 %6388
      %v6390 = vsel %vm903, %v6387, 0
      %v6392 = vsel %vm903, %v6389, 0
      %6394 = vmatprep.subr.mxu0 0.0
      %6395 = vmatpush1.xpose.msra.mxu0 0.0
      %6396 = vmatprep.subr.mxu0 0.0
      %6397 = vmatpush1.xpose.msra.mxu0 0.0
      %6398 = vmatprep.subr.mxu0 0.0
      %6399 = vmatpush1.xpose.msra.mxu0 0.0
      %6400 = vmatprep.subr.mxu0 0.0
      %6401 = vmatpush1.xpose.msra.mxu0 0.0
      %6402 = vmatprep.subr.mxu0 0.0
      %6403 = vmatpush1.xpose.msra.mxu0 0.0
      %6404 = vmatprep.subr.mxu0 0.0
      %6405 = vmatpush1.xpose.msra.mxu0 0.0
      %6406 = vmatprep.subr.mxu0 0.0
      %6407 = vmatpush1.xpose.msra.mxu0 0.0
      %6408 = vmatprep.subr.mxu0 0.0
      %6409 = vmatpush1.xpose.msra.mxu0 0.0
      %6410 = vmatprep.subr.mxu0 0.0
      %6411 = vmatpush1.xpose.msra.mxu0 0.0
      %6412 = vmatprep.subr.mxu0 0.0
      %6413 = vmatpush1.xpose.msra.mxu0 0.0
      %6414 = vmatprep.subr.mxu0 0.0
      %6415 = vmatpush1.xpose.msra.mxu0 0.0
      %6416 = vmatprep.subr.mxu0 0.0
      %6417 = vmatpush1.xpose.msra.mxu0 0.0
      %6418 = vmatprep.subr.mxu0 0.0
      %6419 = vmatpush1.xpose.msra.mxu0 0.0
      %6420 = vmatprep.subr.mxu0 0.0
      %6421 = vmatpush1.xpose.msra.mxu0 0.0
      %6422 = vmatprep.subr.mxu0 0.0
      %6423 = vmatpush1.xpose.msra.mxu0 0.0
      %6424 = vmatprep.subr.mxu0 0.0
      %6425 = vmatpush1.xpose.msra.mxu0 %v6392
      %6426 = vmatprep.subr.mxu0 0.0
      %6427 = vmatpush2.xpose.msra.mxu0 0.0
      %6428 = vmatprep.subr.mxu0 0.0
      %6429 = vmatpush2.xpose.msra.mxu0 0.0
      %6430 = vmatprep.subr.mxu0 0.0
      %6431 = vmatpush2.xpose.msra.mxu0 0.0
      %6432 = vmatprep.subr.mxu0 0.0
      %6433 = vmatpush2.xpose.msra.mxu0 0.0
      %6434 = vmatprep.subr.mxu0 0.0
      %6435 = vmatpush2.xpose.msra.mxu0 0.0
      %6436 = vmatprep.subr.mxu0 0.0
      %6437 = vmatpush2.xpose.msra.mxu0 0.0
      %6438 = vmatprep.subr.mxu0 0.0
      %6439 = vmatpush2.xpose.msra.mxu0 0.0
      %6440 = vmatprep.subr.mxu0 0.0
      %6441 = vmatpush2.xpose.msra.mxu0 0.0
      %6442 = vmatprep.subr.mxu0 0.0
      %6443 = vmatpush2.xpose.msra.mxu0 0.0
      %6444 = vmatprep.subr.mxu0 0.0
      %6445 = vmatpush2.xpose.msra.mxu0 0.0
      %6446 = vmatprep.subr.mxu0 0.0
      %6447 = vmatpush2.xpose.msra.mxu0 0.0
      %6448 = vmatprep.subr.mxu0 0.0
      %6449 = vmatpush2.xpose.msra.mxu0 0.0
      %6450 = vmatprep.subr.mxu0 0.0
      %6451 = vmatpush2.xpose.msra.mxu0 0.0
      %6452 = vmatprep.subr.mxu0 0.0
      %6453 = vmatpush2.xpose.msra.mxu0 0.0
      %6454 = vmatprep.subr.mxu0 0.0
      %6455 = vmatpush2.xpose.msra.mxu0 0.0
      %6456 = vmatprep.subr.mxu0 0.0
      %6457 = vmatpush2.xpose.msra.mxu0 0.0
      %6458 = vmatprep.mubr.f32.mxu0 0.0
      %6459 = vmatmul.mubr.f32.gmra.mxu0 %v6390
      %v6460 = vpop.f32.mrf.mxu0
      %v6461 = vadd.f32 0.0, %v6460
      %v6462 = vpop.f32.mrf.mxu0
      %6463 = vdwg.mxu0
      %6464 = vrot.lane.b32.xlu0 %v6225, 120
      %v6465 = vpop.permute.xlu0 %6464
      %6466 = vrot.lane.b32.xlu0 %v6225, 88
      %v6467 = vpop.permute.xlu0 %6466
      %v6468 = vsel %vm903, %v6465, 0
      %v6470 = vsel %vm903, %v6467, 0
      %6472 = vmatprep.subr.mxu0 0.0
      %6473 = vmatpush1.xpose.msra.mxu0 0.0
      %6474 = vmatprep.subr.mxu0 0.0
      %6475 = vmatpush1.xpose.msra.mxu0 0.0
      %6476 = vmatprep.subr.mxu0 0.0
      %6477 = vmatpush1.xpose.msra.mxu0 0.0
      %6478 = vmatprep.subr.mxu0 0.0
      %6479 = vmatpush1.xpose.msra.mxu0 0.0
      %6480 = vmatprep.subr.mxu0 0.0
      %6481 = vmatpush1.xpose.msra.mxu0 0.0
      %6482 = vmatprep.subr.mxu0 0.0
      %6483 = vmatpush1.xpose.msra.mxu0 0.0
      %6484 = vmatprep.subr.mxu0 0.0
      %6485 = vmatpush1.xpose.msra.mxu0 0.0
      %6486 = vmatprep.subr.mxu0 0.0
      %6487 = vmatpush1.xpose.msra.mxu0 0.0
      %6488 = vmatprep.subr.mxu0 0.0
      %6489 = vmatpush1.xpose.msra.mxu0 0.0
      %6490 = vmatprep.subr.mxu0 0.0
      %6491 = vmatpush1.xpose.msra.mxu0 0.0
      %6492 = vmatprep.subr.mxu0 0.0
      %6493 = vmatpush1.xpose.msra.mxu0 0.0
      %6494 = vmatprep.subr.mxu0 0.0
      %6495 = vmatpush1.xpose.msra.mxu0 0.0
      %6496 = vmatprep.subr.mxu0 0.0
      %6497 = vmatpush1.xpose.msra.mxu0 0.0
      %6498 = vmatprep.subr.mxu0 0.0
      %6499 = vmatpush1.xpose.msra.mxu0 0.0
      %6500 = vmatprep.subr.mxu0 0.0
      %6501 = vmatpush1.xpose.msra.mxu0 0.0
      %6502 = vmatprep.subr.mxu0 0.0
      %6503 = vmatpush1.xpose.msra.mxu0 %v6470
      %6504 = vmatprep.subr.mxu0 0.0
      %6505 = vmatpush2.xpose.msra.mxu0 0.0
      %6506 = vmatprep.subr.mxu0 0.0
      %6507 = vmatpush2.xpose.msra.mxu0 0.0
      %6508 = vmatprep.subr.mxu0 0.0
      %6509 = vmatpush2.xpose.msra.mxu0 0.0
      %6510 = vmatprep.subr.mxu0 0.0
      %6511 = vmatpush2.xpose.msra.mxu0 0.0
      %6512 = vmatprep.subr.mxu0 0.0
      %6513 = vmatpush2.xpose.msra.mxu0 0.0
      %6514 = vmatprep.subr.mxu0 0.0
      %6515 = vmatpush2.xpose.msra.mxu0 0.0
      %6516 = vmatprep.subr.mxu0 0.0
      %6517 = vmatpush2.xpose.msra.mxu0 0.0
      %6518 = vmatprep.subr.mxu0 0.0
      %6519 = vmatpush2.xpose.msra.mxu0 0.0
      %6520 = vmatprep.subr.mxu0 0.0
      %6521 = vmatpush2.xpose.msra.mxu0 0.0
      %6522 = vmatprep.subr.mxu0 0.0
      %6523 = vmatpush2.xpose.msra.mxu0 0.0
      %6524 = vmatprep.subr.mxu0 0.0
      %6525 = vmatpush2.xpose.msra.mxu0 0.0
      %6526 = vmatprep.subr.mxu0 0.0
      %6527 = vmatpush2.xpose.msra.mxu0 0.0
      %6528 = vmatprep.subr.mxu0 0.0
      %6529 = vmatpush2.xpose.msra.mxu0 0.0
      %6530 = vmatprep.subr.mxu0 0.0
      %6531 = vmatpush2.xpose.msra.mxu0 0.0
      %6532 = vmatprep.subr.mxu0 0.0
      %6533 = vmatpush2.xpose.msra.mxu0 0.0
      %6534 = vmatprep.subr.mxu0 0.0
      %6535 = vmatpush2.xpose.msra.mxu0 0.0
      %6536 = vmatprep.mubr.f32.mxu0 0.0
      %6537 = vmatmul.mubr.f32.gmra.mxu0 %v6468
      %v6538 = vpop.f32.mrf.mxu0
      %v6539 = vadd.f32 0.0, %v6538
      %v6540 = vpop.f32.mrf.mxu0
      %6541 = vdwg.mxu0
      %v6542 = vmul.f32 %v6461, 0.35355338
      %v6543 = vmul.f32 %v6539, 0.35355338
      %v6544 = vadd.f32 %v6542, %v1062
      %v6545 = vadd.f32 %v6543, %v1066
      %6546 = vrot.lane.b32.xlu0 %v6222, 112
      %v6547 = vpop.permute.xlu0 %6546
      %6548 = vrot.lane.b32.xlu0 %v6222, 80
      %v6549 = vpop.permute.xlu0 %6548
      %v6550 = vsel %vm903, %v6547, 0
      %v6552 = vsel %vm903, %v6549, 0
      %6554 = vmatprep.subr.mxu0 0.0
      %6555 = vmatpush1.xpose.msra.mxu0 0.0
      %6556 = vmatprep.subr.mxu0 0.0
      %6557 = vmatpush1.xpose.msra.mxu0 0.0
      %6558 = vmatprep.subr.mxu0 0.0
      %6559 = vmatpush1.xpose.msra.mxu0 0.0
      %6560 = vmatprep.subr.mxu0 0.0
      %6561 = vmatpush1.xpose.msra.mxu0 0.0
      %6562 = vmatprep.subr.mxu0 0.0
      %6563 = vmatpush1.xpose.msra.mxu0 0.0
      %6564 = vmatprep.subr.mxu0 0.0
      %6565 = vmatpush1.xpose.msra.mxu0 0.0
      %6566 = vmatprep.subr.mxu0 0.0
      %6567 = vmatpush1.xpose.msra.mxu0 0.0
      %6568 = vmatprep.subr.mxu0 0.0
      %6569 = vmatpush1.xpose.msra.mxu0 0.0
      %6570 = vmatprep.subr.mxu0 0.0
      %6571 = vmatpush1.xpose.msra.mxu0 0.0
      %6572 = vmatprep.subr.mxu0 0.0
      %6573 = vmatpush1.xpose.msra.mxu0 0.0
      %6574 = vmatprep.subr.mxu0 0.0
      %6575 = vmatpush1.xpose.msra.mxu0 0.0
      %6576 = vmatprep.subr.mxu0 0.0
      %6577 = vmatpush1.xpose.msra.mxu0 0.0
      %6578 = vmatprep.subr.mxu0 0.0
      %6579 = vmatpush1.xpose.msra.mxu0 0.0
      %6580 = vmatprep.subr.mxu0 0.0
      %6581 = vmatpush1.xpose.msra.mxu0 0.0
      %6582 = vmatprep.subr.mxu0 0.0
      %6583 = vmatpush1.xpose.msra.mxu0 0.0
      %6584 = vmatprep.subr.mxu0 0.0
      %6585 = vmatpush1.xpose.msra.mxu0 %v6552
      %6586 = vmatprep.subr.mxu0 0.0
      %6587 = vmatpush2.xpose.msra.mxu0 0.0
      %6588 = vmatprep.subr.mxu0 0.0
      %6589 = vmatpush2.xpose.msra.mxu0 0.0
      %6590 = vmatprep.subr.mxu0 0.0
      %6591 = vmatpush2.xpose.msra.mxu0 0.0
      %6592 = vmatprep.subr.mxu0 0.0
      %6593 = vmatpush2.xpose.msra.mxu0 0.0
      %6594 = vmatprep.subr.mxu0 0.0
      %6595 = vmatpush2.xpose.msra.mxu0 0.0
      %6596 = vmatprep.subr.mxu0 0.0
      %6597 = vmatpush2.xpose.msra.mxu0 0.0
      %6598 = vmatprep.subr.mxu0 0.0
      %6599 = vmatpush2.xpose.msra.mxu0 0.0
      %6600 = vmatprep.subr.mxu0 0.0
      %6601 = vmatpush2.xpose.msra.mxu0 0.0
      %6602 = vmatprep.subr.mxu0 0.0
      %6603 = vmatpush2.xpose.msra.mxu0 0.0
      %6604 = vmatprep.subr.mxu0 0.0
      %6605 = vmatpush2.xpose.msra.mxu0 0.0
      %6606 = vmatprep.subr.mxu0 0.0
      %6607 = vmatpush2.xpose.msra.mxu0 0.0
      %6608 = vmatprep.subr.mxu0 0.0
      %6609 = vmatpush2.xpose.msra.mxu0 0.0
      %6610 = vmatprep.subr.mxu0 0.0
      %6611 = vmatpush2.xpose.msra.mxu0 0.0
      %6612 = vmatprep.subr.mxu0 0.0
      %6613 = vmatpush2.xpose.msra.mxu0 0.0
      %6614 = vmatprep.subr.mxu0 0.0
      %6615 = vmatpush2.xpose.msra.mxu0 0.0
      %6616 = vmatprep.subr.mxu0 0.0
      %6617 = vmatpush2.xpose.msra.mxu0 0.0
      %6618 = vmatprep.mubr.f32.mxu0 0.0
      %6619 = vmatmul.mubr.f32.gmra.mxu0 %v6550
      %v6620 = vpop.f32.mrf.mxu0
      %v6621 = vadd.f32 0.0, %v6620
      %v6622 = vpop.f32.mrf.mxu0
      %6623 = vdwg.mxu0
      %6624 = vrot.lane.b32.xlu0 %v6225, 112
      %v6625 = vpop.permute.xlu0 %6624
      %6626 = vrot.lane.b32.xlu0 %v6225, 80
      %v6627 = vpop.permute.xlu0 %6626
      %v6628 = vsel %vm903, %v6625, 0
      %v6630 = vsel %vm903, %v6627, 0
      %6632 = vmatprep.subr.mxu0 0.0
      %6633 = vmatpush1.xpose.msra.mxu0 0.0
      %6634 = vmatprep.subr.mxu0 0.0
      %6635 = vmatpush1.xpose.msra.mxu0 0.0
      %6636 = vmatprep.subr.mxu0 0.0
      %6637 = vmatpush1.xpose.msra.mxu0 0.0
      %6638 = vmatprep.subr.mxu0 0.0
      %6639 = vmatpush1.xpose.msra.mxu0 0.0
      %6640 = vmatprep.subr.mxu0 0.0
      %6641 = vmatpush1.xpose.msra.mxu0 0.0
      %6642 = vmatprep.subr.mxu0 0.0
      %6643 = vmatpush1.xpose.msra.mxu0 0.0
      %6644 = vmatprep.subr.mxu0 0.0
      %6645 = vmatpush1.xpose.msra.mxu0 0.0
      %6646 = vmatprep.subr.mxu0 0.0
      %6647 = vmatpush1.xpose.msra.mxu0 0.0
      %6648 = vmatprep.subr.mxu0 0.0
      %6649 = vmatpush1.xpose.msra.mxu0 0.0
      %6650 = vmatprep.subr.mxu0 0.0
      %6651 = vmatpush1.xpose.msra.mxu0 0.0
      %6652 = vmatprep.subr.mxu0 0.0
      %6653 = vmatpush1.xpose.msra.mxu0 0.0
      %6654 = vmatprep.subr.mxu0 0.0
      %6655 = vmatpush1.xpose.msra.mxu0 0.0
      %6656 = vmatprep.subr.mxu0 0.0
      %6657 = vmatpush1.xpose.msra.mxu0 0.0
      %6658 = vmatprep.subr.mxu0 0.0
      %6659 = vmatpush1.xpose.msra.mxu0 0.0
      %6660 = vmatprep.subr.mxu0 0.0
      %6661 = vmatpush1.xpose.msra.mxu0 0.0
      %6662 = vmatprep.subr.mxu0 0.0
      %6663 = vmatpush1.xpose.msra.mxu0 %v6630
      %6664 = vmatprep.subr.mxu0 0.0
      %6665 = vmatpush2.xpose.msra.mxu0 0.0
      %6666 = vmatprep.subr.mxu0 0.0
      %6667 = vmatpush2.xpose.msra.mxu0 0.0
      %6668 = vmatprep.subr.mxu0 0.0
      %6669 = vmatpush2.xpose.msra.mxu0 0.0
      %6670 = vmatprep.subr.mxu0 0.0
      %6671 = vmatpush2.xpose.msra.mxu0 0.0
      %6672 = vmatprep.subr.mxu0 0.0
      %6673 = vmatpush2.xpose.msra.mxu0 0.0
      %6674 = vmatprep.subr.mxu0 0.0
      %6675 = vmatpush2.xpose.msra.mxu0 0.0
      %6676 = vmatprep.subr.mxu0 0.0
      %6677 = vmatpush2.xpose.msra.mxu0 0.0
      %6678 = vmatprep.subr.mxu0 0.0
      %6679 = vmatpush2.xpose.msra.mxu0 0.0
      %6680 = vmatprep.subr.mxu0 0.0
      %6681 = vmatpush2.xpose.msra.mxu0 0.0
      %6682 = vmatprep.subr.mxu0 0.0
      %6683 = vmatpush2.xpose.msra.mxu0 0.0
      %6684 = vmatprep.subr.mxu0 0.0
      %6685 = vmatpush2.xpose.msra.mxu0 0.0
      %6686 = vmatprep.subr.mxu0 0.0
      %6687 = vmatpush2.xpose.msra.mxu0 0.0
      %6688 = vmatprep.subr.mxu0 0.0
      %6689 = vmatpush2.xpose.msra.mxu0 0.0
      %6690 = vmatprep.subr.mxu0 0.0
      %6691 = vmatpush2.xpose.msra.mxu0 0.0
      %6692 = vmatprep.subr.mxu0 0.0
      %6693 = vmatpush2.xpose.msra.mxu0 0.0
      %6694 = vmatprep.subr.mxu0 0.0
      %6695 = vmatpush2.xpose.msra.mxu0 0.0
      %6696 = vmatprep.mubr.f32.mxu0 0.0
      %6697 = vmatmul.mubr.f32.gmra.mxu0 %v6628
      %v6698 = vpop.f32.mrf.mxu0
      %v6699 = vadd.f32 0.0, %v6698
      %v6700 = vpop.f32.mrf.mxu0
      %6701 = vdwg.mxu0
      %v6702 = vmul.f32 %v6621, 0.35355338
      %v6703 = vmul.f32 %v6699, 0.35355338
      %v6704 = vadd.f32 %v6702, %v1062
      %v6705 = vadd.f32 %v6703, %v1066
      %6706 = vrot.lane.b32.xlu0 %v6222, 104
      %v6707 = vpop.permute.xlu0 %6706
      %6708 = vrot.lane.b32.xlu0 %v6222, 72
      %v6709 = vpop.permute.xlu0 %6708
      %v6710 = vsel %vm903, %v6707, 0
      %v6712 = vsel %vm903, %v6709, 0
      %6714 = vmatprep.subr.mxu0 0.0
      %6715 = vmatpush1.xpose.msra.mxu0 0.0
      %6716 = vmatprep.subr.mxu0 0.0
      %6717 = vmatpush1.xpose.msra.mxu0 0.0
      %6718 = vmatprep.subr.mxu0 0.0
      %6719 = vmatpush1.xpose.msra.mxu0 0.0
      %6720 = vmatprep.subr.mxu0 0.0
      %6721 = vmatpush1.xpose.msra.mxu0 0.0
      %6722 = vmatprep.subr.mxu0 0.0
      %6723 = vmatpush1.xpose.msra.mxu0 0.0
      %6724 = vmatprep.subr.mxu0 0.0
      %6725 = vmatpush1.xpose.msra.mxu0 0.0
      %6726 = vmatprep.subr.mxu0 0.0
      %6727 = vmatpush1.xpose.msra.mxu0 0.0
      %6728 = vmatprep.subr.mxu0 0.0
      %6729 = vmatpush1.xpose.msra.mxu0 0.0
      %6730 = vmatprep.subr.mxu0 0.0
      %6731 = vmatpush1.xpose.msra.mxu0 0.0
      %6732 = vmatprep.subr.mxu0 0.0
      %6733 = vmatpush1.xpose.msra.mxu0 0.0
      %6734 = vmatprep.subr.mxu0 0.0
      %6735 = vmatpush1.xpose.msra.mxu0 0.0
      %6736 = vmatprep.subr.mxu0 0.0
      %6737 = vmatpush1.xpose.msra.mxu0 0.0
      %6738 = vmatprep.subr.mxu0 0.0
      %6739 = vmatpush1.xpose.msra.mxu0 0.0
      %6740 = vmatprep.subr.mxu0 0.0
      %6741 = vmatpush1.xpose.msra.mxu0 0.0
      %6742 = vmatprep.subr.mxu0 0.0
      %6743 = vmatpush1.xpose.msra.mxu0 0.0
      %6744 = vmatprep.subr.mxu0 0.0
      %6745 = vmatpush1.xpose.msra.mxu0 %v6712
      %6746 = vmatprep.subr.mxu0 0.0
      %6747 = vmatpush2.xpose.msra.mxu0 0.0
      %6748 = vmatprep.subr.mxu0 0.0
      %6749 = vmatpush2.xpose.msra.mxu0 0.0
      %6750 = vmatprep.subr.mxu0 0.0
      %6751 = vmatpush2.xpose.msra.mxu0 0.0
      %6752 = vmatprep.subr.mxu0 0.0
      %6753 = vmatpush2.xpose.msra.mxu0 0.0
      %6754 = vmatprep.subr.mxu0 0.0
      %6755 = vmatpush2.xpose.msra.mxu0 0.0
      %6756 = vmatprep.subr.mxu0 0.0
      %6757 = vmatpush2.xpose.msra.mxu0 0.0
      %6758 = vmatprep.subr.mxu0 0.0
      %6759 = vmatpush2.xpose.msra.mxu0 0.0
      %6760 = vmatprep.subr.mxu0 0.0
      %6761 = vmatpush2.xpose.msra.mxu0 0.0
      %6762 = vmatprep.subr.mxu0 0.0
      %6763 = vmatpush2.xpose.msra.mxu0 0.0
      %6764 = vmatprep.subr.mxu0 0.0
      %6765 = vmatpush2.xpose.msra.mxu0 0.0
      %6766 = vmatprep.subr.mxu0 0.0
      %6767 = vmatpush2.xpose.msra.mxu0 0.0
      %6768 = vmatprep.subr.mxu0 0.0
      %6769 = vmatpush2.xpose.msra.mxu0 0.0
      %6770 = vmatprep.subr.mxu0 0.0
      %6771 = vmatpush2.xpose.msra.mxu0 0.0
      %6772 = vmatprep.subr.mxu0 0.0
      %6773 = vmatpush2.xpose.msra.mxu0 0.0
      %6774 = vmatprep.subr.mxu0 0.0
      %6775 = vmatpush2.xpose.msra.mxu0 0.0
      %6776 = vmatprep.subr.mxu0 0.0
      %6777 = vmatpush2.xpose.msra.mxu0 0.0
      %6778 = vmatprep.mubr.f32.mxu0 0.0
      %6779 = vmatmul.mubr.f32.gmra.mxu0 %v6710
      %v6780 = vpop.f32.mrf.mxu0
      %v6781 = vadd.f32 0.0, %v6780
      %v6782 = vpop.f32.mrf.mxu0
      %6783 = vdwg.mxu0
      %6784 = vrot.lane.b32.xlu0 %v6225, 104
      %v6785 = vpop.permute.xlu0 %6784
      %6786 = vrot.lane.b32.xlu0 %v6225, 72
      %v6787 = vpop.permute.xlu0 %6786
      %v6788 = vsel %vm903, %v6785, 0
      %v6790 = vsel %vm903, %v6787, 0
      %6792 = vmatprep.subr.mxu0 0.0
      %6793 = vmatpush1.xpose.msra.mxu0 0.0
      %6794 = vmatprep.subr.mxu0 0.0
      %6795 = vmatpush1.xpose.msra.mxu0 0.0
      %6796 = vmatprep.subr.mxu0 0.0
      %6797 = vmatpush1.xpose.msra.mxu0 0.0
      %6798 = vmatprep.subr.mxu0 0.0
      %6799 = vmatpush1.xpose.msra.mxu0 0.0
      %6800 = vmatprep.subr.mxu0 0.0
      %6801 = vmatpush1.xpose.msra.mxu0 0.0
      %6802 = vmatprep.subr.mxu0 0.0
      %6803 = vmatpush1.xpose.msra.mxu0 0.0
      %6804 = vmatprep.subr.mxu0 0.0
      %6805 = vmatpush1.xpose.msra.mxu0 0.0
      %6806 = vmatprep.subr.mxu0 0.0
      %6807 = vmatpush1.xpose.msra.mxu0 0.0
      %6808 = vmatprep.subr.mxu0 0.0
      %6809 = vmatpush1.xpose.msra.mxu0 0.0
      %6810 = vmatprep.subr.mxu0 0.0
      %6811 = vmatpush1.xpose.msra.mxu0 0.0
      %6812 = vmatprep.subr.mxu0 0.0
      %6813 = vmatpush1.xpose.msra.mxu0 0.0
      %6814 = vmatprep.subr.mxu0 0.0
      %6815 = vmatpush1.xpose.msra.mxu0 0.0
      %6816 = vmatprep.subr.mxu0 0.0
      %6817 = vmatpush1.xpose.msra.mxu0 0.0
      %6818 = vmatprep.subr.mxu0 0.0
      %6819 = vmatpush1.xpose.msra.mxu0 0.0
      %6820 = vmatprep.subr.mxu0 0.0
      %6821 = vmatpush1.xpose.msra.mxu0 0.0
      %6822 = vmatprep.subr.mxu0 0.0
      %6823 = vmatpush1.xpose.msra.mxu0 %v6790
      %6824 = vmatprep.subr.mxu0 0.0
      %6825 = vmatpush2.xpose.msra.mxu0 0.0
      %6826 = vmatprep.subr.mxu0 0.0
      %6827 = vmatpush2.xpose.msra.mxu0 0.0
      %6828 = vmatprep.subr.mxu0 0.0
      %6829 = vmatpush2.xpose.msra.mxu0 0.0
      %6830 = vmatprep.subr.mxu0 0.0
      %6831 = vmatpush2.xpose.msra.mxu0 0.0
      %6832 = vmatprep.subr.mxu0 0.0
      %6833 = vmatpush2.xpose.msra.mxu0 0.0
      %6834 = vmatprep.subr.mxu0 0.0
      %6835 = vmatpush2.xpose.msra.mxu0 0.0
      %6836 = vmatprep.subr.mxu0 0.0
      %6837 = vmatpush2.xpose.msra.mxu0 0.0
      %6838 = vmatprep.subr.mxu0 0.0
      %6839 = vmatpush2.xpose.msra.mxu0 0.0
      %6840 = vmatprep.subr.mxu0 0.0
      %6841 = vmatpush2.xpose.msra.mxu0 0.0
      %6842 = vmatprep.subr.mxu0 0.0
      %6843 = vmatpush2.xpose.msra.mxu0 0.0
      %6844 = vmatprep.subr.mxu0 0.0
      %6845 = vmatpush2.xpose.msra.mxu0 0.0
      %6846 = vmatprep.subr.mxu0 0.0
      %6847 = vmatpush2.xpose.msra.mxu0 0.0
      %6848 = vmatprep.subr.mxu0 0.0
      %6849 = vmatpush2.xpose.msra.mxu0 0.0
      %6850 = vmatprep.subr.mxu0 0.0
      %6851 = vmatpush2.xpose.msra.mxu0 0.0
      %6852 = vmatprep.subr.mxu0 0.0
      %6853 = vmatpush2.xpose.msra.mxu0 0.0
      %6854 = vmatprep.subr.mxu0 0.0
      %6855 = vmatpush2.xpose.msra.mxu0 0.0
      %6856 = vmatprep.mubr.f32.mxu0 0.0
      %6857 = vmatmul.mubr.f32.gmra.mxu0 %v6788
      %v6858 = vpop.f32.mrf.mxu0
      %v6859 = vadd.f32 0.0, %v6858
      %v6860 = vpop.f32.mrf.mxu0
      %6861 = vdwg.mxu0
      %v6862 = vmul.f32 %v6781, 0.35355338
      %v6863 = vmul.f32 %v6859, 0.35355338
      %v6864 = vadd.f32 %v6862, %v1062
      %v6865 = vadd.f32 %v6863, %v1066
      %v6866 = vsel %vm903, %v6384, -inf
      %6867 = vmax.xlane.f32.xlu0 %v6866
      %v6868 = vpop.xlane.xlu0 %6867
      %v6869 = vsel %vm903, %v6544, -inf
      %6870 = vmax.xlane.f32.xlu0 %v6869
      %v6871 = vpop.xlane.xlu0 %6870
      %v6872 = vsel %vm903, %v6704, -inf
      %6873 = vmax.xlane.f32.xlu0 %v6872
      %v6874 = vpop.xlane.xlu0 %6873
      %v6875 = vsel %vm903, %v6864, -inf
      %6876 = vmax.xlane.f32.xlu0 %v6875
      %v6877 = vpop.xlane.xlu0 %6876
      %v6878 = vsel %vm903, %v6385, -inf
      %6879 = vmax.xlane.f32.xlu0 %v6878
      %v6880 = vpop.xlane.xlu0 %6879
      %v6881 = vsel %vm903, %v6545, -inf
      %6882 = vmax.xlane.f32.xlu0 %v6881
      %v6883 = vpop.xlane.xlu0 %6882
      %v6884 = vsel %vm903, %v6705, -inf
      %6885 = vmax.xlane.f32.xlu0 %v6884
      %v6886 = vpop.xlane.xlu0 %6885
      %v6887 = vsel %vm903, %v6865, -inf
      %6888 = vmax.xlane.f32.xlu0 %v6887
      %v6889 = vpop.xlane.xlu0 %6888
      %v6890 = vsub.f32 %v6384, %v6868
      %v6891 = vsub.f32 %v6544, %v6871
      %v6892 = vsub.f32 %v6704, %v6874
      %v6893 = vsub.f32 %v6864, %v6877
      %v6894 = vsub.f32 %v6385, %v6880
      %v6895 = vsub.f32 %v6545, %v6883
      %v6896 = vsub.f32 %v6705, %v6886
      %v6897 = vsub.f32 %v6865, %v6889
      %v6898 = vmul.f32 %v6890, 1.442695
      %v6899 = vpow.pop %v6898
      %v6900 = vmul.f32 %v6891, 1.442695
      %v6901 = vpow.pop %v6900
      %v6902 = vmul.f32 %v6892, 1.442695
      %v6903 = vpow.pop %v6902
      %v6904 = vmul.f32 %v6893, 1.442695
      %v6905 = vpow.pop %v6904
      %v6906 = vmul.f32 %v6894, 1.442695
      %v6907 = vpow.pop %v6906
      %v6908 = vmul.f32 %v6895, 1.442695
      %v6909 = vpow.pop %v6908
      %v6910 = vmul.f32 %v6896, 1.442695
      %v6911 = vpow.pop %v6910
      %v6912 = vmul.f32 %v6897, 1.442695
      %v6913 = vpow.pop %v6912
      %v6914 = vsel %vm903, %v6899, 0.0
      %6915 = vadd.xlane.f32.xlu0 %v6914
      %v6916 = vpop.xlane.xlu0 %6915
      %v6917 = vsel %vm903, %v6901, 0.0
      %6918 = vadd.xlane.f32.xlu0 %v6917
      %v6919 = vpop.xlane.xlu0 %6918
      %v6920 = vsel %vm903, %v6903, 0.0
      %6921 = vadd.xlane.f32.xlu0 %v6920
      %v6922 = vpop.xlane.xlu0 %6921
      %v6923 = vsel %vm903, %v6905, 0.0
      %6924 = vadd.xlane.f32.xlu0 %v6923
      %v6925 = vpop.xlane.xlu0 %6924
      %v6926 = vsel %vm903, %v6907, 0.0
      %6927 = vadd.xlane.f32.xlu0 %v6926
      %v6928 = vpop.xlane.xlu0 %6927
      %v6929 = vsel %vm903, %v6909, 0.0
      %6930 = vadd.xlane.f32.xlu0 %v6929
      %v6931 = vpop.xlane.xlu0 %6930
      %v6932 = vsel %vm903, %v6911, 0.0
      %6933 = vadd.xlane.f32.xlu0 %v6932
      %v6934 = vpop.xlane.xlu0 %6933
      %v6935 = vsel %vm903, %v6913, 0.0
      %6936 = vadd.xlane.f32.xlu0 %v6935
      %v6937 = vpop.xlane.xlu0 %6936
      %v6938 = vrcp.pop %v6916
      %v6939 = vrcp.pop %v6919
      %v6940 = vrcp.pop %v6922
      %v6941 = vrcp.pop %v6925
      %v6942 = vrcp.pop %v6928
      %v6943 = vrcp.pop %v6931
      %v6944 = vrcp.pop %v6934
      %v6945 = vrcp.pop %v6937
      %v6946 = vmul.f32 %v6899, %v6938
      %v6947 = vmul.f32 %v6901, %v6939
      %v6948 = vmul.f32 %v6903, %v6940
      %v6949 = vmul.f32 %v6905, %v6941
      %v6950 = vmul.f32 %v6907, %v6942
      %v6951 = vmul.f32 %v6909, %v6943
      %v6952 = vmul.f32 %v6911, %v6944
      %v6953 = vmul.f32 %v6913, %v6945
      %6954 = vrot.lane.b32.xlu0 %v6222, 64
      %v6955 = vpop.permute.xlu0 %6954
      %v6958 = vsel %vm903, %v6946, 0
      %6960 = vmatprep.subr.mxu0 0.0
      %6961 = vmatpush1.msra.mxu0 0.0
      %6962 = vmatprep.subr.mxu0 0.0
      %6963 = vmatpush1.msra.mxu0 0.0
      %6964 = vmatprep.subr.mxu0 0.0
      %6965 = vmatpush1.msra.mxu0 0.0
      %6966 = vmatprep.subr.mxu0 0.0
      %6967 = vmatpush1.msra.mxu0 0.0
      %6968 = vmatprep.subr.mxu0 0.0
      %6969 = vmatpush1.msra.mxu0 0.0
      %6970 = vmatprep.subr.mxu0 0.0
      %6971 = vmatpush1.msra.mxu0 0.0
      %6972 = vmatprep.subr.mxu0 0.0
      %6973 = vmatpush1.msra.mxu0 0.0
      %6974 = vmatprep.subr.mxu0 0.0
      %6975 = vmatpush1.msra.mxu0 0.0
      %6976 = vmatprep.subr.mxu0 0.0
      %6977 = vmatpush1.msra.mxu0 0.0
      %6978 = vmatprep.subr.mxu0 0.0
      %6979 = vmatpush1.msra.mxu0 0.0
      %6980 = vmatprep.subr.mxu0 0.0
      %6981 = vmatpush1.msra.mxu0 0.0
      %6982 = vmatprep.subr.mxu0 0.0
      %6983 = vmatpush1.msra.mxu0 0.0
      %6984 = vmatprep.subr.mxu0 0.0
      %6985 = vmatpush1.msra.mxu0 0.0
      %6986 = vmatprep.subr.mxu0 0.0
      %6987 = vmatpush1.msra.mxu0 0.0
      %6988 = vmatprep.subr.mxu0 0.0
      %6989 = vmatpush1.msra.mxu0 0.0
      %6990 = vmatprep.subr.mxu0 0.0
      %6991 = vmatpush1.msra.mxu0 %v6955
      %6992 = vmatprep.subr.mxu0 0.0
      %6993 = vmatpush2.msra.mxu0 0.0
      %6994 = vmatprep.subr.mxu0 0.0
      %6995 = vmatpush2.msra.mxu0 0.0
      %6996 = vmatprep.subr.mxu0 0.0
      %6997 = vmatpush2.msra.mxu0 0.0
      %6998 = vmatprep.subr.mxu0 0.0
      %6999 = vmatpush2.msra.mxu0 0.0
      %7000 = vmatprep.subr.mxu0 0.0
      %7001 = vmatpush2.msra.mxu0 0.0
      %7002 = vmatprep.subr.mxu0 0.0
      %7003 = vmatpush2.msra.mxu0 0.0
      %7004 = vmatprep.subr.mxu0 0.0
      %7005 = vmatpush2.msra.mxu0 0.0
      %7006 = vmatprep.subr.mxu0 0.0
      %7007 = vmatpush2.msra.mxu0 0.0
      %7008 = vmatprep.subr.mxu0 0.0
      %7009 = vmatpush2.msra.mxu0 0.0
      %7010 = vmatprep.subr.mxu0 0.0
      %7011 = vmatpush2.msra.mxu0 0.0
      %7012 = vmatprep.subr.mxu0 0.0
      %7013 = vmatpush2.msra.mxu0 0.0
      %7014 = vmatprep.subr.mxu0 0.0
      %7015 = vmatpush2.msra.mxu0 0.0
      %7016 = vmatprep.subr.mxu0 0.0
      %7017 = vmatpush2.msra.mxu0 0.0
      %7018 = vmatprep.subr.mxu0 0.0
      %7019 = vmatpush2.msra.mxu0 0.0
      %7020 = vmatprep.subr.mxu0 0.0
      %7021 = vmatpush2.msra.mxu0 0.0
      %7022 = vmatprep.subr.mxu0 0.0
      %7023 = vmatpush2.msra.mxu0 0.0
      %7024 = vmatprep.mubr.f32.mxu0 0.0
      %7025 = vmatmul.mubr.f32.gmra.mxu0 %v6958
      %v7026 = vpop.f32.mrf.mxu0
      %v7027 = vadd.f32 0.0, %v7026
      %v7028 = vpop.f32.mrf.mxu0
      %7029 = vdwg.mxu0
      %7030 = vrot.lane.b32.xlu0 %v6225, 64
      %v7031 = vpop.permute.xlu0 %7030
      %v7034 = vsel %vm903, %v6950, 0
      %7036 = vmatprep.subr.mxu0 0.0
      %7037 = vmatpush1.msra.mxu0 0.0
      %7038 = vmatprep.subr.mxu0 0.0
      %7039 = vmatpush1.msra.mxu0 0.0
      %7040 = vmatprep.subr.mxu0 0.0
      %7041 = vmatpush1.msra.mxu0 0.0
      %7042 = vmatprep.subr.mxu0 0.0
      %7043 = vmatpush1.msra.mxu0 0.0
      %7044 = vmatprep.subr.mxu0 0.0
      %7045 = vmatpush1.msra.mxu0 0.0
      %7046 = vmatprep.subr.mxu0 0.0
      %7047 = vmatpush1.msra.mxu0 0.0
      %7048 = vmatprep.subr.mxu0 0.0
      %7049 = vmatpush1.msra.mxu0 0.0
      %7050 = vmatprep.subr.mxu0 0.0
      %7051 = vmatpush1.msra.mxu0 0.0
      %7052 = vmatprep.subr.mxu0 0.0
      %7053 = vmatpush1.msra.mxu0 0.0
      %7054 = vmatprep.subr.mxu0 0.0
      %7055 = vmatpush1.msra.mxu0 0.0
      %7056 = vmatprep.subr.mxu0 0.0
      %7057 = vmatpush1.msra.mxu0 0.0
      %7058 = vmatprep.subr.mxu0 0.0
      %7059 = vmatpush1.msra.mxu0 0.0
      %7060 = vmatprep.subr.mxu0 0.0
      %7061 = vmatpush1.msra.mxu0 0.0
      %7062 = vmatprep.subr.mxu0 0.0
      %7063 = vmatpush1.msra.mxu0 0.0
      %7064 = vmatprep.subr.mxu0 0.0
      %7065 = vmatpush1.msra.mxu0 0.0
      %7066 = vmatprep.subr.mxu0 0.0
      %7067 = vmatpush1.msra.mxu0 %v7031
      %7068 = vmatprep.subr.mxu0 0.0
      %7069 = vmatpush2.msra.mxu0 0.0
      %7070 = vmatprep.subr.mxu0 0.0
      %7071 = vmatpush2.msra.mxu0 0.0
      %7072 = vmatprep.subr.mxu0 0.0
      %7073 = vmatpush2.msra.mxu0 0.0
      %7074 = vmatprep.subr.mxu0 0.0
      %7075 = vmatpush2.msra.mxu0 0.0
      %7076 = vmatprep.subr.mxu0 0.0
      %7077 = vmatpush2.msra.mxu0 0.0
      %7078 = vmatprep.subr.mxu0 0.0
      %7079 = vmatpush2.msra.mxu0 0.0
      %7080 = vmatprep.subr.mxu0 0.0
      %7081 = vmatpush2.msra.mxu0 0.0
      %7082 = vmatprep.subr.mxu0 0.0
      %7083 = vmatpush2.msra.mxu0 0.0
      %7084 = vmatprep.subr.mxu0 0.0
      %7085 = vmatpush2.msra.mxu0 0.0
      %7086 = vmatprep.subr.mxu0 0.0
      %7087 = vmatpush2.msra.mxu0 0.0
      %7088 = vmatprep.subr.mxu0 0.0
      %7089 = vmatpush2.msra.mxu0 0.0
      %7090 = vmatprep.subr.mxu0 0.0
      %7091 = vmatpush2.msra.mxu0 0.0
      %7092 = vmatprep.subr.mxu0 0.0
      %7093 = vmatpush2.msra.mxu0 0.0
      %7094 = vmatprep.subr.mxu0 0.0
      %7095 = vmatpush2.msra.mxu0 0.0
      %7096 = vmatprep.subr.mxu0 0.0
      %7097 = vmatpush2.msra.mxu0 0.0
      %7098 = vmatprep.subr.mxu0 0.0
      %7099 = vmatpush2.msra.mxu0 0.0
      %7100 = vmatprep.mubr.f32.mxu0 0.0
      %7101 = vmatmul.mubr.f32.gmra.mxu0 %v7034
      %v7102 = vpop.f32.mrf.mxu0
      %v7103 = vadd.f32 0.0, %v7102
      %v7104 = vpop.f32.mrf.mxu0
      %7105 = vdwg.mxu0
      %7106 = vrot.lane.b32.xlu0 %v6222, 56
      %v7107 = vpop.permute.xlu0 %7106
      %v7110 = vsel %vm903, %v6947, 0
      %7112 = vmatprep.subr.mxu0 0.0
      %7113 = vmatpush1.msra.mxu0 0.0
      %7114 = vmatprep.subr.mxu0 0.0
      %7115 = vmatpush1.msra.mxu0 0.0
      %7116 = vmatprep.subr.mxu0 0.0
      %7117 = vmatpush1.msra.mxu0 0.0
      %7118 = vmatprep.subr.mxu0 0.0
      %7119 = vmatpush1.msra.mxu0 0.0
      %7120 = vmatprep.subr.mxu0 0.0
      %7121 = vmatpush1.msra.mxu0 0.0
      %7122 = vmatprep.subr.mxu0 0.0
      %7123 = vmatpush1.msra.mxu0 0.0
      %7124 = vmatprep.subr.mxu0 0.0
      %7125 = vmatpush1.msra.mxu0 0.0
      %7126 = vmatprep.subr.mxu0 0.0
      %7127 = vmatpush1.msra.mxu0 0.0
      %7128 = vmatprep.subr.mxu0 0.0
      %7129 = vmatpush1.msra.mxu0 0.0
      %7130 = vmatprep.subr.mxu0 0.0
      %7131 = vmatpush1.msra.mxu0 0.0
      %7132 = vmatprep.subr.mxu0 0.0
      %7133 = vmatpush1.msra.mxu0 0.0
      %7134 = vmatprep.subr.mxu0 0.0
      %7135 = vmatpush1.msra.mxu0 0.0
      %7136 = vmatprep.subr.mxu0 0.0
      %7137 = vmatpush1.msra.mxu0 0.0
      %7138 = vmatprep.subr.mxu0 0.0
      %7139 = vmatpush1.msra.mxu0 0.0
      %7140 = vmatprep.subr.mxu0 0.0
      %7141 = vmatpush1.msra.mxu0 0.0
      %7142 = vmatprep.subr.mxu0 0.0
      %7143 = vmatpush1.msra.mxu0 %v7107
      %7144 = vmatprep.subr.mxu0 0.0
      %7145 = vmatpush2.msra.mxu0 0.0
      %7146 = vmatprep.subr.mxu0 0.0
      %7147 = vmatpush2.msra.mxu0 0.0
      %7148 = vmatprep.subr.mxu0 0.0
      %7149 = vmatpush2.msra.mxu0 0.0
      %7150 = vmatprep.subr.mxu0 0.0
      %7151 = vmatpush2.msra.mxu0 0.0
      %7152 = vmatprep.subr.mxu0 0.0
      %7153 = vmatpush2.msra.mxu0 0.0
      %7154 = vmatprep.subr.mxu0 0.0
      %7155 = vmatpush2.msra.mxu0 0.0
      %7156 = vmatprep.subr.mxu0 0.0
      %7157 = vmatpush2.msra.mxu0 0.0
      %7158 = vmatprep.subr.mxu0 0.0
      %7159 = vmatpush2.msra.mxu0 0.0
      %7160 = vmatprep.subr.mxu0 0.0
      %7161 = vmatpush2.msra.mxu0 0.0
      %7162 = vmatprep.subr.mxu0 0.0
      %7163 = vmatpush2.msra.mxu0 0.0
      %7164 = vmatprep.subr.mxu0 0.0
      %7165 = vmatpush2.msra.mxu0 0.0
      %7166 = vmatprep.subr.mxu0 0.0
      %7167 = vmatpush2.msra.mxu0 0.0
      %7168 = vmatprep.subr.mxu0 0.0
      %7169 = vmatpush2.msra.mxu0 0.0
      %7170 = vmatprep.subr.mxu0 0.0
      %7171 = vmatpush2.msra.mxu0 0.0
      %7172 = vmatprep.subr.mxu0 0.0
      %7173 = vmatpush2.msra.mxu0 0.0
      %7174 = vmatprep.subr.mxu0 0.0
      %7175 = vmatpush2.msra.mxu0 0.0
      %7176 = vmatprep.mubr.f32.mxu0 0.0
      %7177 = vmatmul.mubr.f32.gmra.mxu0 %v7110
      %v7178 = vpop.f32.mrf.mxu0
      %v7179 = vadd.f32 0.0, %v7178
      %v7180 = vpop.f32.mrf.mxu0
      %7181 = vdwg.mxu0
      %7182 = vrot.lane.b32.xlu0 %v6225, 56
      %v7183 = vpop.permute.xlu0 %7182
      %v7186 = vsel %vm903, %v6951, 0
      %7188 = vmatprep.subr.mxu0 0.0
      %7189 = vmatpush1.msra.mxu0 0.0
      %7190 = vmatprep.subr.mxu0 0.0
      %7191 = vmatpush1.msra.mxu0 0.0
      %7192 = vmatprep.subr.mxu0 0.0
      %7193 = vmatpush1.msra.mxu0 0.0
      %7194 = vmatprep.subr.mxu0 0.0
      %7195 = vmatpush1.msra.mxu0 0.0
      %7196 = vmatprep.subr.mxu0 0.0
      %7197 = vmatpush1.msra.mxu0 0.0
      %7198 = vmatprep.subr.mxu0 0.0
      %7199 = vmatpush1.msra.mxu0 0.0
      %7200 = vmatprep.subr.mxu0 0.0
      %7201 = vmatpush1.msra.mxu0 0.0
      %7202 = vmatprep.subr.mxu0 0.0
      %7203 = vmatpush1.msra.mxu0 0.0
      %7204 = vmatprep.subr.mxu0 0.0
      %7205 = vmatpush1.msra.mxu0 0.0
      %7206 = vmatprep.subr.mxu0 0.0
      %7207 = vmatpush1.msra.mxu0 0.0
      %7208 = vmatprep.subr.mxu0 0.0
      %7209 = vmatpush1.msra.mxu0 0.0
      %7210 = vmatprep.subr.mxu0 0.0
      %7211 = vmatpush1.msra.mxu0 0.0
      %7212 = vmatprep.subr.mxu0 0.0
      %7213 = vmatpush1.msra.mxu0 0.0
      %7214 = vmatprep.subr.mxu0 0.0
      %7215 = vmatpush1.msra.mxu0 0.0
      %7216 = vmatprep.subr.mxu0 0.0
      %7217 = vmatpush1.msra.mxu0 0.0
      %7218 = vmatprep.subr.mxu0 0.0
      %7219 = vmatpush1.msra.mxu0 %v7183
      %7220 = vmatprep.subr.mxu0 0.0
      %7221 = vmatpush2.msra.mxu0 0.0
      %7222 = vmatprep.subr.mxu0 0.0
      %7223 = vmatpush2.msra.mxu0 0.0
      %7224 = vmatprep.subr.mxu0 0.0
      %7225 = vmatpush2.msra.mxu0 0.0
      %7226 = vmatprep.subr.mxu0 0.0
      %7227 = vmatpush2.msra.mxu0 0.0
      %7228 = vmatprep.subr.mxu0 0.0
      %7229 = vmatpush2.msra.mxu0 0.0
      %7230 = vmatprep.subr.mxu0 0.0
      %7231 = vmatpush2.msra.mxu0 0.0
      %7232 = vmatprep.subr.mxu0 0.0
      %7233 = vmatpush2.msra.mxu0 0.0
      %7234 = vmatprep.subr.mxu0 0.0
      %7235 = vmatpush2.msra.mxu0 0.0
      %7236 = vmatprep.subr.mxu0 0.0
      %7237 = vmatpush2.msra.mxu0 0.0
      %7238 = vmatprep.subr.mxu0 0.0
      %7239 = vmatpush2.msra.mxu0 0.0
      %7240 = vmatprep.subr.mxu0 0.0
      %7241 = vmatpush2.msra.mxu0 0.0
      %7242 = vmatprep.subr.mxu0 0.0
      %7243 = vmatpush2.msra.mxu0 0.0
      %7244 = vmatprep.subr.mxu0 0.0
      %7245 = vmatpush2.msra.mxu0 0.0
      %7246 = vmatprep.subr.mxu0 0.0
      %7247 = vmatpush2.msra.mxu0 0.0
      %7248 = vmatprep.subr.mxu0 0.0
      %7249 = vmatpush2.msra.mxu0 0.0
      %7250 = vmatprep.subr.mxu0 0.0
      %7251 = vmatpush2.msra.mxu0 0.0
      %7252 = vmatprep.mubr.f32.mxu0 0.0
      %7253 = vmatmul.mubr.f32.gmra.mxu0 %v7186
      %v7254 = vpop.f32.mrf.mxu0
      %v7255 = vadd.f32 0.0, %v7254
      %v7256 = vpop.f32.mrf.mxu0
      %7257 = vdwg.mxu0
      %7258 = vrot.lane.b32.xlu0 %v6222, 48
      %v7259 = vpop.permute.xlu0 %7258
      %v7262 = vsel %vm903, %v6948, 0
      %7264 = vmatprep.subr.mxu0 0.0
      %7265 = vmatpush1.msra.mxu0 0.0
      %7266 = vmatprep.subr.mxu0 0.0
      %7267 = vmatpush1.msra.mxu0 0.0
      %7268 = vmatprep.subr.mxu0 0.0
      %7269 = vmatpush1.msra.mxu0 0.0
      %7270 = vmatprep.subr.mxu0 0.0
      %7271 = vmatpush1.msra.mxu0 0.0
      %7272 = vmatprep.subr.mxu0 0.0
      %7273 = vmatpush1.msra.mxu0 0.0
      %7274 = vmatprep.subr.mxu0 0.0
      %7275 = vmatpush1.msra.mxu0 0.0
      %7276 = vmatprep.subr.mxu0 0.0
      %7277 = vmatpush1.msra.mxu0 0.0
      %7278 = vmatprep.subr.mxu0 0.0
      %7279 = vmatpush1.msra.mxu0 0.0
      %7280 = vmatprep.subr.mxu0 0.0
      %7281 = vmatpush1.msra.mxu0 0.0
      %7282 = vmatprep.subr.mxu0 0.0
      %7283 = vmatpush1.msra.mxu0 0.0
      %7284 = vmatprep.subr.mxu0 0.0
      %7285 = vmatpush1.msra.mxu0 0.0
      %7286 = vmatprep.subr.mxu0 0.0
      %7287 = vmatpush1.msra.mxu0 0.0
      %7288 = vmatprep.subr.mxu0 0.0
      %7289 = vmatpush1.msra.mxu0 0.0
      %7290 = vmatprep.subr.mxu0 0.0
      %7291 = vmatpush1.msra.mxu0 0.0
      %7292 = vmatprep.subr.mxu0 0.0
      %7293 = vmatpush1.msra.mxu0 0.0
      %7294 = vmatprep.subr.mxu0 0.0
      %7295 = vmatpush1.msra.mxu0 %v7259
      %7296 = vmatprep.subr.mxu0 0.0
      %7297 = vmatpush2.msra.mxu0 0.0
      %7298 = vmatprep.subr.mxu0 0.0
      %7299 = vmatpush2.msra.mxu0 0.0
      %7300 = vmatprep.subr.mxu0 0.0
      %7301 = vmatpush2.msra.mxu0 0.0
      %7302 = vmatprep.subr.mxu0 0.0
      %7303 = vmatpush2.msra.mxu0 0.0
      %7304 = vmatprep.subr.mxu0 0.0
      %7305 = vmatpush2.msra.mxu0 0.0
      %7306 = vmatprep.subr.mxu0 0.0
      %7307 = vmatpush2.msra.mxu0 0.0
      %7308 = vmatprep.subr.mxu0 0.0
      %7309 = vmatpush2.msra.mxu0 0.0
      %7310 = vmatprep.subr.mxu0 0.0
      %7311 = vmatpush2.msra.mxu0 0.0
      %7312 = vmatprep.subr.mxu0 0.0
      %7313 = vmatpush2.msra.mxu0 0.0
      %7314 = vmatprep.subr.mxu0 0.0
      %7315 = vmatpush2.msra.mxu0 0.0
      %7316 = vmatprep.subr.mxu0 0.0
      %7317 = vmatpush2.msra.mxu0 0.0
      %7318 = vmatprep.subr.mxu0 0.0
      %7319 = vmatpush2.msra.mxu0 0.0
      %7320 = vmatprep.subr.mxu0 0.0
      %7321 = vmatpush2.msra.mxu0 0.0
      %7322 = vmatprep.subr.mxu0 0.0
      %7323 = vmatpush2.msra.mxu0 0.0
      %7324 = vmatprep.subr.mxu0 0.0
      %7325 = vmatpush2.msra.mxu0 0.0
      %7326 = vmatprep.subr.mxu0 0.0
      %7327 = vmatpush2.msra.mxu0 0.0
      %7328 = vmatprep.mubr.f32.mxu0 0.0
      %7329 = vmatmul.mubr.f32.gmra.mxu0 %v7262
      %v7330 = vpop.f32.mrf.mxu0
      %v7331 = vadd.f32 0.0, %v7330
      %v7332 = vpop.f32.mrf.mxu0
      %7333 = vdwg.mxu0
      %7334 = vrot.lane.b32.xlu0 %v6225, 48
      %v7335 = vpop.permute.xlu0 %7334
      %v7338 = vsel %vm903, %v6952, 0
      %7340 = vmatprep.subr.mxu0 0.0
      %7341 = vmatpush1.msra.mxu0 0.0
      %7342 = vmatprep.subr.mxu0 0.0
      %7343 = vmatpush1.msra.mxu0 0.0
      %7344 = vmatprep.subr.mxu0 0.0
      %7345 = vmatpush1.msra.mxu0 0.0
      %7346 = vmatprep.subr.mxu0 0.0
      %7347 = vmatpush1.msra.mxu0 0.0
      %7348 = vmatprep.subr.mxu0 0.0
      %7349 = vmatpush1.msra.mxu0 0.0
      %7350 = vmatprep.subr.mxu0 0.0
      %7351 = vmatpush1.msra.mxu0 0.0
      %7352 = vmatprep.subr.mxu0 0.0
      %7353 = vmatpush1.msra.mxu0 0.0
      %7354 = vmatprep.subr.mxu0 0.0
      %7355 = vmatpush1.msra.mxu0 0.0
      %7356 = vmatprep.subr.mxu0 0.0
      %7357 = vmatpush1.msra.mxu0 0.0
      %7358 = vmatprep.subr.mxu0 0.0
      %7359 = vmatpush1.msra.mxu0 0.0
      %7360 = vmatprep.subr.mxu0 0.0
      %7361 = vmatpush1.msra.mxu0 0.0
      %7362 = vmatprep.subr.mxu0 0.0
      %7363 = vmatpush1.msra.mxu0 0.0
      %7364 = vmatprep.subr.mxu0 0.0
      %7365 = vmatpush1.msra.mxu0 0.0
      %7366 = vmatprep.subr.mxu0 0.0
      %7367 = vmatpush1.msra.mxu0 0.0
      %7368 = vmatprep.subr.mxu0 0.0
      %7369 = vmatpush1.msra.mxu0 0.0
      %7370 = vmatprep.subr.mxu0 0.0
      %7371 = vmatpush1.msra.mxu0 %v7335
      %7372 = vmatprep.subr.mxu0 0.0
      %7373 = vmatpush2.msra.mxu0 0.0
      %7374 = vmatprep.subr.mxu0 0.0
      %7375 = vmatpush2.msra.mxu0 0.0
      %7376 = vmatprep.subr.mxu0 0.0
      %7377 = vmatpush2.msra.mxu0 0.0
      %7378 = vmatprep.subr.mxu0 0.0
      %7379 = vmatpush2.msra.mxu0 0.0
      %7380 = vmatprep.subr.mxu0 0.0
      %7381 = vmatpush2.msra.mxu0 0.0
      %7382 = vmatprep.subr.mxu0 0.0
      %7383 = vmatpush2.msra.mxu0 0.0
      %7384 = vmatprep.subr.mxu0 0.0
      %7385 = vmatpush2.msra.mxu0 0.0
      %7386 = vmatprep.subr.mxu0 0.0
      %7387 = vmatpush2.msra.mxu0 0.0
      %7388 = vmatprep.subr.mxu0 0.0
      %7389 = vmatpush2.msra.mxu0 0.0
      %7390 = vmatprep.subr.mxu0 0.0
      %7391 = vmatpush2.msra.mxu0 0.0
      %7392 = vmatprep.subr.mxu0 0.0
      %7393 = vmatpush2.msra.mxu0 0.0
      %7394 = vmatprep.subr.mxu0 0.0
      %7395 = vmatpush2.msra.mxu0 0.0
      %7396 = vmatprep.subr.mxu0 0.0
      %7397 = vmatpush2.msra.mxu0 0.0
      %7398 = vmatprep.subr.mxu0 0.0
      %7399 = vmatpush2.msra.mxu0 0.0
      %7400 = vmatprep.subr.mxu0 0.0
      %7401 = vmatpush2.msra.mxu0 0.0
      %7402 = vmatprep.subr.mxu0 0.0
      %7403 = vmatpush2.msra.mxu0 0.0
      %7404 = vmatprep.mubr.f32.mxu0 0.0
      %7405 = vmatmul.mubr.f32.gmra.mxu0 %v7338
      %v7406 = vpop.f32.mrf.mxu0
      %v7407 = vadd.f32 0.0, %v7406
      %v7408 = vpop.f32.mrf.mxu0
      %7409 = vdwg.mxu0
      %7410 = vrot.lane.b32.xlu0 %v6222, 40
      %v7411 = vpop.permute.xlu0 %7410
      %v7414 = vsel %vm903, %v6949, 0
      %7416 = vmatprep.subr.mxu0 0.0
      %7417 = vmatpush1.msra.mxu0 0.0
      %7418 = vmatprep.subr.mxu0 0.0
      %7419 = vmatpush1.msra.mxu0 0.0
      %7420 = vmatprep.subr.mxu0 0.0
      %7421 = vmatpush1.msra.mxu0 0.0
      %7422 = vmatprep.subr.mxu0 0.0
      %7423 = vmatpush1.msra.mxu0 0.0
      %7424 = vmatprep.subr.mxu0 0.0
      %7425 = vmatpush1.msra.mxu0 0.0
      %7426 = vmatprep.subr.mxu0 0.0
      %7427 = vmatpush1.msra.mxu0 0.0
      %7428 = vmatprep.subr.mxu0 0.0
      %7429 = vmatpush1.msra.mxu0 0.0
      %7430 = vmatprep.subr.mxu0 0.0
      %7431 = vmatpush1.msra.mxu0 0.0
      %7432 = vmatprep.subr.mxu0 0.0
      %7433 = vmatpush1.msra.mxu0 0.0
      %7434 = vmatprep.subr.mxu0 0.0
      %7435 = vmatpush1.msra.mxu0 0.0
      %7436 = vmatprep.subr.mxu0 0.0
      %7437 = vmatpush1.msra.mxu0 0.0
      %7438 = vmatprep.subr.mxu0 0.0
      %7439 = vmatpush1.msra.mxu0 0.0
      %7440 = vmatprep.subr.mxu0 0.0
      %7441 = vmatpush1.msra.mxu0 0.0
      %7442 = vmatprep.subr.mxu0 0.0
      %7443 = vmatpush1.msra.mxu0 0.0
      %7444 = vmatprep.subr.mxu0 0.0
      %7445 = vmatpush1.msra.mxu0 0.0
      %7446 = vmatprep.subr.mxu0 0.0
      %7447 = vmatpush1.msra.mxu0 %v7411
      %7448 = vmatprep.subr.mxu0 0.0
      %7449 = vmatpush2.msra.mxu0 0.0
      %7450 = vmatprep.subr.mxu0 0.0
      %7451 = vmatpush2.msra.mxu0 0.0
      %7452 = vmatprep.subr.mxu0 0.0
      %7453 = vmatpush2.msra.mxu0 0.0
      %7454 = vmatprep.subr.mxu0 0.0
      %7455 = vmatpush2.msra.mxu0 0.0
      %7456 = vmatprep.subr.mxu0 0.0
      %7457 = vmatpush2.msra.mxu0 0.0
      %7458 = vmatprep.subr.mxu0 0.0
      %7459 = vmatpush2.msra.mxu0 0.0
      %7460 = vmatprep.subr.mxu0 0.0
      %7461 = vmatpush2.msra.mxu0 0.0
      %7462 = vmatprep.subr.mxu0 0.0
      %7463 = vmatpush2.msra.mxu0 0.0
      %7464 = vmatprep.subr.mxu0 0.0
      %7465 = vmatpush2.msra.mxu0 0.0
      %7466 = vmatprep.subr.mxu0 0.0
      %7467 = vmatpush2.msra.mxu0 0.0
      %7468 = vmatprep.subr.mxu0 0.0
      %7469 = vmatpush2.msra.mxu0 0.0
      %7470 = vmatprep.subr.mxu0 0.0
      %7471 = vmatpush2.msra.mxu0 0.0
      %7472 = vmatprep.subr.mxu0 0.0
      %7473 = vmatpush2.msra.mxu0 0.0
      %7474 = vmatprep.subr.mxu0 0.0
      %7475 = vmatpush2.msra.mxu0 0.0
      %7476 = vmatprep.subr.mxu0 0.0
      %7477 = vmatpush2.msra.mxu0 0.0
      %7478 = vmatprep.subr.mxu0 0.0
      %7479 = vmatpush2.msra.mxu0 0.0
      %7480 = vmatprep.mubr.f32.mxu0 0.0
      %7481 = vmatmul.mubr.f32.gmra.mxu0 %v7414
      %v7482 = vpop.f32.mrf.mxu0
      %v7483 = vadd.f32 0.0, %v7482
      %v7484 = vpop.f32.mrf.mxu0
      %7485 = vdwg.mxu0
      %7486 = vrot.lane.b32.xlu0 %v6225, 40
      %v7487 = vpop.permute.xlu0 %7486
      %v7490 = vsel %vm903, %v6953, 0
      %7492 = vmatprep.subr.mxu0 0.0
      %7493 = vmatpush1.msra.mxu0 0.0
      %7494 = vmatprep.subr.mxu0 0.0
      %7495 = vmatpush1.msra.mxu0 0.0
      %7496 = vmatprep.subr.mxu0 0.0
      %7497 = vmatpush1.msra.mxu0 0.0
      %7498 = vmatprep.subr.mxu0 0.0
      %7499 = vmatpush1.msra.mxu0 0.0
      %7500 = vmatprep.subr.mxu0 0.0
      %7501 = vmatpush1.msra.mxu0 0.0
      %7502 = vmatprep.subr.mxu0 0.0
      %7503 = vmatpush1.msra.mxu0 0.0
      %7504 = vmatprep.subr.mxu0 0.0
      %7505 = vmatpush1.msra.mxu0 0.0
      %7506 = vmatprep.subr.mxu0 0.0
      %7507 = vmatpush1.msra.mxu0 0.0
      %7508 = vmatprep.subr.mxu0 0.0
      %7509 = vmatpush1.msra.mxu0 0.0
      %7510 = vmatprep.subr.mxu0 0.0
      %7511 = vmatpush1.msra.mxu0 0.0
      %7512 = vmatprep.subr.mxu0 0.0
      %7513 = vmatpush1.msra.mxu0 0.0
      %7514 = vmatprep.subr.mxu0 0.0
      %7515 = vmatpush1.msra.mxu0 0.0
      %7516 = vmatprep.subr.mxu0 0.0
      %7517 = vmatpush1.msra.mxu0 0.0
      %7518 = vmatprep.subr.mxu0 0.0
      %7519 = vmatpush1.msra.mxu0 0.0
      %7520 = vmatprep.subr.mxu0 0.0
      %7521 = vmatpush1.msra.mxu0 0.0
      %7522 = vmatprep.subr.mxu0 0.0
      %7523 = vmatpush1.msra.mxu0 %v7487
      %7524 = vmatprep.subr.mxu0 0.0
      %7525 = vmatpush2.msra.mxu0 0.0
      %7526 = vmatprep.subr.mxu0 0.0
      %7527 = vmatpush2.msra.mxu0 0.0
      %7528 = vmatprep.subr.mxu0 0.0
      %7529 = vmatpush2.msra.mxu0 0.0
      %7530 = vmatprep.subr.mxu0 0.0
      %7531 = vmatpush2.msra.mxu0 0.0
      %7532 = vmatprep.subr.mxu0 0.0
      %7533 = vmatpush2.msra.mxu0 0.0
      %7534 = vmatprep.subr.mxu0 0.0
      %7535 = vmatpush2.msra.mxu0 0.0
      %7536 = vmatprep.subr.mxu0 0.0
      %7537 = vmatpush2.msra.mxu0 0.0
      %7538 = vmatprep.subr.mxu0 0.0
      %7539 = vmatpush2.msra.mxu0 0.0
      %7540 = vmatprep.subr.mxu0 0.0
      %7541 = vmatpush2.msra.mxu0 0.0
      %7542 = vmatprep.subr.mxu0 0.0
      %7543 = vmatpush2.msra.mxu0 0.0
      %7544 = vmatprep.subr.mxu0 0.0
      %7545 = vmatpush2.msra.mxu0 0.0
      %7546 = vmatprep.subr.mxu0 0.0
      %7547 = vmatpush2.msra.mxu0 0.0
      %7548 = vmatprep.subr.mxu0 0.0
      %7549 = vmatpush2.msra.mxu0 0.0
      %7550 = vmatprep.subr.mxu0 0.0
      %7551 = vmatpush2.msra.mxu0 0.0
      %7552 = vmatprep.subr.mxu0 0.0
      %7553 = vmatpush2.msra.mxu0 0.0
      %7554 = vmatprep.subr.mxu0 0.0
      %7555 = vmatpush2.msra.mxu0 0.0
      %7556 = vmatprep.mubr.f32.mxu0 0.0
      %7557 = vmatmul.mubr.f32.gmra.mxu0 %v7490
      %v7558 = vpop.f32.mrf.mxu0
      %v7559 = vadd.f32 0.0, %v7558
      %v7560 = vpop.f32.mrf.mxu0
      %7561 = vdwg.mxu0
      %7564 = vrot.lane.b32.xlu0 %v7179, 8
      %v7565 = vpop.permute.xlu0 %7564
      %7566 = vrot.lane.b32.xlu0 %v7255, 8
      %v7567 = vpop.permute.xlu0 %7566
      %7572 = vrot.lane.b32.xlu0 %v7331, 16
      %v7573 = vpop.permute.xlu0 %7572
      %7574 = vrot.lane.b32.xlu0 %v7407, 16
      %v7575 = vpop.permute.xlu0 %7574
      %7580 = vrot.lane.b32.xlu0 %v7483, 24
      %v7581 = vpop.permute.xlu0 %7580
      %7582 = vrot.lane.b32.xlu0 %v7559, 24
      %v7583 = vpop.permute.xlu0 %7582
      %v7586 = vsel %vm903, %v7027, %v7565
      %v7587 = vsel %vm903, %v7103, %v7567
      %v7588 = vsel %vm2273, %v7586, %v7573
      %v7589 = vsel %vm2273, %v7587, %v7575
      %v7590 = vsel %vm2276, %v7588, %v7581
      %v7591 = vsel %vm2276, %v7589, %v7583
      %v7592 = vpack.c.bf16 %v7591, %v7590
      %s7593 = scalar_lea.vmem %s738, 48
      %v7594 = vld [vmem:[%s7593] sm:$0xf]
      %v7595 = vld [vmem:[%s7593 + $0x4] sm:$0xf]
      %v7596 = vld [vmem:[%s7593 + $0x8] sm:$0xf]
      %v7597 = vld [vmem:[%s7593 + $0xc] sm:$0xf]
      %s7598 = scalar_lea.vmem %s742, 3
      %v7599 = vld [vmem:[%s7598] sm:$0x1]
      %v7601 = vlaneseq
      %v7602 = vshrl.u32 %v7601, 7
      %v7603 = vsub.s32 0, %v7602
      %v7604 = vrot.slane %v7599, %v7603
      %v7610 = vunpack.c.l.b16 %v7594
      %v7611 = vunpack.c.l.b16 %v7595
      %v7612 = vunpack.c.l.b16 %v7596
      %v7613 = vunpack.c.l.b16 %v7597
      %v7614 = vpack.c.b16 %v7611, %v7610
      %v7615 = vpack.c.b16 %v7613, %v7612
      %v7619 = vsel %vm786, %v7592, 0
      %7621 = vmatprep.subr.bf16.mxu0 0
      %7622 = vmatpush1.bf16.msra.mxu0 0
      %7623 = vmatprep.subr.bf16.mxu0 0
      %7624 = vmatpush1.bf16.msra.mxu0 0
      %7625 = vmatprep.subr.bf16.mxu0 0
      %7626 = vmatpush1.bf16.msra.mxu0 0
      %7627 = vmatprep.subr.bf16.mxu0 0
      %7628 = vmatpush1.bf16.msra.mxu0 0
      %7629 = vmatprep.subr.bf16.mxu0 0
      %7630 = vmatpush1.bf16.msra.mxu0 0
      %7631 = vmatprep.subr.bf16.mxu0 0
      %7632 = vmatpush1.bf16.msra.mxu0 0
      %7633 = vmatprep.subr.bf16.mxu0 0
      %7634 = vmatpush1.bf16.msra.mxu0 %v7615
      %7635 = vmatprep.subr.bf16.mxu0 0
      %7636 = vmatpush1.bf16.msra.mxu0 %v7614
      %7637 = vmatprep.subr.bf16.mxu0 0
      %7638 = vmatpush2.bf16.msra.mxu0 0
      %7639 = vmatprep.subr.bf16.mxu0 0
      %7640 = vmatpush2.bf16.msra.mxu0 0
      %7641 = vmatprep.subr.bf16.mxu0 0
      %7642 = vmatpush2.bf16.msra.mxu0 0
      %7643 = vmatprep.subr.bf16.mxu0 0
      %7644 = vmatpush2.bf16.msra.mxu0 0
      %7645 = vmatprep.subr.bf16.mxu0 0
      %7646 = vmatpush2.bf16.msra.mxu0 0
      %7647 = vmatprep.subr.bf16.mxu0 0
      %7648 = vmatpush2.bf16.msra.mxu0 0
      %7649 = vmatprep.subr.bf16.mxu0 0
      %7650 = vmatpush2.bf16.msra.mxu0 0
      %7651 = vmatprep.subr.bf16.mxu0 0
      %7652 = vmatpush2.bf16.msra.mxu0 0
      %7653 = vmatprep.mubr.bf16.mxu0 0
      %7654 = vmatmul.mubr.bf16.gmra.mxu0 %v7619
      %v7655 = vpop.f32.mrf.mxu0
      %v7656 = vadd.f32 %v7604, %v7655
      %v7657 = vpop.f32.mrf.mxu0
      %v7658 = vpop.f32.mrf.mxu0
      %v7659 = vadd.f32 %v7604, %v7658
      %v7660 = vpop.f32.mrf.mxu0
      %7661 = vdwg.mxu0
      %v7662 = vadd.f32 %v6156, %v7656
      %v7663 = vadd.f32 %v6157, %v7659
      %s7664 = scalar_lea.vmem %s746, 3
      %v7665 = vld [vmem:[%s7664] sm:$0x1]
      %s7666 = scalar_lea.vmem %s750, 3
      %v7667 = vld [vmem:[%s7666] sm:$0x1]
      %v7668 = vsel %vm786, %v7662, 0.0
      %7669 = vadd.xlane.f32.xlu0 %v7668
      %v7670 = vpop.xlane.xlu0 %7669
      %v7671 = vsel %vm786, %v7663, 0.0
      %7672 = vadd.xlane.f32.xlu0 %v7671
      %v7673 = vpop.xlane.xlu0 %7672
      %v7674 = vmul.f32 %v7670, %v793
      %v7675 = vmul.f32 %v7673, %v793
      %v7676 = vsub.f32 %v7662, %v7674
      %v7677 = vsub.f32 %v7663, %v7675
      %v7678 = vmul.f32 %v7676, %v7676
      %v7679 = vmul.f32 %v7677, %v7677
      %v7680 = vsel %vm786, %v7678, 0.0
      %7681 = vadd.xlane.f32.xlu0 %v7680
      %v7682 = vpop.xlane.xlu0 %7681
      %v7683 = vsel %vm786, %v7679, 0.0
      %7684 = vadd.xlane.f32.xlu0 %v7683
      %v7685 = vpop.xlane.xlu0 %7684
      %v7686 = vmul.f32 %v7682, %v793
      %v7687 = vmul.f32 %v7685, %v793
      %v7688 = vadd.f32 %v7686, 1e-07
      %v7689 = vadd.f32 %v7687, 1e-07
      %v7690 = vrsqrt.pop %v7688
      %v7691 = vrsqrt.pop %v7689
      %v7692 = vmul.f32 %v7676, %v7690
      %v7693 = vmul.f32 %v7677, %v7691
      %v7695 = vlaneseq
      %v7696 = vshrl.u32 %v7695, 7
      %v7697 = vsub.s32 0, %v7696
      %v7698 = vrot.slane %v7665, %v7697
      %v7700 = vmul.f32 %v7692, %v7698
      %v7701 = vmul.f32 %v7693, %v7698
      %v7703 = vlaneseq
      %v7704 = vshrl.u32 %v7703, 7
      %v7705 = vsub.s32 0, %v7704
      %v7706 = vrot.slane %v7667, %v7705
      %v7708 = vadd.f32 %v7700, %v7706
      %v7709 = vadd.f32 %v7701, %v7706
      %v7710 = vpack.c.bf16 %v7709, %v7708
      %s7711 = scalar_lea.vmem %s755, 48
      %v7712 = vld [vmem:[%s7711] sm:$0xf]
      %v7713 = vld [vmem:[%s7711 + $0x4] sm:$0xf]
      %v7714 = vld [vmem:[%s7711 + $0x8] sm:$0xf]
      %v7715 = vld [vmem:[%s7711 + $0xc] sm:$0xf]
      %s7716 = scalar_lea.vmem %s759, 3
      %v7717 = vld [vmem:[%s7716] sm:$0x1]
      %v7719 = vlaneseq
      %v7720 = vshrl.u32 %v7719, 7
      %v7721 = vsub.s32 0, %v7720
      %v7722 = vrot.slane %v7717, %v7721
      %v7728 = vunpack.c.l.b16 %v7712
      %v7729 = vunpack.c.l.b16 %v7713
      %v7730 = vunpack.c.l.b16 %v7714
      %v7731 = vunpack.c.l.b16 %v7715
      %v7732 = vpack.c.b16 %v7729, %v7728
      %v7733 = vpack.c.b16 %v7731, %v7730
      %v7737 = vsel %vm786, %v7710, 0
      %7739 = vmatprep.subr.bf16.mxu0 0
      %7740 = vmatpush1.bf16.msra.mxu0 0
      %7741 = vmatprep.subr.bf16.mxu0 0
      %7742 = vmatpush1.bf16.msra.mxu0 0
      %7743 = vmatprep.subr.bf16.mxu0 0
      %7744 = vmatpush1.bf16.msra.mxu0 0
      %7745 = vmatprep.subr.bf16.mxu0 0
      %7746 = vmatpush1.bf16.msra.mxu0 0
      %7747 = vmatprep.subr.bf16.mxu0 0
      %7748 = vmatpush1.bf16.msra.mxu0 0
      %7749 = vmatprep.subr.bf16.mxu0 0
      %7750 = vmatpush1.bf16.msra.mxu0 0
      %7751 = vmatprep.subr.bf16.mxu0 0
      %7752 = vmatpush1.bf16.msra.mxu0 %v7733
      %7753 = vmatprep.subr.bf16.mxu0 0
      %7754 = vmatpush1.bf16.msra.mxu0 %v7732
      %7755 = vmatprep.subr.bf16.mxu0 0
      %7756 = vmatpush2.bf16.msra.mxu0 0
      %7757 = vmatprep.subr.bf16.mxu0 0
      %7758 = vmatpush2.bf16.msra.mxu0 0
      %7759 = vmatprep.subr.bf16.mxu0 0
      %7760 = vmatpush2.bf16.msra.mxu0 0
      %7761 = vmatprep.subr.bf16.mxu0 0
      %7762 = vmatpush2.bf16.msra.mxu0 0
      %7763 = vmatprep.subr.bf16.mxu0 0
      %7764 = vmatpush2.bf16.msra.mxu0 0
      %7765 = vmatprep.subr.bf16.mxu0 0
      %7766 = vmatpush2.bf16.msra.mxu0 0
      %7767 = vmatprep.subr.bf16.mxu0 0
      %7768 = vmatpush2.bf16.msra.mxu0 0
      %7769 = vmatprep.subr.bf16.mxu0 0
      %7770 = vmatpush2.bf16.msra.mxu0 0
      %7771 = vmatprep.mubr.bf16.mxu0 0
      %7772 = vmatmul.mubr.bf16.gmra.mxu0 %v7737
      %v7773 = vpop.f32.mrf.mxu0
      %v7774 = vadd.f32 %v7722, %v7773
      %v7775 = vpop.f32.mrf.mxu0
      %v7776 = vpop.f32.mrf.mxu0
      %v7777 = vadd.f32 %v7722, %v7776
      %v7778 = vpop.f32.mrf.mxu0
      %7779 = vdwg.mxu0
      %v7780 = vmul.f32 %v7774, 0.5
      %v7781 = vmul.f32 %v7777, 0.5
      %v7782 = vmul.f32 %v7774, 0.044715
      %v7783 = vmul.f32 %v7777, 0.044715
      %v7784 = vmul.f32 %v7782, %v7774
      %v7785 = vmul.f32 %v7783, %v7777
      %v7786 = vmul.f32 %v7784, %v7774
      %v7787 = vmul.f32 %v7785, %v7777
      %v7788 = vadd.f32 %v7774, %v7786
      %v7789 = vadd.f32 %v7777, %v7787
      %v7790 = vmul.f32 %v7788, 0.7978846
      %v7791 = vmul.f32 %v7789, 0.7978846
      %v7792 = vtanh.pop %v7790
      %v7793 = vtanh.pop %v7791
      %v7794 = vadd.f32 %v7792, 1.0
      %v7795 = vadd.f32 %v7793, 1.0
      %v7796 = vmul.f32 %v7780, %v7794
      %v7797 = vmul.f32 %v7781, %v7795
      %v7798 = vpack.c.bf16 %v7797, %v7796
      %s7799 = scalar_lea.vmem %s764, 96
      %v7800 = vld [vmem:[%s7799] sm:$0xf]
      %v7801 = vld [vmem:[%s7799 + $0x4] sm:$0xf]
      %v7802 = vld [vmem:[%s7799 + $0x8] sm:$0xf]
      %v7803 = vld [vmem:[%s7799 + $0xc] sm:$0xf]
      %v7804 = vld [vmem:[%s7799 + $0x10] sm:$0xf]
      %v7805 = vld [vmem:[%s7799 + $0x14] sm:$0xf]
      %v7806 = vld [vmem:[%s7799 + $0x18] sm:$0xf]
      %v7807 = vld [vmem:[%s7799 + $0x1c] sm:$0xf]
      %s7808 = scalar_lea.vmem %s768, 3
      %v7809 = vld [vmem:[%s7808] sm:$0x1]
      %v7811 = vlaneseq
      %v7812 = vshrl.u32 %v7811, 7
      %v7813 = vsub.s32 0, %v7812
      %v7814 = vrot.slane %v7809, %v7813
      %v7824 = vunpack.c.l.b16 %v7800
      %v7825 = vunpack.c.l.b16 %v7801
      %v7826 = vunpack.c.l.b16 %v7802
      %v7827 = vunpack.c.l.b16 %v7803
      %v7828 = vunpack.c.l.b16 %v7804
      %v7829 = vunpack.c.l.b16 %v7805
      %v7830 = vunpack.c.l.b16 %v7806
      %v7831 = vunpack.c.l.b16 %v7807
      %v7832 = vpack.c.b16 %v7825, %v7824
      %v7833 = vpack.c.b16 %v7827, %v7826
      %v7834 = vpack.c.b16 %v7829, %v7828
      %v7835 = vpack.c.b16 %v7831, %v7830
      %v7841 = vsel %vm2519, %v7798, 0
      %7843 = vmatprep.subr.bf16.mxu0 0
      %7844 = vmatpush1.bf16.msra.mxu0 0
      %7845 = vmatprep.subr.bf16.mxu0 0
      %7846 = vmatpush1.bf16.msra.mxu0 0
      %7847 = vmatprep.subr.bf16.mxu0 0
      %7848 = vmatpush1.bf16.msra.mxu0 0
      %7849 = vmatprep.subr.bf16.mxu0 0
      %7850 = vmatpush1.bf16.msra.mxu0 0
      %7851 = vmatprep.subr.bf16.mxu0 0
      %7852 = vmatpush1.bf16.msra.mxu0 %v7835
      %7853 = vmatprep.subr.bf16.mxu0 0
      %7854 = vmatpush1.bf16.msra.mxu0 %v7834
      %7855 = vmatprep.subr.bf16.mxu0 0
      %7856 = vmatpush1.bf16.msra.mxu0 %v7833
      %7857 = vmatprep.subr.bf16.mxu0 0
      %7858 = vmatpush1.bf16.msra.mxu0 %v7832
      %7859 = vmatprep.subr.bf16.mxu0 0
      %7860 = vmatpush2.bf16.msra.mxu0 0
      %7861 = vmatprep.subr.bf16.mxu0 0
      %7862 = vmatpush2.bf16.msra.mxu0 0
      %7863 = vmatprep.subr.bf16.mxu0 0
      %7864 = vmatpush2.bf16.msra.mxu0 0
      %7865 = vmatprep.subr.bf16.mxu0 0
      %7866 = vmatpush2.bf16.msra.mxu0 0
      %7867 = vmatprep.subr.bf16.mxu0 0
      %7868 = vmatpush2.bf16.msra.mxu0 0
      %7869 = vmatprep.subr.bf16.mxu0 0
      %7870 = vmatpush2.bf16.msra.mxu0 0
      %7871 = vmatprep.subr.bf16.mxu0 0
      %7872 = vmatpush2.bf16.msra.mxu0 0
      %7873 = vmatprep.subr.bf16.mxu0 0
      %7874 = vmatpush2.bf16.msra.mxu0 0
      %7875 = vmatprep.mubr.bf16.mxu0 0
      %7876 = vmatmul.mubr.bf16.gmra.mxu0 %v7841
      %v7877 = vpop.f32.mrf.mxu0
      %v7878 = vadd.f32 %v7814, %v7877
      %v7879 = vpop.f32.mrf.mxu0
      %v7880 = vpop.f32.mrf.mxu0
      %v7881 = vadd.f32 %v7814, %v7880
      %v7882 = vpop.f32.mrf.mxu0
      %7883 = vdwg.mxu0
      %v7884 = vadd.f32 %v7708, %v7878
      %v7885 = vadd.f32 %v7709, %v7881
      %s7886 = scalar_lea.vmem %s772, 3
      %v7887 = vld [vmem:[%s7886] sm:$0x1]
      %s7888 = scalar_lea.vmem %s776, 3
      %v7889 = vld [vmem:[%s7888] sm:$0x1]
      %v7890 = vsel %vm786, %v7884, 0.0
      %7891 = vadd.xlane.f32.xlu0 %v7890
      %v7892 = vpop.xlane.xlu0 %7891
      %v7893 = vsel %vm786, %v7885, 0.0
      %7894 = vadd.xlane.f32.xlu0 %v7893
      %v7895 = vpop.xlane.xlu0 %7894
      %v7896 = vmul.f32 %v7892, %v793
      %v7897 = vmul.f32 %v7895, %v793
      %v7898 = vsub.f32 %v7884, %v7896
      %v7899 = vsub.f32 %v7885, %v7897
      %v7900 = vmul.f32 %v7898, %v7898
      %v7901 = vmul.f32 %v7899, %v7899
      %v7902 = vsel %vm786, %v7900, 0.0
      %7903 = vadd.xlane.f32.xlu0 %v7902
      %v7904 = vpop.xlane.xlu0 %7903
      %v7905 = vsel %vm786, %v7901, 0.0
      %7906 = vadd.xlane.f32.xlu0 %v7905
      %v7907 = vpop.xlane.xlu0 %7906
      %v7908 = vmul.f32 %v7904, %v793
      %v7909 = vmul.f32 %v7907, %v793
      %v7910 = vadd.f32 %v7908, 1e-07
      %v7911 = vadd.f32 %v7909, 1e-07
      %v7912 = vrsqrt.pop %v7910
      %v7913 = vrsqrt.pop %v7911
      %v7914 = vmul.f32 %v7898, %v7912
      %v7915 = vmul.f32 %v7899, %v7913
      %v7917 = vlaneseq
      %v7918 = vshrl.u32 %v7917, 7
      %v7919 = vsub.s32 0, %v7918
      %v7920 = vrot.slane %v7887, %v7919
      %v7922 = vmul.f32 %v7914, %v7920
      %v7923 = vmul.f32 %v7915, %v7920
      %v7925 = vlaneseq
      %v7926 = vshrl.u32 %v7925, 7
      %v7927 = vsub.s32 0, %v7926
      %v7928 = vrot.slane %v7889, %v7927
      %v7930 = vadd.f32 %v7922, %v7928
      %v7931 = vadd.f32 %v7923, %v7928
      %v7934 = vrot.slane %v7931, 7
      %vm7935 = vcmask 1041409
      %v7936 = vsel %vm7935, %v7934, %v7930
      %v7940 = vrot.slane %v6157, 7
      %v7941 = vsel %vm7935, %v7940, %v6156
      %7942 = vrot.lane.b32.xlu0 %v7941, 32
      %v7943 = vpop.permute.xlu0 %7942
      %v7947 = vrot.slane %v4383, 7
      %v7948 = vsel %vm7935, %v7947, %v4382
      %7949 = vrot.lane.b32.xlu0 %v7948, 64
      %v7950 = vpop.permute.xlu0 %7949
      %v7954 = vrot.slane %v2609, 7
      %v7955 = vsel %vm7935, %v7954, %v2608
      %7956 = vrot.lane.b32.xlu0 %v7955, 96
      %v7957 = vpop.permute.xlu0 %7956
      %v7959 = vsel %vm786, %v7936, %v7943
      %v7960 = vsel %vm2519, %v7959, %v7950
      %vm7961 = vcmask 785408
      %v7962 = vsel %vm7961, %v7960, %v7957
      %7963 = vst [vmem:[%s780] sm:$0x3] %v7962
      %p7964 = scmp.lt.s32.totalorder %s27, 1
      %s7965 = scalar_select %p7964, %s27, 1
      %s7966 = smul.addr %s7965, 2
      %s7967 = scalar_lea.vmem %s16, %s7966
      // Predicated region
      $region85: #{my_model_forward.1} parent=83 // pred_check
        %p7968 = pneg %p461
      $region86: #{my_model_forward.1} parent=83 // pred_check_branch
        %7970 = sbr.rel (%p7968) target = $region88
      $region87: #{my_model_forward.1} parent=83 // pred_region
        _
      $region88: #{my_model_forward.1} parent=83 // pred_fallthru
        _
    $region84: #{my_model_forward.1} parent=5 // pred_fallthru
      _
    %p7971 = scmp.le.s32.totalorder 2, %s22
    // Predicated region
    $region89: #{my_model_forward.1} parent=5 // pred_check
      %p7972 = pneg %p7971
    $region90: #{my_model_forward.1} parent=5 // pred_check_branch
      %7974 = sbr.rel (%p7972) target = $region92
    $region91: #{my_model_forward.1} parent=5 // pred_region
      %s7975 = ssub.s32 %s22, 2
      // Predicated region
      $region93: #{my_model_forward.1} parent=91 // pred_check
        %p7976 = pneg %p467
      $region94: #{my_model_forward.1} parent=91 // pred_check_branch
        %7978 = sbr.rel (%p7976) target = $region96
      $region95: #{my_model_forward.1} parent=91 // pred_region
        %p7979 = scmp.lt.s32.totalorder %s28, 1
        %s7980 = scalar_select %p7979, %s28, 1
        %s7981 = smul.addr %s7980, 2
        %s7982 = scalar_lea.vmem %s16, %s7981
      $region96: #{my_model_forward.1} parent=91 // pred_fallthru
        _
    $region92: #{my_model_forward.1} parent=5 // pred_fallthru
      _
  $region6: #{my_model_forward.1} parent=0 // loop_footer
    %s26 = sadd.s32 1, %s22
  $region7: #{my_model_forward.1} parent=0 // loop_footer_branch
    %21 = sbr.rel target = $region3
  $region8: #{my_model_forward.1} parent=0 // loop_exit
    _

</llo_original>
